<compile_context>
chip_gen: v5e
topology: v5e:2x2
jax: 0.10.0
libtpu: 0.0.40
codegen_flags: <defaults>
</compile_context>

<pallas_src>
import functools

import jax
import jax.numpy as jnp
from jax.experimental import pallas as pl
from jax.experimental.pallas import tpu as pltpu


# ----------------------------------------------------------------------------
# Pallas kernels
# ----------------------------------------------------------------------------
def _matmul_bias_act_kernel(x_ref, w_ref, b_ref, o_ref, *, neg_slope):
    """o = leaky_relu(x @ w + b) on one (bm, Np) output tile. bf16 in, f32 acc."""
    acc = jnp.dot(x_ref[...], w_ref[...], preferred_element_type=jnp.float32)
    acc = acc + b_ref[...]
    if neg_slope is not None:
        acc = jnp.where(acc > 0, acc, acc * neg_slope)
    o_ref[...] = acc.astype(o_ref.dtype)


def _mu_logvar_z_kernel(x_ref, w_ref, b_ref, eps_ref, ml_ref, z_ref, *, lp):
    """Fused fc_mu | fc_logvar matmul + reparameterization epilogue.

    Columns [0, lp)   -> mu,  columns [lp, 2*lp) -> logvar.
    z = mu + eps * exp(0.5 * logvar).
    """
    acc = jnp.dot(x_ref[...], w_ref[...], preferred_element_type=jnp.float32)
    acc = acc + b_ref[...]
    mu = acc[:, :lp]
    logvar = acc[:, lp:]
    z_ref[...] = mu + eps_ref[...] * jnp.exp(0.5 * logvar)
    ml_ref[...] = acc


# ----------------------------------------------------------------------------
# Pallas wrappers
# ----------------------------------------------------------------------------
def _round_up(x, m):
    return ((x + m - 1) // m) * m


def linear_pallas(x, wp, bp, n_real, neg_slope=None,
                  out_dtype=jnp.bfloat16, bm_max=512):
    """y = act(x @ w + b); x:(M,K), wp:(Kp,Np) pre-padded bf16, bp:(1,Np) f32."""
    M, K = x.shape
    Kp, Np = wp.shape
    if M <= bm_max:
        bm = _round_up(max(M, 16), 16)          # single full-M block
    else:
        bm = bm_max                             # tiled; grid >= 2 on big layers
    Mp = _round_up(M, bm)
    xp = jnp.pad(x.astype(jnp.bfloat16), ((0, Mp - M), (0, Kp - K)))

    out = pl.pallas_call(
        functools.partial(_matmul_bias_act_kernel, neg_slope=neg_slope),
        out_shape=jax.ShapeDtypeStruct((Mp, Np), out_dtype),
        grid=(Mp // bm,),
        in_specs=[
            pl.BlockSpec((bm, Kp), lambda i: (i, 0)),   # activation tile
            pl.BlockSpec((Kp, Np), lambda i: (0, 0)),   # full weight (resident)
            pl.BlockSpec((1, Np), lambda i: (0, 0)),    # bias row
        ],
        out_specs=pl.BlockSpec((bm, Np), lambda i: (i, 0)),
        compiler_params=pltpu.CompilerParams(dimension_semantics=("parallel",)),
    )(xp, wp, bp)
    return out[:M, :n_real]


def mu_logvar_z_pallas(h, wp, bp, eps, latent_dim, lp=128):
    """Fused mu/logvar matmul + reparameterize. h:(B,K); wp:(Kp,2*lp); eps:(B,L)."""
    M, K = h.shape
    Kp = wp.shape[0]
    Mp = _round_up(max(M, 8), 8)
    hp = jnp.pad(h.astype(jnp.bfloat16), ((0, Mp - M), (0, Kp - K)))
    ep = jnp.pad(eps.astype(jnp.float32),
                 ((0, Mp - M), (0, lp - eps.shape[1])))
    ml, z = pl.pallas_call(
        functools.partial(_mu_logvar_z_kernel, lp=lp),
        out_shape=(jax.ShapeDtypeStruct((Mp, 2 * lp), jnp.float32),
                   jax.ShapeDtypeStruct((Mp, lp), jnp.float32)),
    )(hp, wp, bp, ep)
    mu = ml[:M, :latent_dim]
    logvar = ml[:M, lp:lp + latent_dim]
    return mu, logvar, z[:M, :latent_dim]


# ----------------------------------------------------------------------------
# Conv / ConvTranspose as (NHWC) im2col + Pallas matmul
# ----------------------------------------------------------------------------
def _im2col_nhwc(x, KH, KW, stride):
    """x:(N,H,W,C) -> patches (N*OH*OW, KH*KW*C) ordered (kh, kw, c)."""
    N, H, W, C = x.shape
    OH = (H - KH) // stride + 1
    OW = (W - KW) // stride + 1
    cols = []
    for kh in range(KH):
        for kw in range(KW):
            cols.append(
                x[:, kh:kh + stride * (OH - 1) + 1:stride,
                  kw:kw + stride * (OW - 1) + 1:stride, :])
    p = jnp.stack(cols, axis=3)                     # (N, OH, OW, KH*KW, C)
    return p.reshape(N * OH * OW, KH * KW * C), OH, OW


def conv2d_pallas(x, wp, bp, cout, K, stride, neg_slope, out_dtype=jnp.bfloat16):
    """x:(N,H,W,Cin) NHWC; wp pre-packed (K*K*Cin -> Kp, Np) bf16."""
    N = x.shape[0]
    patches, OH, OW = _im2col_nhwc(x, K, K, stride)
    y = linear_pallas(patches, wp, bp, cout, neg_slope, out_dtype)
    return y.reshape(N, OH, OW, cout)


def conv_transpose2d_pallas(x, wp, bp, cout, K, stride, neg_slope,
                            out_dtype=jnp.bfloat16):
    """Phase-decomposed ConvTranspose2d (padding=0).

    All stride^2 output phases share one T x T (T = ceil(K/stride)) im2col of the
    un-dilated input; a single matmul with the fused (T*T*Cin, stride^2*Cout)
    phase weight produces all phases, which are interleaved by reshape/transpose.
    """
    N, H, W, C = x.shape
    T = -(-K // stride)
    OH = (H - 1) * stride + K
    OW = (W - 1) * stride + K
    xpad = jnp.pad(x, ((0, 0), (T - 1, T - 1), (T - 1, T - 1), (0, 0)))
    patches, Qh, Qw = _im2col_nhwc(xpad, T, T, 1)   # Qh = H + T - 1
    y = linear_pallas(patches, wp, bp, stride * stride * cout, neg_slope, out_dtype)
    y = y.reshape(N, Qh, Qw, stride, stride, cout)          # (..., rh, rw, co)
    y = y.transpose(0, 1, 3, 2, 4, 5).reshape(N, Qh * stride, Qw * stride, cout)
    return y[:, :OH, :OW, :]                                 # drop phase overhang


# ----------------------------------------------------------------------------
# Parameter init (shapes follow the PyTorch module) + one-time packing
# ----------------------------------------------------------------------------
def init_params(key, input_channels, latent_dim, k):
    k8 = 8 * k
    flattened = k8 * 9 * 9                          # conv stack on 166x166 -> (8k,9,9)
    fc_int = max(latent_dim * 4, flattened // 10)
    shapes = {
        "enc_conv1_w": (k, input_channels, 4, 4), "enc_conv1_b": (k,),
        "enc_conv2_w": (2 * k, k, 4, 4), "enc_conv2_b": (2 * k,),
        "enc_conv3_w": (4 * k, 2 * k, 4, 4), "enc_conv3_b": (4 * k,),
        "enc_conv4_w": (8 * k, 4 * k, 3, 3), "enc_conv4_b": (8 * k,),
        "enc_fc_w": (flattened, fc_int), "enc_fc_b": (fc_int,),
        "fc_mu_w": (fc_int, latent_dim), "fc_mu_b": (latent_dim,),
        "fc_logvar_w": (fc_int, latent_dim), "fc_logvar_b": (latent_dim,),
        "dec_fc_w": (latent_dim, flattened), "dec_fc_b": (flattened,),
        "dec_deconv1_w": (8 * k, 4 * k, 3, 3), "dec_deconv1_b": (4 * k,),
        "dec_deconv2_w": (4 * k, 2 * k, 4, 4), "dec_deconv2_b": (2 * k,),
        "dec_deconv3_w": (2 * k, k, 4, 4), "dec_deconv3_b": (k,),
        "dec_deconv4_w": (k, input_channels, 4, 4), "dec_deconv4_b": (input_channels,),
    }
    params = {}
    keys = jax.random.split(key, len(shapes))
    for (name, shp), kk in zip(shapes.items(), keys):
        params[name] = 0.05 * jax.random.normal(kk, shp, jnp.float32)
    return params


def _deconv_phase_weight(w, stride):
    """w: PyTorch ConvTranspose2d weight (Cin, Cout, K, K) ->
    fused-phase correlation matrix (T*T*Cin, stride*stride*Cout), T = ceil(K/s).

    Phase (rh, rw) column block holds w_corr[mh,mw,ci,co] =
        w[ci, co, s*(T-1-mh)+rh, s*(T-1-mw)+rw]   (0 if the tap index >= K),
    so a plain stride-1 correlation of the 1-padded input reproduces the
    transposed convolution for every output phase.
    """
    Cin, Cout, K, _ = w.shape
    T = -(-K // stride)
    cols = []
    for rh in range(stride):
        for rw in range(stride):
            wc = jnp.zeros((T, T, Cin, Cout), jnp.float32)
            for mh in range(T):
                kh = stride * (T - 1 - mh) + rh
                if kh >= K:
                    continue
                for mw in range(T):
                    kw = stride * (T - 1 - mw) + rw
                    if kw >= K:
                        continue
                    wc = wc.at[mh, mw].set(w[:, :, kh, kw].astype(jnp.float32))
            cols.append(wc)
    wcat = jnp.concatenate(cols, axis=-1)            # (T, T, Cin, s*s*Cout)
    return wcat.reshape(T * T * Cin, stride * stride * Cout)


def pack_params(params):
    """One-time pre-packing: im2col ordering, phase fusion, pad to 128, bf16."""
    def pack_mat(wm, b):
        Kd, Nd = wm.shape
        Kp, Np = _round_up(Kd, 128), _round_up(Nd, 128)
        wp = jnp.pad(wm.astype(jnp.float32),
                     ((0, Kp - Kd), (0, Np - Nd))).astype(jnp.bfloat16)
        bp = jnp.pad(b.astype(jnp.float32), (0, Np - Nd)).reshape(1, Np)
        return wp, bp

    packed = {}
    # Encoder convs: (Cout,Cin,K,K) -> (K,K,Cin,Cout) -> (K*K*Cin, Cout)
    for name in ("enc_conv1", "enc_conv2", "enc_conv3", "enc_conv4"):
        w = params[name + "_w"]
        wm = jnp.transpose(w, (2, 3, 1, 0)).reshape(-1, w.shape[0])
        packed[name + "_w"], packed[name + "_b"] = pack_mat(wm, params[name + "_b"])
    # FC layers
    packed["enc_fc_w"], packed["enc_fc_b"] = pack_mat(params["enc_fc_w"],
                                                      params["enc_fc_b"])
    packed["dec_fc_w"], packed["dec_fc_b"] = pack_mat(params["dec_fc_w"],
                                                      params["dec_fc_b"])
    # Fused fc_mu | fc_logvar (each padded to its own 128-lane block)
    lp = 128
    fc_int, L = params["fc_mu_w"].shape
    Kp = _round_up(fc_int, 128)
    wm = jnp.zeros((Kp, 2 * lp), jnp.float32)
    wm = wm.at[:fc_int, :L].set(params["fc_mu_w"].astype(jnp.float32))
    wm = wm.at[:fc_int, lp:lp + L].set(params["fc_logvar_w"].astype(jnp.float32))
    bb = jnp.zeros((1, 2 * lp), jnp.float32)
    bb = bb.at[0, :L].set(params["fc_mu_b"].astype(jnp.float32))
    bb = bb.at[0, lp:lp + L].set(params["fc_logvar_b"].astype(jnp.float32))
    packed["mu_logvar_w"], packed["mu_logvar_b"] = wm.astype(jnp.bfloat16), bb
    # Decoder deconvs: fused-phase weights, bias tiled per phase
    for name, K, stride in (("dec_deconv1", 3, 2), ("dec_deconv2", 4, 2),
                            ("dec_deconv3", 4, 2), ("dec_deconv4", 4, 2)):
        wm = _deconv_phase_weight(params[name + "_w"], stride)
        bb = jnp.tile(params[name + "_b"].astype(jnp.float32), stride * stride)
        packed[name + "_w"], packed[name + "_b"] = pack_mat(wm, bb)
    return packed


# ----------------------------------------------------------------------------
# BetaVAE forward (NHWC internally, NCHW at the boundaries)
# ----------------------------------------------------------------------------
def build_forward(input_channels, latent_dim, k):
    k8 = 8 * k
    flattened = k8 * 9 * 9
    fc_int = max(latent_dim * 4, flattened // 10)

    def forward(packed, x, eps):
        B = x.shape[0]
        # --- encoder ---
        h = jnp.transpose(x, (0, 2, 3, 1)).astype(jnp.bfloat16)        # NCHW -> NHWC
        h = conv2d_pallas(h, packed["enc_conv1_w"], packed["enc_conv1_b"], k, 4, 2, 0.1)
        h = conv2d_pallas(h, packed["enc_conv2_w"], packed["enc_conv2_b"], 2 * k, 4, 2, 0.1)
        h = conv2d_pallas(h, packed["enc_conv3_w"], packed["enc_conv3_b"], 4 * k, 4, 2, 0.1)
        h = conv2d_pallas(h, packed["enc_conv4_w"], packed["enc_conv4_b"], 8 * k, 3, 2, 0.1)
        # nn.Flatten matches PyTorch's NCHW (C,H,W) ordering
        h_flat = jnp.transpose(h, (0, 3, 1, 2)).reshape(B, flattened)
        h_fc = linear_pallas(h_flat, packed["enc_fc_w"], packed["enc_fc_b"], fc_int, 0.1)
        # fused fc_mu + fc_logvar + reparameterize
        mu, logvar, z = mu_logvar_z_pallas(h_fc, packed["mu_logvar_w"],
                                           packed["mu_logvar_b"], eps, latent_dim)

        # --- decoder ---
        hd = linear_pallas(z, packed["dec_fc_w"], packed["dec_fc_b"], flattened, 0.1)
        hd = hd.reshape(B, k8, 9, 9)                                    # PyTorch view
        hd = jnp.transpose(hd, (0, 2, 3, 1))                            # -> NHWC
        hd = conv_transpose2d_pallas(hd, packed["dec_deconv1_w"],
                                     packed["dec_deconv1_b"], 4 * k, 3, 2, 0.1)
        hd = conv_transpose2d_pallas(hd, packed["dec_deconv2_w"],
                                     packed["dec_deconv2_b"], 2 * k, 4, 2, 0.1)
        hd = conv_transpose2d_pallas(hd, packed["dec_deconv3_w"],
                                     packed["dec_deconv3_b"], k, 4, 2, 0.1)
        x_rec = conv_transpose2d_pallas(hd, packed["dec_deconv4_w"],
                                        packed["dec_deconv4_b"], input_channels,
                                        4, 2, None, out_dtype=jnp.float32)
        x_rec = jnp.transpose(x_rec, (0, 3, 1, 2))                      # NHWC -> NCHW
        return x_rec, mu, logvar

    return jax.jit(forward)


if __name__ == "__main__":
    key = jax.random.PRNGKey(0)
    pkey, xkey, ekey = jax.random.split(key, 3)

    # Small configuration; the 166x166 spatial size is fixed by the module
    # (its flattened size is computed on 166x166 inputs).
    input_channels, latent_dim, k_base, batch = 1, 8, 4, 2

    params = init_params(pkey, input_channels, latent_dim, k_base)
    packed = pack_params(params)        # one-time weight packing (outside the jit)

    x = jax.random.normal(xkey, (batch, input_channels, 166, 166), jnp.float32)
    # epsilon for the reparameterization trick is drawn host-side (deterministic)
    eps = jax.random.normal(ekey, (batch, latent_dim), jnp.float32)

    fwd = build_forward(input_channels, latent_dim, k_base)
    x_rec, mu, logvar = fwd(packed, x, eps)
    jax.block_until_ready((x_rec, mu, logvar))

    assert x_rec.shape == x.shape, x_rec.shape
    assert mu.shape == (batch, latent_dim), mu.shape
    assert logvar.shape == (batch, latent_dim), logvar.shape
    assert jnp.all(jnp.isfinite(x_rec)) and jnp.all(jnp.isfinite(mu)) and jnp.all(jnp.isfinite(logvar))
    print("KERNEL_OK")
</pallas_src>

<mosaic_0001>
module attributes {stable_mosaic.version = 11 : i64} {
  func.func @_matmul_bias_act_kernel(%arg0: i32, %arg1: memref<512x128xbf16, #tpu.memory_space<vmem>>, %arg2: memref<128x128xbf16, #tpu.memory_space<vmem>>, %arg3: memref<1x128xf32, #tpu.memory_space<vmem>>, %arg4: memref<512x128xbf16, #tpu.memory_space<vmem>>) attributes {dimension_semantics = [#tpu.dimension_semantics<parallel>], iteration_bounds = array<i64: 27>, scalar_prefetch = 0 : i64, scratch_operands = 0 : i64, tpu.core_type = #tpu.core_type<tc>, window_params = [{transform_indices = @transform_0, window_bounds = array<i64: 512, 128>}, {pipeline_mode = #tpu.pipeline_mode<synchronous>, transform_indices = @transform_1, window_bounds = array<i64: 128, 128>}, {pipeline_mode = #tpu.pipeline_mode<synchronous>, transform_indices = @transform_2, window_bounds = array<i64: 1, 128>}, {transform_indices = @transform_3, window_bounds = array<i64: 512, 128>}]} {
    %c0 = arith.constant 0 : index
    %c0_0 = arith.constant 0 : index
    %0 = vector.load %arg1[%c0, %c0_0] : memref<512x128xbf16, #tpu.memory_space<vmem>>, vector<512x128xbf16>
    %c0_1 = arith.constant 0 : index
    %c0_2 = arith.constant 0 : index
    %1 = vector.load %arg2[%c0_1, %c0_2] : memref<128x128xbf16, #tpu.memory_space<vmem>>, vector<128x128xbf16>
    %cst = arith.constant dense<0.000000e+00> : vector<512x128xf32>
    %2 = tpu.matmul %0, %1, %cst {dimension_numbers = #tpu.dot_dimension_numbers<[1], [0], [0], [1], [0, 0, 1, 1], [], []>} : vector<512x128xbf16>, vector<128x128xbf16>, vector<512x128xf32> -> vector<512x128xf32>
    %c0_3 = arith.constant 0 : index
    %c0_4 = arith.constant 0 : index
    %3 = vector.load %arg3[%c0_3, %c0_4] : memref<1x128xf32, #tpu.memory_space<vmem>>, vector<1x128xf32>
    %4 = vector.broadcast %3 : vector<1x128xf32> to vector<512x128xf32>
    %5 = arith.addf %2, %4 : vector<512x128xf32>
    %cst_5 = arith.constant 0.000000e+00 : f32
    %6 = vector.broadcast %cst_5 : f32 to vector<512x128xf32>
    %7 = arith.cmpf ogt, %5, %6 : vector<512x128xf32>
    %cst_6 = arith.constant 1.000000e-01 : f32
    %8 = vector.broadcast %cst_6 : f32 to vector<512x128xf32>
    %9 = arith.mulf %5, %8 : vector<512x128xf32>
    %10 = arith.select %7, %5, %9 : vector<512x128xi1>, vector<512x128xf32>
    %11 = arith.truncf %10 : vector<512x128xf32> to vector<512x128xbf16>
    %c0_7 = arith.constant 0 : index
    %c0_8 = arith.constant 0 : index
    %12 = vector.load %arg4[%c0_7, %c0_8] : memref<512x128xbf16, #tpu.memory_space<vmem>>, vector<512x128xbf16>
    tpu.vector_store %arg4[%c0_7, %c0_8], %11 {strides = array<i32>} : memref<512x128xbf16, #tpu.memory_space<vmem>>, vector<512x128xbf16>,
    return
  }
  func.func @transform_0(%arg0: i32) -> (i32, i32) {
    %c0_i32 = arith.constant 0 : i32
    %c0_i32_0 = arith.constant 0 : i32
    return %arg0, %c0_i32 : i32, i32
  }
  func.func @transform_1(%arg0: i32) -> (i32, i32) {
    %c0_i32 = arith.constant 0 : i32
    %c0_i32_0 = arith.constant 0 : i32
    %c0_i32_1 = arith.constant 0 : i32
    return %c0_i32, %c0_i32_0 : i32, i32
  }
  func.func @transform_2(%arg0: i32) -> (i32, i32) {
    %c0_i32 = arith.constant 0 : i32
    %c0_i32_0 = arith.constant 0 : i32
    %c0_i32_1 = arith.constant 0 : i32
    return %c0_i32, %c0_i32_0 : i32, i32
  }
  func.func @transform_3(%arg0: i32) -> (i32, i32) {
    %c0_i32 = arith.constant 0 : i32
    %c0_i32_0 = arith.constant 0 : i32
    return %arg0, %c0_i32 : i32, i32
  }
}

module attributes {stable_mosaic.version = 11 : i64} {
  func.func @_matmul_bias_act_kernel(%arg0: i32, %arg1: memref<512x128xbf16, #tpu.memory_space<vmem>>, %arg2: memref<128x128xbf16, #tpu.memory_space<vmem>>, %arg3: memref<1x128xf32, #tpu.memory_space<vmem>>, %arg4: memref<512x128xbf16, #tpu.memory_space<vmem>>) attributes {dimension_semantics = [#tpu.dimension_semantics<parallel>], iteration_bounds = array<i64: 7>, scalar_prefetch = 0 : i64, scratch_operands = 0 : i64, tpu.core_type = #tpu.core_type<tc>, window_params = [{transform_indices = @transform_0, window_bounds = array<i64: 512, 128>}, {pipeline_mode = #tpu.pipeline_mode<synchronous>, transform_indices = @transform_1, window_bounds = array<i64: 128, 128>}, {pipeline_mode = #tpu.pipeline_mode<synchronous>, transform_indices = @transform_2, window_bounds = array<i64: 1, 128>}, {transform_indices = @transform_3, window_bounds = array<i64: 512, 128>}]} {
    %c0 = arith.constant 0 : index
    %c0_0 = arith.constant 0 : index
    %0 = vector.load %arg1[%c0, %c0_0] : memref<512x128xbf16, #tpu.memory_space<vmem>>, vector<512x128xbf16>
    %c0_1 = arith.constant 0 : index
    %c0_2 = arith.constant 0 : index
    %1 = vector.load %arg2[%c0_1, %c0_2] : memref<128x128xbf16, #tpu.memory_space<vmem>>, vector<128x128xbf16>
    %cst = arith.constant dense<0.000000e+00> : vector<512x128xf32>
    %2 = tpu.matmul %0, %1, %cst {dimension_numbers = #tpu.dot_dimension_numbers<[1], [0], [0], [1], [0, 0, 1, 1], [], []>} : vector<512x128xbf16>, vector<128x128xbf16>, vector<512x128xf32> -> vector<512x128xf32>
    %c0_3 = arith.constant 0 : index
    %c0_4 = arith.constant 0 : index
    %3 = vector.load %arg3[%c0_3, %c0_4] : memref<1x128xf32, #tpu.memory_space<vmem>>, vector<1x128xf32>
    %4 = vector.broadcast %3 : vector<1x128xf32> to vector<512x128xf32>
    %5 = arith.addf %2, %4 : vector<512x128xf32>
    %cst_5 = arith.constant 0.000000e+00 : f32
    %6 = vector.broadcast %cst_5 : f32 to vector<512x128xf32>
    %7 = arith.cmpf ogt, %5, %6 : vector<512x128xf32>
    %cst_6 = arith.constant 1.000000e-01 : f32
    %8 = vector.broadcast %cst_6 : f32 to vector<512x128xf32>
    %9 = arith.mulf %5, %8 : vector<512x128xf32>
    %10 = arith.select %7, %5, %9 : vector<512x128xi1>, vector<512x128xf32>
    %11 = arith.truncf %10 : vector<512x128xf32> to vector<512x128xbf16>
    %c0_7 = arith.constant 0 : index
    %c0_8 = arith.constant 0 : index
    %12 = vector.load %arg4[%c0_7, %c0_8] : memref<512x128xbf16, #tpu.memory_space<vmem>>, vector<512x128xbf16>
    tpu.vector_store %arg4[%c0_7, %c0_8], %11 {strides = array<i32>} : memref<512x128xbf16, #tpu.memory_space<vmem>>, vector<512x128xbf16>,
    return
  }
  func.func @transform_0(%arg0: i32) -> (i32, i32) {
    %c0_i32 = arith.constant 0 : i32
    %c0_i32_0 = arith.constant 0 : i32
    return %arg0, %c0_i32 : i32, i32
  }
  func.func @transform_1(%arg0: i32) -> (i32, i32) {
    %c0_i32 = arith.constant 0 : i32
    %c0_i32_0 = arith.constant 0 : i32
    %c0_i32_1 = arith.constant 0 : i32
    return %c0_i32, %c0_i32_0 : i32, i32
  }
  func.func @transform_2(%arg0: i32) -> (i32, i32) {
    %c0_i32 = arith.constant 0 : i32
    %c0_i32_0 = arith.constant 0 : i32
    %c0_i32_1 = arith.constant 0 : i32
    return %c0_i32, %c0_i32_0 : i32, i32
  }
  func.func @transform_3(%arg0: i32) -> (i32, i32) {
    %c0_i32 = arith.constant 0 : i32
    %c0_i32_0 = arith.constant 0 : i32
    return %arg0, %c0_i32 : i32, i32
  }
}

module attributes {stable_mosaic.version = 11 : i64} {
  func.func @_matmul_bias_act_kernel(%arg0: i32, %arg1: memref<512x128xbf16, #tpu.memory_space<vmem>>, %arg2: memref<128x128xbf16, #tpu.memory_space<vmem>>, %arg3: memref<1x128xf32, #tpu.memory_space<vmem>>, %arg4: memref<512x128xbf16, #tpu.memory_space<vmem>>) attributes {dimension_semantics = [#tpu.dimension_semantics<parallel>], iteration_bounds = array<i64: 2>, scalar_prefetch = 0 : i64, scratch_operands = 0 : i64, tpu.core_type = #tpu.core_type<tc>, window_params = [{transform_indices = @transform_0, window_bounds = array<i64: 512, 128>}, {pipeline_mode = #tpu.pipeline_mode<synchronous>, transform_indices = @transform_1, window_bounds = array<i64: 128, 128>}, {pipeline_mode = #tpu.pipeline_mode<synchronous>, transform_indices = @transform_2, window_bounds = array<i64: 1, 128>}, {transform_indices = @transform_3, window_bounds = array<i64: 512, 128>}]} {
    %c0 = arith.constant 0 : index
    %c0_0 = arith.constant 0 : index
    %0 = vector.load %arg1[%c0, %c0_0] : memref<512x128xbf16, #tpu.memory_space<vmem>>, vector<512x128xbf16>
    %c0_1 = arith.constant 0 : index
    %c0_2 = arith.constant 0 : index
    %1 = vector.load %arg2[%c0_1, %c0_2] : memref<128x128xbf16, #tpu.memory_space<vmem>>, vector<128x128xbf16>
    %cst = arith.constant dense<0.000000e+00> : vector<512x128xf32>
    %2 = tpu.matmul %0, %1, %cst {dimension_numbers = #tpu.dot_dimension_numbers<[1], [0], [0], [1], [0, 0, 1, 1], [], []>} : vector<512x128xbf16>, vector<128x128xbf16>, vector<512x128xf32> -> vector<512x128xf32>
    %c0_3 = arith.constant 0 : index
    %c0_4 = arith.constant 0 : index
    %3 = vector.load %arg3[%c0_3, %c0_4] : memref<1x128xf32, #tpu.memory_space<vmem>>, vector<1x128xf32>
    %4 = vector.broadcast %3 : vector<1x128xf32> to vector<512x128xf32>
    %5 = arith.addf %2, %4 : vector<512x128xf32>
    %cst_5 = arith.constant 0.000000e+00 : f32
    %6 = vector.broadcast %cst_5 : f32 to vector<512x128xf32>
    %7 = arith.cmpf ogt, %5, %6 : vector<512x128xf32>
    %cst_6 = arith.constant 1.000000e-01 : f32
    %8 = vector.broadcast %cst_6 : f32 to vector<512x128xf32>
    %9 = arith.mulf %5, %8 : vector<512x128xf32>
    %10 = arith.select %7, %5, %9 : vector<512x128xi1>, vector<512x128xf32>
    %11 = arith.truncf %10 : vector<512x128xf32> to vector<512x128xbf16>
    %c0_7 = arith.constant 0 : index
    %c0_8 = arith.constant 0 : index
    %12 = vector.load %arg4[%c0_7, %c0_8] : memref<512x128xbf16, #tpu.memory_space<vmem>>, vector<512x128xbf16>
    tpu.vector_store %arg4[%c0_7, %c0_8], %11 {strides = array<i32>} : memref<512x128xbf16, #tpu.memory_space<vmem>>, vector<512x128xbf16>,
    return
  }
  func.func @transform_0(%arg0: i32) -> (i32, i32) {
    %c0_i32 = arith.constant 0 : i32
    %c0_i32_0 = arith.constant 0 : i32
    return %arg0, %c0_i32 : i32, i32
  }
  func.func @transform_1(%arg0: i32) -> (i32, i32) {
    %c0_i32 = arith.constant 0 : i32
    %c0_i32_0 = arith.constant 0 : i32
    %c0_i32_1 = arith.constant 0 : i32
    return %c0_i32, %c0_i32_0 : i32, i32
  }
  func.func @transform_2(%arg0: i32) -> (i32, i32) {
    %c0_i32 = arith.constant 0 : i32
    %c0_i32_0 = arith.constant 0 : i32
    %c0_i32_1 = arith.constant 0 : i32
    return %c0_i32, %c0_i32_0 : i32, i32
  }
  func.func @transform_3(%arg0: i32) -> (i32, i32) {
    %c0_i32 = arith.constant 0 : i32
    %c0_i32_0 = arith.constant 0 : i32
    return %arg0, %c0_i32 : i32, i32
  }
}

module attributes {stable_mosaic.version = 11 : i64} {
  func.func @_matmul_bias_act_kernel(%arg0: i32, %arg1: memref<176x256xbf16, #tpu.memory_space<vmem>>, %arg2: memref<256x128xbf16, #tpu.memory_space<vmem>>, %arg3: memref<1x128xf32, #tpu.memory_space<vmem>>, %arg4: memref<176x128xbf16, #tpu.memory_space<vmem>>) attributes {dimension_semantics = [#tpu.dimension_semantics<parallel>], iteration_bounds = array<i64: 1>, scalar_prefetch = 0 : i64, scratch_operands = 0 : i64, tpu.core_type = #tpu.core_type<tc>, window_params = [{transform_indices = @transform_0, window_bounds = array<i64: 176, 256>}, {pipeline_mode = #tpu.pipeline_mode<synchronous>, transform_indices = @transform_1, window_bounds = array<i64: 256, 128>}, {pipeline_mode = #tpu.pipeline_mode<synchronous>, transform_indices = @transform_2, window_bounds = array<i64: 1, 128>}, {transform_indices = @transform_3, window_bounds = array<i64: 176, 128>}]} {
    %c0 = arith.constant 0 : index
    %c0_0 = arith.constant 0 : index
    %0 = vector.load %arg1[%c0, %c0_0] : memref<176x256xbf16, #tpu.memory_space<vmem>>, vector<176x256xbf16>
    %c0_1 = arith.constant 0 : index
    %c0_2 = arith.constant 0 : index
    %1 = vector.load %arg2[%c0_1, %c0_2] : memref<256x128xbf16, #tpu.memory_space<vmem>>, vector<256x128xbf16>
    %cst = arith.constant dense<0.000000e+00> : vector<176x128xf32>
    %2 = tpu.matmul %0, %1, %cst {dimension_numbers = #tpu.dot_dimension_numbers<[1], [0], [0], [1], [0, 0, 1, 1], [], []>} : vector<176x256xbf16>, vector<256x128xbf16>, vector<176x128xf32> -> vector<176x128xf32>
    %c0_3 = arith.constant 0 : index
    %c0_4 = arith.constant 0 : index
    %3 = vector.load %arg3[%c0_3, %c0_4] : memref<1x128xf32, #tpu.memory_space<vmem>>, vector<1x128xf32>
    %4 = vector.broadcast %3 : vector<1x128xf32> to vector<176x128xf32>
    %5 = arith.addf %2, %4 : vector<176x128xf32>
    %cst_5 = arith.constant 0.000000e+00 : f32
    %6 = vector.broadcast %cst_5 : f32 to vector<176x128xf32>
    %7 = arith.cmpf ogt, %5, %6 : vector<176x128xf32>
    %cst_6 = arith.constant 1.000000e-01 : f32
    %8 = vector.broadcast %cst_6 : f32 to vector<176x128xf32>
    %9 = arith.mulf %5, %8 : vector<176x128xf32>
    %10 = arith.select %7, %5, %9 : vector<176x128xi1>, vector<176x128xf32>
    %11 = arith.truncf %10 : vector<176x128xf32> to vector<176x128xbf16>
    %c0_7 = arith.constant 0 : index
    %c0_8 = arith.constant 0 : index
    %12 = vector.load %arg4[%c0_7, %c0_8] : memref<176x128xbf16, #tpu.memory_space<vmem>>, vector<176x128xbf16>
    tpu.vector_store %arg4[%c0_7, %c0_8], %11 {strides = array<i32>} : memref<176x128xbf16, #tpu.memory_space<vmem>>, vector<176x128xbf16>,
    return
  }
  func.func @transform_0(%arg0: i32) -> (i32, i32) {
    %c0_i32 = arith.constant 0 : i32
    %c0_i32_0 = arith.constant 0 : i32
    return %arg0, %c0_i32 : i32, i32
  }
  func.func @transform_1(%arg0: i32) -> (i32, i32) {
    %c0_i32 = arith.constant 0 : i32
    %c0_i32_0 = arith.constant 0 : i32
    %c0_i32_1 = arith.constant 0 : i32
    return %c0_i32, %c0_i32_0 : i32, i32
  }
  func.func @transform_2(%arg0: i32) -> (i32, i32) {
    %c0_i32 = arith.constant 0 : i32
    %c0_i32_0 = arith.constant 0 : i32
    %c0_i32_1 = arith.constant 0 : i32
    return %c0_i32, %c0_i32_0 : i32, i32
  }
  func.func @transform_3(%arg0: i32) -> (i32, i32) {
    %c0_i32 = arith.constant 0 : i32
    %c0_i32_0 = arith.constant 0 : i32
    return %arg0, %c0_i32 : i32, i32
  }
}

module attributes {stable_mosaic.version = 11 : i64} {
  func.func @_matmul_bias_act_kernel(%arg0: i32, %arg1: memref<16x2688xbf16, #tpu.memory_space<vmem>>, %arg2: memref<2688x384xbf16, #tpu.memory_space<vmem>>, %arg3: memref<1x384xf32, #tpu.memory_space<vmem>>, %arg4: memref<16x384xbf16, #tpu.memory_space<vmem>>) attributes {dimension_semantics = [#tpu.dimension_semantics<parallel>], iteration_bounds = array<i64: 1>, scalar_prefetch = 0 : i64, scratch_operands = 0 : i64, tpu.core_type = #tpu.core_type<tc>, window_params = [{transform_indices = @transform_0, window_bounds = array<i64: 16, 2688>}, {pipeline_mode = #tpu.pipeline_mode<synchronous>, transform_indices = @transform_1, window_bounds = array<i64: 2688, 384>}, {pipeline_mode = #tpu.pipeline_mode<synchronous>, transform_indices = @transform_2, window_bounds = array<i64: 1, 384>}, {transform_indices = @transform_3, window_bounds = array<i64: 16, 384>}]} {
    %c0 = arith.constant 0 : index
    %c0_0 = arith.constant 0 : index
    %0 = vector.load %arg1[%c0, %c0_0] : memref<16x2688xbf16, #tpu.memory_space<vmem>>, vector<16x2688xbf16>
    %c0_1 = arith.constant 0 : index
    %c0_2 = arith.constant 0 : index
    %1 = vector.load %arg2[%c0_1, %c0_2] : memref<2688x384xbf16, #tpu.memory_space<vmem>>, vector<2688x384xbf16>
    %cst = arith.constant dense<0.000000e+00> : vector<16x384xf32>
    %2 = tpu.matmul %0, %1, %cst {dimension_numbers = #tpu.dot_dimension_numbers<[1], [0], [0], [1], [0, 0, 1, 1], [], []>} : vector<16x2688xbf16>, vector<2688x384xbf16>, vector<16x384xf32> -> vector<16x384xf32>
    %c0_3 = arith.constant 0 : index
    %c0_4 = arith.constant 0 : index
    %3 = vector.load %arg3[%c0_3, %c0_4] : memref<1x384xf32, #tpu.memory_space<vmem>>, vector<1x384xf32>
    %4 = vector.broadcast %3 : vector<1x384xf32> to vector<16x384xf32>
    %5 = arith.addf %2, %4 : vector<16x384xf32>
    %cst_5 = arith.constant 0.000000e+00 : f32
    %6 = vector.broadcast %cst_5 : f32 to vector<16x384xf32>
    %7 = arith.cmpf ogt, %5, %6 : vector<16x384xf32>
    %cst_6 = arith.constant 1.000000e-01 : f32
    %8 = vector.broadcast %cst_6 : f32 to vector<16x384xf32>
    %9 = arith.mulf %5, %8 : vector<16x384xf32>
    %10 = arith.select %7, %5, %9 : vector<16x384xi1>, vector<16x384xf32>
    %11 = arith.truncf %10 : vector<16x384xf32> to vector<16x384xbf16>
    %c0_7 = arith.constant 0 : index
    %c0_8 = arith.constant 0 : index
    %12 = vector.load %arg4[%c0_7, %c0_8] : memref<16x384xbf16, #tpu.memory_space<vmem>>, vector<16x384xbf16>
    tpu.vector_store %arg4[%c0_7, %c0_8], %11 {strides = array<i32>} : memref<16x384xbf16, #tpu.memory_space<vmem>>, vector<16x384xbf16>,
    return
  }
  func.func @transform_0(%arg0: i32) -> (i32, i32) {
    %c0_i32 = arith.constant 0 : i32
    %c0_i32_0 = arith.constant 0 : i32
    return %arg0, %c0_i32 : i32, i32
  }
  func.func @transform_1(%arg0: i32) -> (i32, i32) {
    %c0_i32 = arith.constant 0 : i32
    %c0_i32_0 = arith.constant 0 : i32
    %c0_i32_1 = arith.constant 0 : i32
    return %c0_i32, %c0_i32_0 : i32, i32
  }
  func.func @transform_2(%arg0: i32) -> (i32, i32) {
    %c0_i32 = arith.constant 0 : i32
    %c0_i32_0 = arith.constant 0 : i32
    %c0_i32_1 = arith.constant 0 : i32
    return %c0_i32, %c0_i32_0 : i32, i32
  }
  func.func @transform_3(%arg0: i32) -> (i32, i32) {
    %c0_i32 = arith.constant 0 : i32
    %c0_i32_0 = arith.constant 0 : i32
    return %arg0, %c0_i32 : i32, i32
  }
}

module attributes {stable_mosaic.version = 11 : i64} {
  func.func @_mu_logvar_z_kernel(%arg0: memref<8x384xbf16, #tpu.memory_space<vmem>>, %arg1: memref<384x256xbf16, #tpu.memory_space<vmem>>, %arg2: memref<1x256xf32, #tpu.memory_space<vmem>>, %arg3: memref<8x128xf32, #tpu.memory_space<vmem>>, %arg4: memref<8x256xf32, #tpu.memory_space<vmem>>, %arg5: memref<8x128xf32, #tpu.memory_space<vmem>>) attributes {dimension_semantics = [], scalar_prefetch = 0 : i64, scratch_operands = 0 : i64, tpu.core_type = #tpu.core_type<tc>} {
    %c0 = arith.constant 0 : index
    %c0_0 = arith.constant 0 : index
    %0 = vector.load %arg0[%c0, %c0_0] : memref<8x384xbf16, #tpu.memory_space<vmem>>, vector<8x384xbf16>
    %c0_1 = arith.constant 0 : index
    %c0_2 = arith.constant 0 : index
    %1 = vector.load %arg1[%c0_1, %c0_2] : memref<384x256xbf16, #tpu.memory_space<vmem>>, vector<384x256xbf16>
    %cst = arith.constant dense<0.000000e+00> : vector<8x256xf32>
    %2 = tpu.matmul %0, %1, %cst {dimension_numbers = #tpu.dot_dimension_numbers<[1], [0], [0], [1], [0, 0, 1, 1], [], []>} : vector<8x384xbf16>, vector<384x256xbf16>, vector<8x256xf32> -> vector<8x256xf32>
    %c0_3 = arith.constant 0 : index
    %c0_4 = arith.constant 0 : index
    %3 = vector.load %arg2[%c0_3, %c0_4] : memref<1x256xf32, #tpu.memory_space<vmem>>, vector<1x256xf32>
    %4 = vector.broadcast %3 : vector<1x256xf32> to vector<8x256xf32>
    %5 = arith.addf %2, %4 : vector<8x256xf32>
    %6 = vector.extract_strided_slice %5 {offsets = [0, 0], sizes = [8, 128], strides = [1, 1]} : vector<8x256xf32> to vector<8x128xf32>
    %7 = vector.extract_strided_slice %5 {offsets = [0, 128], sizes = [8, 128], strides = [1, 1]} : vector<8x256xf32> to vector<8x128xf32>
    %c0_5 = arith.constant 0 : index
    %c0_6 = arith.constant 0 : index
    %8 = vector.load %arg3[%c0_5, %c0_6] : memref<8x128xf32, #tpu.memory_space<vmem>>, vector<8x128xf32>
    %cst_7 = arith.constant 5.000000e-01 : f32
    %9 = vector.broadcast %cst_7 : f32 to vector<8x128xf32>
    %10 = arith.mulf %9, %7 : vector<8x128xf32>
    %11 = math.exp %10 : vector<8x128xf32>
    %12 = arith.mulf %8, %11 : vector<8x128xf32>
    %13 = arith.addf %6, %12 : vector<8x128xf32>
    %c0_8 = arith.constant 0 : index
    %c0_9 = arith.constant 0 : index
    %14 = vector.load %arg5[%c0_8, %c0_9] : memref<8x128xf32, #tpu.memory_space<vmem>>, vector<8x128xf32>
    tpu.vector_store %arg5[%c0_8, %c0_9], %13 {strides = array<i32>} : memref<8x128xf32, #tpu.memory_space<vmem>>, vector<8x128xf32>,
    %c0_10 = arith.constant 0 : index
    %c0_11 = arith.constant 0 : index
    %15 = vector.load %arg4[%c0_10, %c0_11] : memref<8x256xf32, #tpu.memory_space<vmem>>, vector<8x256xf32>
    tpu.vector_store %arg4[%c0_10, %c0_11], %5 {strides = array<i32>} : memref<8x256xf32, #tpu.memory_space<vmem>>, vector<8x256xf32>,
    return
  }
}

module attributes {stable_mosaic.version = 11 : i64} {
  func.func @_matmul_bias_act_kernel(%arg0: i32, %arg1: memref<16x128xbf16, #tpu.memory_space<vmem>>, %arg2: memref<128x2688xbf16, #tpu.memory_space<vmem>>, %arg3: memref<1x2688xf32, #tpu.memory_space<vmem>>, %arg4: memref<16x2688xbf16, #tpu.memory_space<vmem>>) attributes {dimension_semantics = [#tpu.dimension_semantics<parallel>], iteration_bounds = array<i64: 1>, scalar_prefetch = 0 : i64, scratch_operands = 0 : i64, tpu.core_type = #tpu.core_type<tc>, window_params = [{transform_indices = @transform_0, window_bounds = array<i64: 16, 128>}, {pipeline_mode = #tpu.pipeline_mode<synchronous>, transform_indices = @transform_1, window_bounds = array<i64: 128, 2688>}, {pipeline_mode = #tpu.pipeline_mode<synchronous>, transform_indices = @transform_2, window_bounds = array<i64: 1, 2688>}, {transform_indices = @transform_3, window_bounds = array<i64: 16, 2688>}]} {
    %c0 = arith.constant 0 : index
    %c0_0 = arith.constant 0 : index
    %0 = vector.load %arg1[%c0, %c0_0] : memref<16x128xbf16, #tpu.memory_space<vmem>>, vector<16x128xbf16>
    %c0_1 = arith.constant 0 : index
    %c0_2 = arith.constant 0 : index
    %1 = vector.load %arg2[%c0_1, %c0_2] : memref<128x2688xbf16, #tpu.memory_space<vmem>>, vector<128x2688xbf16>
    %cst = arith.constant dense<0.000000e+00> : vector<16x2688xf32>
    %2 = tpu.matmul %0, %1, %cst {dimension_numbers = #tpu.dot_dimension_numbers<[1], [0], [0], [1], [0, 0, 1, 1], [], []>} : vector<16x128xbf16>, vector<128x2688xbf16>, vector<16x2688xf32> -> vector<16x2688xf32>
    %c0_3 = arith.constant 0 : index
    %c0_4 = arith.constant 0 : index
    %3 = vector.load %arg3[%c0_3, %c0_4] : memref<1x2688xf32, #tpu.memory_space<vmem>>, vector<1x2688xf32>
    %4 = vector.broadcast %3 : vector<1x2688xf32> to vector<16x2688xf32>
    %5 = arith.addf %2, %4 : vector<16x2688xf32>
    %cst_5 = arith.constant 0.000000e+00 : f32
    %6 = vector.broadcast %cst_5 : f32 to vector<16x2688xf32>
    %7 = arith.cmpf ogt, %5, %6 : vector<16x2688xf32>
    %cst_6 = arith.constant 1.000000e-01 : f32
    %8 = vector.broadcast %cst_6 : f32 to vector<16x2688xf32>
    %9 = arith.mulf %5, %8 : vector<16x2688xf32>
    %10 = arith.select %7, %5, %9 : vector<16x2688xi1>, vector<16x2688xf32>
    %11 = arith.truncf %10 : vector<16x2688xf32> to vector<16x2688xbf16>
    %c0_7 = arith.constant 0 : index
    %c0_8 = arith.constant 0 : index
    %12 = vector.load %arg4[%c0_7, %c0_8] : memref<16x2688xbf16, #tpu.memory_space<vmem>>, vector<16x2688xbf16>
    tpu.vector_store %arg4[%c0_7, %c0_8], %11 {strides = array<i32>} : memref<16x2688xbf16, #tpu.memory_space<vmem>>, vector<16x2688xbf16>,
    return
  }
  func.func @transform_0(%arg0: i32) -> (i32, i32) {
    %c0_i32 = arith.constant 0 : i32
    %c0_i32_0 = arith.constant 0 : i32
    return %arg0, %c0_i32 : i32, i32
  }
  func.func @transform_1(%arg0: i32) -> (i32, i32) {
    %c0_i32 = arith.constant 0 : i32
    %c0_i32_0 = arith.constant 0 : i32
    %c0_i32_1 = arith.constant 0 : i32
    return %c0_i32, %c0_i32_0 : i32, i32
  }
  func.func @transform_2(%arg0: i32) -> (i32, i32) {
    %c0_i32 = arith.constant 0 : i32
    %c0_i32_0 = arith.constant 0 : i32
    %c0_i32_1 = arith.constant 0 : i32
    return %c0_i32, %c0_i32_0 : i32, i32
  }
  func.func @transform_3(%arg0: i32) -> (i32, i32) {
    %c0_i32 = arith.constant 0 : i32
    %c0_i32_0 = arith.constant 0 : i32
    return %arg0, %c0_i32 : i32, i32
  }
}

module attributes {stable_mosaic.version = 11 : i64} {
  func.func @_matmul_bias_act_kernel(%arg0: i32, %arg1: memref<208x128xbf16, #tpu.memory_space<vmem>>, %arg2: memref<128x128xbf16, #tpu.memory_space<vmem>>, %arg3: memref<1x128xf32, #tpu.memory_space<vmem>>, %arg4: memref<208x128xbf16, #tpu.memory_space<vmem>>) attributes {dimension_semantics = [#tpu.dimension_semantics<parallel>], iteration_bounds = array<i64: 1>, scalar_prefetch = 0 : i64, scratch_operands = 0 : i64, tpu.core_type = #tpu.core_type<tc>, window_params = [{transform_indices = @transform_0, window_bounds = array<i64: 208, 128>}, {pipeline_mode = #tpu.pipeline_mode<synchronous>, transform_indices = @transform_1, window_bounds = array<i64: 128, 128>}, {pipeline_mode = #tpu.pipeline_mode<synchronous>, transform_indices = @transform_2, window_bounds = array<i64: 1, 128>}, {transform_indices = @transform_3, window_bounds = array<i64: 208, 128>}]} {
    %c0 = arith.constant 0 : index
    %c0_0 = arith.constant 0 : index
    %0 = vector.load %arg1[%c0, %c0_0] : memref<208x128xbf16, #tpu.memory_space<vmem>>, vector<208x128xbf16>
    %c0_1 = arith.constant 0 : index
    %c0_2 = arith.constant 0 : index
    %1 = vector.load %arg2[%c0_1, %c0_2] : memref<128x128xbf16, #tpu.memory_space<vmem>>, vector<128x128xbf16>
    %cst = arith.constant dense<0.000000e+00> : vector<208x128xf32>
    %2 = tpu.matmul %0, %1, %cst {dimension_numbers = #tpu.dot_dimension_numbers<[1], [0], [0], [1], [0, 0, 1, 1], [], []>} : vector<208x128xbf16>, vector<128x128xbf16>, vector<208x128xf32> -> vector<208x128xf32>
    %c0_3 = arith.constant 0 : index
    %c0_4 = arith.constant 0 : index
    %3 = vector.load %arg3[%c0_3, %c0_4] : memref<1x128xf32, #tpu.memory_space<vmem>>, vector<1x128xf32>
    %4 = vector.broadcast %3 : vector<1x128xf32> to vector<208x128xf32>
    %5 = arith.addf %2, %4 : vector<208x128xf32>
    %cst_5 = arith.constant 0.000000e+00 : f32
    %6 = vector.broadcast %cst_5 : f32 to vector<208x128xf32>
    %7 = arith.cmpf ogt, %5, %6 : vector<208x128xf32>
    %cst_6 = arith.constant 1.000000e-01 : f32
    %8 = vector.broadcast %cst_6 : f32 to vector<208x128xf32>
    %9 = arith.mulf %5, %8 : vector<208x128xf32>
    %10 = arith.select %7, %5, %9 : vector<208x128xi1>, vector<208x128xf32>
    %11 = arith.truncf %10 : vector<208x128xf32> to vector<208x128xbf16>
    %c0_7 = arith.constant 0 : index
    %c0_8 = arith.constant 0 : index
    %12 = vector.load %arg4[%c0_7, %c0_8] : memref<208x128xbf16, #tpu.memory_space<vmem>>, vector<208x128xbf16>
    tpu.vector_store %arg4[%c0_7, %c0_8], %11 {strides = array<i32>} : memref<208x128xbf16, #tpu.memory_space<vmem>>, vector<208x128xbf16>,
    return
  }
  func.func @transform_0(%arg0: i32) -> (i32, i32) {
    %c0_i32 = arith.constant 0 : i32
    %c0_i32_0 = arith.constant 0 : i32
    return %arg0, %c0_i32 : i32, i32
  }
  func.func @transform_1(%arg0: i32) -> (i32, i32) {
    %c0_i32 = arith.constant 0 : i32
    %c0_i32_0 = arith.constant 0 : i32
    %c0_i32_1 = arith.constant 0 : i32
    return %c0_i32, %c0_i32_0 : i32, i32
  }
  func.func @transform_2(%arg0: i32) -> (i32, i32) {
    %c0_i32 = arith.constant 0 : i32
    %c0_i32_0 = arith.constant 0 : i32
    %c0_i32_1 = arith.constant 0 : i32
    return %c0_i32, %c0_i32_0 : i32, i32
  }
  func.func @transform_3(%arg0: i32) -> (i32, i32) {
    %c0_i32 = arith.constant 0 : i32
    %c0_i32_0 = arith.constant 0 : i32
    return %arg0, %c0_i32 : i32, i32
  }
}

module attributes {stable_mosaic.version = 11 : i64} {
  func.func @_matmul_bias_act_kernel(%arg0: i32, %arg1: memref<512x128xbf16, #tpu.memory_space<vmem>>, %arg2: memref<128x128xbf16, #tpu.memory_space<vmem>>, %arg3: memref<1x128xf32, #tpu.memory_space<vmem>>, %arg4: memref<512x128xf32, #tpu.memory_space<vmem>>) attributes {dimension_semantics = [#tpu.dimension_semantics<parallel>], iteration_bounds = array<i64: 27>, scalar_prefetch = 0 : i64, scratch_operands = 0 : i64, tpu.core_type = #tpu.core_type<tc>, window_params = [{transform_indices = @transform_0, window_bounds = array<i64: 512, 128>}, {pipeline_mode = #tpu.pipeline_mode<synchronous>, transform_indices = @transform_1, window_bounds = array<i64: 128, 128>}, {pipeline_mode = #tpu.pipeline_mode<synchronous>, transform_indices = @transform_2, window_bounds = array<i64: 1, 128>}, {transform_indices = @transform_3, window_bounds = array<i64: 512, 128>}]} {
    %c0 = arith.constant 0 : index
    %c0_0 = arith.constant 0 : index
    %0 = vector.load %arg1[%c0, %c0_0] : memref<512x128xbf16, #tpu.memory_space<vmem>>, vector<512x128xbf16>
    %c0_1 = arith.constant 0 : index
    %c0_2 = arith.constant 0 : index
    %1 = vector.load %arg2[%c0_1, %c0_2] : memref<128x128xbf16, #tpu.memory_space<vmem>>, vector<128x128xbf16>
    %cst = arith.constant dense<0.000000e+00> : vector<512x128xf32>
    %2 = tpu.matmul %0, %1, %cst {dimension_numbers = #tpu.dot_dimension_numbers<[1], [0], [0], [1], [0, 0, 1, 1], [], []>} : vector<512x128xbf16>, vector<128x128xbf16>, vector<512x128xf32> -> vector<512x128xf32>
    %c0_3 = arith.constant 0 : index
    %c0_4 = arith.constant 0 : index
    %3 = vector.load %arg3[%c0_3, %c0_4] : memref<1x128xf32, #tpu.memory_space<vmem>>, vector<1x128xf32>
    %4 = vector.broadcast %3 : vector<1x128xf32> to vector<512x128xf32>
    %5 = arith.addf %2, %4 : vector<512x128xf32>
    %c0_5 = arith.constant 0 : index
    %c0_6 = arith.constant 0 : index
    %6 = vector.load %arg4[%c0_5, %c0_6] : memref<512x128xf32, #tpu.memory_space<vmem>>, vector<512x128xf32>
    tpu.vector_store %arg4[%c0_5, %c0_6], %5 {strides = array<i32>} : memref<512x128xf32, #tpu.memory_space<vmem>>, vector<512x128xf32>,
    return
  }
  func.func @transform_0(%arg0: i32) -> (i32, i32) {
    %c0_i32 = arith.constant 0 : i32
    %c0_i32_0 = arith.constant 0 : i32
    return %arg0, %c0_i32 : i32, i32
  }
  func.func @transform_1(%arg0: i32) -> (i32, i32) {
    %c0_i32 = arith.constant 0 : i32
    %c0_i32_0 = arith.constant 0 : i32
    %c0_i32_1 = arith.constant 0 : i32
    return %c0_i32, %c0_i32_0 : i32, i32
  }
  func.func @transform_2(%arg0: i32) -> (i32, i32) {
    %c0_i32 = arith.constant 0 : i32
    %c0_i32_0 = arith.constant 0 : i32
    %c0_i32_1 = arith.constant 0 : i32
    return %c0_i32, %c0_i32_0 : i32, i32
  }
  func.func @transform_3(%arg0: i32) -> (i32, i32) {
    %c0_i32 = arith.constant 0 : i32
    %c0_i32_0 = arith.constant 0 : i32
    return %arg0, %c0_i32 : i32, i32
  }
}

</mosaic_0001>

<llo_original>
// kernel: forward.11
$region0: #{forward.11}
  #allocation0 [shape = 'u32[]', space=smem, size = 0x4, offset = 0x4, fixed_abs, tag = 'smem constant byte address 0x4 - core index']
  #allocation1 [shape = 'u32[72,128]{1,0:T(1,128)}', space=vmem, size = 0x9000, scoped, tag = 'internal scratch']
  %s0 = inlined_call_operand.vmem [shape: bf16[13824,128], index: 0, kind: input, shape index: {}]
  %s1 = inlined_call_operand.vmem [shape: bf16[128,128], index: 1, kind: input, shape index: {}]
  %s2 = inlined_call_operand.vmem [shape: f32[1,128], index: 2, kind: input, shape index: {}]
  %s3 = inlined_call_operand.vmem [shape: bf16[13824,128], index: 3, kind: output, shape index: {}]
  %s4 = sld [smem:[#allocation0]]
  $region45: #{forward.11} parent=0
    _
  %s6 = ssub.s32 1, %s4
  %s7 = scalar_select 0, %s6, %s4
  loop: start=0, step=1, limit=29
  $region2: #{forward.11} parent=0 // loop_pre_header
    _
  $region3: #{forward.11} parent=0 // loop_header
    %s9 = sphi 0, %s13
    %p10 = scmp.ge.s32.totalorder %s9, 29
    %s19 = sphi 0, %s21
    %s22 = sphi 0, %s19
    %s23 = sphi 0, %s22
    %s39 = sphi 0, %s23
    %s43 = sphi 0, %s43
    %s45 = sphi 0, %s43
    %s46 = sphi 0, %s45
    %s60 = sphi 0, %s46
    %s64 = sphi 0, %s64
    %s66 = sphi 0, %s64
    %s67 = sphi 0, %s66
    %s81 = sphi 0, %s67
    %s87 = sphi 0, %s89
    %s90 = sphi 0, %s87
    %s91 = sphi 0, %s90
    %s107 = sphi 0, %s91
  $region4: #{forward.11} parent=0 // loop_header_branch
    %12 = sbr.rel (%p10) target = $region8
  $region5: #{forward.11} parent=0 // loop_body
    %s14 = ssub.s32 %s9, 1
    %s15 = ssub.s32 %s9, 2
    %s16 = sadd.s32 %s9, 1
    %s17 = ssub.s32 %s9, %s16
    %p18 = scmp.eq.s32.totalorder %s17, 0
    %s20 = sadd.s32 %s19, 1
    %s21 = scalar_select %p18, %s19, %s20
    %p24 = pneg %p18
    %p25 = scmp.eq.s32.totalorder %s9, 26
    %p26 = por %p24, %p25
    %p27 = scmp.ne.s32.totalorder %s19, %s22
    %p28 = scmp.eq.s32.totalorder %s9, 0
    %p29 = por %p27, %p28
    %p30 = scmp.ne.s32.totalorder %s19, %s22
    %p31 = scmp.eq.s32.totalorder %s14, 26
    %p32 = por %p30, %p31
    %p33 = scmp.ne.s32.totalorder %s22, %s23
    %p34 = scmp.eq.s32.totalorder %s14, 0
    %p35 = por %p33, %p34
    %p36 = scmp.ne.s32.totalorder %s22, %s23
    %p37 = scmp.eq.s32.totalorder %s15, 26
    %p38 = por %p36, %p37
    %p40 = scmp.ne.s32.totalorder %s23, %s39
    %p41 = scmp.eq.s32.totalorder %s15, 0
    %p42 = por %p40, %p41
    %s44 = sadd.s32 %s43, 1
    %p47 = scmp.eq.s32.totalorder %s9, 26
    %p48 = scmp.ne.s32.totalorder %s43, %s45
    %p49 = scmp.eq.s32.totalorder %s9, 0
    %p50 = por %p48, %p49
    %p51 = scmp.ne.s32.totalorder %s43, %s45
    %p52 = scmp.eq.s32.totalorder %s14, 26
    %p53 = por %p51, %p52
    %p54 = scmp.ne.s32.totalorder %s45, %s46
    %p55 = scmp.eq.s32.totalorder %s14, 0
    %p56 = por %p54, %p55
    %p57 = scmp.ne.s32.totalorder %s45, %s46
    %p58 = scmp.eq.s32.totalorder %s15, 26
    %p59 = por %p57, %p58
    %p61 = scmp.ne.s32.totalorder %s46, %s60
    %p62 = scmp.eq.s32.totalorder %s15, 0
    %p63 = por %p61, %p62
    %s65 = sadd.s32 %s64, 1
    %p68 = scmp.eq.s32.totalorder %s9, 26
    %p69 = scmp.ne.s32.totalorder %s64, %s66
    %p70 = scmp.eq.s32.totalorder %s9, 0
    %p71 = por %p69, %p70
    %p72 = scmp.ne.s32.totalorder %s64, %s66
    %p73 = scmp.eq.s32.totalorder %s14, 26
    %p74 = por %p72, %p73
    %p75 = scmp.ne.s32.totalorder %s66, %s67
    %p76 = scmp.eq.s32.totalorder %s14, 0
    %p77 = por %p75, %p76
    %p78 = scmp.ne.s32.totalorder %s66, %s67
    %p79 = scmp.eq.s32.totalorder %s15, 26
    %p80 = por %p78, %p79
    %p82 = scmp.ne.s32.totalorder %s67, %s81
    %p83 = scmp.eq.s32.totalorder %s15, 0
    %p84 = por %p82, %p83
    %s85 = ssub.s32 %s9, %s16
    %p86 = scmp.eq.s32.totalorder %s85, 0
    %s88 = sadd.s32 %s87, 1
    %s89 = scalar_select %p86, %s87, %s88
    %p92 = pneg %p86
    %p93 = scmp.eq.s32.totalorder %s9, 26
    %p94 = por %p92, %p93
    %p95 = scmp.ne.s32.totalorder %s87, %s90
    %p96 = scmp.eq.s32.totalorder %s9, 0
    %p97 = por %p95, %p96
    %p98 = scmp.ne.s32.totalorder %s87, %s90
    %p99 = scmp.eq.s32.totalorder %s14, 26
    %p100 = por %p98, %p99
    %p101 = scmp.ne.s32.totalorder %s90, %s91
    %p102 = scmp.eq.s32.totalorder %s14, 0
    %p103 = por %p101, %p102
    %p104 = scmp.ne.s32.totalorder %s90, %s91
    %p105 = scmp.eq.s32.totalorder %s15, 26
    %p106 = por %p104, %p105
    %p108 = scmp.ne.s32.totalorder %s91, %s107
    %p109 = scmp.eq.s32.totalorder %s15, 0
    %p110 = por %p108, %p109
    %p111 = scmp.le.s32.totalorder 1, %s9
    %p112 = scmp.lt.s32.totalorder %s9, 28
    %p113 = pnand %p111, %p112
    %p114 = pneg %p113
    // Predicated region
    $region9: #{forward.11} parent=5 // pred_check
      _
    $region10: #{forward.11} parent=5 // pred_check_branch
      %116 = sbr.rel (%p113) target = $region12
    $region11: #{forward.11} parent=5 // pred_region
      %s117 = ssub.s32 %s9, 1
      // Predicated region
      $region13: #{forward.11} parent=11 // pred_check
        %p118 = pneg %p56
      $region14: #{forward.11} parent=11 // pred_check_branch
        %120 = sbr.rel (%p118) target = $region16
      $region15: #{forward.11} parent=11 // pred_region
        _
      $region16: #{forward.11} parent=11 // pred_fallthru
        _
      // Predicated region
      $region17: #{forward.11} parent=11 // pred_check
        %p121 = pneg %p77
      $region18: #{forward.11} parent=11 // pred_check_branch
        %123 = sbr.rel (%p121) target = $region20
      $region19: #{forward.11} parent=11 // pred_region
        _
      $region20: #{forward.11} parent=11 // pred_fallthru
        _
    $region12: #{forward.11} parent=5 // pred_fallthru
      _
    %p124 = scmp.lt.s32.totalorder %s9, 27
    // Predicated region
    $region21: #{forward.11} parent=5 // pred_check
      %p125 = pneg %p124
    $region22: #{forward.11} parent=5 // pred_check_branch
      %127 = sbr.rel (%p125) target = $region24
    $region23: #{forward.11} parent=5 // pred_region
      // Predicated region
      $region25: #{forward.11} parent=23 // pred_check
        %p128 = pneg %p29
      $region26: #{forward.11} parent=23 // pred_check_branch
        %130 = sbr.rel (%p128) target = $region28
      $region27: #{forward.11} parent=23 // pred_region
        %s131 = smul.u32 64, %s9
        %p132 = scmp.lt.s32.totalorder %s131, 1727
        %s133 = scalar_select %p132, %s131, 1727
        %s134 = smul.addr %s133, 4
        %s135 = scalar_lea.vmem %s0, %s134
        %s136 = smul.u32 64, %s9
      $region28: #{forward.11} parent=23 // pred_fallthru
        _
    $region24: #{forward.11} parent=5 // pred_fallthru
      _
    %p137 = scmp.le.s32.totalorder 1, %s9
    %p138 = scmp.lt.s32.totalorder %s9, 28
    %p139 = pnand %p137, %p138
    %p140 = pneg %p139
    // Predicated region
    $region29: #{forward.11} parent=5 // pred_check
      _
    $region30: #{forward.11} parent=5 // pred_check_branch
      %142 = sbr.rel (%p139) target = $region32
    $region31: #{forward.11} parent=5 // pred_region
      %s143 = ssub.s32 %s9, 1
      %s144 = smul.u32 64, %s14
      %p145 = scmp.lt.s32.totalorder %s144, 1727
      %s146 = scalar_select %p145, %s144, 1727
      %s147 = smul.addr %s146, 4
      %s148 = scalar_lea.vmem %s0, %s147
      %p149 = pneg %p35
      %p150 = pneg %p32
      %p151 = pneg %p56
      %p152 = pneg %p53
      %p153 = pneg %p77
      %p154 = pneg %p74
      %p155 = pneg %p103
      %p156 = pneg %p100
      %s157 = smul.u32 64, %s14
      %p158 = scmp.lt.s32.totalorder %s157, 1727
      %s159 = scalar_select %p158, %s157, 1727
      %s160 = smul.addr %s159, 4
      %s161 = scalar_lea.vmem %s3, %s160
      %s162 = smul.u32 64, %s14
      %p163 = scmp.lt.s32.totalorder %s162, 1727
      %s164 = scalar_select %p163, %s162, 1727
      %s165 = smul.addr %s164, 4
      %s166 = scalar_lea.vmem %s0, %s165
      %s167 = smul.u32 64, %s14
      %s168 = smul.u32 64, %s14
      %p169 = scmp.lt.s32.totalorder %s168, 1727
      %s170 = scalar_select %p169, %s168, 1727
      %s171 = smul.addr %s170, 4
      %s172 = scalar_lea.vmem %s3, %s171
      %s173 = smul.u32 64, %s14
      %v174 = vld [vmem:[%s166] sm:$0xf]
      %v175 = vld [vmem:[%s166 + $0x4] sm:$0xf]
      %v176 = vld [vmem:[%s166 + $0x8] sm:$0xf]
      %v177 = vld [vmem:[%s166 + $0xc] sm:$0xf]
      %v178 = vld [vmem:[%s166 + $0x10] sm:$0xf]
      %v179 = vld [vmem:[%s166 + $0x14] sm:$0xf]
      %v180 = vld [vmem:[%s166 + $0x18] sm:$0xf]
      %v181 = vld [vmem:[%s166 + $0x1c] sm:$0xf]
      %v182 = vld [vmem:[%s166 + $0x20] sm:$0xf]
      %v183 = vld [vmem:[%s166 + $0x24] sm:$0xf]
      %v184 = vld [vmem:[%s166 + $0x28] sm:$0xf]
      %v185 = vld [vmem:[%s166 + $0x2c] sm:$0xf]
      %v186 = vld [vmem:[%s166 + $0x30] sm:$0xf]
      %v187 = vld [vmem:[%s166 + $0x34] sm:$0xf]
      %v188 = vld [vmem:[%s166 + $0x38] sm:$0xf]
      %v189 = vld [vmem:[%s166 + $0x3c] sm:$0xf]
      %v190 = vld [vmem:[%s166 + $0x40] sm:$0xf]
      %v191 = vld [vmem:[%s166 + $0x44] sm:$0xf]
      %v192 = vld [vmem:[%s166 + $0x48] sm:$0xf]
      %v193 = vld [vmem:[%s166 + $0x4c] sm:$0xf]
      %v194 = vld [vmem:[%s166 + $0x50] sm:$0xf]
      %v195 = vld [vmem:[%s166 + $0x54] sm:$0xf]
      %v196 = vld [vmem:[%s166 + $0x58] sm:$0xf]
      %v197 = vld [vmem:[%s166 + $0x5c] sm:$0xf]
      %v198 = vld [vmem:[%s166 + $0x60] sm:$0xf]
      %v199 = vld [vmem:[%s166 + $0x64] sm:$0xf]
      %v200 = vld [vmem:[%s166 + $0x68] sm:$0xf]
      %v201 = vld [vmem:[%s166 + $0x6c] sm:$0xf]
      %v202 = vld [vmem:[%s166 + $0x70] sm:$0xf]
      %v203 = vld [vmem:[%s166 + $0x74] sm:$0xf]
      %v204 = vld [vmem:[%s166 + $0x78] sm:$0xf]
      %v205 = vld [vmem:[%s166 + $0x7c] sm:$0xf]
      %v206 = vld [vmem:[%s166 + $0x80] sm:$0xf]
      %v207 = vld [vmem:[%s166 + $0x84] sm:$0xf]
      %v208 = vld [vmem:[%s166 + $0x88] sm:$0xf]
      %v209 = vld [vmem:[%s166 + $0x8c] sm:$0xf]
      %v210 = vld [vmem:[%s166 + $0x90] sm:$0xf]
      %v211 = vld [vmem:[%s166 + $0x94] sm:$0xf]
      %v212 = vld [vmem:[%s166 + $0x98] sm:$0xf]
      %v213 = vld [vmem:[%s166 + $0x9c] sm:$0xf]
      %v214 = vld [vmem:[%s166 + $0xa0] sm:$0xf]
      %v215 = vld [vmem:[%s166 + $0xa4] sm:$0xf]
      %v216 = vld [vmem:[%s166 + $0xa8] sm:$0xf]
      %v217 = vld [vmem:[%s166 + $0xac] sm:$0xf]
      %v218 = vld [vmem:[%s166 + $0xb0] sm:$0xf]
      %v219 = vld [vmem:[%s166 + $0xb4] sm:$0xf]
      %v220 = vld [vmem:[%s166 + $0xb8] sm:$0xf]
      %v221 = vld [vmem:[%s166 + $0xbc] sm:$0xf]
      %v222 = vld [vmem:[%s166 + $0xc0] sm:$0xf]
      %v223 = vld [vmem:[%s166 + $0xc4] sm:$0xf]
      %v224 = vld [vmem:[%s166 + $0xc8] sm:$0xf]
      %v225 = vld [vmem:[%s166 + $0xcc] sm:$0xf]
      %v226 = vld [vmem:[%s166 + $0xd0] sm:$0xf]
      %v227 = vld [vmem:[%s166 + $0xd4] sm:$0xf]
      %v228 = vld [vmem:[%s166 + $0xd8] sm:$0xf]
      %v229 = vld [vmem:[%s166 + $0xdc] sm:$0xf]
      %v230 = vld [vmem:[%s166 + $0xe0] sm:$0xf]
      %v231 = vld [vmem:[%s166 + $0xe4] sm:$0xf]
      %v232 = vld [vmem:[%s166 + $0xe8] sm:$0xf]
      %v233 = vld [vmem:[%s166 + $0xec] sm:$0xf]
      %v234 = vld [vmem:[%s166 + $0xf0] sm:$0xf]
      %v235 = vld [vmem:[%s166 + $0xf4] sm:$0xf]
      %v236 = vld [vmem:[%s166 + $0xf8] sm:$0xf]
      %v237 = vld [vmem:[%s166 + $0xfc] sm:$0xf]
      %v238 = vld [vmem:[%s1] sm:$0xf]
      %v239 = vld [vmem:[%s1 + $0x4] sm:$0xf]
      %v240 = vld [vmem:[%s1 + $0x8] sm:$0xf]
      %v241 = vld [vmem:[%s1 + $0xc] sm:$0xf]
      %v242 = vld [vmem:[%s1 + $0x10] sm:$0xf]
      %v243 = vld [vmem:[%s1 + $0x14] sm:$0xf]
      %v244 = vld [vmem:[%s1 + $0x18] sm:$0xf]
      %v245 = vld [vmem:[%s1 + $0x1c] sm:$0xf]
      %v246 = vld [vmem:[%s1 + $0x20] sm:$0xf]
      %v247 = vld [vmem:[%s1 + $0x24] sm:$0xf]
      %v248 = vld [vmem:[%s1 + $0x28] sm:$0xf]
      %v249 = vld [vmem:[%s1 + $0x2c] sm:$0xf]
      %v250 = vld [vmem:[%s1 + $0x30] sm:$0xf]
      %v251 = vld [vmem:[%s1 + $0x34] sm:$0xf]
      %v252 = vld [vmem:[%s1 + $0x38] sm:$0xf]
      %v253 = vld [vmem:[%s1 + $0x3c] sm:$0xf]
      %v254 = vld [vmem:[%s2] sm:$0x1]
      %v256 = vperm.slane %v254, 0
      %v322 = vunpack.c.l.b16 %v174
      %v323 = vunpack.c.l.b16 %v175
      %v324 = vunpack.c.l.b16 %v176
      %v325 = vunpack.c.l.b16 %v177
      %v326 = vunpack.c.l.b16 %v178
      %v327 = vunpack.c.l.b16 %v179
      %v328 = vunpack.c.l.b16 %v180
      %v329 = vunpack.c.l.b16 %v181
      %v330 = vunpack.c.l.b16 %v182
      %v331 = vunpack.c.l.b16 %v183
      %v332 = vunpack.c.l.b16 %v184
      %v333 = vunpack.c.l.b16 %v185
      %v334 = vunpack.c.l.b16 %v186
      %v335 = vunpack.c.l.b16 %v187
      %v336 = vunpack.c.l.b16 %v188
      %v337 = vunpack.c.l.b16 %v189
      %v338 = vunpack.c.l.b16 %v190
      %v339 = vunpack.c.l.b16 %v191
      %v340 = vunpack.c.l.b16 %v192
      %v341 = vunpack.c.l.b16 %v193
      %v342 = vunpack.c.l.b16 %v194
      %v343 = vunpack.c.l.b16 %v195
      %v344 = vunpack.c.l.b16 %v196
      %v345 = vunpack.c.l.b16 %v197
      %v346 = vunpack.c.l.b16 %v198
      %v347 = vunpack.c.l.b16 %v199
      %v348 = vunpack.c.l.b16 %v200
      %v349 = vunpack.c.l.b16 %v201
      %v350 = vunpack.c.l.b16 %v202
      %v351 = vunpack.c.l.b16 %v203
      %v352 = vunpack.c.l.b16 %v204
      %v353 = vunpack.c.l.b16 %v205
      %v354 = vunpack.c.l.b16 %v206
      %v355 = vunpack.c.l.b16 %v207
      %v356 = vunpack.c.l.b16 %v208
      %v357 = vunpack.c.l.b16 %v209
      %v358 = vunpack.c.l.b16 %v210
      %v359 = vunpack.c.l.b16 %v211
      %v360 = vunpack.c.l.b16 %v212
      %v361 = vunpack.c.l.b16 %v213
      %v362 = vunpack.c.l.b16 %v214
      %v363 = vunpack.c.l.b16 %v215
      %v364 = vunpack.c.l.b16 %v216
      %v365 = vunpack.c.l.b16 %v217
      %v366 = vunpack.c.l.b16 %v218
      %v367 = vunpack.c.l.b16 %v219
      %v368 = vunpack.c.l.b16 %v220
      %v369 = vunpack.c.l.b16 %v221
      %v370 = vunpack.c.l.b16 %v222
      %v371 = vunpack.c.l.b16 %v223
      %v372 = vunpack.c.l.b16 %v224
      %v373 = vunpack.c.l.b16 %v225
      %v374 = vunpack.c.l.b16 %v226
      %v375 = vunpack.c.l.b16 %v227
      %v376 = vunpack.c.l.b16 %v228
      %v377 = vunpack.c.l.b16 %v229
      %v378 = vunpack.c.l.b16 %v230
      %v379 = vunpack.c.l.b16 %v231
      %v380 = vunpack.c.l.b16 %v232
      %v381 = vunpack.c.l.b16 %v233
      %v382 = vunpack.c.l.b16 %v234
      %v383 = vunpack.c.l.b16 %v235
      %v384 = vunpack.c.l.b16 %v236
      %v385 = vunpack.c.l.b16 %v237
      %v386 = vpack.c.b16 %v323, %v322
      %v387 = vpack.c.b16 %v325, %v324
      %v388 = vpack.c.b16 %v327, %v326
      %v389 = vpack.c.b16 %v329, %v328
      %v390 = vpack.c.b16 %v331, %v330
      %v391 = vpack.c.b16 %v333, %v332
      %v392 = vpack.c.b16 %v335, %v334
      %v393 = vpack.c.b16 %v337, %v336
      %v394 = vpack.c.b16 %v339, %v338
      %v395 = vpack.c.b16 %v341, %v340
      %v396 = vpack.c.b16 %v343, %v342
      %v397 = vpack.c.b16 %v345, %v344
      %v398 = vpack.c.b16 %v347, %v346
      %v399 = vpack.c.b16 %v349, %v348
      %v400 = vpack.c.b16 %v351, %v350
      %v401 = vpack.c.b16 %v353, %v352
      %v402 = vpack.c.b16 %v355, %v354
      %v403 = vpack.c.b16 %v357, %v356
      %v404 = vpack.c.b16 %v359, %v358
      %v405 = vpack.c.b16 %v361, %v360
      %v406 = vpack.c.b16 %v363, %v362
      %v407 = vpack.c.b16 %v365, %v364
      %v408 = vpack.c.b16 %v367, %v366
      %v409 = vpack.c.b16 %v369, %v368
      %v410 = vpack.c.b16 %v371, %v370
      %v411 = vpack.c.b16 %v373, %v372
      %v412 = vpack.c.b16 %v375, %v374
      %v413 = vpack.c.b16 %v377, %v376
      %v414 = vpack.c.b16 %v379, %v378
      %v415 = vpack.c.b16 %v381, %v380
      %v416 = vpack.c.b16 %v383, %v382
      %v417 = vpack.c.b16 %v385, %v384
      %v466 = vunpack.c.l.b16 %v238
      %v467 = vunpack.c.l.b16 %v239
      %v468 = vunpack.c.l.b16 %v240
      %v469 = vunpack.c.l.b16 %v241
      %v470 = vunpack.c.l.b16 %v242
      %v471 = vunpack.c.l.b16 %v243
      %v472 = vunpack.c.l.b16 %v244
      %v473 = vunpack.c.l.b16 %v245
      %v474 = vunpack.c.l.b16 %v246
      %v475 = vunpack.c.l.b16 %v247
      %v476 = vunpack.c.l.b16 %v248
      %v477 = vunpack.c.l.b16 %v249
      %v478 = vunpack.c.l.b16 %v250
      %v479 = vunpack.c.l.b16 %v251
      %v480 = vunpack.c.l.b16 %v252
      %v481 = vunpack.c.l.b16 %v253
      %v482 = vpack.c.b16 %v467, %v466
      %v483 = vpack.c.b16 %v469, %v468
      %v484 = vpack.c.b16 %v471, %v470
      %v485 = vpack.c.b16 %v473, %v472
      %v486 = vpack.c.b16 %v475, %v474
      %v487 = vpack.c.b16 %v477, %v476
      %v488 = vpack.c.b16 %v479, %v478
      %v489 = vpack.c.b16 %v481, %v480
      %498 = vmatpush.bf16.msra.mxu0 %v489
      %499 = vmatpush.bf16.msra.mxu0 %v488
      %500 = vmatpush.bf16.msra.mxu0 %v487
      %501 = vmatpush.bf16.msra.mxu0 %v486
      %502 = vmatpush.bf16.msra.mxu0 %v485
      %503 = vmatpush.bf16.msra.mxu0 %v484
      %504 = vmatpush.bf16.msra.mxu0 %v483
      %505 = vmatpush.bf16.msra.mxu0 %v482
      %506 = vmatmul.bf16.gmra.mxu0 %v386
      %v507 = vpop.f32.mrf.mxu0
      %v508 = vadd.f32 %v256, %v507
      %v509 = vpop.f32.mrf.mxu0
      %v510 = vadd.f32 %v256, %v509
      %511 = vmatmul.bf16.gmra.mxu0 %v387
      %v512 = vpop.f32.mrf.mxu0
      %v513 = vadd.f32 %v256, %v512
      %v514 = vpop.f32.mrf.mxu0
      %v515 = vadd.f32 %v256, %v514
      %516 = vmatmul.bf16.gmra.mxu0 %v388
      %v517 = vpop.f32.mrf.mxu0
      %v518 = vadd.f32 %v256, %v517
      %v519 = vpop.f32.mrf.mxu0
      %v520 = vadd.f32 %v256, %v519
      %521 = vmatmul.bf16.gmra.mxu0 %v389
      %v522 = vpop.f32.mrf.mxu0
      %v523 = vadd.f32 %v256, %v522
      %v524 = vpop.f32.mrf.mxu0
      %v525 = vadd.f32 %v256, %v524
      %526 = vmatmul.bf16.gmra.mxu0 %v390
      %v527 = vpop.f32.mrf.mxu0
      %v528 = vadd.f32 %v256, %v527
      %v529 = vpop.f32.mrf.mxu0
      %v530 = vadd.f32 %v256, %v529
      %531 = vmatmul.bf16.gmra.mxu0 %v391
      %v532 = vpop.f32.mrf.mxu0
      %v533 = vadd.f32 %v256, %v532
      %v534 = vpop.f32.mrf.mxu0
      %v535 = vadd.f32 %v256, %v534
      %536 = vmatmul.bf16.gmra.mxu0 %v392
      %v537 = vpop.f32.mrf.mxu0
      %v538 = vadd.f32 %v256, %v537
      %v539 = vpop.f32.mrf.mxu0
      %v540 = vadd.f32 %v256, %v539
      %541 = vmatmul.bf16.gmra.mxu0 %v393
      %v542 = vpop.f32.mrf.mxu0
      %v543 = vadd.f32 %v256, %v542
      %v544 = vpop.f32.mrf.mxu0
      %v545 = vadd.f32 %v256, %v544
      %546 = vmatmul.bf16.gmra.mxu0 %v394
      %v547 = vpop.f32.mrf.mxu0
      %v548 = vadd.f32 %v256, %v547
      %v549 = vpop.f32.mrf.mxu0
      %v550 = vadd.f32 %v256, %v549
      %551 = vmatmul.bf16.gmra.mxu0 %v395
      %v552 = vpop.f32.mrf.mxu0
      %v553 = vadd.f32 %v256, %v552
      %v554 = vpop.f32.mrf.mxu0
      %v555 = vadd.f32 %v256, %v554
      %556 = vmatmul.bf16.gmra.mxu0 %v396
      %v557 = vpop.f32.mrf.mxu0
      %v558 = vadd.f32 %v256, %v557
      %v559 = vpop.f32.mrf.mxu0
      %v560 = vadd.f32 %v256, %v559
      %561 = vmatmul.bf16.gmra.mxu0 %v397
      %v562 = vpop.f32.mrf.mxu0
      %v563 = vadd.f32 %v256, %v562
      %v564 = vpop.f32.mrf.mxu0
      %v565 = vadd.f32 %v256, %v564
      %566 = vmatmul.bf16.gmra.mxu0 %v398
      %v567 = vpop.f32.mrf.mxu0
      %v568 = vadd.f32 %v256, %v567
      %v569 = vpop.f32.mrf.mxu0
      %v570 = vadd.f32 %v256, %v569
      %571 = vmatmul.bf16.gmra.mxu0 %v399
      %v572 = vpop.f32.mrf.mxu0
      %v573 = vadd.f32 %v256, %v572
      %v574 = vpop.f32.mrf.mxu0
      %v575 = vadd.f32 %v256, %v574
      %576 = vmatmul.bf16.gmra.mxu0 %v400
      %v577 = vpop.f32.mrf.mxu0
      %v578 = vadd.f32 %v256, %v577
      %v579 = vpop.f32.mrf.mxu0
      %v580 = vadd.f32 %v256, %v579
      %581 = vmatmul.bf16.gmra.mxu0 %v401
      %v582 = vpop.f32.mrf.mxu0
      %v583 = vadd.f32 %v256, %v582
      %v584 = vpop.f32.mrf.mxu0
      %v585 = vadd.f32 %v256, %v584
      %586 = vmatmul.bf16.gmra.mxu0 %v402
      %v587 = vpop.f32.mrf.mxu0
      %v588 = vadd.f32 %v256, %v587
      %v589 = vpop.f32.mrf.mxu0
      %v590 = vadd.f32 %v256, %v589
      %591 = vmatmul.bf16.gmra.mxu0 %v403
      %v592 = vpop.f32.mrf.mxu0
      %v593 = vadd.f32 %v256, %v592
      %v594 = vpop.f32.mrf.mxu0
      %v595 = vadd.f32 %v256, %v594
      %596 = vmatmul.bf16.gmra.mxu0 %v404
      %v597 = vpop.f32.mrf.mxu0
      %v598 = vadd.f32 %v256, %v597
      %v599 = vpop.f32.mrf.mxu0
      %v600 = vadd.f32 %v256, %v599
      %601 = vmatmul.bf16.gmra.mxu0 %v405
      %v602 = vpop.f32.mrf.mxu0
      %v603 = vadd.f32 %v256, %v602
      %v604 = vpop.f32.mrf.mxu0
      %v605 = vadd.f32 %v256, %v604
      %606 = vmatmul.bf16.gmra.mxu0 %v406
      %v607 = vpop.f32.mrf.mxu0
      %v608 = vadd.f32 %v256, %v607
      %v609 = vpop.f32.mrf.mxu0
      %v610 = vadd.f32 %v256, %v609
      %611 = vmatmul.bf16.gmra.mxu0 %v407
      %v612 = vpop.f32.mrf.mxu0
      %v613 = vadd.f32 %v256, %v612
      %v614 = vpop.f32.mrf.mxu0
      %v615 = vadd.f32 %v256, %v614
      %616 = vmatmul.bf16.gmra.mxu0 %v408
      %v617 = vpop.f32.mrf.mxu0
      %v618 = vadd.f32 %v256, %v617
      %v619 = vpop.f32.mrf.mxu0
      %v620 = vadd.f32 %v256, %v619
      %621 = vmatmul.bf16.gmra.mxu0 %v409
      %v622 = vpop.f32.mrf.mxu0
      %v623 = vadd.f32 %v256, %v622
      %v624 = vpop.f32.mrf.mxu0
      %v625 = vadd.f32 %v256, %v624
      %626 = vmatmul.bf16.gmra.mxu0 %v410
      %v627 = vpop.f32.mrf.mxu0
      %v628 = vadd.f32 %v256, %v627
      %v629 = vpop.f32.mrf.mxu0
      %v630 = vadd.f32 %v256, %v629
      %631 = vmatmul.bf16.gmra.mxu0 %v411
      %v632 = vpop.f32.mrf.mxu0
      %v633 = vadd.f32 %v256, %v632
      %v634 = vpop.f32.mrf.mxu0
      %v635 = vadd.f32 %v256, %v634
      %636 = vmatmul.bf16.gmra.mxu0 %v412
      %v637 = vpop.f32.mrf.mxu0
      %v638 = vadd.f32 %v256, %v637
      %v639 = vpop.f32.mrf.mxu0
      %v640 = vadd.f32 %v256, %v639
      %641 = vmatmul.bf16.gmra.mxu0 %v413
      %v642 = vpop.f32.mrf.mxu0
      %v643 = vadd.f32 %v256, %v642
      %v644 = vpop.f32.mrf.mxu0
      %v645 = vadd.f32 %v256, %v644
      %646 = vmatmul.bf16.gmra.mxu0 %v414
      %v647 = vpop.f32.mrf.mxu0
      %v648 = vadd.f32 %v256, %v647
      %v649 = vpop.f32.mrf.mxu0
      %v650 = vadd.f32 %v256, %v649
      %651 = vmatmul.bf16.gmra.mxu0 %v415
      %v652 = vpop.f32.mrf.mxu0
      %v653 = vadd.f32 %v256, %v652
      %v654 = vpop.f32.mrf.mxu0
      %v655 = vadd.f32 %v256, %v654
      %656 = vmatmul.bf16.gmra.mxu0 %v416
      %v657 = vpop.f32.mrf.mxu0
      %v658 = vadd.f32 %v256, %v657
      %v659 = vpop.f32.mrf.mxu0
      %v660 = vadd.f32 %v256, %v659
      %661 = vmatmul.bf16.gmra.mxu0 %v417
      %v662 = vpop.f32.mrf.mxu0
      %v663 = vadd.f32 %v256, %v662
      %v664 = vpop.f32.mrf.mxu0
      %v665 = vadd.f32 %v256, %v664
      %666 = vdwg.mxu0
      %vm667 = vcmp.gt.f32.partialorder %v508, 0.0
      %vm668 = vcmp.gt.f32.partialorder %v510, 0.0
      %vm669 = vcmp.gt.f32.partialorder %v513, 0.0
      %vm670 = vcmp.gt.f32.partialorder %v515, 0.0
      %vm671 = vcmp.gt.f32.partialorder %v518, 0.0
      %vm672 = vcmp.gt.f32.partialorder %v520, 0.0
      %vm673 = vcmp.gt.f32.partialorder %v523, 0.0
      %vm674 = vcmp.gt.f32.partialorder %v525, 0.0
      %vm675 = vcmp.gt.f32.partialorder %v528, 0.0
      %vm676 = vcmp.gt.f32.partialorder %v530, 0.0
      %vm677 = vcmp.gt.f32.partialorder %v533, 0.0
      %vm678 = vcmp.gt.f32.partialorder %v535, 0.0
      %vm679 = vcmp.gt.f32.partialorder %v538, 0.0
      %vm680 = vcmp.gt.f32.partialorder %v540, 0.0
      %vm681 = vcmp.gt.f32.partialorder %v543, 0.0
      %vm682 = vcmp.gt.f32.partialorder %v545, 0.0
      %vm683 = vcmp.gt.f32.partialorder %v548, 0.0
      %vm684 = vcmp.gt.f32.partialorder %v550, 0.0
      %vm685 = vcmp.gt.f32.partialorder %v553, 0.0
      %vm686 = vcmp.gt.f32.partialorder %v555, 0.0
      %vm687 = vcmp.gt.f32.partialorder %v558, 0.0
      %vm688 = vcmp.gt.f32.partialorder %v560, 0.0
      %vm689 = vcmp.gt.f32.partialorder %v563, 0.0
      %vm690 = vcmp.gt.f32.partialorder %v565, 0.0
      %vm691 = vcmp.gt.f32.partialorder %v568, 0.0
      %vm692 = vcmp.gt.f32.partialorder %v570, 0.0
      %vm693 = vcmp.gt.f32.partialorder %v573, 0.0
      %vm694 = vcmp.gt.f32.partialorder %v575, 0.0
      %vm695 = vcmp.gt.f32.partialorder %v578, 0.0
      %vm696 = vcmp.gt.f32.partialorder %v580, 0.0
      %vm697 = vcmp.gt.f32.partialorder %v583, 0.0
      %vm698 = vcmp.gt.f32.partialorder %v585, 0.0
      %vm699 = vcmp.gt.f32.partialorder %v588, 0.0
      %vm700 = vcmp.gt.f32.partialorder %v590, 0.0
      %vm701 = vcmp.gt.f32.partialorder %v593, 0.0
      %vm702 = vcmp.gt.f32.partialorder %v595, 0.0
      %vm703 = vcmp.gt.f32.partialorder %v598, 0.0
      %vm704 = vcmp.gt.f32.partialorder %v600, 0.0
      %vm705 = vcmp.gt.f32.partialorder %v603, 0.0
      %vm706 = vcmp.gt.f32.partialorder %v605, 0.0
      %vm707 = vcmp.gt.f32.partialorder %v608, 0.0
      %vm708 = vcmp.gt.f32.partialorder %v610, 0.0
      %vm709 = vcmp.gt.f32.partialorder %v613, 0.0
      %vm710 = vcmp.gt.f32.partialorder %v615, 0.0
      %vm711 = vcmp.gt.f32.partialorder %v618, 0.0
      %vm712 = vcmp.gt.f32.partialorder %v620, 0.0
      %vm713 = vcmp.gt.f32.partialorder %v623, 0.0
      %vm714 = vcmp.gt.f32.partialorder %v625, 0.0
      %vm715 = vcmp.gt.f32.partialorder %v628, 0.0
      %vm716 = vcmp.gt.f32.partialorder %v630, 0.0
      %vm717 = vcmp.gt.f32.partialorder %v633, 0.0
      %vm718 = vcmp.gt.f32.partialorder %v635, 0.0
      %vm719 = vcmp.gt.f32.partialorder %v638, 0.0
      %vm720 = vcmp.gt.f32.partialorder %v640, 0.0
      %vm721 = vcmp.gt.f32.partialorder %v643, 0.0
      %vm722 = vcmp.gt.f32.partialorder %v645, 0.0
      %vm723 = vcmp.gt.f32.partialorder %v648, 0.0
      %vm724 = vcmp.gt.f32.partialorder %v650, 0.0
      %vm725 = vcmp.gt.f32.partialorder %v653, 0.0
      %vm726 = vcmp.gt.f32.partialorder %v655, 0.0
      %vm727 = vcmp.gt.f32.partialorder %v658, 0.0
      %vm728 = vcmp.gt.f32.partialorder %v660, 0.0
      %vm729 = vcmp.gt.f32.partialorder %v663, 0.0
      %vm730 = vcmp.gt.f32.partialorder %v665, 0.0
      %v731 = vmul.f32 %v508, 0.1
      %v732 = vmul.f32 %v510, 0.1
      %v733 = vmul.f32 %v513, 0.1
      %v734 = vmul.f32 %v515, 0.1
      %v735 = vmul.f32 %v518, 0.1
      %v736 = vmul.f32 %v520, 0.1
      %v737 = vmul.f32 %v523, 0.1
      %v738 = vmul.f32 %v525, 0.1
      %v739 = vmul.f32 %v528, 0.1
      %v740 = vmul.f32 %v530, 0.1
      %v741 = vmul.f32 %v533, 0.1
      %v742 = vmul.f32 %v535, 0.1
      %v743 = vmul.f32 %v538, 0.1
      %v744 = vmul.f32 %v540, 0.1
      %v745 = vmul.f32 %v543, 0.1
      %v746 = vmul.f32 %v545, 0.1
      %v747 = vmul.f32 %v548, 0.1
      %v748 = vmul.f32 %v550, 0.1
      %v749 = vmul.f32 %v553, 0.1
      %v750 = vmul.f32 %v555, 0.1
      %v751 = vmul.f32 %v558, 0.1
      %v752 = vmul.f32 %v560, 0.1
      %v753 = vmul.f32 %v563, 0.1
      %v754 = vmul.f32 %v565, 0.1
      %v755 = vmul.f32 %v568, 0.1
      %v756 = vmul.f32 %v570, 0.1
      %v757 = vmul.f32 %v573, 0.1
      %v758 = vmul.f32 %v575, 0.1
      %v759 = vmul.f32 %v578, 0.1
      %v760 = vmul.f32 %v580, 0.1
      %v761 = vmul.f32 %v583, 0.1
      %v762 = vmul.f32 %v585, 0.1
      %v763 = vmul.f32 %v588, 0.1
      %v764 = vmul.f32 %v590, 0.1
      %v765 = vmul.f32 %v593, 0.1
      %v766 = vmul.f32 %v595, 0.1
      %v767 = vmul.f32 %v598, 0.1
      %v768 = vmul.f32 %v600, 0.1
      %v769 = vmul.f32 %v603, 0.1
      %v770 = vmul.f32 %v605, 0.1
      %v771 = vmul.f32 %v608, 0.1
      %v772 = vmul.f32 %v610, 0.1
      %v773 = vmul.f32 %v613, 0.1
      %v774 = vmul.f32 %v615, 0.1
      %v775 = vmul.f32 %v618, 0.1
      %v776 = vmul.f32 %v620, 0.1
      %v777 = vmul.f32 %v623, 0.1
      %v778 = vmul.f32 %v625, 0.1
      %v779 = vmul.f32 %v628, 0.1
      %v780 = vmul.f32 %v630, 0.1
      %v781 = vmul.f32 %v633, 0.1
      %v782 = vmul.f32 %v635, 0.1
      %v783 = vmul.f32 %v638, 0.1
      %v784 = vmul.f32 %v640, 0.1
      %v785 = vmul.f32 %v643, 0.1
      %v786 = vmul.f32 %v645, 0.1
      %v787 = vmul.f32 %v648, 0.1
      %v788 = vmul.f32 %v650, 0.1
      %v789 = vmul.f32 %v653, 0.1
      %v790 = vmul.f32 %v655, 0.1
      %v791 = vmul.f32 %v658, 0.1
      %v792 = vmul.f32 %v660, 0.1
      %v793 = vmul.f32 %v663, 0.1
      %v794 = vmul.f32 %v665, 0.1
      %v795 = vsel %vm667, %v508, %v731
      %v796 = vsel %vm668, %v510, %v732
      %v797 = vsel %vm669, %v513, %v733
      %v798 = vsel %vm670, %v515, %v734
      %v799 = vsel %vm671, %v518, %v735
      %v800 = vsel %vm672, %v520, %v736
      %v801 = vsel %vm673, %v523, %v737
      %v802 = vsel %vm674, %v525, %v738
      %v803 = vsel %vm675, %v528, %v739
      %v804 = vsel %vm676, %v530, %v740
      %v805 = vsel %vm677, %v533, %v741
      %v806 = vsel %vm678, %v535, %v742
      %v807 = vsel %vm679, %v538, %v743
      %v808 = vsel %vm680, %v540, %v744
      %v809 = vsel %vm681, %v543, %v745
      %v810 = vsel %vm682, %v545, %v746
      %v811 = vsel %vm683, %v548, %v747
      %v812 = vsel %vm684, %v550, %v748
      %v813 = vsel %vm685, %v553, %v749
      %v814 = vsel %vm686, %v555, %v750
      %v815 = vsel %vm687, %v558, %v751
      %v816 = vsel %vm688, %v560, %v752
      %v817 = vsel %vm689, %v563, %v753
      %v818 = vsel %vm690, %v565, %v754
      %v819 = vsel %vm691, %v568, %v755
      %v820 = vsel %vm692, %v570, %v756
      %v821 = vsel %vm693, %v573, %v757
      %v822 = vsel %vm694, %v575, %v758
      %v823 = vsel %vm695, %v578, %v759
      %v824 = vsel %vm696, %v580, %v760
      %v825 = vsel %vm697, %v583, %v761
      %v826 = vsel %vm698, %v585, %v762
      %v827 = vsel %vm699, %v588, %v763
      %v828 = vsel %vm700, %v590, %v764
      %v829 = vsel %vm701, %v593, %v765
      %v830 = vsel %vm702, %v595, %v766
      %v831 = vsel %vm703, %v598, %v767
      %v832 = vsel %vm704, %v600, %v768
      %v833 = vsel %vm705, %v603, %v769
      %v834 = vsel %vm706, %v605, %v770
      %v835 = vsel %vm707, %v608, %v771
      %v836 = vsel %vm708, %v610, %v772
      %v837 = vsel %vm709, %v613, %v773
      %v838 = vsel %vm710, %v615, %v774
      %v839 = vsel %vm711, %v618, %v775
      %v840 = vsel %vm712, %v620, %v776
      %v841 = vsel %vm713, %v623, %v777
      %v842 = vsel %vm714, %v625, %v778
      %v843 = vsel %vm715, %v628, %v779
      %v844 = vsel %vm716, %v630, %v780
      %v845 = vsel %vm717, %v633, %v781
      %v846 = vsel %vm718, %v635, %v782
      %v847 = vsel %vm719, %v638, %v783
      %v848 = vsel %vm720, %v640, %v784
      %v849 = vsel %vm721, %v643, %v785
      %v850 = vsel %vm722, %v645, %v786
      %v851 = vsel %vm723, %v648, %v787
      %v852 = vsel %vm724, %v650, %v788
      %v853 = vsel %vm725, %v653, %v789
      %v854 = vsel %vm726, %v655, %v790
      %v855 = vsel %vm727, %v658, %v791
      %v856 = vsel %vm728, %v660, %v792
      %v857 = vsel %vm729, %v663, %v793
      %v858 = vsel %vm730, %v665, %v794
      %v859 = vpack.c.bf16 %v795, %v795
      %v860 = vpack.c.bf16 %v796, %v796
      %v861 = vpack.c.bf16 %v797, %v797
      %v862 = vpack.c.bf16 %v798, %v798
      %v863 = vpack.c.bf16 %v799, %v799
      %v864 = vpack.c.bf16 %v800, %v800
      %v865 = vpack.c.bf16 %v801, %v801
      %v866 = vpack.c.bf16 %v802, %v802
      %v867 = vpack.c.bf16 %v803, %v803
      %v868 = vpack.c.bf16 %v804, %v804
      %v869 = vpack.c.bf16 %v805, %v805
      %v870 = vpack.c.bf16 %v806, %v806
      %v871 = vpack.c.bf16 %v807, %v807
      %v872 = vpack.c.bf16 %v808, %v808
      %v873 = vpack.c.bf16 %v809, %v809
      %v874 = vpack.c.bf16 %v810, %v810
      %v875 = vpack.c.bf16 %v811, %v811
      %v876 = vpack.c.bf16 %v812, %v812
      %v877 = vpack.c.bf16 %v813, %v813
      %v878 = vpack.c.bf16 %v814, %v814
      %v879 = vpack.c.bf16 %v815, %v815
      %v880 = vpack.c.bf16 %v816, %v816
      %v881 = vpack.c.bf16 %v817, %v817
      %v882 = vpack.c.bf16 %v818, %v818
      %v883 = vpack.c.bf16 %v819, %v819
      %v884 = vpack.c.bf16 %v820, %v820
      %v885 = vpack.c.bf16 %v821, %v821
      %v886 = vpack.c.bf16 %v822, %v822
      %v887 = vpack.c.bf16 %v823, %v823
      %v888 = vpack.c.bf16 %v824, %v824
      %v889 = vpack.c.bf16 %v825, %v825
      %v890 = vpack.c.bf16 %v826, %v826
      %v891 = vpack.c.bf16 %v827, %v827
      %v892 = vpack.c.bf16 %v828, %v828
      %v893 = vpack.c.bf16 %v829, %v829
      %v894 = vpack.c.bf16 %v830, %v830
      %v895 = vpack.c.bf16 %v831, %v831
      %v896 = vpack.c.bf16 %v832, %v832
      %v897 = vpack.c.bf16 %v833, %v833
      %v898 = vpack.c.bf16 %v834, %v834
      %v899 = vpack.c.bf16 %v835, %v835
      %v900 = vpack.c.bf16 %v836, %v836
      %v901 = vpack.c.bf16 %v837, %v837
      %v902 = vpack.c.bf16 %v838, %v838
      %v903 = vpack.c.bf16 %v839, %v839
      %v904 = vpack.c.bf16 %v840, %v840
      %v905 = vpack.c.bf16 %v841, %v841
      %v906 = vpack.c.bf16 %v842, %v842
      %v907 = vpack.c.bf16 %v843, %v843
      %v908 = vpack.c.bf16 %v844, %v844
      %v909 = vpack.c.bf16 %v845, %v845
      %v910 = vpack.c.bf16 %v846, %v846
      %v911 = vpack.c.bf16 %v847, %v847
      %v912 = vpack.c.bf16 %v848, %v848
      %v913 = vpack.c.bf16 %v849, %v849
      %v914 = vpack.c.bf16 %v850, %v850
      %v915 = vpack.c.bf16 %v851, %v851
      %v916 = vpack.c.bf16 %v852, %v852
      %v917 = vpack.c.bf16 %v853, %v853
      %v918 = vpack.c.bf16 %v854, %v854
      %v919 = vpack.c.bf16 %v855, %v855
      %v920 = vpack.c.bf16 %v856, %v856
      %v921 = vpack.c.bf16 %v857, %v857
      %v922 = vpack.c.bf16 %v858, %v858
      %923 = vst [vmem:[%s172] sm:$0xf] %v859
      %924 = vst [vmem:[%s172 + $0x4] sm:$0xf] %v860
      %925 = vst [vmem:[%s172 + $0x8] sm:$0xf] %v861
      %926 = vst [vmem:[%s172 + $0xc] sm:$0xf] %v862
      %927 = vst [vmem:[%s172 + $0x10] sm:$0xf] %v863
      %928 = vst [vmem:[%s172 + $0x14] sm:$0xf] %v864
      %929 = vst [vmem:[%s172 + $0x18] sm:$0xf] %v865
      %930 = vst [vmem:[%s172 + $0x1c] sm:$0xf] %v866
      %931 = vst [vmem:[%s172 + $0x20] sm:$0xf] %v867
      %932 = vst [vmem:[%s172 + $0x24] sm:$0xf] %v868
      %933 = vst [vmem:[%s172 + $0x28] sm:$0xf] %v869
      %934 = vst [vmem:[%s172 + $0x2c] sm:$0xf] %v870
      %935 = vst [vmem:[%s172 + $0x30] sm:$0xf] %v871
      %936 = vst [vmem:[%s172 + $0x34] sm:$0xf] %v872
      %937 = vst [vmem:[%s172 + $0x38] sm:$0xf] %v873
      %938 = vst [vmem:[%s172 + $0x3c] sm:$0xf] %v874
      %939 = vst [vmem:[%s172 + $0x40] sm:$0xf] %v875
      %940 = vst [vmem:[%s172 + $0x44] sm:$0xf] %v876
      %941 = vst [vmem:[%s172 + $0x48] sm:$0xf] %v877
      %942 = vst [vmem:[%s172 + $0x4c] sm:$0xf] %v878
      %943 = vst [vmem:[%s172 + $0x50] sm:$0xf] %v879
      %944 = vst [vmem:[%s172 + $0x54] sm:$0xf] %v880
      %945 = vst [vmem:[%s172 + $0x58] sm:$0xf] %v881
      %946 = vst [vmem:[%s172 + $0x5c] sm:$0xf] %v882
      %947 = vst [vmem:[%s172 + $0x60] sm:$0xf] %v883
      %948 = vst [vmem:[%s172 + $0x64] sm:$0xf] %v884
      %949 = vst [vmem:[%s172 + $0x68] sm:$0xf] %v885
      %950 = vst [vmem:[%s172 + $0x6c] sm:$0xf] %v886
      %951 = vst [vmem:[%s172 + $0x70] sm:$0xf] %v887
      %952 = vst [vmem:[%s172 + $0x74] sm:$0xf] %v888
      %953 = vst [vmem:[%s172 + $0x78] sm:$0xf] %v889
      %954 = vst [vmem:[%s172 + $0x7c] sm:$0xf] %v890
      %955 = vst [vmem:[%s172 + $0x80] sm:$0xf] %v891
      %956 = vst [vmem:[%s172 + $0x84] sm:$0xf] %v892
      %957 = vst [vmem:[%s172 + $0x88] sm:$0xf] %v893
      %958 = vst [vmem:[%s172 + $0x8c] sm:$0xf] %v894
      %959 = vst [vmem:[%s172 + $0x90] sm:$0xf] %v895
      %960 = vst [vmem:[%s172 + $0x94] sm:$0xf] %v896
      %961 = vst [vmem:[%s172 + $0x98] sm:$0xf] %v897
      %962 = vst [vmem:[%s172 + $0x9c] sm:$0xf] %v898
      %963 = vst [vmem:[%s172 + $0xa0] sm:$0xf] %v899
      %964 = vst [vmem:[%s172 + $0xa4] sm:$0xf] %v900
      %965 = vst [vmem:[%s172 + $0xa8] sm:$0xf] %v901
      %966 = vst [vmem:[%s172 + $0xac] sm:$0xf] %v902
      %967 = vst [vmem:[%s172 + $0xb0] sm:$0xf] %v903
      %968 = vst [vmem:[%s172 + $0xb4] sm:$0xf] %v904
      %969 = vst [vmem:[%s172 + $0xb8] sm:$0xf] %v905
      %970 = vst [vmem:[%s172 + $0xbc] sm:$0xf] %v906
      %971 = vst [vmem:[%s172 + $0xc0] sm:$0xf] %v907
      %972 = vst [vmem:[%s172 + $0xc4] sm:$0xf] %v908
      %973 = vst [vmem:[%s172 + $0xc8] sm:$0xf] %v909
      %974 = vst [vmem:[%s172 + $0xcc] sm:$0xf] %v910
      %975 = vst [vmem:[%s172 + $0xd0] sm:$0xf] %v911
      %976 = vst [vmem:[%s172 + $0xd4] sm:$0xf] %v912
      %977 = vst [vmem:[%s172 + $0xd8] sm:$0xf] %v913
      %978 = vst [vmem:[%s172 + $0xdc] sm:$0xf] %v914
      %979 = vst [vmem:[%s172 + $0xe0] sm:$0xf] %v915
      %980 = vst [vmem:[%s172 + $0xe4] sm:$0xf] %v916
      %981 = vst [vmem:[%s172 + $0xe8] sm:$0xf] %v917
      %982 = vst [vmem:[%s172 + $0xec] sm:$0xf] %v918
      %983 = vst [vmem:[%s172 + $0xf0] sm:$0xf] %v919
      %984 = vst [vmem:[%s172 + $0xf4] sm:$0xf] %v920
      %985 = vst [vmem:[%s172 + $0xf8] sm:$0xf] %v921
      %986 = vst [vmem:[%s172 + $0xfc] sm:$0xf] %v922
      %s987 = smul.u32 64, %s14
      %p988 = scmp.lt.s32.totalorder %s987, 1727
      %s989 = scalar_select %p988, %s987, 1727
      %s990 = smul.addr %s989, 4
      %s991 = scalar_lea.vmem %s3, %s990
      // Predicated region
      $region33: #{forward.11} parent=31 // pred_check
        %p992 = pneg %p100
      $region34: #{forward.11} parent=31 // pred_check_branch
        %994 = sbr.rel (%p992) target = $region36
      $region35: #{forward.11} parent=31 // pred_region
        %s995 = smul.u32 64, %s14
      $region36: #{forward.11} parent=31 // pred_fallthru
        _
    $region32: #{forward.11} parent=5 // pred_fallthru
      _
    %p996 = scmp.le.s32.totalorder 2, %s9
    // Predicated region
    $region37: #{forward.11} parent=5 // pred_check
      %p997 = pneg %p996
    $region38: #{forward.11} parent=5 // pred_check_branch
      %999 = sbr.rel (%p997) target = $region40
    $region39: #{forward.11} parent=5 // pred_region
      %s1000 = ssub.s32 %s9, 2
      // Predicated region
      $region41: #{forward.11} parent=39 // pred_check
        %p1001 = pneg %p106
      $region42: #{forward.11} parent=39 // pred_check_branch
        %1003 = sbr.rel (%p1001) target = $region44
      $region43: #{forward.11} parent=39 // pred_region
        %s1004 = smul.u32 64, %s15
        %p1005 = scmp.lt.s32.totalorder %s1004, 1727
        %s1006 = scalar_select %p1005, %s1004, 1727
        %s1007 = smul.addr %s1006, 4
        %s1008 = scalar_lea.vmem %s3, %s1007
      $region44: #{forward.11} parent=39 // pred_fallthru
        _
    $region40: #{forward.11} parent=5 // pred_fallthru
      _
  $region6: #{forward.11} parent=0 // loop_footer
    %s13 = sadd.s32 1, %s9
  $region7: #{forward.11} parent=0 // loop_footer_branch
    %8 = sbr.rel target = $region3
  $region8: #{forward.11} parent=0 // loop_exit
    _

// kernel: forward.12
$region0: #{forward.12}
  #allocation0 [shape = 'u32[]', space=smem, size = 0x4, offset = 0x4, fixed_abs, tag = 'smem constant byte address 0x4 - core index']
  #allocation1 [shape = 'u32[72,128]{1,0:T(1,128)}', space=vmem, size = 0x9000, scoped, tag = 'internal scratch']
  %s0 = inlined_call_operand.vmem [shape: bf16[3584,128], index: 0, kind: input, shape index: {}]
  %s1 = inlined_call_operand.vmem [shape: bf16[128,128], index: 1, kind: input, shape index: {}]
  %s2 = inlined_call_operand.vmem [shape: f32[1,128], index: 2, kind: input, shape index: {}]
  %s3 = inlined_call_operand.vmem [shape: bf16[3584,128], index: 3, kind: output, shape index: {}]
  %s4 = sld [smem:[#allocation0]]
  $region45: #{forward.12} parent=0
    _
  %s6 = ssub.s32 1, %s4
  %s7 = scalar_select 0, %s6, %s4
  loop: start=0, step=1, limit=9
  $region2: #{forward.12} parent=0 // loop_pre_header
    _
  $region3: #{forward.12} parent=0 // loop_header
    %s9 = sphi 0, %s13
    %p10 = scmp.ge.s32.totalorder %s9, 9
    %s19 = sphi 0, %s21
    %s22 = sphi 0, %s19
    %s23 = sphi 0, %s22
    %s39 = sphi 0, %s23
    %s43 = sphi 0, %s43
    %s45 = sphi 0, %s43
    %s46 = sphi 0, %s45
    %s60 = sphi 0, %s46
    %s64 = sphi 0, %s64
    %s66 = sphi 0, %s64
    %s67 = sphi 0, %s66
    %s81 = sphi 0, %s67
    %s87 = sphi 0, %s89
    %s90 = sphi 0, %s87
    %s91 = sphi 0, %s90
    %s107 = sphi 0, %s91
  $region4: #{forward.12} parent=0 // loop_header_branch
    %12 = sbr.rel (%p10) target = $region8
  $region5: #{forward.12} parent=0 // loop_body
    %s14 = ssub.s32 %s9, 1
    %s15 = ssub.s32 %s9, 2
    %s16 = sadd.s32 %s9, 1
    %s17 = ssub.s32 %s9, %s16
    %p18 = scmp.eq.s32.totalorder %s17, 0
    %s20 = sadd.s32 %s19, 1
    %s21 = scalar_select %p18, %s19, %s20
    %p24 = pneg %p18
    %p25 = scmp.eq.s32.totalorder %s9, 6
    %p26 = por %p24, %p25
    %p27 = scmp.ne.s32.totalorder %s19, %s22
    %p28 = scmp.eq.s32.totalorder %s9, 0
    %p29 = por %p27, %p28
    %p30 = scmp.ne.s32.totalorder %s19, %s22
    %p31 = scmp.eq.s32.totalorder %s14, 6
    %p32 = por %p30, %p31
    %p33 = scmp.ne.s32.totalorder %s22, %s23
    %p34 = scmp.eq.s32.totalorder %s14, 0
    %p35 = por %p33, %p34
    %p36 = scmp.ne.s32.totalorder %s22, %s23
    %p37 = scmp.eq.s32.totalorder %s15, 6
    %p38 = por %p36, %p37
    %p40 = scmp.ne.s32.totalorder %s23, %s39
    %p41 = scmp.eq.s32.totalorder %s15, 0
    %p42 = por %p40, %p41
    %s44 = sadd.s32 %s43, 1
    %p47 = scmp.eq.s32.totalorder %s9, 6
    %p48 = scmp.ne.s32.totalorder %s43, %s45
    %p49 = scmp.eq.s32.totalorder %s9, 0
    %p50 = por %p48, %p49
    %p51 = scmp.ne.s32.totalorder %s43, %s45
    %p52 = scmp.eq.s32.totalorder %s14, 6
    %p53 = por %p51, %p52
    %p54 = scmp.ne.s32.totalorder %s45, %s46
    %p55 = scmp.eq.s32.totalorder %s14, 0
    %p56 = por %p54, %p55
    %p57 = scmp.ne.s32.totalorder %s45, %s46
    %p58 = scmp.eq.s32.totalorder %s15, 6
    %p59 = por %p57, %p58
    %p61 = scmp.ne.s32.totalorder %s46, %s60
    %p62 = scmp.eq.s32.totalorder %s15, 0
    %p63 = por %p61, %p62
    %s65 = sadd.s32 %s64, 1
    %p68 = scmp.eq.s32.totalorder %s9, 6
    %p69 = scmp.ne.s32.totalorder %s64, %s66
    %p70 = scmp.eq.s32.totalorder %s9, 0
    %p71 = por %p69, %p70
    %p72 = scmp.ne.s32.totalorder %s64, %s66
    %p73 = scmp.eq.s32.totalorder %s14, 6
    %p74 = por %p72, %p73
    %p75 = scmp.ne.s32.totalorder %s66, %s67
    %p76 = scmp.eq.s32.totalorder %s14, 0
    %p77 = por %p75, %p76
    %p78 = scmp.ne.s32.totalorder %s66, %s67
    %p79 = scmp.eq.s32.totalorder %s15, 6
    %p80 = por %p78, %p79
    %p82 = scmp.ne.s32.totalorder %s67, %s81
    %p83 = scmp.eq.s32.totalorder %s15, 0
    %p84 = por %p82, %p83
    %s85 = ssub.s32 %s9, %s16
    %p86 = scmp.eq.s32.totalorder %s85, 0
    %s88 = sadd.s32 %s87, 1
    %s89 = scalar_select %p86, %s87, %s88
    %p92 = pneg %p86
    %p93 = scmp.eq.s32.totalorder %s9, 6
    %p94 = por %p92, %p93
    %p95 = scmp.ne.s32.totalorder %s87, %s90
    %p96 = scmp.eq.s32.totalorder %s9, 0
    %p97 = por %p95, %p96
    %p98 = scmp.ne.s32.totalorder %s87, %s90
    %p99 = scmp.eq.s32.totalorder %s14, 6
    %p100 = por %p98, %p99
    %p101 = scmp.ne.s32.totalorder %s90, %s91
    %p102 = scmp.eq.s32.totalorder %s14, 0
    %p103 = por %p101, %p102
    %p104 = scmp.ne.s32.totalorder %s90, %s91
    %p105 = scmp.eq.s32.totalorder %s15, 6
    %p106 = por %p104, %p105
    %p108 = scmp.ne.s32.totalorder %s91, %s107
    %p109 = scmp.eq.s32.totalorder %s15, 0
    %p110 = por %p108, %p109
    %p111 = scmp.le.s32.totalorder 1, %s9
    %p112 = scmp.lt.s32.totalorder %s9, 8
    %p113 = pnand %p111, %p112
    %p114 = pneg %p113
    // Predicated region
    $region9: #{forward.12} parent=5 // pred_check
      _
    $region10: #{forward.12} parent=5 // pred_check_branch
      %116 = sbr.rel (%p113) target = $region12
    $region11: #{forward.12} parent=5 // pred_region
      %s117 = ssub.s32 %s9, 1
      // Predicated region
      $region13: #{forward.12} parent=11 // pred_check
        %p118 = pneg %p56
      $region14: #{forward.12} parent=11 // pred_check_branch
        %120 = sbr.rel (%p118) target = $region16
      $region15: #{forward.12} parent=11 // pred_region
        _
      $region16: #{forward.12} parent=11 // pred_fallthru
        _
      // Predicated region
      $region17: #{forward.12} parent=11 // pred_check
        %p121 = pneg %p77
      $region18: #{forward.12} parent=11 // pred_check_branch
        %123 = sbr.rel (%p121) target = $region20
      $region19: #{forward.12} parent=11 // pred_region
        _
      $region20: #{forward.12} parent=11 // pred_fallthru
        _
    $region12: #{forward.12} parent=5 // pred_fallthru
      _
    %p124 = scmp.lt.s32.totalorder %s9, 7
    // Predicated region
    $region21: #{forward.12} parent=5 // pred_check
      %p125 = pneg %p124
    $region22: #{forward.12} parent=5 // pred_check_branch
      %127 = sbr.rel (%p125) target = $region24
    $region23: #{forward.12} parent=5 // pred_region
      // Predicated region
      $region25: #{forward.12} parent=23 // pred_check
        %p128 = pneg %p29
      $region26: #{forward.12} parent=23 // pred_check_branch
        %130 = sbr.rel (%p128) target = $region28
      $region27: #{forward.12} parent=23 // pred_region
        %s131 = smul.u32 64, %s9
        %p132 = scmp.lt.s32.totalorder %s131, 447
        %s133 = scalar_select %p132, %s131, 447
        %s134 = smul.addr %s133, 4
        %s135 = scalar_lea.vmem %s0, %s134
        %s136 = smul.u32 64, %s9
      $region28: #{forward.12} parent=23 // pred_fallthru
        _
    $region24: #{forward.12} parent=5 // pred_fallthru
      _
    %p137 = scmp.le.s32.totalorder 1, %s9
    %p138 = scmp.lt.s32.totalorder %s9, 8
    %p139 = pnand %p137, %p138
    %p140 = pneg %p139
    // Predicated region
    $region29: #{forward.12} parent=5 // pred_check
      _
    $region30: #{forward.12} parent=5 // pred_check_branch
      %142 = sbr.rel (%p139) target = $region32
    $region31: #{forward.12} parent=5 // pred_region
      %s143 = ssub.s32 %s9, 1
      %s144 = smul.u32 64, %s14
      %p145 = scmp.lt.s32.totalorder %s144, 447
      %s146 = scalar_select %p145, %s144, 447
      %s147 = smul.addr %s146, 4
      %s148 = scalar_lea.vmem %s0, %s147
      %p149 = pneg %p35
      %p150 = pneg %p32
      %p151 = pneg %p56
      %p152 = pneg %p53
      %p153 = pneg %p77
      %p154 = pneg %p74
      %p155 = pneg %p103
      %p156 = pneg %p100
      %s157 = smul.u32 64, %s14
      %p158 = scmp.lt.s32.totalorder %s157, 447
      %s159 = scalar_select %p158, %s157, 447
      %s160 = smul.addr %s159, 4
      %s161 = scalar_lea.vmem %s3, %s160
      %s162 = smul.u32 64, %s14
      %p163 = scmp.lt.s32.totalorder %s162, 447
      %s164 = scalar_select %p163, %s162, 447
      %s165 = smul.addr %s164, 4
      %s166 = scalar_lea.vmem %s0, %s165
      %s167 = smul.u32 64, %s14
      %s168 = smul.u32 64, %s14
      %p169 = scmp.lt.s32.totalorder %s168, 447
      %s170 = scalar_select %p169, %s168, 447
      %s171 = smul.addr %s170, 4
      %s172 = scalar_lea.vmem %s3, %s171
      %s173 = smul.u32 64, %s14
      %v174 = vld [vmem:[%s166] sm:$0xf]
      %v175 = vld [vmem:[%s166 + $0x4] sm:$0xf]
      %v176 = vld [vmem:[%s166 + $0x8] sm:$0xf]
      %v177 = vld [vmem:[%s166 + $0xc] sm:$0xf]
      %v178 = vld [vmem:[%s166 + $0x10] sm:$0xf]
      %v179 = vld [vmem:[%s166 + $0x14] sm:$0xf]
      %v180 = vld [vmem:[%s166 + $0x18] sm:$0xf]
      %v181 = vld [vmem:[%s166 + $0x1c] sm:$0xf]
      %v182 = vld [vmem:[%s166 + $0x20] sm:$0xf]
      %v183 = vld [vmem:[%s166 + $0x24] sm:$0xf]
      %v184 = vld [vmem:[%s166 + $0x28] sm:$0xf]
      %v185 = vld [vmem:[%s166 + $0x2c] sm:$0xf]
      %v186 = vld [vmem:[%s166 + $0x30] sm:$0xf]
      %v187 = vld [vmem:[%s166 + $0x34] sm:$0xf]
      %v188 = vld [vmem:[%s166 + $0x38] sm:$0xf]
      %v189 = vld [vmem:[%s166 + $0x3c] sm:$0xf]
      %v190 = vld [vmem:[%s166 + $0x40] sm:$0xf]
      %v191 = vld [vmem:[%s166 + $0x44] sm:$0xf]
      %v192 = vld [vmem:[%s166 + $0x48] sm:$0xf]
      %v193 = vld [vmem:[%s166 + $0x4c] sm:$0xf]
      %v194 = vld [vmem:[%s166 + $0x50] sm:$0xf]
      %v195 = vld [vmem:[%s166 + $0x54] sm:$0xf]
      %v196 = vld [vmem:[%s166 + $0x58] sm:$0xf]
      %v197 = vld [vmem:[%s166 + $0x5c] sm:$0xf]
      %v198 = vld [vmem:[%s166 + $0x60] sm:$0xf]
      %v199 = vld [vmem:[%s166 + $0x64] sm:$0xf]
      %v200 = vld [vmem:[%s166 + $0x68] sm:$0xf]
      %v201 = vld [vmem:[%s166 + $0x6c] sm:$0xf]
      %v202 = vld [vmem:[%s166 + $0x70] sm:$0xf]
      %v203 = vld [vmem:[%s166 + $0x74] sm:$0xf]
      %v204 = vld [vmem:[%s166 + $0x78] sm:$0xf]
      %v205 = vld [vmem:[%s166 + $0x7c] sm:$0xf]
      %v206 = vld [vmem:[%s166 + $0x80] sm:$0xf]
      %v207 = vld [vmem:[%s166 + $0x84] sm:$0xf]
      %v208 = vld [vmem:[%s166 + $0x88] sm:$0xf]
      %v209 = vld [vmem:[%s166 + $0x8c] sm:$0xf]
      %v210 = vld [vmem:[%s166 + $0x90] sm:$0xf]
      %v211 = vld [vmem:[%s166 + $0x94] sm:$0xf]
      %v212 = vld [vmem:[%s166 + $0x98] sm:$0xf]
      %v213 = vld [vmem:[%s166 + $0x9c] sm:$0xf]
      %v214 = vld [vmem:[%s166 + $0xa0] sm:$0xf]
      %v215 = vld [vmem:[%s166 + $0xa4] sm:$0xf]
      %v216 = vld [vmem:[%s166 + $0xa8] sm:$0xf]
      %v217 = vld [vmem:[%s166 + $0xac] sm:$0xf]
      %v218 = vld [vmem:[%s166 + $0xb0] sm:$0xf]
      %v219 = vld [vmem:[%s166 + $0xb4] sm:$0xf]
      %v220 = vld [vmem:[%s166 + $0xb8] sm:$0xf]
      %v221 = vld [vmem:[%s166 + $0xbc] sm:$0xf]
      %v222 = vld [vmem:[%s166 + $0xc0] sm:$0xf]
      %v223 = vld [vmem:[%s166 + $0xc4] sm:$0xf]
      %v224 = vld [vmem:[%s166 + $0xc8] sm:$0xf]
      %v225 = vld [vmem:[%s166 + $0xcc] sm:$0xf]
      %v226 = vld [vmem:[%s166 + $0xd0] sm:$0xf]
      %v227 = vld [vmem:[%s166 + $0xd4] sm:$0xf]
      %v228 = vld [vmem:[%s166 + $0xd8] sm:$0xf]
      %v229 = vld [vmem:[%s166 + $0xdc] sm:$0xf]
      %v230 = vld [vmem:[%s166 + $0xe0] sm:$0xf]
      %v231 = vld [vmem:[%s166 + $0xe4] sm:$0xf]
      %v232 = vld [vmem:[%s166 + $0xe8] sm:$0xf]
      %v233 = vld [vmem:[%s166 + $0xec] sm:$0xf]
      %v234 = vld [vmem:[%s166 + $0xf0] sm:$0xf]
      %v235 = vld [vmem:[%s166 + $0xf4] sm:$0xf]
      %v236 = vld [vmem:[%s166 + $0xf8] sm:$0xf]
      %v237 = vld [vmem:[%s166 + $0xfc] sm:$0xf]
      %v238 = vld [vmem:[%s1] sm:$0xf]
      %v239 = vld [vmem:[%s1 + $0x4] sm:$0xf]
      %v240 = vld [vmem:[%s1 + $0x8] sm:$0xf]
      %v241 = vld [vmem:[%s1 + $0xc] sm:$0xf]
      %v242 = vld [vmem:[%s1 + $0x10] sm:$0xf]
      %v243 = vld [vmem:[%s1 + $0x14] sm:$0xf]
      %v244 = vld [vmem:[%s1 + $0x18] sm:$0xf]
      %v245 = vld [vmem:[%s1 + $0x1c] sm:$0xf]
      %v246 = vld [vmem:[%s1 + $0x20] sm:$0xf]
      %v247 = vld [vmem:[%s1 + $0x24] sm:$0xf]
      %v248 = vld [vmem:[%s1 + $0x28] sm:$0xf]
      %v249 = vld [vmem:[%s1 + $0x2c] sm:$0xf]
      %v250 = vld [vmem:[%s1 + $0x30] sm:$0xf]
      %v251 = vld [vmem:[%s1 + $0x34] sm:$0xf]
      %v252 = vld [vmem:[%s1 + $0x38] sm:$0xf]
      %v253 = vld [vmem:[%s1 + $0x3c] sm:$0xf]
      %v254 = vld [vmem:[%s2] sm:$0x1]
      %v256 = vperm.slane %v254, 0
      %v322 = vunpack.c.l.b16 %v174
      %v323 = vunpack.c.l.b16 %v175
      %v324 = vunpack.c.l.b16 %v176
      %v325 = vunpack.c.l.b16 %v177
      %v326 = vunpack.c.l.b16 %v178
      %v327 = vunpack.c.l.b16 %v179
      %v328 = vunpack.c.l.b16 %v180
      %v329 = vunpack.c.l.b16 %v181
      %v330 = vunpack.c.l.b16 %v182
      %v331 = vunpack.c.l.b16 %v183
      %v332 = vunpack.c.l.b16 %v184
      %v333 = vunpack.c.l.b16 %v185
      %v334 = vunpack.c.l.b16 %v186
      %v335 = vunpack.c.l.b16 %v187
      %v336 = vunpack.c.l.b16 %v188
      %v337 = vunpack.c.l.b16 %v189
      %v338 = vunpack.c.l.b16 %v190
      %v339 = vunpack.c.l.b16 %v191
      %v340 = vunpack.c.l.b16 %v192
      %v341 = vunpack.c.l.b16 %v193
      %v342 = vunpack.c.l.b16 %v194
      %v343 = vunpack.c.l.b16 %v195
      %v344 = vunpack.c.l.b16 %v196
      %v345 = vunpack.c.l.b16 %v197
      %v346 = vunpack.c.l.b16 %v198
      %v347 = vunpack.c.l.b16 %v199
      %v348 = vunpack.c.l.b16 %v200
      %v349 = vunpack.c.l.b16 %v201
      %v350 = vunpack.c.l.b16 %v202
      %v351 = vunpack.c.l.b16 %v203
      %v352 = vunpack.c.l.b16 %v204
      %v353 = vunpack.c.l.b16 %v205
      %v354 = vunpack.c.l.b16 %v206
      %v355 = vunpack.c.l.b16 %v207
      %v356 = vunpack.c.l.b16 %v208
      %v357 = vunpack.c.l.b16 %v209
      %v358 = vunpack.c.l.b16 %v210
      %v359 = vunpack.c.l.b16 %v211
      %v360 = vunpack.c.l.b16 %v212
      %v361 = vunpack.c.l.b16 %v213
      %v362 = vunpack.c.l.b16 %v214
      %v363 = vunpack.c.l.b16 %v215
      %v364 = vunpack.c.l.b16 %v216
      %v365 = vunpack.c.l.b16 %v217
      %v366 = vunpack.c.l.b16 %v218
      %v367 = vunpack.c.l.b16 %v219
      %v368 = vunpack.c.l.b16 %v220
      %v369 = vunpack.c.l.b16 %v221
      %v370 = vunpack.c.l.b16 %v222
      %v371 = vunpack.c.l.b16 %v223
      %v372 = vunpack.c.l.b16 %v224
      %v373 = vunpack.c.l.b16 %v225
      %v374 = vunpack.c.l.b16 %v226
      %v375 = vunpack.c.l.b16 %v227
      %v376 = vunpack.c.l.b16 %v228
      %v377 = vunpack.c.l.b16 %v229
      %v378 = vunpack.c.l.b16 %v230
      %v379 = vunpack.c.l.b16 %v231
      %v380 = vunpack.c.l.b16 %v232
      %v381 = vunpack.c.l.b16 %v233
      %v382 = vunpack.c.l.b16 %v234
      %v383 = vunpack.c.l.b16 %v235
      %v384 = vunpack.c.l.b16 %v236
      %v385 = vunpack.c.l.b16 %v237
      %v386 = vpack.c.b16 %v323, %v322
      %v387 = vpack.c.b16 %v325, %v324
      %v388 = vpack.c.b16 %v327, %v326
      %v389 = vpack.c.b16 %v329, %v328
      %v390 = vpack.c.b16 %v331, %v330
      %v391 = vpack.c.b16 %v333, %v332
      %v392 = vpack.c.b16 %v335, %v334
      %v393 = vpack.c.b16 %v337, %v336
      %v394 = vpack.c.b16 %v339, %v338
      %v395 = vpack.c.b16 %v341, %v340
      %v396 = vpack.c.b16 %v343, %v342
      %v397 = vpack.c.b16 %v345, %v344
      %v398 = vpack.c.b16 %v347, %v346
      %v399 = vpack.c.b16 %v349, %v348
      %v400 = vpack.c.b16 %v351, %v350
      %v401 = vpack.c.b16 %v353, %v352
      %v402 = vpack.c.b16 %v355, %v354
      %v403 = vpack.c.b16 %v357, %v356
      %v404 = vpack.c.b16 %v359, %v358
      %v405 = vpack.c.b16 %v361, %v360
      %v406 = vpack.c.b16 %v363, %v362
      %v407 = vpack.c.b16 %v365, %v364
      %v408 = vpack.c.b16 %v367, %v366
      %v409 = vpack.c.b16 %v369, %v368
      %v410 = vpack.c.b16 %v371, %v370
      %v411 = vpack.c.b16 %v373, %v372
      %v412 = vpack.c.b16 %v375, %v374
      %v413 = vpack.c.b16 %v377, %v376
      %v414 = vpack.c.b16 %v379, %v378
      %v415 = vpack.c.b16 %v381, %v380
      %v416 = vpack.c.b16 %v383, %v382
      %v417 = vpack.c.b16 %v385, %v384
      %v466 = vunpack.c.l.b16 %v238
      %v467 = vunpack.c.l.b16 %v239
      %v468 = vunpack.c.l.b16 %v240
      %v469 = vunpack.c.l.b16 %v241
      %v470 = vunpack.c.l.b16 %v242
      %v471 = vunpack.c.l.b16 %v243
      %v472 = vunpack.c.l.b16 %v244
      %v473 = vunpack.c.l.b16 %v245
      %v474 = vunpack.c.l.b16 %v246
      %v475 = vunpack.c.l.b16 %v247
      %v476 = vunpack.c.l.b16 %v248
      %v477 = vunpack.c.l.b16 %v249
      %v478 = vunpack.c.l.b16 %v250
      %v479 = vunpack.c.l.b16 %v251
      %v480 = vunpack.c.l.b16 %v252
      %v481 = vunpack.c.l.b16 %v253
      %v482 = vpack.c.b16 %v467, %v466
      %v483 = vpack.c.b16 %v469, %v468
      %v484 = vpack.c.b16 %v471, %v470
      %v485 = vpack.c.b16 %v473, %v472
      %v486 = vpack.c.b16 %v475, %v474
      %v487 = vpack.c.b16 %v477, %v476
      %v488 = vpack.c.b16 %v479, %v478
      %v489 = vpack.c.b16 %v481, %v480
      %498 = vmatpush.bf16.msra.mxu0 %v489
      %499 = vmatpush.bf16.msra.mxu0 %v488
      %500 = vmatpush.bf16.msra.mxu0 %v487
      %501 = vmatpush.bf16.msra.mxu0 %v486
      %502 = vmatpush.bf16.msra.mxu0 %v485
      %503 = vmatpush.bf16.msra.mxu0 %v484
      %504 = vmatpush.bf16.msra.mxu0 %v483
      %505 = vmatpush.bf16.msra.mxu0 %v482
      %506 = vmatmul.bf16.gmra.mxu0 %v386
      %v507 = vpop.f32.mrf.mxu0
      %v508 = vadd.f32 %v256, %v507
      %v509 = vpop.f32.mrf.mxu0
      %v510 = vadd.f32 %v256, %v509
      %511 = vmatmul.bf16.gmra.mxu0 %v387
      %v512 = vpop.f32.mrf.mxu0
      %v513 = vadd.f32 %v256, %v512
      %v514 = vpop.f32.mrf.mxu0
      %v515 = vadd.f32 %v256, %v514
      %516 = vmatmul.bf16.gmra.mxu0 %v388
      %v517 = vpop.f32.mrf.mxu0
      %v518 = vadd.f32 %v256, %v517
      %v519 = vpop.f32.mrf.mxu0
      %v520 = vadd.f32 %v256, %v519
      %521 = vmatmul.bf16.gmra.mxu0 %v389
      %v522 = vpop.f32.mrf.mxu0
      %v523 = vadd.f32 %v256, %v522
      %v524 = vpop.f32.mrf.mxu0
      %v525 = vadd.f32 %v256, %v524
      %526 = vmatmul.bf16.gmra.mxu0 %v390
      %v527 = vpop.f32.mrf.mxu0
      %v528 = vadd.f32 %v256, %v527
      %v529 = vpop.f32.mrf.mxu0
      %v530 = vadd.f32 %v256, %v529
      %531 = vmatmul.bf16.gmra.mxu0 %v391
      %v532 = vpop.f32.mrf.mxu0
      %v533 = vadd.f32 %v256, %v532
      %v534 = vpop.f32.mrf.mxu0
      %v535 = vadd.f32 %v256, %v534
      %536 = vmatmul.bf16.gmra.mxu0 %v392
      %v537 = vpop.f32.mrf.mxu0
      %v538 = vadd.f32 %v256, %v537
      %v539 = vpop.f32.mrf.mxu0
      %v540 = vadd.f32 %v256, %v539
      %541 = vmatmul.bf16.gmra.mxu0 %v393
      %v542 = vpop.f32.mrf.mxu0
      %v543 = vadd.f32 %v256, %v542
      %v544 = vpop.f32.mrf.mxu0
      %v545 = vadd.f32 %v256, %v544
      %546 = vmatmul.bf16.gmra.mxu0 %v394
      %v547 = vpop.f32.mrf.mxu0
      %v548 = vadd.f32 %v256, %v547
      %v549 = vpop.f32.mrf.mxu0
      %v550 = vadd.f32 %v256, %v549
      %551 = vmatmul.bf16.gmra.mxu0 %v395
      %v552 = vpop.f32.mrf.mxu0
      %v553 = vadd.f32 %v256, %v552
      %v554 = vpop.f32.mrf.mxu0
      %v555 = vadd.f32 %v256, %v554
      %556 = vmatmul.bf16.gmra.mxu0 %v396
      %v557 = vpop.f32.mrf.mxu0
      %v558 = vadd.f32 %v256, %v557
      %v559 = vpop.f32.mrf.mxu0
      %v560 = vadd.f32 %v256, %v559
      %561 = vmatmul.bf16.gmra.mxu0 %v397
      %v562 = vpop.f32.mrf.mxu0
      %v563 = vadd.f32 %v256, %v562
      %v564 = vpop.f32.mrf.mxu0
      %v565 = vadd.f32 %v256, %v564
      %566 = vmatmul.bf16.gmra.mxu0 %v398
      %v567 = vpop.f32.mrf.mxu0
      %v568 = vadd.f32 %v256, %v567
      %v569 = vpop.f32.mrf.mxu0
      %v570 = vadd.f32 %v256, %v569
      %571 = vmatmul.bf16.gmra.mxu0 %v399
      %v572 = vpop.f32.mrf.mxu0
      %v573 = vadd.f32 %v256, %v572
      %v574 = vpop.f32.mrf.mxu0
      %v575 = vadd.f32 %v256, %v574
      %576 = vmatmul.bf16.gmra.mxu0 %v400
      %v577 = vpop.f32.mrf.mxu0
      %v578 = vadd.f32 %v256, %v577
      %v579 = vpop.f32.mrf.mxu0
      %v580 = vadd.f32 %v256, %v579
      %581 = vmatmul.bf16.gmra.mxu0 %v401
      %v582 = vpop.f32.mrf.mxu0
      %v583 = vadd.f32 %v256, %v582
      %v584 = vpop.f32.mrf.mxu0
      %v585 = vadd.f32 %v256, %v584
      %586 = vmatmul.bf16.gmra.mxu0 %v402
      %v587 = vpop.f32.mrf.mxu0
      %v588 = vadd.f32 %v256, %v587
      %v589 = vpop.f32.mrf.mxu0
      %v590 = vadd.f32 %v256, %v589
      %591 = vmatmul.bf16.gmra.mxu0 %v403
      %v592 = vpop.f32.mrf.mxu0
      %v593 = vadd.f32 %v256, %v592
      %v594 = vpop.f32.mrf.mxu0
      %v595 = vadd.f32 %v256, %v594
      %596 = vmatmul.bf16.gmra.mxu0 %v404
      %v597 = vpop.f32.mrf.mxu0
      %v598 = vadd.f32 %v256, %v597
      %v599 = vpop.f32.mrf.mxu0
      %v600 = vadd.f32 %v256, %v599
      %601 = vmatmul.bf16.gmra.mxu0 %v405
      %v602 = vpop.f32.mrf.mxu0
      %v603 = vadd.f32 %v256, %v602
      %v604 = vpop.f32.mrf.mxu0
      %v605 = vadd.f32 %v256, %v604
      %606 = vmatmul.bf16.gmra.mxu0 %v406
      %v607 = vpop.f32.mrf.mxu0
      %v608 = vadd.f32 %v256, %v607
      %v609 = vpop.f32.mrf.mxu0
      %v610 = vadd.f32 %v256, %v609
      %611 = vmatmul.bf16.gmra.mxu0 %v407
      %v612 = vpop.f32.mrf.mxu0
      %v613 = vadd.f32 %v256, %v612
      %v614 = vpop.f32.mrf.mxu0
      %v615 = vadd.f32 %v256, %v614
      %616 = vmatmul.bf16.gmra.mxu0 %v408
      %v617 = vpop.f32.mrf.mxu0
      %v618 = vadd.f32 %v256, %v617
      %v619 = vpop.f32.mrf.mxu0
      %v620 = vadd.f32 %v256, %v619
      %621 = vmatmul.bf16.gmra.mxu0 %v409
      %v622 = vpop.f32.mrf.mxu0
      %v623 = vadd.f32 %v256, %v622
      %v624 = vpop.f32.mrf.mxu0
      %v625 = vadd.f32 %v256, %v624
      %626 = vmatmul.bf16.gmra.mxu0 %v410
      %v627 = vpop.f32.mrf.mxu0
      %v628 = vadd.f32 %v256, %v627
      %v629 = vpop.f32.mrf.mxu0
      %v630 = vadd.f32 %v256, %v629
      %631 = vmatmul.bf16.gmra.mxu0 %v411
      %v632 = vpop.f32.mrf.mxu0
      %v633 = vadd.f32 %v256, %v632
      %v634 = vpop.f32.mrf.mxu0
      %v635 = vadd.f32 %v256, %v634
      %636 = vmatmul.bf16.gmra.mxu0 %v412
      %v637 = vpop.f32.mrf.mxu0
      %v638 = vadd.f32 %v256, %v637
      %v639 = vpop.f32.mrf.mxu0
      %v640 = vadd.f32 %v256, %v639
      %641 = vmatmul.bf16.gmra.mxu0 %v413
      %v642 = vpop.f32.mrf.mxu0
      %v643 = vadd.f32 %v256, %v642
      %v644 = vpop.f32.mrf.mxu0
      %v645 = vadd.f32 %v256, %v644
      %646 = vmatmul.bf16.gmra.mxu0 %v414
      %v647 = vpop.f32.mrf.mxu0
      %v648 = vadd.f32 %v256, %v647
      %v649 = vpop.f32.mrf.mxu0
      %v650 = vadd.f32 %v256, %v649
      %651 = vmatmul.bf16.gmra.mxu0 %v415
      %v652 = vpop.f32.mrf.mxu0
      %v653 = vadd.f32 %v256, %v652
      %v654 = vpop.f32.mrf.mxu0
      %v655 = vadd.f32 %v256, %v654
      %656 = vmatmul.bf16.gmra.mxu0 %v416
      %v657 = vpop.f32.mrf.mxu0
      %v658 = vadd.f32 %v256, %v657
      %v659 = vpop.f32.mrf.mxu0
      %v660 = vadd.f32 %v256, %v659
      %661 = vmatmul.bf16.gmra.mxu0 %v417
      %v662 = vpop.f32.mrf.mxu0
      %v663 = vadd.f32 %v256, %v662
      %v664 = vpop.f32.mrf.mxu0
      %v665 = vadd.f32 %v256, %v664
      %666 = vdwg.mxu0
      %vm667 = vcmp.gt.f32.partialorder %v508, 0.0
      %vm668 = vcmp.gt.f32.partialorder %v510, 0.0
      %vm669 = vcmp.gt.f32.partialorder %v513, 0.0
      %vm670 = vcmp.gt.f32.partialorder %v515, 0.0
      %vm671 = vcmp.gt.f32.partialorder %v518, 0.0
      %vm672 = vcmp.gt.f32.partialorder %v520, 0.0
      %vm673 = vcmp.gt.f32.partialorder %v523, 0.0
      %vm674 = vcmp.gt.f32.partialorder %v525, 0.0
      %vm675 = vcmp.gt.f32.partialorder %v528, 0.0
      %vm676 = vcmp.gt.f32.partialorder %v530, 0.0
      %vm677 = vcmp.gt.f32.partialorder %v533, 0.0
      %vm678 = vcmp.gt.f32.partialorder %v535, 0.0
      %vm679 = vcmp.gt.f32.partialorder %v538, 0.0
      %vm680 = vcmp.gt.f32.partialorder %v540, 0.0
      %vm681 = vcmp.gt.f32.partialorder %v543, 0.0
      %vm682 = vcmp.gt.f32.partialorder %v545, 0.0
      %vm683 = vcmp.gt.f32.partialorder %v548, 0.0
      %vm684 = vcmp.gt.f32.partialorder %v550, 0.0
      %vm685 = vcmp.gt.f32.partialorder %v553, 0.0
      %vm686 = vcmp.gt.f32.partialorder %v555, 0.0
      %vm687 = vcmp.gt.f32.partialorder %v558, 0.0
      %vm688 = vcmp.gt.f32.partialorder %v560, 0.0
      %vm689 = vcmp.gt.f32.partialorder %v563, 0.0
      %vm690 = vcmp.gt.f32.partialorder %v565, 0.0
      %vm691 = vcmp.gt.f32.partialorder %v568, 0.0
      %vm692 = vcmp.gt.f32.partialorder %v570, 0.0
      %vm693 = vcmp.gt.f32.partialorder %v573, 0.0
      %vm694 = vcmp.gt.f32.partialorder %v575, 0.0
      %vm695 = vcmp.gt.f32.partialorder %v578, 0.0
      %vm696 = vcmp.gt.f32.partialorder %v580, 0.0
      %vm697 = vcmp.gt.f32.partialorder %v583, 0.0
      %vm698 = vcmp.gt.f32.partialorder %v585, 0.0
      %vm699 = vcmp.gt.f32.partialorder %v588, 0.0
      %vm700 = vcmp.gt.f32.partialorder %v590, 0.0
      %vm701 = vcmp.gt.f32.partialorder %v593, 0.0
      %vm702 = vcmp.gt.f32.partialorder %v595, 0.0
      %vm703 = vcmp.gt.f32.partialorder %v598, 0.0
      %vm704 = vcmp.gt.f32.partialorder %v600, 0.0
      %vm705 = vcmp.gt.f32.partialorder %v603, 0.0
      %vm706 = vcmp.gt.f32.partialorder %v605, 0.0
      %vm707 = vcmp.gt.f32.partialorder %v608, 0.0
      %vm708 = vcmp.gt.f32.partialorder %v610, 0.0
      %vm709 = vcmp.gt.f32.partialorder %v613, 0.0
      %vm710 = vcmp.gt.f32.partialorder %v615, 0.0
      %vm711 = vcmp.gt.f32.partialorder %v618, 0.0
      %vm712 = vcmp.gt.f32.partialorder %v620, 0.0
      %vm713 = vcmp.gt.f32.partialorder %v623, 0.0
      %vm714 = vcmp.gt.f32.partialorder %v625, 0.0
      %vm715 = vcmp.gt.f32.partialorder %v628, 0.0
      %vm716 = vcmp.gt.f32.partialorder %v630, 0.0
      %vm717 = vcmp.gt.f32.partialorder %v633, 0.0
      %vm718 = vcmp.gt.f32.partialorder %v635, 0.0
      %vm719 = vcmp.gt.f32.partialorder %v638, 0.0
      %vm720 = vcmp.gt.f32.partialorder %v640, 0.0
      %vm721 = vcmp.gt.f32.partialorder %v643, 0.0
      %vm722 = vcmp.gt.f32.partialorder %v645, 0.0
      %vm723 = vcmp.gt.f32.partialorder %v648, 0.0
      %vm724 = vcmp.gt.f32.partialorder %v650, 0.0
      %vm725 = vcmp.gt.f32.partialorder %v653, 0.0
      %vm726 = vcmp.gt.f32.partialorder %v655, 0.0
      %vm727 = vcmp.gt.f32.partialorder %v658, 0.0
      %vm728 = vcmp.gt.f32.partialorder %v660, 0.0
      %vm729 = vcmp.gt.f32.partialorder %v663, 0.0
      %vm730 = vcmp.gt.f32.partialorder %v665, 0.0
      %v731 = vmul.f32 %v508, 0.1
      %v732 = vmul.f32 %v510, 0.1
      %v733 = vmul.f32 %v513, 0.1
      %v734 = vmul.f32 %v515, 0.1
      %v735 = vmul.f32 %v518, 0.1
      %v736 = vmul.f32 %v520, 0.1
      %v737 = vmul.f32 %v523, 0.1
      %v738 = vmul.f32 %v525, 0.1
      %v739 = vmul.f32 %v528, 0.1
      %v740 = vmul.f32 %v530, 0.1
      %v741 = vmul.f32 %v533, 0.1
      %v742 = vmul.f32 %v535, 0.1
      %v743 = vmul.f32 %v538, 0.1
      %v744 = vmul.f32 %v540, 0.1
      %v745 = vmul.f32 %v543, 0.1
      %v746 = vmul.f32 %v545, 0.1
      %v747 = vmul.f32 %v548, 0.1
      %v748 = vmul.f32 %v550, 0.1
      %v749 = vmul.f32 %v553, 0.1
      %v750 = vmul.f32 %v555, 0.1
      %v751 = vmul.f32 %v558, 0.1
      %v752 = vmul.f32 %v560, 0.1
      %v753 = vmul.f32 %v563, 0.1
      %v754 = vmul.f32 %v565, 0.1
      %v755 = vmul.f32 %v568, 0.1
      %v756 = vmul.f32 %v570, 0.1
      %v757 = vmul.f32 %v573, 0.1
      %v758 = vmul.f32 %v575, 0.1
      %v759 = vmul.f32 %v578, 0.1
      %v760 = vmul.f32 %v580, 0.1
      %v761 = vmul.f32 %v583, 0.1
      %v762 = vmul.f32 %v585, 0.1
      %v763 = vmul.f32 %v588, 0.1
      %v764 = vmul.f32 %v590, 0.1
      %v765 = vmul.f32 %v593, 0.1
      %v766 = vmul.f32 %v595, 0.1
      %v767 = vmul.f32 %v598, 0.1
      %v768 = vmul.f32 %v600, 0.1
      %v769 = vmul.f32 %v603, 0.1
      %v770 = vmul.f32 %v605, 0.1
      %v771 = vmul.f32 %v608, 0.1
      %v772 = vmul.f32 %v610, 0.1
      %v773 = vmul.f32 %v613, 0.1
      %v774 = vmul.f32 %v615, 0.1
      %v775 = vmul.f32 %v618, 0.1
      %v776 = vmul.f32 %v620, 0.1
      %v777 = vmul.f32 %v623, 0.1
      %v778 = vmul.f32 %v625, 0.1
      %v779 = vmul.f32 %v628, 0.1
      %v780 = vmul.f32 %v630, 0.1
      %v781 = vmul.f32 %v633, 0.1
      %v782 = vmul.f32 %v635, 0.1
      %v783 = vmul.f32 %v638, 0.1
      %v784 = vmul.f32 %v640, 0.1
      %v785 = vmul.f32 %v643, 0.1
      %v786 = vmul.f32 %v645, 0.1
      %v787 = vmul.f32 %v648, 0.1
      %v788 = vmul.f32 %v650, 0.1
      %v789 = vmul.f32 %v653, 0.1
      %v790 = vmul.f32 %v655, 0.1
      %v791 = vmul.f32 %v658, 0.1
      %v792 = vmul.f32 %v660, 0.1
      %v793 = vmul.f32 %v663, 0.1
      %v794 = vmul.f32 %v665, 0.1
      %v795 = vsel %vm667, %v508, %v731
      %v796 = vsel %vm668, %v510, %v732
      %v797 = vsel %vm669, %v513, %v733
      %v798 = vsel %vm670, %v515, %v734
      %v799 = vsel %vm671, %v518, %v735
      %v800 = vsel %vm672, %v520, %v736
      %v801 = vsel %vm673, %v523, %v737
      %v802 = vsel %vm674, %v525, %v738
      %v803 = vsel %vm675, %v528, %v739
      %v804 = vsel %vm676, %v530, %v740
      %v805 = vsel %vm677, %v533, %v741
      %v806 = vsel %vm678, %v535, %v742
      %v807 = vsel %vm679, %v538, %v743
      %v808 = vsel %vm680, %v540, %v744
      %v809 = vsel %vm681, %v543, %v745
      %v810 = vsel %vm682, %v545, %v746
      %v811 = vsel %vm683, %v548, %v747
      %v812 = vsel %vm684, %v550, %v748
      %v813 = vsel %vm685, %v553, %v749
      %v814 = vsel %vm686, %v555, %v750
      %v815 = vsel %vm687, %v558, %v751
      %v816 = vsel %vm688, %v560, %v752
      %v817 = vsel %vm689, %v563, %v753
      %v818 = vsel %vm690, %v565, %v754
      %v819 = vsel %vm691, %v568, %v755
      %v820 = vsel %vm692, %v570, %v756
      %v821 = vsel %vm693, %v573, %v757
      %v822 = vsel %vm694, %v575, %v758
      %v823 = vsel %vm695, %v578, %v759
      %v824 = vsel %vm696, %v580, %v760
      %v825 = vsel %vm697, %v583, %v761
      %v826 = vsel %vm698, %v585, %v762
      %v827 = vsel %vm699, %v588, %v763
      %v828 = vsel %vm700, %v590, %v764
      %v829 = vsel %vm701, %v593, %v765
      %v830 = vsel %vm702, %v595, %v766
      %v831 = vsel %vm703, %v598, %v767
      %v832 = vsel %vm704, %v600, %v768
      %v833 = vsel %vm705, %v603, %v769
      %v834 = vsel %vm706, %v605, %v770
      %v835 = vsel %vm707, %v608, %v771
      %v836 = vsel %vm708, %v610, %v772
      %v837 = vsel %vm709, %v613, %v773
      %v838 = vsel %vm710, %v615, %v774
      %v839 = vsel %vm711, %v618, %v775
      %v840 = vsel %vm712, %v620, %v776
      %v841 = vsel %vm713, %v623, %v777
      %v842 = vsel %vm714, %v625, %v778
      %v843 = vsel %vm715, %v628, %v779
      %v844 = vsel %vm716, %v630, %v780
      %v845 = vsel %vm717, %v633, %v781
      %v846 = vsel %vm718, %v635, %v782
      %v847 = vsel %vm719, %v638, %v783
      %v848 = vsel %vm720, %v640, %v784
      %v849 = vsel %vm721, %v643, %v785
      %v850 = vsel %vm722, %v645, %v786
      %v851 = vsel %vm723, %v648, %v787
      %v852 = vsel %vm724, %v650, %v788
      %v853 = vsel %vm725, %v653, %v789
      %v854 = vsel %vm726, %v655, %v790
      %v855 = vsel %vm727, %v658, %v791
      %v856 = vsel %vm728, %v660, %v792
      %v857 = vsel %vm729, %v663, %v793
      %v858 = vsel %vm730, %v665, %v794
      %v859 = vpack.c.bf16 %v795, %v795
      %v860 = vpack.c.bf16 %v796, %v796
      %v861 = vpack.c.bf16 %v797, %v797
      %v862 = vpack.c.bf16 %v798, %v798
      %v863 = vpack.c.bf16 %v799, %v799
      %v864 = vpack.c.bf16 %v800, %v800
      %v865 = vpack.c.bf16 %v801, %v801
      %v866 = vpack.c.bf16 %v802, %v802
      %v867 = vpack.c.bf16 %v803, %v803
      %v868 = vpack.c.bf16 %v804, %v804
      %v869 = vpack.c.bf16 %v805, %v805
      %v870 = vpack.c.bf16 %v806, %v806
      %v871 = vpack.c.bf16 %v807, %v807
      %v872 = vpack.c.bf16 %v808, %v808
      %v873 = vpack.c.bf16 %v809, %v809
      %v874 = vpack.c.bf16 %v810, %v810
      %v875 = vpack.c.bf16 %v811, %v811
      %v876 = vpack.c.bf16 %v812, %v812
      %v877 = vpack.c.bf16 %v813, %v813
      %v878 = vpack.c.bf16 %v814, %v814
      %v879 = vpack.c.bf16 %v815, %v815
      %v880 = vpack.c.bf16 %v816, %v816
      %v881 = vpack.c.bf16 %v817, %v817
      %v882 = vpack.c.bf16 %v818, %v818
      %v883 = vpack.c.bf16 %v819, %v819
      %v884 = vpack.c.bf16 %v820, %v820
      %v885 = vpack.c.bf16 %v821, %v821
      %v886 = vpack.c.bf16 %v822, %v822
      %v887 = vpack.c.bf16 %v823, %v823
      %v888 = vpack.c.bf16 %v824, %v824
      %v889 = vpack.c.bf16 %v825, %v825
      %v890 = vpack.c.bf16 %v826, %v826
      %v891 = vpack.c.bf16 %v827, %v827
      %v892 = vpack.c.bf16 %v828, %v828
      %v893 = vpack.c.bf16 %v829, %v829
      %v894 = vpack.c.bf16 %v830, %v830
      %v895 = vpack.c.bf16 %v831, %v831
      %v896 = vpack.c.bf16 %v832, %v832
      %v897 = vpack.c.bf16 %v833, %v833
      %v898 = vpack.c.bf16 %v834, %v834
      %v899 = vpack.c.bf16 %v835, %v835
      %v900 = vpack.c.bf16 %v836, %v836
      %v901 = vpack.c.bf16 %v837, %v837
      %v902 = vpack.c.bf16 %v838, %v838
      %v903 = vpack.c.bf16 %v839, %v839
      %v904 = vpack.c.bf16 %v840, %v840
      %v905 = vpack.c.bf16 %v841, %v841
      %v906 = vpack.c.bf16 %v842, %v842
      %v907 = vpack.c.bf16 %v843, %v843
      %v908 = vpack.c.bf16 %v844, %v844
      %v909 = vpack.c.bf16 %v845, %v845
      %v910 = vpack.c.bf16 %v846, %v846
      %v911 = vpack.c.bf16 %v847, %v847
      %v912 = vpack.c.bf16 %v848, %v848
      %v913 = vpack.c.bf16 %v849, %v849
      %v914 = vpack.c.bf16 %v850, %v850
      %v915 = vpack.c.bf16 %v851, %v851
      %v916 = vpack.c.bf16 %v852, %v852
      %v917 = vpack.c.bf16 %v853, %v853
      %v918 = vpack.c.bf16 %v854, %v854
      %v919 = vpack.c.bf16 %v855, %v855
      %v920 = vpack.c.bf16 %v856, %v856
      %v921 = vpack.c.bf16 %v857, %v857
      %v922 = vpack.c.bf16 %v858, %v858
      %923 = vst [vmem:[%s172] sm:$0xf] %v859
      %924 = vst [vmem:[%s172 + $0x4] sm:$0xf] %v860
      %925 = vst [vmem:[%s172 + $0x8] sm:$0xf] %v861
      %926 = vst [vmem:[%s172 + $0xc] sm:$0xf] %v862
      %927 = vst [vmem:[%s172 + $0x10] sm:$0xf] %v863
      %928 = vst [vmem:[%s172 + $0x14] sm:$0xf] %v864
      %929 = vst [vmem:[%s172 + $0x18] sm:$0xf] %v865
      %930 = vst [vmem:[%s172 + $0x1c] sm:$0xf] %v866
      %931 = vst [vmem:[%s172 + $0x20] sm:$0xf] %v867
      %932 = vst [vmem:[%s172 + $0x24] sm:$0xf] %v868
      %933 = vst [vmem:[%s172 + $0x28] sm:$0xf] %v869
      %934 = vst [vmem:[%s172 + $0x2c] sm:$0xf] %v870
      %935 = vst [vmem:[%s172 + $0x30] sm:$0xf] %v871
      %936 = vst [vmem:[%s172 + $0x34] sm:$0xf] %v872
      %937 = vst [vmem:[%s172 + $0x38] sm:$0xf] %v873
      %938 = vst [vmem:[%s172 + $0x3c] sm:$0xf] %v874
      %939 = vst [vmem:[%s172 + $0x40] sm:$0xf] %v875
      %940 = vst [vmem:[%s172 + $0x44] sm:$0xf] %v876
      %941 = vst [vmem:[%s172 + $0x48] sm:$0xf] %v877
      %942 = vst [vmem:[%s172 + $0x4c] sm:$0xf] %v878
      %943 = vst [vmem:[%s172 + $0x50] sm:$0xf] %v879
      %944 = vst [vmem:[%s172 + $0x54] sm:$0xf] %v880
      %945 = vst [vmem:[%s172 + $0x58] sm:$0xf] %v881
      %946 = vst [vmem:[%s172 + $0x5c] sm:$0xf] %v882
      %947 = vst [vmem:[%s172 + $0x60] sm:$0xf] %v883
      %948 = vst [vmem:[%s172 + $0x64] sm:$0xf] %v884
      %949 = vst [vmem:[%s172 + $0x68] sm:$0xf] %v885
      %950 = vst [vmem:[%s172 + $0x6c] sm:$0xf] %v886
      %951 = vst [vmem:[%s172 + $0x70] sm:$0xf] %v887
      %952 = vst [vmem:[%s172 + $0x74] sm:$0xf] %v888
      %953 = vst [vmem:[%s172 + $0x78] sm:$0xf] %v889
      %954 = vst [vmem:[%s172 + $0x7c] sm:$0xf] %v890
      %955 = vst [vmem:[%s172 + $0x80] sm:$0xf] %v891
      %956 = vst [vmem:[%s172 + $0x84] sm:$0xf] %v892
      %957 = vst [vmem:[%s172 + $0x88] sm:$0xf] %v893
      %958 = vst [vmem:[%s172 + $0x8c] sm:$0xf] %v894
      %959 = vst [vmem:[%s172 + $0x90] sm:$0xf] %v895
      %960 = vst [vmem:[%s172 + $0x94] sm:$0xf] %v896
      %961 = vst [vmem:[%s172 + $0x98] sm:$0xf] %v897
      %962 = vst [vmem:[%s172 + $0x9c] sm:$0xf] %v898
      %963 = vst [vmem:[%s172 + $0xa0] sm:$0xf] %v899
      %964 = vst [vmem:[%s172 + $0xa4] sm:$0xf] %v900
      %965 = vst [vmem:[%s172 + $0xa8] sm:$0xf] %v901
      %966 = vst [vmem:[%s172 + $0xac] sm:$0xf] %v902
      %967 = vst [vmem:[%s172 + $0xb0] sm:$0xf] %v903
      %968 = vst [vmem:[%s172 + $0xb4] sm:$0xf] %v904
      %969 = vst [vmem:[%s172 + $0xb8] sm:$0xf] %v905
      %970 = vst [vmem:[%s172 + $0xbc] sm:$0xf] %v906
      %971 = vst [vmem:[%s172 + $0xc0] sm:$0xf] %v907
      %972 = vst [vmem:[%s172 + $0xc4] sm:$0xf] %v908
      %973 = vst [vmem:[%s172 + $0xc8] sm:$0xf] %v909
      %974 = vst [vmem:[%s172 + $0xcc] sm:$0xf] %v910
      %975 = vst [vmem:[%s172 + $0xd0] sm:$0xf] %v911
      %976 = vst [vmem:[%s172 + $0xd4] sm:$0xf] %v912
      %977 = vst [vmem:[%s172 + $0xd8] sm:$0xf] %v913
      %978 = vst [vmem:[%s172 + $0xdc] sm:$0xf] %v914
      %979 = vst [vmem:[%s172 + $0xe0] sm:$0xf] %v915
      %980 = vst [vmem:[%s172 + $0xe4] sm:$0xf] %v916
      %981 = vst [vmem:[%s172 + $0xe8] sm:$0xf] %v917
      %982 = vst [vmem:[%s172 + $0xec] sm:$0xf] %v918
      %983 = vst [vmem:[%s172 + $0xf0] sm:$0xf] %v919
      %984 = vst [vmem:[%s172 + $0xf4] sm:$0xf] %v920
      %985 = vst [vmem:[%s172 + $0xf8] sm:$0xf] %v921
      %986 = vst [vmem:[%s172 + $0xfc] sm:$0xf] %v922
      %s987 = smul.u32 64, %s14
      %p988 = scmp.lt.s32.totalorder %s987, 447
      %s989 = scalar_select %p988, %s987, 447
      %s990 = smul.addr %s989, 4
      %s991 = scalar_lea.vmem %s3, %s990
      // Predicated region
      $region33: #{forward.12} parent=31 // pred_check
        %p992 = pneg %p100
      $region34: #{forward.12} parent=31 // pred_check_branch
        %994 = sbr.rel (%p992) target = $region36
      $region35: #{forward.12} parent=31 // pred_region
        %s995 = smul.u32 64, %s14
      $region36: #{forward.12} parent=31 // pred_fallthru
        _
    $region32: #{forward.12} parent=5 // pred_fallthru
      _
    %p996 = scmp.le.s32.totalorder 2, %s9
    // Predicated region
    $region37: #{forward.12} parent=5 // pred_check
      %p997 = pneg %p996
    $region38: #{forward.12} parent=5 // pred_check_branch
      %999 = sbr.rel (%p997) target = $region40
    $region39: #{forward.12} parent=5 // pred_region
      %s1000 = ssub.s32 %s9, 2
      // Predicated region
      $region41: #{forward.12} parent=39 // pred_check
        %p1001 = pneg %p106
      $region42: #{forward.12} parent=39 // pred_check_branch
        %1003 = sbr.rel (%p1001) target = $region44
      $region43: #{forward.12} parent=39 // pred_region
        %s1004 = smul.u32 64, %s15
        %p1005 = scmp.lt.s32.totalorder %s1004, 447
        %s1006 = scalar_select %p1005, %s1004, 447
        %s1007 = smul.addr %s1006, 4
        %s1008 = scalar_lea.vmem %s3, %s1007
      $region44: #{forward.12} parent=39 // pred_fallthru
        _
    $region40: #{forward.12} parent=5 // pred_fallthru
      _
  $region6: #{forward.12} parent=0 // loop_footer
    %s13 = sadd.s32 1, %s9
  $region7: #{forward.12} parent=0 // loop_footer_branch
    %8 = sbr.rel target = $region3
  $region8: #{forward.12} parent=0 // loop_exit
    _

// kernel: forward.13
$region0: #{forward.13}
  #allocation0 [shape = 'u32[]', space=smem, size = 0x4, offset = 0x4, fixed_abs, tag = 'smem constant byte address 0x4 - core index']
  #allocation1 [shape = 'u32[72,128]{1,0:T(1,128)}', space=vmem, size = 0x9000, scoped, tag = 'internal scratch']
  %s0 = inlined_call_operand.vmem [shape: bf16[1024,128], index: 0, kind: input, shape index: {}]
  %s1 = inlined_call_operand.vmem [shape: bf16[128,128], index: 1, kind: input, shape index: {}]
  %s2 = inlined_call_operand.vmem [shape: f32[1,128], index: 2, kind: input, shape index: {}]
  %s3 = inlined_call_operand.vmem [shape: bf16[1024,128], index: 3, kind: output, shape index: {}]
  %s4 = sld [smem:[#allocation0]]
  $region45: #{forward.13} parent=0
    _
  %s6 = ssub.s32 1, %s4
  %s7 = scalar_select 0, %s6, %s4
  loop: start=0, step=1, limit=4
  $region2: #{forward.13} parent=0 // loop_pre_header
    _
  $region3: #{forward.13} parent=0 // loop_header
    %s9 = sphi 0, %s13
    %p10 = scmp.ge.s32.totalorder %s9, 4
    %s19 = sphi 0, %s21
    %s22 = sphi 0, %s19
    %s23 = sphi 0, %s22
    %s39 = sphi 0, %s23
    %s43 = sphi 0, %s43
    %s45 = sphi 0, %s43
    %s46 = sphi 0, %s45
    %s60 = sphi 0, %s46
    %s64 = sphi 0, %s64
    %s66 = sphi 0, %s64
    %s67 = sphi 0, %s66
    %s81 = sphi 0, %s67
    %s87 = sphi 0, %s89
    %s90 = sphi 0, %s87
    %s91 = sphi 0, %s90
    %s107 = sphi 0, %s91
  $region4: #{forward.13} parent=0 // loop_header_branch
    %12 = sbr.rel (%p10) target = $region8
  $region5: #{forward.13} parent=0 // loop_body
    %s14 = ssub.s32 %s9, 1
    %s15 = ssub.s32 %s9, 2
    %s16 = sadd.s32 %s9, 1
    %s17 = ssub.s32 %s9, %s16
    %p18 = scmp.eq.s32.totalorder %s17, 0
    %s20 = sadd.s32 %s19, 1
    %s21 = scalar_select %p18, %s19, %s20
    %p24 = pneg %p18
    %p25 = scmp.eq.s32.totalorder %s9, 1
    %p26 = por %p24, %p25
    %p27 = scmp.ne.s32.totalorder %s19, %s22
    %p28 = scmp.eq.s32.totalorder %s9, 0
    %p29 = por %p27, %p28
    %p30 = scmp.ne.s32.totalorder %s19, %s22
    %p31 = scmp.eq.s32.totalorder %s14, 1
    %p32 = por %p30, %p31
    %p33 = scmp.ne.s32.totalorder %s22, %s23
    %p34 = scmp.eq.s32.totalorder %s14, 0
    %p35 = por %p33, %p34
    %p36 = scmp.ne.s32.totalorder %s22, %s23
    %p37 = scmp.eq.s32.totalorder %s15, 1
    %p38 = por %p36, %p37
    %p40 = scmp.ne.s32.totalorder %s23, %s39
    %p41 = scmp.eq.s32.totalorder %s15, 0
    %p42 = por %p40, %p41
    %s44 = sadd.s32 %s43, 1
    %p47 = scmp.eq.s32.totalorder %s9, 1
    %p48 = scmp.ne.s32.totalorder %s43, %s45
    %p49 = scmp.eq.s32.totalorder %s9, 0
    %p50 = por %p48, %p49
    %p51 = scmp.ne.s32.totalorder %s43, %s45
    %p52 = scmp.eq.s32.totalorder %s14, 1
    %p53 = por %p51, %p52
    %p54 = scmp.ne.s32.totalorder %s45, %s46
    %p55 = scmp.eq.s32.totalorder %s14, 0
    %p56 = por %p54, %p55
    %p57 = scmp.ne.s32.totalorder %s45, %s46
    %p58 = scmp.eq.s32.totalorder %s15, 1
    %p59 = por %p57, %p58
    %p61 = scmp.ne.s32.totalorder %s46, %s60
    %p62 = scmp.eq.s32.totalorder %s15, 0
    %p63 = por %p61, %p62
    %s65 = sadd.s32 %s64, 1
    %p68 = scmp.eq.s32.totalorder %s9, 1
    %p69 = scmp.ne.s32.totalorder %s64, %s66
    %p70 = scmp.eq.s32.totalorder %s9, 0
    %p71 = por %p69, %p70
    %p72 = scmp.ne.s32.totalorder %s64, %s66
    %p73 = scmp.eq.s32.totalorder %s14, 1
    %p74 = por %p72, %p73
    %p75 = scmp.ne.s32.totalorder %s66, %s67
    %p76 = scmp.eq.s32.totalorder %s14, 0
    %p77 = por %p75, %p76
    %p78 = scmp.ne.s32.totalorder %s66, %s67
    %p79 = scmp.eq.s32.totalorder %s15, 1
    %p80 = por %p78, %p79
    %p82 = scmp.ne.s32.totalorder %s67, %s81
    %p83 = scmp.eq.s32.totalorder %s15, 0
    %p84 = por %p82, %p83
    %s85 = ssub.s32 %s9, %s16
    %p86 = scmp.eq.s32.totalorder %s85, 0
    %s88 = sadd.s32 %s87, 1
    %s89 = scalar_select %p86, %s87, %s88
    %p92 = pneg %p86
    %p93 = scmp.eq.s32.totalorder %s9, 1
    %p94 = por %p92, %p93
    %p95 = scmp.ne.s32.totalorder %s87, %s90
    %p96 = scmp.eq.s32.totalorder %s9, 0
    %p97 = por %p95, %p96
    %p98 = scmp.ne.s32.totalorder %s87, %s90
    %p99 = scmp.eq.s32.totalorder %s14, 1
    %p100 = por %p98, %p99
    %p101 = scmp.ne.s32.totalorder %s90, %s91
    %p102 = scmp.eq.s32.totalorder %s14, 0
    %p103 = por %p101, %p102
    %p104 = scmp.ne.s32.totalorder %s90, %s91
    %p105 = scmp.eq.s32.totalorder %s15, 1
    %p106 = por %p104, %p105
    %p108 = scmp.ne.s32.totalorder %s91, %s107
    %p109 = scmp.eq.s32.totalorder %s15, 0
    %p110 = por %p108, %p109
    %p111 = scmp.le.s32.totalorder 1, %s9
    %p112 = scmp.lt.s32.totalorder %s9, 3
    %p113 = pnand %p111, %p112
    %p114 = pneg %p113
    // Predicated region
    $region9: #{forward.13} parent=5 // pred_check
      _
    $region10: #{forward.13} parent=5 // pred_check_branch
      %116 = sbr.rel (%p113) target = $region12
    $region11: #{forward.13} parent=5 // pred_region
      %s117 = ssub.s32 %s9, 1
      // Predicated region
      $region13: #{forward.13} parent=11 // pred_check
        %p118 = pneg %p56
      $region14: #{forward.13} parent=11 // pred_check_branch
        %120 = sbr.rel (%p118) target = $region16
      $region15: #{forward.13} parent=11 // pred_region
        _
      $region16: #{forward.13} parent=11 // pred_fallthru
        _
      // Predicated region
      $region17: #{forward.13} parent=11 // pred_check
        %p121 = pneg %p77
      $region18: #{forward.13} parent=11 // pred_check_branch
        %123 = sbr.rel (%p121) target = $region20
      $region19: #{forward.13} parent=11 // pred_region
        _
      $region20: #{forward.13} parent=11 // pred_fallthru
        _
    $region12: #{forward.13} parent=5 // pred_fallthru
      _
    %p124 = scmp.lt.s32.totalorder %s9, 2
    // Predicated region
    $region21: #{forward.13} parent=5 // pred_check
      %p125 = pneg %p124
    $region22: #{forward.13} parent=5 // pred_check_branch
      %127 = sbr.rel (%p125) target = $region24
    $region23: #{forward.13} parent=5 // pred_region
      // Predicated region
      $region25: #{forward.13} parent=23 // pred_check
        %p128 = pneg %p29
      $region26: #{forward.13} parent=23 // pred_check_branch
        %130 = sbr.rel (%p128) target = $region28
      $region27: #{forward.13} parent=23 // pred_region
        %s131 = smul.u32 64, %s9
        %p132 = scmp.lt.s32.totalorder %s131, 127
        %s133 = scalar_select %p132, %s131, 127
        %s134 = smul.addr %s133, 4
        %s135 = scalar_lea.vmem %s0, %s134
        %s136 = smul.u32 64, %s9
      $region28: #{forward.13} parent=23 // pred_fallthru
        _
    $region24: #{forward.13} parent=5 // pred_fallthru
      _
    %p137 = scmp.le.s32.totalorder 1, %s9
    %p138 = scmp.lt.s32.totalorder %s9, 3
    %p139 = pnand %p137, %p138
    %p140 = pneg %p139
    // Predicated region
    $region29: #{forward.13} parent=5 // pred_check
      _
    $region30: #{forward.13} parent=5 // pred_check_branch
      %142 = sbr.rel (%p139) target = $region32
    $region31: #{forward.13} parent=5 // pred_region
      %s143 = ssub.s32 %s9, 1
      %s144 = smul.u32 64, %s14
      %p145 = scmp.lt.s32.totalorder %s144, 127
      %s146 = scalar_select %p145, %s144, 127
      %s147 = smul.addr %s146, 4
      %s148 = scalar_lea.vmem %s0, %s147
      %p149 = pneg %p35
      %p150 = pneg %p32
      %p151 = pneg %p56
      %p152 = pneg %p53
      %p153 = pneg %p77
      %p154 = pneg %p74
      %p155 = pneg %p103
      %p156 = pneg %p100
      %s157 = smul.u32 64, %s14
      %p158 = scmp.lt.s32.totalorder %s157, 127
      %s159 = scalar_select %p158, %s157, 127
      %s160 = smul.addr %s159, 4
      %s161 = scalar_lea.vmem %s3, %s160
      %s162 = smul.u32 64, %s14
      %p163 = scmp.lt.s32.totalorder %s162, 127
      %s164 = scalar_select %p163, %s162, 127
      %s165 = smul.addr %s164, 4
      %s166 = scalar_lea.vmem %s0, %s165
      %s167 = smul.u32 64, %s14
      %s168 = smul.u32 64, %s14
      %p169 = scmp.lt.s32.totalorder %s168, 127
      %s170 = scalar_select %p169, %s168, 127
      %s171 = smul.addr %s170, 4
      %s172 = scalar_lea.vmem %s3, %s171
      %s173 = smul.u32 64, %s14
      %v174 = vld [vmem:[%s166] sm:$0xf]
      %v175 = vld [vmem:[%s166 + $0x4] sm:$0xf]
      %v176 = vld [vmem:[%s166 + $0x8] sm:$0xf]
      %v177 = vld [vmem:[%s166 + $0xc] sm:$0xf]
      %v178 = vld [vmem:[%s166 + $0x10] sm:$0xf]
      %v179 = vld [vmem:[%s166 + $0x14] sm:$0xf]
      %v180 = vld [vmem:[%s166 + $0x18] sm:$0xf]
      %v181 = vld [vmem:[%s166 + $0x1c] sm:$0xf]
      %v182 = vld [vmem:[%s166 + $0x20] sm:$0xf]
      %v183 = vld [vmem:[%s166 + $0x24] sm:$0xf]
      %v184 = vld [vmem:[%s166 + $0x28] sm:$0xf]
      %v185 = vld [vmem:[%s166 + $0x2c] sm:$0xf]
      %v186 = vld [vmem:[%s166 + $0x30] sm:$0xf]
      %v187 = vld [vmem:[%s166 + $0x34] sm:$0xf]
      %v188 = vld [vmem:[%s166 + $0x38] sm:$0xf]
      %v189 = vld [vmem:[%s166 + $0x3c] sm:$0xf]
      %v190 = vld [vmem:[%s166 + $0x40] sm:$0xf]
      %v191 = vld [vmem:[%s166 + $0x44] sm:$0xf]
      %v192 = vld [vmem:[%s166 + $0x48] sm:$0xf]
      %v193 = vld [vmem:[%s166 + $0x4c] sm:$0xf]
      %v194 = vld [vmem:[%s166 + $0x50] sm:$0xf]
      %v195 = vld [vmem:[%s166 + $0x54] sm:$0xf]
      %v196 = vld [vmem:[%s166 + $0x58] sm:$0xf]
      %v197 = vld [vmem:[%s166 + $0x5c] sm:$0xf]
      %v198 = vld [vmem:[%s166 + $0x60] sm:$0xf]
      %v199 = vld [vmem:[%s166 + $0x64] sm:$0xf]
      %v200 = vld [vmem:[%s166 + $0x68] sm:$0xf]
      %v201 = vld [vmem:[%s166 + $0x6c] sm:$0xf]
      %v202 = vld [vmem:[%s166 + $0x70] sm:$0xf]
      %v203 = vld [vmem:[%s166 + $0x74] sm:$0xf]
      %v204 = vld [vmem:[%s166 + $0x78] sm:$0xf]
      %v205 = vld [vmem:[%s166 + $0x7c] sm:$0xf]
      %v206 = vld [vmem:[%s166 + $0x80] sm:$0xf]
      %v207 = vld [vmem:[%s166 + $0x84] sm:$0xf]
      %v208 = vld [vmem:[%s166 + $0x88] sm:$0xf]
      %v209 = vld [vmem:[%s166 + $0x8c] sm:$0xf]
      %v210 = vld [vmem:[%s166 + $0x90] sm:$0xf]
      %v211 = vld [vmem:[%s166 + $0x94] sm:$0xf]
      %v212 = vld [vmem:[%s166 + $0x98] sm:$0xf]
      %v213 = vld [vmem:[%s166 + $0x9c] sm:$0xf]
      %v214 = vld [vmem:[%s166 + $0xa0] sm:$0xf]
      %v215 = vld [vmem:[%s166 + $0xa4] sm:$0xf]
      %v216 = vld [vmem:[%s166 + $0xa8] sm:$0xf]
      %v217 = vld [vmem:[%s166 + $0xac] sm:$0xf]
      %v218 = vld [vmem:[%s166 + $0xb0] sm:$0xf]
      %v219 = vld [vmem:[%s166 + $0xb4] sm:$0xf]
      %v220 = vld [vmem:[%s166 + $0xb8] sm:$0xf]
      %v221 = vld [vmem:[%s166 + $0xbc] sm:$0xf]
      %v222 = vld [vmem:[%s166 + $0xc0] sm:$0xf]
      %v223 = vld [vmem:[%s166 + $0xc4] sm:$0xf]
      %v224 = vld [vmem:[%s166 + $0xc8] sm:$0xf]
      %v225 = vld [vmem:[%s166 + $0xcc] sm:$0xf]
      %v226 = vld [vmem:[%s166 + $0xd0] sm:$0xf]
      %v227 = vld [vmem:[%s166 + $0xd4] sm:$0xf]
      %v228 = vld [vmem:[%s166 + $0xd8] sm:$0xf]
      %v229 = vld [vmem:[%s166 + $0xdc] sm:$0xf]
      %v230 = vld [vmem:[%s166 + $0xe0] sm:$0xf]
      %v231 = vld [vmem:[%s166 + $0xe4] sm:$0xf]
      %v232 = vld [vmem:[%s166 + $0xe8] sm:$0xf]
      %v233 = vld [vmem:[%s166 + $0xec] sm:$0xf]
      %v234 = vld [vmem:[%s166 + $0xf0] sm:$0xf]
      %v235 = vld [vmem:[%s166 + $0xf4] sm:$0xf]
      %v236 = vld [vmem:[%s166 + $0xf8] sm:$0xf]
      %v237 = vld [vmem:[%s166 + $0xfc] sm:$0xf]
      %v238 = vld [vmem:[%s1] sm:$0xf]
      %v239 = vld [vmem:[%s1 + $0x4] sm:$0xf]
      %v240 = vld [vmem:[%s1 + $0x8] sm:$0xf]
      %v241 = vld [vmem:[%s1 + $0xc] sm:$0xf]
      %v242 = vld [vmem:[%s1 + $0x10] sm:$0xf]
      %v243 = vld [vmem:[%s1 + $0x14] sm:$0xf]
      %v244 = vld [vmem:[%s1 + $0x18] sm:$0xf]
      %v245 = vld [vmem:[%s1 + $0x1c] sm:$0xf]
      %v246 = vld [vmem:[%s1 + $0x20] sm:$0xf]
      %v247 = vld [vmem:[%s1 + $0x24] sm:$0xf]
      %v248 = vld [vmem:[%s1 + $0x28] sm:$0xf]
      %v249 = vld [vmem:[%s1 + $0x2c] sm:$0xf]
      %v250 = vld [vmem:[%s1 + $0x30] sm:$0xf]
      %v251 = vld [vmem:[%s1 + $0x34] sm:$0xf]
      %v252 = vld [vmem:[%s1 + $0x38] sm:$0xf]
      %v253 = vld [vmem:[%s1 + $0x3c] sm:$0xf]
      %v254 = vld [vmem:[%s2] sm:$0x1]
      %v256 = vperm.slane %v254, 0
      %v322 = vunpack.c.l.b16 %v174
      %v323 = vunpack.c.l.b16 %v175
      %v324 = vunpack.c.l.b16 %v176
      %v325 = vunpack.c.l.b16 %v177
      %v326 = vunpack.c.l.b16 %v178
      %v327 = vunpack.c.l.b16 %v179
      %v328 = vunpack.c.l.b16 %v180
      %v329 = vunpack.c.l.b16 %v181
      %v330 = vunpack.c.l.b16 %v182
      %v331 = vunpack.c.l.b16 %v183
      %v332 = vunpack.c.l.b16 %v184
      %v333 = vunpack.c.l.b16 %v185
      %v334 = vunpack.c.l.b16 %v186
      %v335 = vunpack.c.l.b16 %v187
      %v336 = vunpack.c.l.b16 %v188
      %v337 = vunpack.c.l.b16 %v189
      %v338 = vunpack.c.l.b16 %v190
      %v339 = vunpack.c.l.b16 %v191
      %v340 = vunpack.c.l.b16 %v192
      %v341 = vunpack.c.l.b16 %v193
      %v342 = vunpack.c.l.b16 %v194
      %v343 = vunpack.c.l.b16 %v195
      %v344 = vunpack.c.l.b16 %v196
      %v345 = vunpack.c.l.b16 %v197
      %v346 = vunpack.c.l.b16 %v198
      %v347 = vunpack.c.l.b16 %v199
      %v348 = vunpack.c.l.b16 %v200
      %v349 = vunpack.c.l.b16 %v201
      %v350 = vunpack.c.l.b16 %v202
      %v351 = vunpack.c.l.b16 %v203
      %v352 = vunpack.c.l.b16 %v204
      %v353 = vunpack.c.l.b16 %v205
      %v354 = vunpack.c.l.b16 %v206
      %v355 = vunpack.c.l.b16 %v207
      %v356 = vunpack.c.l.b16 %v208
      %v357 = vunpack.c.l.b16 %v209
      %v358 = vunpack.c.l.b16 %v210
      %v359 = vunpack.c.l.b16 %v211
      %v360 = vunpack.c.l.b16 %v212
      %v361 = vunpack.c.l.b16 %v213
      %v362 = vunpack.c.l.b16 %v214
      %v363 = vunpack.c.l.b16 %v215
      %v364 = vunpack.c.l.b16 %v216
      %v365 = vunpack.c.l.b16 %v217
      %v366 = vunpack.c.l.b16 %v218
      %v367 = vunpack.c.l.b16 %v219
      %v368 = vunpack.c.l.b16 %v220
      %v369 = vunpack.c.l.b16 %v221
      %v370 = vunpack.c.l.b16 %v222
      %v371 = vunpack.c.l.b16 %v223
      %v372 = vunpack.c.l.b16 %v224
      %v373 = vunpack.c.l.b16 %v225
      %v374 = vunpack.c.l.b16 %v226
      %v375 = vunpack.c.l.b16 %v227
      %v376 = vunpack.c.l.b16 %v228
      %v377 = vunpack.c.l.b16 %v229
      %v378 = vunpack.c.l.b16 %v230
      %v379 = vunpack.c.l.b16 %v231
      %v380 = vunpack.c.l.b16 %v232
      %v381 = vunpack.c.l.b16 %v233
      %v382 = vunpack.c.l.b16 %v234
      %v383 = vunpack.c.l.b16 %v235
      %v384 = vunpack.c.l.b16 %v236
      %v385 = vunpack.c.l.b16 %v237
      %v386 = vpack.c.b16 %v323, %v322
      %v387 = vpack.c.b16 %v325, %v324
      %v388 = vpack.c.b16 %v327, %v326
      %v389 = vpack.c.b16 %v329, %v328
      %v390 = vpack.c.b16 %v331, %v330
      %v391 = vpack.c.b16 %v333, %v332
      %v392 = vpack.c.b16 %v335, %v334
      %v393 = vpack.c.b16 %v337, %v336
      %v394 = vpack.c.b16 %v339, %v338
      %v395 = vpack.c.b16 %v341, %v340
      %v396 = vpack.c.b16 %v343, %v342
      %v397 = vpack.c.b16 %v345, %v344
      %v398 = vpack.c.b16 %v347, %v346
      %v399 = vpack.c.b16 %v349, %v348
      %v400 = vpack.c.b16 %v351, %v350
      %v401 = vpack.c.b16 %v353, %v352
      %v402 = vpack.c.b16 %v355, %v354
      %v403 = vpack.c.b16 %v357, %v356
      %v404 = vpack.c.b16 %v359, %v358
      %v405 = vpack.c.b16 %v361, %v360
      %v406 = vpack.c.b16 %v363, %v362
      %v407 = vpack.c.b16 %v365, %v364
      %v408 = vpack.c.b16 %v367, %v366
      %v409 = vpack.c.b16 %v369, %v368
      %v410 = vpack.c.b16 %v371, %v370
      %v411 = vpack.c.b16 %v373, %v372
      %v412 = vpack.c.b16 %v375, %v374
      %v413 = vpack.c.b16 %v377, %v376
      %v414 = vpack.c.b16 %v379, %v378
      %v415 = vpack.c.b16 %v381, %v380
      %v416 = vpack.c.b16 %v383, %v382
      %v417 = vpack.c.b16 %v385, %v384
      %v466 = vunpack.c.l.b16 %v238
      %v467 = vunpack.c.l.b16 %v239
      %v468 = vunpack.c.l.b16 %v240
      %v469 = vunpack.c.l.b16 %v241
      %v470 = vunpack.c.l.b16 %v242
      %v471 = vunpack.c.l.b16 %v243
      %v472 = vunpack.c.l.b16 %v244
      %v473 = vunpack.c.l.b16 %v245
      %v474 = vunpack.c.l.b16 %v246
      %v475 = vunpack.c.l.b16 %v247
      %v476 = vunpack.c.l.b16 %v248
      %v477 = vunpack.c.l.b16 %v249
      %v478 = vunpack.c.l.b16 %v250
      %v479 = vunpack.c.l.b16 %v251
      %v480 = vunpack.c.l.b16 %v252
      %v481 = vunpack.c.l.b16 %v253
      %v482 = vpack.c.b16 %v467, %v466
      %v483 = vpack.c.b16 %v469, %v468
      %v484 = vpack.c.b16 %v471, %v470
      %v485 = vpack.c.b16 %v473, %v472
      %v486 = vpack.c.b16 %v475, %v474
      %v487 = vpack.c.b16 %v477, %v476
      %v488 = vpack.c.b16 %v479, %v478
      %v489 = vpack.c.b16 %v481, %v480
      %498 = vmatpush.bf16.msra.mxu0 %v489
      %499 = vmatpush.bf16.msra.mxu0 %v488
      %500 = vmatpush.bf16.msra.mxu0 %v487
      %501 = vmatpush.bf16.msra.mxu0 %v486
      %502 = vmatpush.bf16.msra.mxu0 %v485
      %503 = vmatpush.bf16.msra.mxu0 %v484
      %504 = vmatpush.bf16.msra.mxu0 %v483
      %505 = vmatpush.bf16.msra.mxu0 %v482
      %506 = vmatmul.bf16.gmra.mxu0 %v386
      %v507 = vpop.f32.mrf.mxu0
      %v508 = vadd.f32 %v256, %v507
      %v509 = vpop.f32.mrf.mxu0
      %v510 = vadd.f32 %v256, %v509
      %511 = vmatmul.bf16.gmra.mxu0 %v387
      %v512 = vpop.f32.mrf.mxu0
      %v513 = vadd.f32 %v256, %v512
      %v514 = vpop.f32.mrf.mxu0
      %v515 = vadd.f32 %v256, %v514
      %516 = vmatmul.bf16.gmra.mxu0 %v388
      %v517 = vpop.f32.mrf.mxu0
      %v518 = vadd.f32 %v256, %v517
      %v519 = vpop.f32.mrf.mxu0
      %v520 = vadd.f32 %v256, %v519
      %521 = vmatmul.bf16.gmra.mxu0 %v389
      %v522 = vpop.f32.mrf.mxu0
      %v523 = vadd.f32 %v256, %v522
      %v524 = vpop.f32.mrf.mxu0
      %v525 = vadd.f32 %v256, %v524
      %526 = vmatmul.bf16.gmra.mxu0 %v390
      %v527 = vpop.f32.mrf.mxu0
      %v528 = vadd.f32 %v256, %v527
      %v529 = vpop.f32.mrf.mxu0
      %v530 = vadd.f32 %v256, %v529
      %531 = vmatmul.bf16.gmra.mxu0 %v391
      %v532 = vpop.f32.mrf.mxu0
      %v533 = vadd.f32 %v256, %v532
      %v534 = vpop.f32.mrf.mxu0
      %v535 = vadd.f32 %v256, %v534
      %536 = vmatmul.bf16.gmra.mxu0 %v392
      %v537 = vpop.f32.mrf.mxu0
      %v538 = vadd.f32 %v256, %v537
      %v539 = vpop.f32.mrf.mxu0
      %v540 = vadd.f32 %v256, %v539
      %541 = vmatmul.bf16.gmra.mxu0 %v393
      %v542 = vpop.f32.mrf.mxu0
      %v543 = vadd.f32 %v256, %v542
      %v544 = vpop.f32.mrf.mxu0
      %v545 = vadd.f32 %v256, %v544
      %546 = vmatmul.bf16.gmra.mxu0 %v394
      %v547 = vpop.f32.mrf.mxu0
      %v548 = vadd.f32 %v256, %v547
      %v549 = vpop.f32.mrf.mxu0
      %v550 = vadd.f32 %v256, %v549
      %551 = vmatmul.bf16.gmra.mxu0 %v395
      %v552 = vpop.f32.mrf.mxu0
      %v553 = vadd.f32 %v256, %v552
      %v554 = vpop.f32.mrf.mxu0
      %v555 = vadd.f32 %v256, %v554
      %556 = vmatmul.bf16.gmra.mxu0 %v396
      %v557 = vpop.f32.mrf.mxu0
      %v558 = vadd.f32 %v256, %v557
      %v559 = vpop.f32.mrf.mxu0
      %v560 = vadd.f32 %v256, %v559
      %561 = vmatmul.bf16.gmra.mxu0 %v397
      %v562 = vpop.f32.mrf.mxu0
      %v563 = vadd.f32 %v256, %v562
      %v564 = vpop.f32.mrf.mxu0
      %v565 = vadd.f32 %v256, %v564
      %566 = vmatmul.bf16.gmra.mxu0 %v398
      %v567 = vpop.f32.mrf.mxu0
      %v568 = vadd.f32 %v256, %v567
      %v569 = vpop.f32.mrf.mxu0
      %v570 = vadd.f32 %v256, %v569
      %571 = vmatmul.bf16.gmra.mxu0 %v399
      %v572 = vpop.f32.mrf.mxu0
      %v573 = vadd.f32 %v256, %v572
      %v574 = vpop.f32.mrf.mxu0
      %v575 = vadd.f32 %v256, %v574
      %576 = vmatmul.bf16.gmra.mxu0 %v400
      %v577 = vpop.f32.mrf.mxu0
      %v578 = vadd.f32 %v256, %v577
      %v579 = vpop.f32.mrf.mxu0
      %v580 = vadd.f32 %v256, %v579
      %581 = vmatmul.bf16.gmra.mxu0 %v401
      %v582 = vpop.f32.mrf.mxu0
      %v583 = vadd.f32 %v256, %v582
      %v584 = vpop.f32.mrf.mxu0
      %v585 = vadd.f32 %v256, %v584
      %586 = vmatmul.bf16.gmra.mxu0 %v402
      %v587 = vpop.f32.mrf.mxu0
      %v588 = vadd.f32 %v256, %v587
      %v589 = vpop.f32.mrf.mxu0
      %v590 = vadd.f32 %v256, %v589
      %591 = vmatmul.bf16.gmra.mxu0 %v403
      %v592 = vpop.f32.mrf.mxu0
      %v593 = vadd.f32 %v256, %v592
      %v594 = vpop.f32.mrf.mxu0
      %v595 = vadd.f32 %v256, %v594
      %596 = vmatmul.bf16.gmra.mxu0 %v404
      %v597 = vpop.f32.mrf.mxu0
      %v598 = vadd.f32 %v256, %v597
      %v599 = vpop.f32.mrf.mxu0
      %v600 = vadd.f32 %v256, %v599
      %601 = vmatmul.bf16.gmra.mxu0 %v405
      %v602 = vpop.f32.mrf.mxu0
      %v603 = vadd.f32 %v256, %v602
      %v604 = vpop.f32.mrf.mxu0
      %v605 = vadd.f32 %v256, %v604
      %606 = vmatmul.bf16.gmra.mxu0 %v406
      %v607 = vpop.f32.mrf.mxu0
      %v608 = vadd.f32 %v256, %v607
      %v609 = vpop.f32.mrf.mxu0
      %v610 = vadd.f32 %v256, %v609
      %611 = vmatmul.bf16.gmra.mxu0 %v407
      %v612 = vpop.f32.mrf.mxu0
      %v613 = vadd.f32 %v256, %v612
      %v614 = vpop.f32.mrf.mxu0
      %v615 = vadd.f32 %v256, %v614
      %616 = vmatmul.bf16.gmra.mxu0 %v408
      %v617 = vpop.f32.mrf.mxu0
      %v618 = vadd.f32 %v256, %v617
      %v619 = vpop.f32.mrf.mxu0
      %v620 = vadd.f32 %v256, %v619
      %621 = vmatmul.bf16.gmra.mxu0 %v409
      %v622 = vpop.f32.mrf.mxu0
      %v623 = vadd.f32 %v256, %v622
      %v624 = vpop.f32.mrf.mxu0
      %v625 = vadd.f32 %v256, %v624
      %626 = vmatmul.bf16.gmra.mxu0 %v410
      %v627 = vpop.f32.mrf.mxu0
      %v628 = vadd.f32 %v256, %v627
      %v629 = vpop.f32.mrf.mxu0
      %v630 = vadd.f32 %v256, %v629
      %631 = vmatmul.bf16.gmra.mxu0 %v411
      %v632 = vpop.f32.mrf.mxu0
      %v633 = vadd.f32 %v256, %v632
      %v634 = vpop.f32.mrf.mxu0
      %v635 = vadd.f32 %v256, %v634
      %636 = vmatmul.bf16.gmra.mxu0 %v412
      %v637 = vpop.f32.mrf.mxu0
      %v638 = vadd.f32 %v256, %v637
      %v639 = vpop.f32.mrf.mxu0
      %v640 = vadd.f32 %v256, %v639
      %641 = vmatmul.bf16.gmra.mxu0 %v413
      %v642 = vpop.f32.mrf.mxu0
      %v643 = vadd.f32 %v256, %v642
      %v644 = vpop.f32.mrf.mxu0
      %v645 = vadd.f32 %v256, %v644
      %646 = vmatmul.bf16.gmra.mxu0 %v414
      %v647 = vpop.f32.mrf.mxu0
      %v648 = vadd.f32 %v256, %v647
      %v649 = vpop.f32.mrf.mxu0
      %v650 = vadd.f32 %v256, %v649
      %651 = vmatmul.bf16.gmra.mxu0 %v415
      %v652 = vpop.f32.mrf.mxu0
      %v653 = vadd.f32 %v256, %v652
      %v654 = vpop.f32.mrf.mxu0
      %v655 = vadd.f32 %v256, %v654
      %656 = vmatmul.bf16.gmra.mxu0 %v416
      %v657 = vpop.f32.mrf.mxu0
      %v658 = vadd.f32 %v256, %v657
      %v659 = vpop.f32.mrf.mxu0
      %v660 = vadd.f32 %v256, %v659
      %661 = vmatmul.bf16.gmra.mxu0 %v417
      %v662 = vpop.f32.mrf.mxu0
      %v663 = vadd.f32 %v256, %v662
      %v664 = vpop.f32.mrf.mxu0
      %v665 = vadd.f32 %v256, %v664
      %666 = vdwg.mxu0
      %vm667 = vcmp.gt.f32.partialorder %v508, 0.0
      %vm668 = vcmp.gt.f32.partialorder %v510, 0.0
      %vm669 = vcmp.gt.f32.partialorder %v513, 0.0
      %vm670 = vcmp.gt.f32.partialorder %v515, 0.0
      %vm671 = vcmp.gt.f32.partialorder %v518, 0.0
      %vm672 = vcmp.gt.f32.partialorder %v520, 0.0
      %vm673 = vcmp.gt.f32.partialorder %v523, 0.0
      %vm674 = vcmp.gt.f32.partialorder %v525, 0.0
      %vm675 = vcmp.gt.f32.partialorder %v528, 0.0
      %vm676 = vcmp.gt.f32.partialorder %v530, 0.0
      %vm677 = vcmp.gt.f32.partialorder %v533, 0.0
      %vm678 = vcmp.gt.f32.partialorder %v535, 0.0
      %vm679 = vcmp.gt.f32.partialorder %v538, 0.0
      %vm680 = vcmp.gt.f32.partialorder %v540, 0.0
      %vm681 = vcmp.gt.f32.partialorder %v543, 0.0
      %vm682 = vcmp.gt.f32.partialorder %v545, 0.0
      %vm683 = vcmp.gt.f32.partialorder %v548, 0.0
      %vm684 = vcmp.gt.f32.partialorder %v550, 0.0
      %vm685 = vcmp.gt.f32.partialorder %v553, 0.0
      %vm686 = vcmp.gt.f32.partialorder %v555, 0.0
      %vm687 = vcmp.gt.f32.partialorder %v558, 0.0
      %vm688 = vcmp.gt.f32.partialorder %v560, 0.0
      %vm689 = vcmp.gt.f32.partialorder %v563, 0.0
      %vm690 = vcmp.gt.f32.partialorder %v565, 0.0
      %vm691 = vcmp.gt.f32.partialorder %v568, 0.0
      %vm692 = vcmp.gt.f32.partialorder %v570, 0.0
      %vm693 = vcmp.gt.f32.partialorder %v573, 0.0
      %vm694 = vcmp.gt.f32.partialorder %v575, 0.0
      %vm695 = vcmp.gt.f32.partialorder %v578, 0.0
      %vm696 = vcmp.gt.f32.partialorder %v580, 0.0
      %vm697 = vcmp.gt.f32.partialorder %v583, 0.0
      %vm698 = vcmp.gt.f32.partialorder %v585, 0.0
      %vm699 = vcmp.gt.f32.partialorder %v588, 0.0
      %vm700 = vcmp.gt.f32.partialorder %v590, 0.0
      %vm701 = vcmp.gt.f32.partialorder %v593, 0.0
      %vm702 = vcmp.gt.f32.partialorder %v595, 0.0
      %vm703 = vcmp.gt.f32.partialorder %v598, 0.0
      %vm704 = vcmp.gt.f32.partialorder %v600, 0.0
      %vm705 = vcmp.gt.f32.partialorder %v603, 0.0
      %vm706 = vcmp.gt.f32.partialorder %v605, 0.0
      %vm707 = vcmp.gt.f32.partialorder %v608, 0.0
      %vm708 = vcmp.gt.f32.partialorder %v610, 0.0
      %vm709 = vcmp.gt.f32.partialorder %v613, 0.0
      %vm710 = vcmp.gt.f32.partialorder %v615, 0.0
      %vm711 = vcmp.gt.f32.partialorder %v618, 0.0
      %vm712 = vcmp.gt.f32.partialorder %v620, 0.0
      %vm713 = vcmp.gt.f32.partialorder %v623, 0.0
      %vm714 = vcmp.gt.f32.partialorder %v625, 0.0
      %vm715 = vcmp.gt.f32.partialorder %v628, 0.0
      %vm716 = vcmp.gt.f32.partialorder %v630, 0.0
      %vm717 = vcmp.gt.f32.partialorder %v633, 0.0
      %vm718 = vcmp.gt.f32.partialorder %v635, 0.0
      %vm719 = vcmp.gt.f32.partialorder %v638, 0.0
      %vm720 = vcmp.gt.f32.partialorder %v640, 0.0
      %vm721 = vcmp.gt.f32.partialorder %v643, 0.0
      %vm722 = vcmp.gt.f32.partialorder %v645, 0.0
      %vm723 = vcmp.gt.f32.partialorder %v648, 0.0
      %vm724 = vcmp.gt.f32.partialorder %v650, 0.0
      %vm725 = vcmp.gt.f32.partialorder %v653, 0.0
      %vm726 = vcmp.gt.f32.partialorder %v655, 0.0
      %vm727 = vcmp.gt.f32.partialorder %v658, 0.0
      %vm728 = vcmp.gt.f32.partialorder %v660, 0.0
      %vm729 = vcmp.gt.f32.partialorder %v663, 0.0
      %vm730 = vcmp.gt.f32.partialorder %v665, 0.0
      %v731 = vmul.f32 %v508, 0.1
      %v732 = vmul.f32 %v510, 0.1
      %v733 = vmul.f32 %v513, 0.1
      %v734 = vmul.f32 %v515, 0.1
      %v735 = vmul.f32 %v518, 0.1
      %v736 = vmul.f32 %v520, 0.1
      %v737 = vmul.f32 %v523, 0.1
      %v738 = vmul.f32 %v525, 0.1
      %v739 = vmul.f32 %v528, 0.1
      %v740 = vmul.f32 %v530, 0.1
      %v741 = vmul.f32 %v533, 0.1
      %v742 = vmul.f32 %v535, 0.1
      %v743 = vmul.f32 %v538, 0.1
      %v744 = vmul.f32 %v540, 0.1
      %v745 = vmul.f32 %v543, 0.1
      %v746 = vmul.f32 %v545, 0.1
      %v747 = vmul.f32 %v548, 0.1
      %v748 = vmul.f32 %v550, 0.1
      %v749 = vmul.f32 %v553, 0.1
      %v750 = vmul.f32 %v555, 0.1
      %v751 = vmul.f32 %v558, 0.1
      %v752 = vmul.f32 %v560, 0.1
      %v753 = vmul.f32 %v563, 0.1
      %v754 = vmul.f32 %v565, 0.1
      %v755 = vmul.f32 %v568, 0.1
      %v756 = vmul.f32 %v570, 0.1
      %v757 = vmul.f32 %v573, 0.1
      %v758 = vmul.f32 %v575, 0.1
      %v759 = vmul.f32 %v578, 0.1
      %v760 = vmul.f32 %v580, 0.1
      %v761 = vmul.f32 %v583, 0.1
      %v762 = vmul.f32 %v585, 0.1
      %v763 = vmul.f32 %v588, 0.1
      %v764 = vmul.f32 %v590, 0.1
      %v765 = vmul.f32 %v593, 0.1
      %v766 = vmul.f32 %v595, 0.1
      %v767 = vmul.f32 %v598, 0.1
      %v768 = vmul.f32 %v600, 0.1
      %v769 = vmul.f32 %v603, 0.1
      %v770 = vmul.f32 %v605, 0.1
      %v771 = vmul.f32 %v608, 0.1
      %v772 = vmul.f32 %v610, 0.1
      %v773 = vmul.f32 %v613, 0.1
      %v774 = vmul.f32 %v615, 0.1
      %v775 = vmul.f32 %v618, 0.1
      %v776 = vmul.f32 %v620, 0.1
      %v777 = vmul.f32 %v623, 0.1
      %v778 = vmul.f32 %v625, 0.1
      %v779 = vmul.f32 %v628, 0.1
      %v780 = vmul.f32 %v630, 0.1
      %v781 = vmul.f32 %v633, 0.1
      %v782 = vmul.f32 %v635, 0.1
      %v783 = vmul.f32 %v638, 0.1
      %v784 = vmul.f32 %v640, 0.1
      %v785 = vmul.f32 %v643, 0.1
      %v786 = vmul.f32 %v645, 0.1
      %v787 = vmul.f32 %v648, 0.1
      %v788 = vmul.f32 %v650, 0.1
      %v789 = vmul.f32 %v653, 0.1
      %v790 = vmul.f32 %v655, 0.1
      %v791 = vmul.f32 %v658, 0.1
      %v792 = vmul.f32 %v660, 0.1
      %v793 = vmul.f32 %v663, 0.1
      %v794 = vmul.f32 %v665, 0.1
      %v795 = vsel %vm667, %v508, %v731
      %v796 = vsel %vm668, %v510, %v732
      %v797 = vsel %vm669, %v513, %v733
      %v798 = vsel %vm670, %v515, %v734
      %v799 = vsel %vm671, %v518, %v735
      %v800 = vsel %vm672, %v520, %v736
      %v801 = vsel %vm673, %v523, %v737
      %v802 = vsel %vm674, %v525, %v738
      %v803 = vsel %vm675, %v528, %v739
      %v804 = vsel %vm676, %v530, %v740
      %v805 = vsel %vm677, %v533, %v741
      %v806 = vsel %vm678, %v535, %v742
      %v807 = vsel %vm679, %v538, %v743
      %v808 = vsel %vm680, %v540, %v744
      %v809 = vsel %vm681, %v543, %v745
      %v810 = vsel %vm682, %v545, %v746
      %v811 = vsel %vm683, %v548, %v747
      %v812 = vsel %vm684, %v550, %v748
      %v813 = vsel %vm685, %v553, %v749
      %v814 = vsel %vm686, %v555, %v750
      %v815 = vsel %vm687, %v558, %v751
      %v816 = vsel %vm688, %v560, %v752
      %v817 = vsel %vm689, %v563, %v753
      %v818 = vsel %vm690, %v565, %v754
      %v819 = vsel %vm691, %v568, %v755
      %v820 = vsel %vm692, %v570, %v756
      %v821 = vsel %vm693, %v573, %v757
      %v822 = vsel %vm694, %v575, %v758
      %v823 = vsel %vm695, %v578, %v759
      %v824 = vsel %vm696, %v580, %v760
      %v825 = vsel %vm697, %v583, %v761
      %v826 = vsel %vm698, %v585, %v762
      %v827 = vsel %vm699, %v588, %v763
      %v828 = vsel %vm700, %v590, %v764
      %v829 = vsel %vm701, %v593, %v765
      %v830 = vsel %vm702, %v595, %v766
      %v831 = vsel %vm703, %v598, %v767
      %v832 = vsel %vm704, %v600, %v768
      %v833 = vsel %vm705, %v603, %v769
      %v834 = vsel %vm706, %v605, %v770
      %v835 = vsel %vm707, %v608, %v771
      %v836 = vsel %vm708, %v610, %v772
      %v837 = vsel %vm709, %v613, %v773
      %v838 = vsel %vm710, %v615, %v774
      %v839 = vsel %vm711, %v618, %v775
      %v840 = vsel %vm712, %v620, %v776
      %v841 = vsel %vm713, %v623, %v777
      %v842 = vsel %vm714, %v625, %v778
      %v843 = vsel %vm715, %v628, %v779
      %v844 = vsel %vm716, %v630, %v780
      %v845 = vsel %vm717, %v633, %v781
      %v846 = vsel %vm718, %v635, %v782
      %v847 = vsel %vm719, %v638, %v783
      %v848 = vsel %vm720, %v640, %v784
      %v849 = vsel %vm721, %v643, %v785
      %v850 = vsel %vm722, %v645, %v786
      %v851 = vsel %vm723, %v648, %v787
      %v852 = vsel %vm724, %v650, %v788
      %v853 = vsel %vm725, %v653, %v789
      %v854 = vsel %vm726, %v655, %v790
      %v855 = vsel %vm727, %v658, %v791
      %v856 = vsel %vm728, %v660, %v792
      %v857 = vsel %vm729, %v663, %v793
      %v858 = vsel %vm730, %v665, %v794
      %v859 = vpack.c.bf16 %v795, %v795
      %v860 = vpack.c.bf16 %v796, %v796
      %v861 = vpack.c.bf16 %v797, %v797
      %v862 = vpack.c.bf16 %v798, %v798
      %v863 = vpack.c.bf16 %v799, %v799
      %v864 = vpack.c.bf16 %v800, %v800
      %v865 = vpack.c.bf16 %v801, %v801
      %v866 = vpack.c.bf16 %v802, %v802
      %v867 = vpack.c.bf16 %v803, %v803
      %v868 = vpack.c.bf16 %v804, %v804
      %v869 = vpack.c.bf16 %v805, %v805
      %v870 = vpack.c.bf16 %v806, %v806
      %v871 = vpack.c.bf16 %v807, %v807
      %v872 = vpack.c.bf16 %v808, %v808
      %v873 = vpack.c.bf16 %v809, %v809
      %v874 = vpack.c.bf16 %v810, %v810
      %v875 = vpack.c.bf16 %v811, %v811
      %v876 = vpack.c.bf16 %v812, %v812
      %v877 = vpack.c.bf16 %v813, %v813
      %v878 = vpack.c.bf16 %v814, %v814
      %v879 = vpack.c.bf16 %v815, %v815
      %v880 = vpack.c.bf16 %v816, %v816
      %v881 = vpack.c.bf16 %v817, %v817
      %v882 = vpack.c.bf16 %v818, %v818
      %v883 = vpack.c.bf16 %v819, %v819
      %v884 = vpack.c.bf16 %v820, %v820
      %v885 = vpack.c.bf16 %v821, %v821
      %v886 = vpack.c.bf16 %v822, %v822
      %v887 = vpack.c.bf16 %v823, %v823
      %v888 = vpack.c.bf16 %v824, %v824
      %v889 = vpack.c.bf16 %v825, %v825
      %v890 = vpack.c.bf16 %v826, %v826
      %v891 = vpack.c.bf16 %v827, %v827
      %v892 = vpack.c.bf16 %v828, %v828
      %v893 = vpack.c.bf16 %v829, %v829
      %v894 = vpack.c.bf16 %v830, %v830
      %v895 = vpack.c.bf16 %v831, %v831
      %v896 = vpack.c.bf16 %v832, %v832
      %v897 = vpack.c.bf16 %v833, %v833
      %v898 = vpack.c.bf16 %v834, %v834
      %v899 = vpack.c.bf16 %v835, %v835
      %v900 = vpack.c.bf16 %v836, %v836
      %v901 = vpack.c.bf16 %v837, %v837
      %v902 = vpack.c.bf16 %v838, %v838
      %v903 = vpack.c.bf16 %v839, %v839
      %v904 = vpack.c.bf16 %v840, %v840
      %v905 = vpack.c.bf16 %v841, %v841
      %v906 = vpack.c.bf16 %v842, %v842
      %v907 = vpack.c.bf16 %v843, %v843
      %v908 = vpack.c.bf16 %v844, %v844
      %v909 = vpack.c.bf16 %v845, %v845
      %v910 = vpack.c.bf16 %v846, %v846
      %v911 = vpack.c.bf16 %v847, %v847
      %v912 = vpack.c.bf16 %v848, %v848
      %v913 = vpack.c.bf16 %v849, %v849
      %v914 = vpack.c.bf16 %v850, %v850
      %v915 = vpack.c.bf16 %v851, %v851
      %v916 = vpack.c.bf16 %v852, %v852
      %v917 = vpack.c.bf16 %v853, %v853
      %v918 = vpack.c.bf16 %v854, %v854
      %v919 = vpack.c.bf16 %v855, %v855
      %v920 = vpack.c.bf16 %v856, %v856
      %v921 = vpack.c.bf16 %v857, %v857
      %v922 = vpack.c.bf16 %v858, %v858
      %923 = vst [vmem:[%s172] sm:$0xf] %v859
      %924 = vst [vmem:[%s172 + $0x4] sm:$0xf] %v860
      %925 = vst [vmem:[%s172 + $0x8] sm:$0xf] %v861
      %926 = vst [vmem:[%s172 + $0xc] sm:$0xf] %v862
      %927 = vst [vmem:[%s172 + $0x10] sm:$0xf] %v863
      %928 = vst [vmem:[%s172 + $0x14] sm:$0xf] %v864
      %929 = vst [vmem:[%s172 + $0x18] sm:$0xf] %v865
      %930 = vst [vmem:[%s172 + $0x1c] sm:$0xf] %v866
      %931 = vst [vmem:[%s172 + $0x20] sm:$0xf] %v867
      %932 = vst [vmem:[%s172 + $0x24] sm:$0xf] %v868
      %933 = vst [vmem:[%s172 + $0x28] sm:$0xf] %v869
      %934 = vst [vmem:[%s172 + $0x2c] sm:$0xf] %v870
      %935 = vst [vmem:[%s172 + $0x30] sm:$0xf] %v871
      %936 = vst [vmem:[%s172 + $0x34] sm:$0xf] %v872
      %937 = vst [vmem:[%s172 + $0x38] sm:$0xf] %v873
      %938 = vst [vmem:[%s172 + $0x3c] sm:$0xf] %v874
      %939 = vst [vmem:[%s172 + $0x40] sm:$0xf] %v875
      %940 = vst [vmem:[%s172 + $0x44] sm:$0xf] %v876
      %941 = vst [vmem:[%s172 + $0x48] sm:$0xf] %v877
      %942 = vst [vmem:[%s172 + $0x4c] sm:$0xf] %v878
      %943 = vst [vmem:[%s172 + $0x50] sm:$0xf] %v879
      %944 = vst [vmem:[%s172 + $0x54] sm:$0xf] %v880
      %945 = vst [vmem:[%s172 + $0x58] sm:$0xf] %v881
      %946 = vst [vmem:[%s172 + $0x5c] sm:$0xf] %v882
      %947 = vst [vmem:[%s172 + $0x60] sm:$0xf] %v883
      %948 = vst [vmem:[%s172 + $0x64] sm:$0xf] %v884
      %949 = vst [vmem:[%s172 + $0x68] sm:$0xf] %v885
      %950 = vst [vmem:[%s172 + $0x6c] sm:$0xf] %v886
      %951 = vst [vmem:[%s172 + $0x70] sm:$0xf] %v887
      %952 = vst [vmem:[%s172 + $0x74] sm:$0xf] %v888
      %953 = vst [vmem:[%s172 + $0x78] sm:$0xf] %v889
      %954 = vst [vmem:[%s172 + $0x7c] sm:$0xf] %v890
      %955 = vst [vmem:[%s172 + $0x80] sm:$0xf] %v891
      %956 = vst [vmem:[%s172 + $0x84] sm:$0xf] %v892
      %957 = vst [vmem:[%s172 + $0x88] sm:$0xf] %v893
      %958 = vst [vmem:[%s172 + $0x8c] sm:$0xf] %v894
      %959 = vst [vmem:[%s172 + $0x90] sm:$0xf] %v895
      %960 = vst [vmem:[%s172 + $0x94] sm:$0xf] %v896
      %961 = vst [vmem:[%s172 + $0x98] sm:$0xf] %v897
      %962 = vst [vmem:[%s172 + $0x9c] sm:$0xf] %v898
      %963 = vst [vmem:[%s172 + $0xa0] sm:$0xf] %v899
      %964 = vst [vmem:[%s172 + $0xa4] sm:$0xf] %v900
      %965 = vst [vmem:[%s172 + $0xa8] sm:$0xf] %v901
      %966 = vst [vmem:[%s172 + $0xac] sm:$0xf] %v902
      %967 = vst [vmem:[%s172 + $0xb0] sm:$0xf] %v903
      %968 = vst [vmem:[%s172 + $0xb4] sm:$0xf] %v904
      %969 = vst [vmem:[%s172 + $0xb8] sm:$0xf] %v905
      %970 = vst [vmem:[%s172 + $0xbc] sm:$0xf] %v906
      %971 = vst [vmem:[%s172 + $0xc0] sm:$0xf] %v907
      %972 = vst [vmem:[%s172 + $0xc4] sm:$0xf] %v908
      %973 = vst [vmem:[%s172 + $0xc8] sm:$0xf] %v909
      %974 = vst [vmem:[%s172 + $0xcc] sm:$0xf] %v910
      %975 = vst [vmem:[%s172 + $0xd0] sm:$0xf] %v911
      %976 = vst [vmem:[%s172 + $0xd4] sm:$0xf] %v912
      %977 = vst [vmem:[%s172 + $0xd8] sm:$0xf] %v913
      %978 = vst [vmem:[%s172 + $0xdc] sm:$0xf] %v914
      %979 = vst [vmem:[%s172 + $0xe0] sm:$0xf] %v915
      %980 = vst [vmem:[%s172 + $0xe4] sm:$0xf] %v916
      %981 = vst [vmem:[%s172 + $0xe8] sm:$0xf] %v917
      %982 = vst [vmem:[%s172 + $0xec] sm:$0xf] %v918
      %983 = vst [vmem:[%s172 + $0xf0] sm:$0xf] %v919
      %984 = vst [vmem:[%s172 + $0xf4] sm:$0xf] %v920
      %985 = vst [vmem:[%s172 + $0xf8] sm:$0xf] %v921
      %986 = vst [vmem:[%s172 + $0xfc] sm:$0xf] %v922
      %s987 = smul.u32 64, %s14
      %p988 = scmp.lt.s32.totalorder %s987, 127
      %s989 = scalar_select %p988, %s987, 127
      %s990 = smul.addr %s989, 4
      %s991 = scalar_lea.vmem %s3, %s990
      // Predicated region
      $region33: #{forward.13} parent=31 // pred_check
        %p992 = pneg %p100
      $region34: #{forward.13} parent=31 // pred_check_branch
        %994 = sbr.rel (%p992) target = $region36
      $region35: #{forward.13} parent=31 // pred_region
        %s995 = smul.u32 64, %s14
      $region36: #{forward.13} parent=31 // pred_fallthru
        _
    $region32: #{forward.13} parent=5 // pred_fallthru
      _
    %p996 = scmp.le.s32.totalorder 2, %s9
    // Predicated region
    $region37: #{forward.13} parent=5 // pred_check
      %p997 = pneg %p996
    $region38: #{forward.13} parent=5 // pred_check_branch
      %999 = sbr.rel (%p997) target = $region40
    $region39: #{forward.13} parent=5 // pred_region
      %s1000 = ssub.s32 %s9, 2
      // Predicated region
      $region41: #{forward.13} parent=39 // pred_check
        %p1001 = pneg %p106
      $region42: #{forward.13} parent=39 // pred_check_branch
        %1003 = sbr.rel (%p1001) target = $region44
      $region43: #{forward.13} parent=39 // pred_region
        %s1004 = smul.u32 64, %s15
        %p1005 = scmp.lt.s32.totalorder %s1004, 127
        %s1006 = scalar_select %p1005, %s1004, 127
        %s1007 = smul.addr %s1006, 4
        %s1008 = scalar_lea.vmem %s3, %s1007
      $region44: #{forward.13} parent=39 // pred_fallthru
        _
    $region40: #{forward.13} parent=5 // pred_fallthru
      _
  $region6: #{forward.13} parent=0 // loop_footer
    %s13 = sadd.s32 1, %s9
  $region7: #{forward.13} parent=0 // loop_footer_branch
    %8 = sbr.rel target = $region3
  $region8: #{forward.13} parent=0 // loop_exit
    _

// kernel: forward.14
$region0: #{forward.14}
  #allocation0 [shape = 'u32[]', space=smem, size = 0x4, offset = 0x4, fixed_abs, tag = 'smem constant byte address 0x4 - core index']
  #allocation1 [shape = 'u32[72,128]{1,0:T(1,128)}', space=vmem, size = 0x9000, scoped, tag = 'internal scratch']
  %s0 = inlined_call_operand.vmem [shape: bf16[176,256], index: 0, kind: input, shape index: {}]
  %s1 = inlined_call_operand.vmem [shape: bf16[256,128], index: 1, kind: input, shape index: {}]
  %s2 = inlined_call_operand.vmem [shape: f32[1,128], index: 2, kind: input, shape index: {}]
  %s3 = inlined_call_operand.vmem [shape: bf16[176,128], index: 3, kind: output, shape index: {}]
  %s4 = sld [smem:[#allocation0]]
  $region22: #{forward.14} parent=0
    _
  %s6 = ssub.s32 1, %s4
  %s7 = scalar_select 0, %s6, %s4
  // Predicated region
  $region2: #{forward.14} parent=0 // pred_check
    _
  $region3: #{forward.14} parent=0 // pred_check_branch
    %9 = sbr.rel (0) target = $region5
  $region4: #{forward.14} parent=0 // pred_region
    _
  $region5: #{forward.14} parent=0 // pred_fallthru
    _
  // Predicated region
  $region6: #{forward.14} parent=0 // pred_check
    _
  $region7: #{forward.14} parent=0 // pred_check_branch
    %11 = sbr.rel (0) target = $region9
  $region8: #{forward.14} parent=0 // pred_region
    _
  $region9: #{forward.14} parent=0 // pred_fallthru
    _
  // Predicated region
  $region10: #{forward.14} parent=0 // pred_check
    _
  $region11: #{forward.14} parent=0 // pred_check_branch
    %13 = sbr.rel (0) target = $region13
  $region12: #{forward.14} parent=0 // pred_region
    _
  $region13: #{forward.14} parent=0 // pred_fallthru
    _
  %v14 = vld [vmem:[%s0] sm:$0xff]
  %v15 = vld [vmem:[%s0 + $0x8] sm:$0xff]
  %v16 = vld [vmem:[%s0 + $0x10] sm:$0xff]
  %v17 = vld [vmem:[%s0 + $0x18] sm:$0xff]
  %v18 = vld [vmem:[%s0 + $0x20] sm:$0xff]
  %v19 = vld [vmem:[%s0 + $0x28] sm:$0xff]
  %v20 = vld [vmem:[%s0 + $0x30] sm:$0xff]
  %v21 = vld [vmem:[%s0 + $0x38] sm:$0xff]
  %v22 = vld [vmem:[%s0 + $0x40] sm:$0xff]
  %v23 = vld [vmem:[%s0 + $0x48] sm:$0xff]
  %v24 = vld [vmem:[%s0 + $0x50] sm:$0xff]
  %v25 = vld [vmem:[%s0 + $0x58] sm:$0xff]
  %v26 = vld [vmem:[%s0 + $0x60] sm:$0xff]
  %v27 = vld [vmem:[%s0 + $0x68] sm:$0xff]
  %v28 = vld [vmem:[%s0 + $0x70] sm:$0xff]
  %v29 = vld [vmem:[%s0 + $0x78] sm:$0xff]
  %v30 = vld [vmem:[%s0 + $0x80] sm:$0xff]
  %v31 = vld [vmem:[%s0 + $0x88] sm:$0xff]
  %v32 = vld [vmem:[%s0 + $0x90] sm:$0xff]
  %v33 = vld [vmem:[%s0 + $0x98] sm:$0xff]
  %v34 = vld [vmem:[%s0 + $0xa0] sm:$0xff]
  %v35 = vld [vmem:[%s0 + $0xa8] sm:$0xff]
  %v36 = vld [vmem:[%s1] sm:$0xf]
  %v37 = vld [vmem:[%s1 + $0x4] sm:$0xf]
  %v38 = vld [vmem:[%s1 + $0x8] sm:$0xf]
  %v39 = vld [vmem:[%s1 + $0xc] sm:$0xf]
  %v40 = vld [vmem:[%s1 + $0x10] sm:$0xf]
  %v41 = vld [vmem:[%s1 + $0x14] sm:$0xf]
  %v42 = vld [vmem:[%s1 + $0x18] sm:$0xf]
  %v43 = vld [vmem:[%s1 + $0x1c] sm:$0xf]
  %v44 = vld [vmem:[%s1 + $0x20] sm:$0xf]
  %v45 = vld [vmem:[%s1 + $0x24] sm:$0xf]
  %v46 = vld [vmem:[%s1 + $0x28] sm:$0xf]
  %v47 = vld [vmem:[%s1 + $0x2c] sm:$0xf]
  %v48 = vld [vmem:[%s1 + $0x30] sm:$0xf]
  %v49 = vld [vmem:[%s1 + $0x34] sm:$0xf]
  %v50 = vld [vmem:[%s1 + $0x38] sm:$0xf]
  %v51 = vld [vmem:[%s1 + $0x3c] sm:$0xf]
  %v52 = vld [vmem:[%s1 + $0x40] sm:$0xf]
  %v53 = vld [vmem:[%s1 + $0x44] sm:$0xf]
  %v54 = vld [vmem:[%s1 + $0x48] sm:$0xf]
  %v55 = vld [vmem:[%s1 + $0x4c] sm:$0xf]
  %v56 = vld [vmem:[%s1 + $0x50] sm:$0xf]
  %v57 = vld [vmem:[%s1 + $0x54] sm:$0xf]
  %v58 = vld [vmem:[%s1 + $0x58] sm:$0xf]
  %v59 = vld [vmem:[%s1 + $0x5c] sm:$0xf]
  %v60 = vld [vmem:[%s1 + $0x60] sm:$0xf]
  %v61 = vld [vmem:[%s1 + $0x64] sm:$0xf]
  %v62 = vld [vmem:[%s1 + $0x68] sm:$0xf]
  %v63 = vld [vmem:[%s1 + $0x6c] sm:$0xf]
  %v64 = vld [vmem:[%s1 + $0x70] sm:$0xf]
  %v65 = vld [vmem:[%s1 + $0x74] sm:$0xf]
  %v66 = vld [vmem:[%s1 + $0x78] sm:$0xf]
  %v67 = vld [vmem:[%s1 + $0x7c] sm:$0xf]
  %v68 = vld [vmem:[%s2] sm:$0x1]
  %v70 = vperm.slane %v68, 0
  %v94 = vunpack.c.l.b16 %v14
  %v95 = vunpack.c.h.b16 %v14
  %v96 = vunpack.c.l.b16 %v15
  %v97 = vunpack.c.h.b16 %v15
  %v98 = vunpack.c.l.b16 %v16
  %v99 = vunpack.c.h.b16 %v16
  %v100 = vunpack.c.l.b16 %v17
  %v101 = vunpack.c.h.b16 %v17
  %v102 = vunpack.c.l.b16 %v18
  %v103 = vunpack.c.h.b16 %v18
  %v104 = vunpack.c.l.b16 %v19
  %v105 = vunpack.c.h.b16 %v19
  %v106 = vunpack.c.l.b16 %v20
  %v107 = vunpack.c.h.b16 %v20
  %v108 = vunpack.c.l.b16 %v21
  %v109 = vunpack.c.h.b16 %v21
  %v110 = vunpack.c.l.b16 %v22
  %v111 = vunpack.c.h.b16 %v22
  %v112 = vunpack.c.l.b16 %v23
  %v113 = vunpack.c.h.b16 %v23
  %v114 = vunpack.c.l.b16 %v24
  %v115 = vunpack.c.h.b16 %v24
  %v116 = vunpack.c.l.b16 %v25
  %v117 = vunpack.c.h.b16 %v25
  %v118 = vunpack.c.l.b16 %v26
  %v119 = vunpack.c.h.b16 %v26
  %v120 = vunpack.c.l.b16 %v27
  %v121 = vunpack.c.h.b16 %v27
  %v122 = vunpack.c.l.b16 %v28
  %v123 = vunpack.c.h.b16 %v28
  %v124 = vunpack.c.l.b16 %v29
  %v125 = vunpack.c.h.b16 %v29
  %v126 = vunpack.c.l.b16 %v30
  %v127 = vunpack.c.h.b16 %v30
  %v128 = vunpack.c.l.b16 %v31
  %v129 = vunpack.c.h.b16 %v31
  %v130 = vunpack.c.l.b16 %v32
  %v131 = vunpack.c.h.b16 %v32
  %v132 = vunpack.c.l.b16 %v33
  %v133 = vunpack.c.h.b16 %v33
  %v134 = vunpack.c.l.b16 %v34
  %v135 = vunpack.c.h.b16 %v34
  %v136 = vunpack.c.l.b16 %v35
  %v137 = vunpack.c.h.b16 %v35
  %v138 = vpack.c.b16 %v96, %v94
  %v139 = vpack.c.b16 %v97, %v95
  %v140 = vpack.c.b16 %v100, %v98
  %v141 = vpack.c.b16 %v101, %v99
  %v142 = vpack.c.b16 %v104, %v102
  %v143 = vpack.c.b16 %v105, %v103
  %v144 = vpack.c.b16 %v108, %v106
  %v145 = vpack.c.b16 %v109, %v107
  %v146 = vpack.c.b16 %v112, %v110
  %v147 = vpack.c.b16 %v113, %v111
  %v148 = vpack.c.b16 %v116, %v114
  %v149 = vpack.c.b16 %v117, %v115
  %v150 = vpack.c.b16 %v120, %v118
  %v151 = vpack.c.b16 %v121, %v119
  %v152 = vpack.c.b16 %v124, %v122
  %v153 = vpack.c.b16 %v125, %v123
  %v154 = vpack.c.b16 %v128, %v126
  %v155 = vpack.c.b16 %v129, %v127
  %v156 = vpack.c.b16 %v132, %v130
  %v157 = vpack.c.b16 %v133, %v131
  %v158 = vpack.c.b16 %v136, %v134
  %v159 = vpack.c.b16 %v137, %v135
  %v214 = vunpack.c.l.b16 %v36
  %v215 = vunpack.c.l.b16 %v37
  %v216 = vunpack.c.l.b16 %v38
  %v217 = vunpack.c.l.b16 %v39
  %v218 = vunpack.c.l.b16 %v40
  %v219 = vunpack.c.l.b16 %v41
  %v220 = vunpack.c.l.b16 %v42
  %v221 = vunpack.c.l.b16 %v43
  %v222 = vunpack.c.l.b16 %v44
  %v223 = vunpack.c.l.b16 %v45
  %v224 = vunpack.c.l.b16 %v46
  %v225 = vunpack.c.l.b16 %v47
  %v226 = vunpack.c.l.b16 %v48
  %v227 = vunpack.c.l.b16 %v49
  %v228 = vunpack.c.l.b16 %v50
  %v229 = vunpack.c.l.b16 %v51
  %v230 = vunpack.c.l.b16 %v52
  %v231 = vunpack.c.l.b16 %v53
  %v232 = vunpack.c.l.b16 %v54
  %v233 = vunpack.c.l.b16 %v55
  %v234 = vunpack.c.l.b16 %v56
  %v235 = vunpack.c.l.b16 %v57
  %v236 = vunpack.c.l.b16 %v58
  %v237 = vunpack.c.l.b16 %v59
  %v238 = vunpack.c.l.b16 %v60
  %v239 = vunpack.c.l.b16 %v61
  %v240 = vunpack.c.l.b16 %v62
  %v241 = vunpack.c.l.b16 %v63
  %v242 = vunpack.c.l.b16 %v64
  %v243 = vunpack.c.l.b16 %v65
  %v244 = vunpack.c.l.b16 %v66
  %v245 = vunpack.c.l.b16 %v67
  %v246 = vpack.c.b16 %v215, %v214
  %v247 = vpack.c.b16 %v217, %v216
  %v248 = vpack.c.b16 %v219, %v218
  %v249 = vpack.c.b16 %v221, %v220
  %v250 = vpack.c.b16 %v223, %v222
  %v251 = vpack.c.b16 %v225, %v224
  %v252 = vpack.c.b16 %v227, %v226
  %v253 = vpack.c.b16 %v229, %v228
  %v254 = vpack.c.b16 %v231, %v230
  %v255 = vpack.c.b16 %v233, %v232
  %v256 = vpack.c.b16 %v235, %v234
  %v257 = vpack.c.b16 %v237, %v236
  %v258 = vpack.c.b16 %v239, %v238
  %v259 = vpack.c.b16 %v241, %v240
  %v260 = vpack.c.b16 %v243, %v242
  %v261 = vpack.c.b16 %v245, %v244
  %278 = vmatpush.bf16.msra.mxu0 %v253
  %279 = vmatpush.bf16.msra.mxu0 %v252
  %280 = vmatpush.bf16.msra.mxu0 %v251
  %281 = vmatpush.bf16.msra.mxu0 %v250
  %282 = vmatpush.bf16.msra.mxu0 %v249
  %283 = vmatpush.bf16.msra.mxu0 %v248
  %284 = vmatpush.bf16.msra.mxu0 %v247
  %285 = vmatpush.bf16.msra.mxu0 %v246
  %286 = vmatmul.bf16.gmra.mxu0 %v138
  %v287 = vpop.f32.mrf.mxu0
  %v288 = vadd.f32 %v70, %v287
  %v289 = vpop.f32.mrf.mxu0
  %v290 = vadd.f32 %v70, %v289
  %291 = vmatmul.bf16.gmra.mxu0 %v140
  %v292 = vpop.f32.mrf.mxu0
  %v293 = vadd.f32 %v70, %v292
  %v294 = vpop.f32.mrf.mxu0
  %v295 = vadd.f32 %v70, %v294
  %296 = vmatmul.bf16.gmra.mxu0 %v142
  %v297 = vpop.f32.mrf.mxu0
  %v298 = vadd.f32 %v70, %v297
  %v299 = vpop.f32.mrf.mxu0
  %v300 = vadd.f32 %v70, %v299
  %301 = vmatmul.bf16.gmra.mxu0 %v144
  %v302 = vpop.f32.mrf.mxu0
  %v303 = vadd.f32 %v70, %v302
  %v304 = vpop.f32.mrf.mxu0
  %v305 = vadd.f32 %v70, %v304
  %306 = vmatmul.bf16.gmra.mxu0 %v146
  %v307 = vpop.f32.mrf.mxu0
  %v308 = vadd.f32 %v70, %v307
  %v309 = vpop.f32.mrf.mxu0
  %v310 = vadd.f32 %v70, %v309
  %311 = vmatmul.bf16.gmra.mxu0 %v148
  %v312 = vpop.f32.mrf.mxu0
  %v313 = vadd.f32 %v70, %v312
  %v314 = vpop.f32.mrf.mxu0
  %v315 = vadd.f32 %v70, %v314
  %316 = vmatmul.bf16.gmra.mxu0 %v150
  %v317 = vpop.f32.mrf.mxu0
  %v318 = vadd.f32 %v70, %v317
  %v319 = vpop.f32.mrf.mxu0
  %v320 = vadd.f32 %v70, %v319
  %321 = vmatmul.bf16.gmra.mxu0 %v152
  %v322 = vpop.f32.mrf.mxu0
  %v323 = vadd.f32 %v70, %v322
  %v324 = vpop.f32.mrf.mxu0
  %v325 = vadd.f32 %v70, %v324
  %326 = vmatmul.bf16.gmra.mxu0 %v154
  %v327 = vpop.f32.mrf.mxu0
  %v328 = vadd.f32 %v70, %v327
  %v329 = vpop.f32.mrf.mxu0
  %v330 = vadd.f32 %v70, %v329
  %331 = vmatmul.bf16.gmra.mxu0 %v156
  %v332 = vpop.f32.mrf.mxu0
  %v333 = vadd.f32 %v70, %v332
  %v334 = vpop.f32.mrf.mxu0
  %v335 = vadd.f32 %v70, %v334
  %336 = vmatmul.bf16.gmra.mxu0 %v158
  %v337 = vpop.f32.mrf.mxu0
  %v338 = vadd.f32 %v70, %v337
  %v339 = vpop.f32.mrf.mxu0
  %v340 = vadd.f32 %v70, %v339
  %341 = vdwg.mxu0
  %342 = vmatpush.bf16.msra.mxu0 %v261
  %343 = vmatpush.bf16.msra.mxu0 %v260
  %344 = vmatpush.bf16.msra.mxu0 %v259
  %345 = vmatpush.bf16.msra.mxu0 %v258
  %346 = vmatpush.bf16.msra.mxu0 %v257
  %347 = vmatpush.bf16.msra.mxu0 %v256
  %348 = vmatpush.bf16.msra.mxu0 %v255
  %349 = vmatpush.bf16.msra.mxu0 %v254
  %350 = vmatmul.bf16.gmra.mxu0 %v139
  %v351 = vpop.f32.mrf.mxu0
  %v352 = vadd.f32 %v288, %v351
  %v353 = vpop.f32.mrf.mxu0
  %v354 = vadd.f32 %v290, %v353
  %355 = vmatmul.bf16.gmra.mxu0 %v141
  %v356 = vpop.f32.mrf.mxu0
  %v357 = vadd.f32 %v293, %v356
  %v358 = vpop.f32.mrf.mxu0
  %v359 = vadd.f32 %v295, %v358
  %360 = vmatmul.bf16.gmra.mxu0 %v143
  %v361 = vpop.f32.mrf.mxu0
  %v362 = vadd.f32 %v298, %v361
  %v363 = vpop.f32.mrf.mxu0
  %v364 = vadd.f32 %v300, %v363
  %365 = vmatmul.bf16.gmra.mxu0 %v145
  %v366 = vpop.f32.mrf.mxu0
  %v367 = vadd.f32 %v303, %v366
  %v368 = vpop.f32.mrf.mxu0
  %v369 = vadd.f32 %v305, %v368
  %370 = vmatmul.bf16.gmra.mxu0 %v147
  %v371 = vpop.f32.mrf.mxu0
  %v372 = vadd.f32 %v308, %v371
  %v373 = vpop.f32.mrf.mxu0
  %v374 = vadd.f32 %v310, %v373
  %375 = vmatmul.bf16.gmra.mxu0 %v149
  %v376 = vpop.f32.mrf.mxu0
  %v377 = vadd.f32 %v313, %v376
  %v378 = vpop.f32.mrf.mxu0
  %v379 = vadd.f32 %v315, %v378
  %380 = vmatmul.bf16.gmra.mxu0 %v151
  %v381 = vpop.f32.mrf.mxu0
  %v382 = vadd.f32 %v318, %v381
  %v383 = vpop.f32.mrf.mxu0
  %v384 = vadd.f32 %v320, %v383
  %385 = vmatmul.bf16.gmra.mxu0 %v153
  %v386 = vpop.f32.mrf.mxu0
  %v387 = vadd.f32 %v323, %v386
  %v388 = vpop.f32.mrf.mxu0
  %v389 = vadd.f32 %v325, %v388
  %390 = vmatmul.bf16.gmra.mxu0 %v155
  %v391 = vpop.f32.mrf.mxu0
  %v392 = vadd.f32 %v328, %v391
  %v393 = vpop.f32.mrf.mxu0
  %v394 = vadd.f32 %v330, %v393
  %395 = vmatmul.bf16.gmra.mxu0 %v157
  %v396 = vpop.f32.mrf.mxu0
  %v397 = vadd.f32 %v333, %v396
  %v398 = vpop.f32.mrf.mxu0
  %v399 = vadd.f32 %v335, %v398
  %400 = vmatmul.bf16.gmra.mxu0 %v159
  %v401 = vpop.f32.mrf.mxu0
  %v402 = vadd.f32 %v338, %v401
  %v403 = vpop.f32.mrf.mxu0
  %v404 = vadd.f32 %v340, %v403
  %405 = vdwg.mxu0
  %vm406 = vcmp.gt.f32.partialorder %v352, 0.0
  %vm407 = vcmp.gt.f32.partialorder %v354, 0.0
  %vm408 = vcmp.gt.f32.partialorder %v357, 0.0
  %vm409 = vcmp.gt.f32.partialorder %v359, 0.0
  %vm410 = vcmp.gt.f32.partialorder %v362, 0.0
  %vm411 = vcmp.gt.f32.partialorder %v364, 0.0
  %vm412 = vcmp.gt.f32.partialorder %v367, 0.0
  %vm413 = vcmp.gt.f32.partialorder %v369, 0.0
  %vm414 = vcmp.gt.f32.partialorder %v372, 0.0
  %vm415 = vcmp.gt.f32.partialorder %v374, 0.0
  %vm416 = vcmp.gt.f32.partialorder %v377, 0.0
  %vm417 = vcmp.gt.f32.partialorder %v379, 0.0
  %vm418 = vcmp.gt.f32.partialorder %v382, 0.0
  %vm419 = vcmp.gt.f32.partialorder %v384, 0.0
  %vm420 = vcmp.gt.f32.partialorder %v387, 0.0
  %vm421 = vcmp.gt.f32.partialorder %v389, 0.0
  %vm422 = vcmp.gt.f32.partialorder %v392, 0.0
  %vm423 = vcmp.gt.f32.partialorder %v394, 0.0
  %vm424 = vcmp.gt.f32.partialorder %v397, 0.0
  %vm425 = vcmp.gt.f32.partialorder %v399, 0.0
  %vm426 = vcmp.gt.f32.partialorder %v402, 0.0
  %vm427 = vcmp.gt.f32.partialorder %v404, 0.0
  %v428 = vmul.f32 %v352, 0.1
  %v429 = vmul.f32 %v354, 0.1
  %v430 = vmul.f32 %v357, 0.1
  %v431 = vmul.f32 %v359, 0.1
  %v432 = vmul.f32 %v362, 0.1
  %v433 = vmul.f32 %v364, 0.1
  %v434 = vmul.f32 %v367, 0.1
  %v435 = vmul.f32 %v369, 0.1
  %v436 = vmul.f32 %v372, 0.1
  %v437 = vmul.f32 %v374, 0.1
  %v438 = vmul.f32 %v377, 0.1
  %v439 = vmul.f32 %v379, 0.1
  %v440 = vmul.f32 %v382, 0.1
  %v441 = vmul.f32 %v384, 0.1
  %v442 = vmul.f32 %v387, 0.1
  %v443 = vmul.f32 %v389, 0.1
  %v444 = vmul.f32 %v392, 0.1
  %v445 = vmul.f32 %v394, 0.1
  %v446 = vmul.f32 %v397, 0.1
  %v447 = vmul.f32 %v399, 0.1
  %v448 = vmul.f32 %v402, 0.1
  %v449 = vmul.f32 %v404, 0.1
  %v450 = vsel %vm406, %v352, %v428
  %v451 = vsel %vm407, %v354, %v429
  %v452 = vsel %vm408, %v357, %v430
  %v453 = vsel %vm409, %v359, %v431
  %v454 = vsel %vm410, %v362, %v432
  %v455 = vsel %vm411, %v364, %v433
  %v456 = vsel %vm412, %v367, %v434
  %v457 = vsel %vm413, %v369, %v435
  %v458 = vsel %vm414, %v372, %v436
  %v459 = vsel %vm415, %v374, %v437
  %v460 = vsel %vm416, %v377, %v438
  %v461 = vsel %vm417, %v379, %v439
  %v462 = vsel %vm418, %v382, %v440
  %v463 = vsel %vm419, %v384, %v441
  %v464 = vsel %vm420, %v387, %v442
  %v465 = vsel %vm421, %v389, %v443
  %v466 = vsel %vm422, %v392, %v444
  %v467 = vsel %vm423, %v394, %v445
  %v468 = vsel %vm424, %v397, %v446
  %v469 = vsel %vm425, %v399, %v447
  %v470 = vsel %vm426, %v402, %v448
  %v471 = vsel %vm427, %v404, %v449
  %v472 = vpack.c.bf16 %v450, %v450
  %v473 = vpack.c.bf16 %v451, %v451
  %v474 = vpack.c.bf16 %v452, %v452
  %v475 = vpack.c.bf16 %v453, %v453
  %v476 = vpack.c.bf16 %v454, %v454
  %v477 = vpack.c.bf16 %v455, %v455
  %v478 = vpack.c.bf16 %v456, %v456
  %v479 = vpack.c.bf16 %v457, %v457
  %v480 = vpack.c.bf16 %v458, %v458
  %v481 = vpack.c.bf16 %v459, %v459
  %v482 = vpack.c.bf16 %v460, %v460
  %v483 = vpack.c.bf16 %v461, %v461
  %v484 = vpack.c.bf16 %v462, %v462
  %v485 = vpack.c.bf16 %v463, %v463
  %v486 = vpack.c.bf16 %v464, %v464
  %v487 = vpack.c.bf16 %v465, %v465
  %v488 = vpack.c.bf16 %v466, %v466
  %v489 = vpack.c.bf16 %v467, %v467
  %v490 = vpack.c.bf16 %v468, %v468
  %v491 = vpack.c.bf16 %v469, %v469
  %v492 = vpack.c.bf16 %v470, %v470
  %v493 = vpack.c.bf16 %v471, %v471
  %494 = vst [vmem:[%s3] sm:$0xf] %v472
  %495 = vst [vmem:[%s3 + $0x4] sm:$0xf] %v473
  %496 = vst [vmem:[%s3 + $0x8] sm:$0xf] %v474
  %497 = vst [vmem:[%s3 + $0xc] sm:$0xf] %v475
  %498 = vst [vmem:[%s3 + $0x10] sm:$0xf] %v476
  %499 = vst [vmem:[%s3 + $0x14] sm:$0xf] %v477
  %500 = vst [vmem:[%s3 + $0x18] sm:$0xf] %v478
  %501 = vst [vmem:[%s3 + $0x1c] sm:$0xf] %v479
  %502 = vst [vmem:[%s3 + $0x20] sm:$0xf] %v480
  %503 = vst [vmem:[%s3 + $0x24] sm:$0xf] %v481
  %504 = vst [vmem:[%s3 + $0x28] sm:$0xf] %v482
  %505 = vst [vmem:[%s3 + $0x2c] sm:$0xf] %v483
  %506 = vst [vmem:[%s3 + $0x30] sm:$0xf] %v484
  %507 = vst [vmem:[%s3 + $0x34] sm:$0xf] %v485
  %508 = vst [vmem:[%s3 + $0x38] sm:$0xf] %v486
  %509 = vst [vmem:[%s3 + $0x3c] sm:$0xf] %v487
  %510 = vst [vmem:[%s3 + $0x40] sm:$0xf] %v488
  %511 = vst [vmem:[%s3 + $0x44] sm:$0xf] %v489
  %512 = vst [vmem:[%s3 + $0x48] sm:$0xf] %v490
  %513 = vst [vmem:[%s3 + $0x4c] sm:$0xf] %v491
  %514 = vst [vmem:[%s3 + $0x50] sm:$0xf] %v492
  %515 = vst [vmem:[%s3 + $0x54] sm:$0xf] %v493
  // Predicated region
  $region14: #{forward.14} parent=0 // pred_check
    _
  $region15: #{forward.14} parent=0 // pred_check_branch
    %517 = sbr.rel (0) target = $region17
  $region16: #{forward.14} parent=0 // pred_region
    _
  $region17: #{forward.14} parent=0 // pred_fallthru
    _
  // Predicated region
  $region18: #{forward.14} parent=0 // pred_check
    _
  $region19: #{forward.14} parent=0 // pred_check_branch
    %519 = sbr.rel (0) target = $region21
  $region20: #{forward.14} parent=0 // pred_region
    _
  $region21: #{forward.14} parent=0 // pred_fallthru
    _

// kernel: forward.15
$region0: #{forward.15}
  #allocation0 [shape = 'u32[]', space=smem, size = 0x4, offset = 0x4, fixed_abs, tag = 'smem constant byte address 0x4 - core index']
  #allocation1 [shape = 'u32[72,128]{1,0:T(1,128)}', space=vmem, size = 0x9000, scoped, tag = 'internal scratch']
  %s0 = inlined_call_operand.vmem [shape: bf16[16,2688], index: 0, kind: input, shape index: {}]
  %s1 = inlined_call_operand.vmem [shape: bf16[2688,384], index: 1, kind: input, shape index: {}]
  %s2 = inlined_call_operand.vmem [shape: f32[1,384], index: 2, kind: input, shape index: {}]
  %s3 = inlined_call_operand.vmem [shape: bf16[16,384], index: 3, kind: output, shape index: {}]
  %s4 = sld [smem:[#allocation0]]
  $region22: #{forward.15} parent=0
    _
  %s6 = ssub.s32 1, %s4
  %s7 = scalar_select 0, %s6, %s4
  // Predicated region
  $region2: #{forward.15} parent=0 // pred_check
    _
  $region3: #{forward.15} parent=0 // pred_check_branch
    %9 = sbr.rel (0) target = $region5
  $region4: #{forward.15} parent=0 // pred_region
    _
  $region5: #{forward.15} parent=0 // pred_fallthru
    _
  // Predicated region
  $region6: #{forward.15} parent=0 // pred_check
    _
  $region7: #{forward.15} parent=0 // pred_check_branch
    %11 = sbr.rel (0) target = $region9
  $region8: #{forward.15} parent=0 // pred_region
    _
  $region9: #{forward.15} parent=0 // pred_fallthru
    _
  // Predicated region
  $region10: #{forward.15} parent=0 // pred_check
    _
  $region11: #{forward.15} parent=0 // pred_check_branch
    %13 = sbr.rel (0) target = $region13
  $region12: #{forward.15} parent=0 // pred_region
    _
  $region13: #{forward.15} parent=0 // pred_fallthru
    _
  %v14 = vld [vmem:[%s0] sm:$0xff]
  %v15 = vld [vmem:[%s0 + $0x8] sm:$0xff]
  %v16 = vld [vmem:[%s0 + $0x10] sm:$0xff]
  %v17 = vld [vmem:[%s0 + $0x18] sm:$0xff]
  %v18 = vld [vmem:[%s0 + $0x20] sm:$0xff]
  %v19 = vld [vmem:[%s0 + $0x28] sm:$0xff]
  %v20 = vld [vmem:[%s0 + $0x30] sm:$0xff]
  %v21 = vld [vmem:[%s0 + $0x38] sm:$0xff]
  %v22 = vld [vmem:[%s0 + $0x40] sm:$0xff]
  %v23 = vld [vmem:[%s0 + $0x48] sm:$0xff]
  %v24 = vld [vmem:[%s0 + $0x50] sm:$0xf]
  %v25 = vld [vmem:[%s0 + $0x54] sm:$0xff]
  %v26 = vld [vmem:[%s0 + $0x5c] sm:$0xff]
  %v27 = vld [vmem:[%s0 + $0x64] sm:$0xff]
  %v28 = vld [vmem:[%s0 + $0x6c] sm:$0xff]
  %v29 = vld [vmem:[%s0 + $0x74] sm:$0xff]
  %v30 = vld [vmem:[%s0 + $0x7c] sm:$0xff]
  %v31 = vld [vmem:[%s0 + $0x84] sm:$0xff]
  %v32 = vld [vmem:[%s0 + $0x8c] sm:$0xff]
  %v33 = vld [vmem:[%s0 + $0x94] sm:$0xff]
  %v34 = vld [vmem:[%s0 + $0x9c] sm:$0xff]
  %v35 = vld [vmem:[%s0 + $0xa4] sm:$0xf]
  %v36 = vld [vmem:[%s1] sm:$0xff]
  %v37 = vld [vmem:[%s1 + $0x8] sm:$0xf]
  %v38 = vld [vmem:[%s1 + $0xc] sm:$0xff]
  %v39 = vld [vmem:[%s1 + $0x14] sm:$0xf]
  %v40 = vld [vmem:[%s1 + $0x18] sm:$0xff]
  %v41 = vld [vmem:[%s1 + $0x20] sm:$0xf]
  %v42 = vld [vmem:[%s1 + $0x24] sm:$0xff]
  %v43 = vld [vmem:[%s1 + $0x2c] sm:$0xf]
  %v44 = vld [vmem:[%s1 + $0x30] sm:$0xff]
  %v45 = vld [vmem:[%s1 + $0x38] sm:$0xf]
  %v46 = vld [vmem:[%s1 + $0x3c] sm:$0xff]
  %v47 = vld [vmem:[%s1 + $0x44] sm:$0xf]
  %v48 = vld [vmem:[%s1 + $0x48] sm:$0xff]
  %v49 = vld [vmem:[%s1 + $0x50] sm:$0xf]
  %v50 = vld [vmem:[%s1 + $0x54] sm:$0xff]
  %v51 = vld [vmem:[%s1 + $0x5c] sm:$0xf]
  %v52 = vld [vmem:[%s1 + $0x60] sm:$0xff]
  %v53 = vld [vmem:[%s1 + $0x68] sm:$0xf]
  %v54 = vld [vmem:[%s1 + $0x6c] sm:$0xff]
  %v55 = vld [vmem:[%s1 + $0x74] sm:$0xf]
  %v56 = vld [vmem:[%s1 + $0x78] sm:$0xff]
  %v57 = vld [vmem:[%s1 + $0x80] sm:$0xf]
  %v58 = vld [vmem:[%s1 + $0x84] sm:$0xff]
  %v59 = vld [vmem:[%s1 + $0x8c] sm:$0xf]
  %v60 = vld [vmem:[%s1 + $0x90] sm:$0xff]
  %v61 = vld [vmem:[%s1 + $0x98] sm:$0xf]
  %v62 = vld [vmem:[%s1 + $0x9c] sm:$0xff]
  %v63 = vld [vmem:[%s1 + $0xa4] sm:$0xf]
  %v64 = vld [vmem:[%s1 + $0xa8] sm:$0xff]
  %v65 = vld [vmem:[%s1 + $0xb0] sm:$0xf]
  %v66 = vld [vmem:[%s1 + $0xb4] sm:$0xff]
  %v67 = vld [vmem:[%s1 + $0xbc] sm:$0xf]
  %v68 = vld [vmem:[%s1 + $0xc0] sm:$0xff]
  %v69 = vld [vmem:[%s1 + $0xc8] sm:$0xf]
  %v70 = vld [vmem:[%s1 + $0xcc] sm:$0xff]
  %v71 = vld [vmem:[%s1 + $0xd4] sm:$0xf]
  %v72 = vld [vmem:[%s1 + $0xd8] sm:$0xff]
  %v73 = vld [vmem:[%s1 + $0xe0] sm:$0xf]
  %v74 = vld [vmem:[%s1 + $0xe4] sm:$0xff]
  %v75 = vld [vmem:[%s1 + $0xec] sm:$0xf]
  %v76 = vld [vmem:[%s1 + $0xf0] sm:$0xff]
  %v77 = vld [vmem:[%s1 + $0xf8] sm:$0xf]
  %v78 = vld [vmem:[%s1 + $0xfc] sm:$0xff]
  %v79 = vld [vmem:[%s1 + $0x104] sm:$0xf]
  %v80 = vld [vmem:[%s1 + $0x108] sm:$0xff]
  %v81 = vld [vmem:[%s1 + $0x110] sm:$0xf]
  %v82 = vld [vmem:[%s1 + $0x114] sm:$0xff]
  %v83 = vld [vmem:[%s1 + $0x11c] sm:$0xf]
  %v84 = vld [vmem:[%s1 + $0x120] sm:$0xff]
  %v85 = vld [vmem:[%s1 + $0x128] sm:$0xf]
  %v86 = vld [vmem:[%s1 + $0x12c] sm:$0xff]
  %v87 = vld [vmem:[%s1 + $0x134] sm:$0xf]
  %v88 = vld [vmem:[%s1 + $0x138] sm:$0xff]
  %v89 = vld [vmem:[%s1 + $0x140] sm:$0xf]
  %v90 = vld [vmem:[%s1 + $0x144] sm:$0xff]
  %v91 = vld [vmem:[%s1 + $0x14c] sm:$0xf]
  %v92 = vld [vmem:[%s1 + $0x150] sm:$0xff]
  %v93 = vld [vmem:[%s1 + $0x158] sm:$0xf]
  %v94 = vld [vmem:[%s1 + $0x15c] sm:$0xff]
  %v95 = vld [vmem:[%s1 + $0x164] sm:$0xf]
  %v96 = vld [vmem:[%s1 + $0x168] sm:$0xff]
  %v97 = vld [vmem:[%s1 + $0x170] sm:$0xf]
  %v98 = vld [vmem:[%s1 + $0x174] sm:$0xff]
  %v99 = vld [vmem:[%s1 + $0x17c] sm:$0xf]
  %v100 = vld [vmem:[%s1 + $0x180] sm:$0xff]
  %v101 = vld [vmem:[%s1 + $0x188] sm:$0xf]
  %v102 = vld [vmem:[%s1 + $0x18c] sm:$0xff]
  %v103 = vld [vmem:[%s1 + $0x194] sm:$0xf]
  %v104 = vld [vmem:[%s1 + $0x198] sm:$0xff]
  %v105 = vld [vmem:[%s1 + $0x1a0] sm:$0xf]
  %v106 = vld [vmem:[%s1 + $0x1a4] sm:$0xff]
  %v107 = vld [vmem:[%s1 + $0x1ac] sm:$0xf]
  %v108 = vld [vmem:[%s1 + $0x1b0] sm:$0xff]
  %v109 = vld [vmem:[%s1 + $0x1b8] sm:$0xf]
  %v110 = vld [vmem:[%s1 + $0x1bc] sm:$0xff]
  %v111 = vld [vmem:[%s1 + $0x1c4] sm:$0xf]
  %v112 = vld [vmem:[%s1 + $0x1c8] sm:$0xff]
  %v113 = vld [vmem:[%s1 + $0x1d0] sm:$0xf]
  %v114 = vld [vmem:[%s1 + $0x1d4] sm:$0xff]
  %v115 = vld [vmem:[%s1 + $0x1dc] sm:$0xf]
  %v116 = vld [vmem:[%s1 + $0x1e0] sm:$0xff]
  %v117 = vld [vmem:[%s1 + $0x1e8] sm:$0xf]
  %v118 = vld [vmem:[%s1 + $0x1ec] sm:$0xff]
  %v119 = vld [vmem:[%s1 + $0x1f4] sm:$0xf]
  %v120 = vld [vmem:[%s1 + $0x1f8] sm:$0xff]
  %v121 = vld [vmem:[%s1 + $0x200] sm:$0xf]
  %v122 = vld [vmem:[%s1 + $0x204] sm:$0xff]
  %v123 = vld [vmem:[%s1 + $0x20c] sm:$0xf]
  %v124 = vld [vmem:[%s1 + $0x210] sm:$0xff]
  %v125 = vld [vmem:[%s1 + $0x218] sm:$0xf]
  %v126 = vld [vmem:[%s1 + $0x21c] sm:$0xff]
  %v127 = vld [vmem:[%s1 + $0x224] sm:$0xf]
  %v128 = vld [vmem:[%s1 + $0x228] sm:$0xff]
  %v129 = vld [vmem:[%s1 + $0x230] sm:$0xf]
  %v130 = vld [vmem:[%s1 + $0x234] sm:$0xff]
  %v131 = vld [vmem:[%s1 + $0x23c] sm:$0xf]
  %v132 = vld [vmem:[%s1 + $0x240] sm:$0xff]
  %v133 = vld [vmem:[%s1 + $0x248] sm:$0xf]
  %v134 = vld [vmem:[%s1 + $0x24c] sm:$0xff]
  %v135 = vld [vmem:[%s1 + $0x254] sm:$0xf]
  %v136 = vld [vmem:[%s1 + $0x258] sm:$0xff]
  %v137 = vld [vmem:[%s1 + $0x260] sm:$0xf]
  %v138 = vld [vmem:[%s1 + $0x264] sm:$0xff]
  %v139 = vld [vmem:[%s1 + $0x26c] sm:$0xf]
  %v140 = vld [vmem:[%s1 + $0x270] sm:$0xff]
  %v141 = vld [vmem:[%s1 + $0x278] sm:$0xf]
  %v142 = vld [vmem:[%s1 + $0x27c] sm:$0xff]
  %v143 = vld [vmem:[%s1 + $0x284] sm:$0xf]
  %v144 = vld [vmem:[%s1 + $0x288] sm:$0xff]
  %v145 = vld [vmem:[%s1 + $0x290] sm:$0xf]
  %v146 = vld [vmem:[%s1 + $0x294] sm:$0xff]
  %v147 = vld [vmem:[%s1 + $0x29c] sm:$0xf]
  %v148 = vld [vmem:[%s1 + $0x2a0] sm:$0xff]
  %v149 = vld [vmem:[%s1 + $0x2a8] sm:$0xf]
  %v150 = vld [vmem:[%s1 + $0x2ac] sm:$0xff]
  %v151 = vld [vmem:[%s1 + $0x2b4] sm:$0xf]
  %v152 = vld [vmem:[%s1 + $0x2b8] sm:$0xff]
  %v153 = vld [vmem:[%s1 + $0x2c0] sm:$0xf]
  %v154 = vld [vmem:[%s1 + $0x2c4] sm:$0xff]
  %v155 = vld [vmem:[%s1 + $0x2cc] sm:$0xf]
  %v156 = vld [vmem:[%s1 + $0x2d0] sm:$0xff]
  %v157 = vld [vmem:[%s1 + $0x2d8] sm:$0xf]
  %v158 = vld [vmem:[%s1 + $0x2dc] sm:$0xff]
  %v159 = vld [vmem:[%s1 + $0x2e4] sm:$0xf]
  %v160 = vld [vmem:[%s1 + $0x2e8] sm:$0xff]
  %v161 = vld [vmem:[%s1 + $0x2f0] sm:$0xf]
  %v162 = vld [vmem:[%s1 + $0x2f4] sm:$0xff]
  %v163 = vld [vmem:[%s1 + $0x2fc] sm:$0xf]
  %v164 = vld [vmem:[%s1 + $0x300] sm:$0xff]
  %v165 = vld [vmem:[%s1 + $0x308] sm:$0xf]
  %v166 = vld [vmem:[%s1 + $0x30c] sm:$0xff]
  %v167 = vld [vmem:[%s1 + $0x314] sm:$0xf]
  %v168 = vld [vmem:[%s1 + $0x318] sm:$0xff]
  %v169 = vld [vmem:[%s1 + $0x320] sm:$0xf]
  %v170 = vld [vmem:[%s1 + $0x324] sm:$0xff]
  %v171 = vld [vmem:[%s1 + $0x32c] sm:$0xf]
  %v172 = vld [vmem:[%s1 + $0x330] sm:$0xff]
  %v173 = vld [vmem:[%s1 + $0x338] sm:$0xf]
  %v174 = vld [vmem:[%s1 + $0x33c] sm:$0xff]
  %v175 = vld [vmem:[%s1 + $0x344] sm:$0xf]
  %v176 = vld [vmem:[%s1 + $0x348] sm:$0xff]
  %v177 = vld [vmem:[%s1 + $0x350] sm:$0xf]
  %v178 = vld [vmem:[%s1 + $0x354] sm:$0xff]
  %v179 = vld [vmem:[%s1 + $0x35c] sm:$0xf]
  %v180 = vld [vmem:[%s1 + $0x360] sm:$0xff]
  %v181 = vld [vmem:[%s1 + $0x368] sm:$0xf]
  %v182 = vld [vmem:[%s1 + $0x36c] sm:$0xff]
  %v183 = vld [vmem:[%s1 + $0x374] sm:$0xf]
  %v184 = vld [vmem:[%s1 + $0x378] sm:$0xff]
  %v185 = vld [vmem:[%s1 + $0x380] sm:$0xf]
  %v186 = vld [vmem:[%s1 + $0x384] sm:$0xff]
  %v187 = vld [vmem:[%s1 + $0x38c] sm:$0xf]
  %v188 = vld [vmem:[%s1 + $0x390] sm:$0xff]
  %v189 = vld [vmem:[%s1 + $0x398] sm:$0xf]
  %v190 = vld [vmem:[%s1 + $0x39c] sm:$0xff]
  %v191 = vld [vmem:[%s1 + $0x3a4] sm:$0xf]
  %v192 = vld [vmem:[%s1 + $0x3a8] sm:$0xff]
  %v193 = vld [vmem:[%s1 + $0x3b0] sm:$0xf]
  %v194 = vld [vmem:[%s1 + $0x3b4] sm:$0xff]
  %v195 = vld [vmem:[%s1 + $0x3bc] sm:$0xf]
  %v196 = vld [vmem:[%s1 + $0x3c0] sm:$0xff]
  %v197 = vld [vmem:[%s1 + $0x3c8] sm:$0xf]
  %v198 = vld [vmem:[%s1 + $0x3cc] sm:$0xff]
  %v199 = vld [vmem:[%s1 + $0x3d4] sm:$0xf]
  %v200 = vld [vmem:[%s1 + $0x3d8] sm:$0xff]
  %v201 = vld [vmem:[%s1 + $0x3e0] sm:$0xf]
  %v202 = vld [vmem:[%s1 + $0x3e4] sm:$0xff]
  %v203 = vld [vmem:[%s1 + $0x3ec] sm:$0xf]
  %v204 = vld [vmem:[%s1 + $0x3f0] sm:$0xff]
  %v205 = vld [vmem:[%s1 + $0x3f8] sm:$0xf]
  %v206 = vld [vmem:[%s1 + $0x3fc] sm:$0xff]
  %v207 = vld [vmem:[%s1 + $0x404] sm:$0xf]
  %v208 = vld [vmem:[%s1 + $0x408] sm:$0xff]
  %v209 = vld [vmem:[%s1 + $0x410] sm:$0xf]
  %v210 = vld [vmem:[%s1 + $0x414] sm:$0xff]
  %v211 = vld [vmem:[%s1 + $0x41c] sm:$0xf]
  %v212 = vld [vmem:[%s1 + $0x420] sm:$0xff]
  %v213 = vld [vmem:[%s1 + $0x428] sm:$0xf]
  %v214 = vld [vmem:[%s1 + $0x42c] sm:$0xff]
  %v215 = vld [vmem:[%s1 + $0x434] sm:$0xf]
  %v216 = vld [vmem:[%s1 + $0x438] sm:$0xff]
  %v217 = vld [vmem:[%s1 + $0x440] sm:$0xf]
  %v218 = vld [vmem:[%s1 + $0x444] sm:$0xff]
  %v219 = vld [vmem:[%s1 + $0x44c] sm:$0xf]
  %v220 = vld [vmem:[%s1 + $0x450] sm:$0xff]
  %v221 = vld [vmem:[%s1 + $0x458] sm:$0xf]
  %v222 = vld [vmem:[%s1 + $0x45c] sm:$0xff]
  %v223 = vld [vmem:[%s1 + $0x464] sm:$0xf]
  %v224 = vld [vmem:[%s1 + $0x468] sm:$0xff]
  %v225 = vld [vmem:[%s1 + $0x470] sm:$0xf]
  %v226 = vld [vmem:[%s1 + $0x474] sm:$0xff]
  %v227 = vld [vmem:[%s1 + $0x47c] sm:$0xf]
  %v228 = vld [vmem:[%s1 + $0x480] sm:$0xff]
  %v229 = vld [vmem:[%s1 + $0x488] sm:$0xf]
  %v230 = vld [vmem:[%s1 + $0x48c] sm:$0xff]
  %v231 = vld [vmem:[%s1 + $0x494] sm:$0xf]
  %v232 = vld [vmem:[%s1 + $0x498] sm:$0xff]
  %v233 = vld [vmem:[%s1 + $0x4a0] sm:$0xf]
  %v234 = vld [vmem:[%s1 + $0x4a4] sm:$0xff]
  %v235 = vld [vmem:[%s1 + $0x4ac] sm:$0xf]
  %v236 = vld [vmem:[%s1 + $0x4b0] sm:$0xff]
  %v237 = vld [vmem:[%s1 + $0x4b8] sm:$0xf]
  %v238 = vld [vmem:[%s1 + $0x4bc] sm:$0xff]
  %v239 = vld [vmem:[%s1 + $0x4c4] sm:$0xf]
  %v240 = vld [vmem:[%s1 + $0x4c8] sm:$0xff]
  %v241 = vld [vmem:[%s1 + $0x4d0] sm:$0xf]
  %v242 = vld [vmem:[%s1 + $0x4d4] sm:$0xff]
  %v243 = vld [vmem:[%s1 + $0x4dc] sm:$0xf]
  %v244 = vld [vmem:[%s1 + $0x4e0] sm:$0xff]
  %v245 = vld [vmem:[%s1 + $0x4e8] sm:$0xf]
  %v246 = vld [vmem:[%s1 + $0x4ec] sm:$0xff]
  %v247 = vld [vmem:[%s1 + $0x4f4] sm:$0xf]
  %v248 = vld [vmem:[%s1 + $0x4f8] sm:$0xff]
  %v249 = vld [vmem:[%s1 + $0x500] sm:$0xf]
  %v250 = vld [vmem:[%s1 + $0x504] sm:$0xff]
  %v251 = vld [vmem:[%s1 + $0x50c] sm:$0xf]
  %v252 = vld [vmem:[%s1 + $0x510] sm:$0xff]
  %v253 = vld [vmem:[%s1 + $0x518] sm:$0xf]
  %v254 = vld [vmem:[%s1 + $0x51c] sm:$0xff]
  %v255 = vld [vmem:[%s1 + $0x524] sm:$0xf]
  %v256 = vld [vmem:[%s1 + $0x528] sm:$0xff]
  %v257 = vld [vmem:[%s1 + $0x530] sm:$0xf]
  %v258 = vld [vmem:[%s1 + $0x534] sm:$0xff]
  %v259 = vld [vmem:[%s1 + $0x53c] sm:$0xf]
  %v260 = vld [vmem:[%s1 + $0x540] sm:$0xff]
  %v261 = vld [vmem:[%s1 + $0x548] sm:$0xf]
  %v262 = vld [vmem:[%s1 + $0x54c] sm:$0xff]
  %v263 = vld [vmem:[%s1 + $0x554] sm:$0xf]
  %v264 = vld [vmem:[%s1 + $0x558] sm:$0xff]
  %v265 = vld [vmem:[%s1 + $0x560] sm:$0xf]
  %v266 = vld [vmem:[%s1 + $0x564] sm:$0xff]
  %v267 = vld [vmem:[%s1 + $0x56c] sm:$0xf]
  %v268 = vld [vmem:[%s1 + $0x570] sm:$0xff]
  %v269 = vld [vmem:[%s1 + $0x578] sm:$0xf]
  %v270 = vld [vmem:[%s1 + $0x57c] sm:$0xff]
  %v271 = vld [vmem:[%s1 + $0x584] sm:$0xf]
  %v272 = vld [vmem:[%s1 + $0x588] sm:$0xff]
  %v273 = vld [vmem:[%s1 + $0x590] sm:$0xf]
  %v274 = vld [vmem:[%s1 + $0x594] sm:$0xff]
  %v275 = vld [vmem:[%s1 + $0x59c] sm:$0xf]
  %v276 = vld [vmem:[%s1 + $0x5a0] sm:$0xff]
  %v277 = vld [vmem:[%s1 + $0x5a8] sm:$0xf]
  %v278 = vld [vmem:[%s1 + $0x5ac] sm:$0xff]
  %v279 = vld [vmem:[%s1 + $0x5b4] sm:$0xf]
  %v280 = vld [vmem:[%s1 + $0x5b8] sm:$0xff]
  %v281 = vld [vmem:[%s1 + $0x5c0] sm:$0xf]
  %v282 = vld [vmem:[%s1 + $0x5c4] sm:$0xff]
  %v283 = vld [vmem:[%s1 + $0x5cc] sm:$0xf]
  %v284 = vld [vmem:[%s1 + $0x5d0] sm:$0xff]
  %v285 = vld [vmem:[%s1 + $0x5d8] sm:$0xf]
  %v286 = vld [vmem:[%s1 + $0x5dc] sm:$0xff]
  %v287 = vld [vmem:[%s1 + $0x5e4] sm:$0xf]
  %v288 = vld [vmem:[%s1 + $0x5e8] sm:$0xff]
  %v289 = vld [vmem:[%s1 + $0x5f0] sm:$0xf]
  %v290 = vld [vmem:[%s1 + $0x5f4] sm:$0xff]
  %v291 = vld [vmem:[%s1 + $0x5fc] sm:$0xf]
  %v292 = vld [vmem:[%s1 + $0x600] sm:$0xff]
  %v293 = vld [vmem:[%s1 + $0x608] sm:$0xf]
  %v294 = vld [vmem:[%s1 + $0x60c] sm:$0xff]
  %v295 = vld [vmem:[%s1 + $0x614] sm:$0xf]
  %v296 = vld [vmem:[%s1 + $0x618] sm:$0xff]
  %v297 = vld [vmem:[%s1 + $0x620] sm:$0xf]
  %v298 = vld [vmem:[%s1 + $0x624] sm:$0xff]
  %v299 = vld [vmem:[%s1 + $0x62c] sm:$0xf]
  %v300 = vld [vmem:[%s1 + $0x630] sm:$0xff]
  %v301 = vld [vmem:[%s1 + $0x638] sm:$0xf]
  %v302 = vld [vmem:[%s1 + $0x63c] sm:$0xff]
  %v303 = vld [vmem:[%s1 + $0x644] sm:$0xf]
  %v304 = vld [vmem:[%s1 + $0x648] sm:$0xff]
  %v305 = vld [vmem:[%s1 + $0x650] sm:$0xf]
  %v306 = vld [vmem:[%s1 + $0x654] sm:$0xff]
  %v307 = vld [vmem:[%s1 + $0x65c] sm:$0xf]
  %v308 = vld [vmem:[%s1 + $0x660] sm:$0xff]
  %v309 = vld [vmem:[%s1 + $0x668] sm:$0xf]
  %v310 = vld [vmem:[%s1 + $0x66c] sm:$0xff]
  %v311 = vld [vmem:[%s1 + $0x674] sm:$0xf]
  %v312 = vld [vmem:[%s1 + $0x678] sm:$0xff]
  %v313 = vld [vmem:[%s1 + $0x680] sm:$0xf]
  %v314 = vld [vmem:[%s1 + $0x684] sm:$0xff]
  %v315 = vld [vmem:[%s1 + $0x68c] sm:$0xf]
  %v316 = vld [vmem:[%s1 + $0x690] sm:$0xff]
  %v317 = vld [vmem:[%s1 + $0x698] sm:$0xf]
  %v318 = vld [vmem:[%s1 + $0x69c] sm:$0xff]
  %v319 = vld [vmem:[%s1 + $0x6a4] sm:$0xf]
  %v320 = vld [vmem:[%s1 + $0x6a8] sm:$0xff]
  %v321 = vld [vmem:[%s1 + $0x6b0] sm:$0xf]
  %v322 = vld [vmem:[%s1 + $0x6b4] sm:$0xff]
  %v323 = vld [vmem:[%s1 + $0x6bc] sm:$0xf]
  %v324 = vld [vmem:[%s1 + $0x6c0] sm:$0xff]
  %v325 = vld [vmem:[%s1 + $0x6c8] sm:$0xf]
  %v326 = vld [vmem:[%s1 + $0x6cc] sm:$0xff]
  %v327 = vld [vmem:[%s1 + $0x6d4] sm:$0xf]
  %v328 = vld [vmem:[%s1 + $0x6d8] sm:$0xff]
  %v329 = vld [vmem:[%s1 + $0x6e0] sm:$0xf]
  %v330 = vld [vmem:[%s1 + $0x6e4] sm:$0xff]
  %v331 = vld [vmem:[%s1 + $0x6ec] sm:$0xf]
  %v332 = vld [vmem:[%s1 + $0x6f0] sm:$0xff]
  %v333 = vld [vmem:[%s1 + $0x6f8] sm:$0xf]
  %v334 = vld [vmem:[%s1 + $0x6fc] sm:$0xff]
  %v335 = vld [vmem:[%s1 + $0x704] sm:$0xf]
  %v336 = vld [vmem:[%s1 + $0x708] sm:$0xff]
  %v337 = vld [vmem:[%s1 + $0x710] sm:$0xf]
  %v338 = vld [vmem:[%s1 + $0x714] sm:$0xff]
  %v339 = vld [vmem:[%s1 + $0x71c] sm:$0xf]
  %v340 = vld [vmem:[%s1 + $0x720] sm:$0xff]
  %v341 = vld [vmem:[%s1 + $0x728] sm:$0xf]
  %v342 = vld [vmem:[%s1 + $0x72c] sm:$0xff]
  %v343 = vld [vmem:[%s1 + $0x734] sm:$0xf]
  %v344 = vld [vmem:[%s1 + $0x738] sm:$0xff]
  %v345 = vld [vmem:[%s1 + $0x740] sm:$0xf]
  %v346 = vld [vmem:[%s1 + $0x744] sm:$0xff]
  %v347 = vld [vmem:[%s1 + $0x74c] sm:$0xf]
  %v348 = vld [vmem:[%s1 + $0x750] sm:$0xff]
  %v349 = vld [vmem:[%s1 + $0x758] sm:$0xf]
  %v350 = vld [vmem:[%s1 + $0x75c] sm:$0xff]
  %v351 = vld [vmem:[%s1 + $0x764] sm:$0xf]
  %v352 = vld [vmem:[%s1 + $0x768] sm:$0xff]
  %v353 = vld [vmem:[%s1 + $0x770] sm:$0xf]
  %v354 = vld [vmem:[%s1 + $0x774] sm:$0xff]
  %v355 = vld [vmem:[%s1 + $0x77c] sm:$0xf]
  %v356 = vld [vmem:[%s1 + $0x780] sm:$0xff]
  %v357 = vld [vmem:[%s1 + $0x788] sm:$0xf]
  %v358 = vld [vmem:[%s1 + $0x78c] sm:$0xff]
  %v359 = vld [vmem:[%s1 + $0x794] sm:$0xf]
  %v360 = vld [vmem:[%s1 + $0x798] sm:$0xff]
  %v361 = vld [vmem:[%s1 + $0x7a0] sm:$0xf]
  %v362 = vld [vmem:[%s1 + $0x7a4] sm:$0xff]
  %v363 = vld [vmem:[%s1 + $0x7ac] sm:$0xf]
  %v364 = vld [vmem:[%s1 + $0x7b0] sm:$0xff]
  %v365 = vld [vmem:[%s1 + $0x7b8] sm:$0xf]
  %v366 = vld [vmem:[%s1 + $0x7bc] sm:$0xff]
  %v367 = vld [vmem:[%s1 + $0x7c4] sm:$0xf]
  %v368 = vld [vmem:[%s1 + $0x7c8] sm:$0xff]
  %v369 = vld [vmem:[%s1 + $0x7d0] sm:$0xf]
  %v370 = vld [vmem:[%s1 + $0x7d4] sm:$0xff]
  %v371 = vld [vmem:[%s1 + $0x7dc] sm:$0xf]
  %v372 = vld [vmem:[%s1 + $0x7e0] sm:$0xff]
  %v373 = vld [vmem:[%s1 + $0x7e8] sm:$0xf]
  %v374 = vld [vmem:[%s1 + $0x7ec] sm:$0xff]
  %v375 = vld [vmem:[%s1 + $0x7f4] sm:$0xf]
  %v376 = vld [vmem:[%s1 + $0x7f8] sm:$0xff]
  %v377 = vld [vmem:[%s1 + $0x800] sm:$0xf]
  %v378 = vld [vmem:[%s1 + $0x804] sm:$0xff]
  %v379 = vld [vmem:[%s1 + $0x80c] sm:$0xf]
  %v380 = vld [vmem:[%s1 + $0x810] sm:$0xff]
  %v381 = vld [vmem:[%s1 + $0x818] sm:$0xf]
  %v382 = vld [vmem:[%s1 + $0x81c] sm:$0xff]
  %v383 = vld [vmem:[%s1 + $0x824] sm:$0xf]
  %v384 = vld [vmem:[%s1 + $0x828] sm:$0xff]
  %v385 = vld [vmem:[%s1 + $0x830] sm:$0xf]
  %v386 = vld [vmem:[%s1 + $0x834] sm:$0xff]
  %v387 = vld [vmem:[%s1 + $0x83c] sm:$0xf]
  %v388 = vld [vmem:[%s1 + $0x840] sm:$0xff]
  %v389 = vld [vmem:[%s1 + $0x848] sm:$0xf]
  %v390 = vld [vmem:[%s1 + $0x84c] sm:$0xff]
  %v391 = vld [vmem:[%s1 + $0x854] sm:$0xf]
  %v392 = vld [vmem:[%s1 + $0x858] sm:$0xff]
  %v393 = vld [vmem:[%s1 + $0x860] sm:$0xf]
  %v394 = vld [vmem:[%s1 + $0x864] sm:$0xff]
  %v395 = vld [vmem:[%s1 + $0x86c] sm:$0xf]
  %v396 = vld [vmem:[%s1 + $0x870] sm:$0xff]
  %v397 = vld [vmem:[%s1 + $0x878] sm:$0xf]
  %v398 = vld [vmem:[%s1 + $0x87c] sm:$0xff]
  %v399 = vld [vmem:[%s1 + $0x884] sm:$0xf]
  %v400 = vld [vmem:[%s1 + $0x888] sm:$0xff]
  %v401 = vld [vmem:[%s1 + $0x890] sm:$0xf]
  %v402 = vld [vmem:[%s1 + $0x894] sm:$0xff]
  %v403 = vld [vmem:[%s1 + $0x89c] sm:$0xf]
  %v404 = vld [vmem:[%s1 + $0x8a0] sm:$0xff]
  %v405 = vld [vmem:[%s1 + $0x8a8] sm:$0xf]
  %v406 = vld [vmem:[%s1 + $0x8ac] sm:$0xff]
  %v407 = vld [vmem:[%s1 + $0x8b4] sm:$0xf]
  %v408 = vld [vmem:[%s1 + $0x8b8] sm:$0xff]
  %v409 = vld [vmem:[%s1 + $0x8c0] sm:$0xf]
  %v410 = vld [vmem:[%s1 + $0x8c4] sm:$0xff]
  %v411 = vld [vmem:[%s1 + $0x8cc] sm:$0xf]
  %v412 = vld [vmem:[%s1 + $0x8d0] sm:$0xff]
  %v413 = vld [vmem:[%s1 + $0x8d8] sm:$0xf]
  %v414 = vld [vmem:[%s1 + $0x8dc] sm:$0xff]
  %v415 = vld [vmem:[%s1 + $0x8e4] sm:$0xf]
  %v416 = vld [vmem:[%s1 + $0x8e8] sm:$0xff]
  %v417 = vld [vmem:[%s1 + $0x8f0] sm:$0xf]
  %v418 = vld [vmem:[%s1 + $0x8f4] sm:$0xff]
  %v419 = vld [vmem:[%s1 + $0x8fc] sm:$0xf]
  %v420 = vld [vmem:[%s1 + $0x900] sm:$0xff]
  %v421 = vld [vmem:[%s1 + $0x908] sm:$0xf]
  %v422 = vld [vmem:[%s1 + $0x90c] sm:$0xff]
  %v423 = vld [vmem:[%s1 + $0x914] sm:$0xf]
  %v424 = vld [vmem:[%s1 + $0x918] sm:$0xff]
  %v425 = vld [vmem:[%s1 + $0x920] sm:$0xf]
  %v426 = vld [vmem:[%s1 + $0x924] sm:$0xff]
  %v427 = vld [vmem:[%s1 + $0x92c] sm:$0xf]
  %v428 = vld [vmem:[%s1 + $0x930] sm:$0xff]
  %v429 = vld [vmem:[%s1 + $0x938] sm:$0xf]
  %v430 = vld [vmem:[%s1 + $0x93c] sm:$0xff]
  %v431 = vld [vmem:[%s1 + $0x944] sm:$0xf]
  %v432 = vld [vmem:[%s1 + $0x948] sm:$0xff]
  %v433 = vld [vmem:[%s1 + $0x950] sm:$0xf]
  %v434 = vld [vmem:[%s1 + $0x954] sm:$0xff]
  %v435 = vld [vmem:[%s1 + $0x95c] sm:$0xf]
  %v436 = vld [vmem:[%s1 + $0x960] sm:$0xff]
  %v437 = vld [vmem:[%s1 + $0x968] sm:$0xf]
  %v438 = vld [vmem:[%s1 + $0x96c] sm:$0xff]
  %v439 = vld [vmem:[%s1 + $0x974] sm:$0xf]
  %v440 = vld [vmem:[%s1 + $0x978] sm:$0xff]
  %v441 = vld [vmem:[%s1 + $0x980] sm:$0xf]
  %v442 = vld [vmem:[%s1 + $0x984] sm:$0xff]
  %v443 = vld [vmem:[%s1 + $0x98c] sm:$0xf]
  %v444 = vld [vmem:[%s1 + $0x990] sm:$0xff]
  %v445 = vld [vmem:[%s1 + $0x998] sm:$0xf]
  %v446 = vld [vmem:[%s1 + $0x99c] sm:$0xff]
  %v447 = vld [vmem:[%s1 + $0x9a4] sm:$0xf]
  %v448 = vld [vmem:[%s1 + $0x9a8] sm:$0xff]
  %v449 = vld [vmem:[%s1 + $0x9b0] sm:$0xf]
  %v450 = vld [vmem:[%s1 + $0x9b4] sm:$0xff]
  %v451 = vld [vmem:[%s1 + $0x9bc] sm:$0xf]
  %v452 = vld [vmem:[%s1 + $0x9c0] sm:$0xff]
  %v453 = vld [vmem:[%s1 + $0x9c8] sm:$0xf]
  %v454 = vld [vmem:[%s1 + $0x9cc] sm:$0xff]
  %v455 = vld [vmem:[%s1 + $0x9d4] sm:$0xf]
  %v456 = vld [vmem:[%s1 + $0x9d8] sm:$0xff]
  %v457 = vld [vmem:[%s1 + $0x9e0] sm:$0xf]
  %v458 = vld [vmem:[%s1 + $0x9e4] sm:$0xff]
  %v459 = vld [vmem:[%s1 + $0x9ec] sm:$0xf]
  %v460 = vld [vmem:[%s1 + $0x9f0] sm:$0xff]
  %v461 = vld [vmem:[%s1 + $0x9f8] sm:$0xf]
  %v462 = vld [vmem:[%s1 + $0x9fc] sm:$0xff]
  %v463 = vld [vmem:[%s1 + $0xa04] sm:$0xf]
  %v464 = vld [vmem:[%s1 + $0xa08] sm:$0xff]
  %v465 = vld [vmem:[%s1 + $0xa10] sm:$0xf]
  %v466 = vld [vmem:[%s1 + $0xa14] sm:$0xff]
  %v467 = vld [vmem:[%s1 + $0xa1c] sm:$0xf]
  %v468 = vld [vmem:[%s1 + $0xa20] sm:$0xff]
  %v469 = vld [vmem:[%s1 + $0xa28] sm:$0xf]
  %v470 = vld [vmem:[%s1 + $0xa2c] sm:$0xff]
  %v471 = vld [vmem:[%s1 + $0xa34] sm:$0xf]
  %v472 = vld [vmem:[%s1 + $0xa38] sm:$0xff]
  %v473 = vld [vmem:[%s1 + $0xa40] sm:$0xf]
  %v474 = vld [vmem:[%s1 + $0xa44] sm:$0xff]
  %v475 = vld [vmem:[%s1 + $0xa4c] sm:$0xf]
  %v476 = vld [vmem:[%s1 + $0xa50] sm:$0xff]
  %v477 = vld [vmem:[%s1 + $0xa58] sm:$0xf]
  %v478 = vld [vmem:[%s1 + $0xa5c] sm:$0xff]
  %v479 = vld [vmem:[%s1 + $0xa64] sm:$0xf]
  %v480 = vld [vmem:[%s1 + $0xa68] sm:$0xff]
  %v481 = vld [vmem:[%s1 + $0xa70] sm:$0xf]
  %v482 = vld [vmem:[%s1 + $0xa74] sm:$0xff]
  %v483 = vld [vmem:[%s1 + $0xa7c] sm:$0xf]
  %v484 = vld [vmem:[%s1 + $0xa80] sm:$0xff]
  %v485 = vld [vmem:[%s1 + $0xa88] sm:$0xf]
  %v486 = vld [vmem:[%s1 + $0xa8c] sm:$0xff]
  %v487 = vld [vmem:[%s1 + $0xa94] sm:$0xf]
  %v488 = vld [vmem:[%s1 + $0xa98] sm:$0xff]
  %v489 = vld [vmem:[%s1 + $0xaa0] sm:$0xf]
  %v490 = vld [vmem:[%s1 + $0xaa4] sm:$0xff]
  %v491 = vld [vmem:[%s1 + $0xaac] sm:$0xf]
  %v492 = vld [vmem:[%s1 + $0xab0] sm:$0xff]
  %v493 = vld [vmem:[%s1 + $0xab8] sm:$0xf]
  %v494 = vld [vmem:[%s1 + $0xabc] sm:$0xff]
  %v495 = vld [vmem:[%s1 + $0xac4] sm:$0xf]
  %v496 = vld [vmem:[%s1 + $0xac8] sm:$0xff]
  %v497 = vld [vmem:[%s1 + $0xad0] sm:$0xf]
  %v498 = vld [vmem:[%s1 + $0xad4] sm:$0xff]
  %v499 = vld [vmem:[%s1 + $0xadc] sm:$0xf]
  %v500 = vld [vmem:[%s1 + $0xae0] sm:$0xff]
  %v501 = vld [vmem:[%s1 + $0xae8] sm:$0xf]
  %v502 = vld [vmem:[%s1 + $0xaec] sm:$0xff]
  %v503 = vld [vmem:[%s1 + $0xaf4] sm:$0xf]
  %v504 = vld [vmem:[%s1 + $0xaf8] sm:$0xff]
  %v505 = vld [vmem:[%s1 + $0xb00] sm:$0xf]
  %v506 = vld [vmem:[%s1 + $0xb04] sm:$0xff]
  %v507 = vld [vmem:[%s1 + $0xb0c] sm:$0xf]
  %v508 = vld [vmem:[%s1 + $0xb10] sm:$0xff]
  %v509 = vld [vmem:[%s1 + $0xb18] sm:$0xf]
  %v510 = vld [vmem:[%s1 + $0xb1c] sm:$0xff]
  %v511 = vld [vmem:[%s1 + $0xb24] sm:$0xf]
  %v512 = vld [vmem:[%s1 + $0xb28] sm:$0xff]
  %v513 = vld [vmem:[%s1 + $0xb30] sm:$0xf]
  %v514 = vld [vmem:[%s1 + $0xb34] sm:$0xff]
  %v515 = vld [vmem:[%s1 + $0xb3c] sm:$0xf]
  %v516 = vld [vmem:[%s1 + $0xb40] sm:$0xff]
  %v517 = vld [vmem:[%s1 + $0xb48] sm:$0xf]
  %v518 = vld [vmem:[%s1 + $0xb4c] sm:$0xff]
  %v519 = vld [vmem:[%s1 + $0xb54] sm:$0xf]
  %v520 = vld [vmem:[%s1 + $0xb58] sm:$0xff]
  %v521 = vld [vmem:[%s1 + $0xb60] sm:$0xf]
  %v522 = vld [vmem:[%s1 + $0xb64] sm:$0xff]
  %v523 = vld [vmem:[%s1 + $0xb6c] sm:$0xf]
  %v524 = vld [vmem:[%s1 + $0xb70] sm:$0xff]
  %v525 = vld [vmem:[%s1 + $0xb78] sm:$0xf]
  %v526 = vld [vmem:[%s1 + $0xb7c] sm:$0xff]
  %v527 = vld [vmem:[%s1 + $0xb84] sm:$0xf]
  %v528 = vld [vmem:[%s1 + $0xb88] sm:$0xff]
  %v529 = vld [vmem:[%s1 + $0xb90] sm:$0xf]
  %v530 = vld [vmem:[%s1 + $0xb94] sm:$0xff]
  %v531 = vld [vmem:[%s1 + $0xb9c] sm:$0xf]
  %v532 = vld [vmem:[%s1 + $0xba0] sm:$0xff]
  %v533 = vld [vmem:[%s1 + $0xba8] sm:$0xf]
  %v534 = vld [vmem:[%s1 + $0xbac] sm:$0xff]
  %v535 = vld [vmem:[%s1 + $0xbb4] sm:$0xf]
  %v536 = vld [vmem:[%s1 + $0xbb8] sm:$0xff]
  %v537 = vld [vmem:[%s1 + $0xbc0] sm:$0xf]
  %v538 = vld [vmem:[%s1 + $0xbc4] sm:$0xff]
  %v539 = vld [vmem:[%s1 + $0xbcc] sm:$0xf]
  %v540 = vld [vmem:[%s1 + $0xbd0] sm:$0xff]
  %v541 = vld [vmem:[%s1 + $0xbd8] sm:$0xf]
  %v542 = vld [vmem:[%s1 + $0xbdc] sm:$0xff]
  %v543 = vld [vmem:[%s1 + $0xbe4] sm:$0xf]
  %v544 = vld [vmem:[%s1 + $0xbe8] sm:$0xff]
  %v545 = vld [vmem:[%s1 + $0xbf0] sm:$0xf]
  %v546 = vld [vmem:[%s1 + $0xbf4] sm:$0xff]
  %v547 = vld [vmem:[%s1 + $0xbfc] sm:$0xf]
  %v548 = vld [vmem:[%s1 + $0xc00] sm:$0xff]
  %v549 = vld [vmem:[%s1 + $0xc08] sm:$0xf]
  %v550 = vld [vmem:[%s1 + $0xc0c] sm:$0xff]
  %v551 = vld [vmem:[%s1 + $0xc14] sm:$0xf]
  %v552 = vld [vmem:[%s1 + $0xc18] sm:$0xff]
  %v553 = vld [vmem:[%s1 + $0xc20] sm:$0xf]
  %v554 = vld [vmem:[%s1 + $0xc24] sm:$0xff]
  %v555 = vld [vmem:[%s1 + $0xc2c] sm:$0xf]
  %v556 = vld [vmem:[%s1 + $0xc30] sm:$0xff]
  %v557 = vld [vmem:[%s1 + $0xc38] sm:$0xf]
  %v558 = vld [vmem:[%s1 + $0xc3c] sm:$0xff]
  %v559 = vld [vmem:[%s1 + $0xc44] sm:$0xf]
  %v560 = vld [vmem:[%s1 + $0xc48] sm:$0xff]
  %v561 = vld [vmem:[%s1 + $0xc50] sm:$0xf]
  %v562 = vld [vmem:[%s1 + $0xc54] sm:$0xff]
  %v563 = vld [vmem:[%s1 + $0xc5c] sm:$0xf]
  %v564 = vld [vmem:[%s1 + $0xc60] sm:$0xff]
  %v565 = vld [vmem:[%s1 + $0xc68] sm:$0xf]
  %v566 = vld [vmem:[%s1 + $0xc6c] sm:$0xff]
  %v567 = vld [vmem:[%s1 + $0xc74] sm:$0xf]
  %v568 = vld [vmem:[%s1 + $0xc78] sm:$0xff]
  %v569 = vld [vmem:[%s1 + $0xc80] sm:$0xf]
  %v570 = vld [vmem:[%s1 + $0xc84] sm:$0xff]
  %v571 = vld [vmem:[%s1 + $0xc8c] sm:$0xf]
  %v572 = vld [vmem:[%s1 + $0xc90] sm:$0xff]
  %v573 = vld [vmem:[%s1 + $0xc98] sm:$0xf]
  %v574 = vld [vmem:[%s1 + $0xc9c] sm:$0xff]
  %v575 = vld [vmem:[%s1 + $0xca4] sm:$0xf]
  %v576 = vld [vmem:[%s1 + $0xca8] sm:$0xff]
  %v577 = vld [vmem:[%s1 + $0xcb0] sm:$0xf]
  %v578 = vld [vmem:[%s1 + $0xcb4] sm:$0xff]
  %v579 = vld [vmem:[%s1 + $0xcbc] sm:$0xf]
  %v580 = vld [vmem:[%s1 + $0xcc0] sm:$0xff]
  %v581 = vld [vmem:[%s1 + $0xcc8] sm:$0xf]
  %v582 = vld [vmem:[%s1 + $0xccc] sm:$0xff]
  %v583 = vld [vmem:[%s1 + $0xcd4] sm:$0xf]
  %v584 = vld [vmem:[%s1 + $0xcd8] sm:$0xff]
  %v585 = vld [vmem:[%s1 + $0xce0] sm:$0xf]
  %v586 = vld [vmem:[%s1 + $0xce4] sm:$0xff]
  %v587 = vld [vmem:[%s1 + $0xcec] sm:$0xf]
  %v588 = vld [vmem:[%s1 + $0xcf0] sm:$0xff]
  %v589 = vld [vmem:[%s1 + $0xcf8] sm:$0xf]
  %v590 = vld [vmem:[%s1 + $0xcfc] sm:$0xff]
  %v591 = vld [vmem:[%s1 + $0xd04] sm:$0xf]
  %v592 = vld [vmem:[%s1 + $0xd08] sm:$0xff]
  %v593 = vld [vmem:[%s1 + $0xd10] sm:$0xf]
  %v594 = vld [vmem:[%s1 + $0xd14] sm:$0xff]
  %v595 = vld [vmem:[%s1 + $0xd1c] sm:$0xf]
  %v596 = vld [vmem:[%s1 + $0xd20] sm:$0xff]
  %v597 = vld [vmem:[%s1 + $0xd28] sm:$0xf]
  %v598 = vld [vmem:[%s1 + $0xd2c] sm:$0xff]
  %v599 = vld [vmem:[%s1 + $0xd34] sm:$0xf]
  %v600 = vld [vmem:[%s1 + $0xd38] sm:$0xff]
  %v601 = vld [vmem:[%s1 + $0xd40] sm:$0xf]
  %v602 = vld [vmem:[%s1 + $0xd44] sm:$0xff]
  %v603 = vld [vmem:[%s1 + $0xd4c] sm:$0xf]
  %v604 = vld [vmem:[%s1 + $0xd50] sm:$0xff]
  %v605 = vld [vmem:[%s1 + $0xd58] sm:$0xf]
  %v606 = vld [vmem:[%s1 + $0xd5c] sm:$0xff]
  %v607 = vld [vmem:[%s1 + $0xd64] sm:$0xf]
  %v608 = vld [vmem:[%s1 + $0xd68] sm:$0xff]
  %v609 = vld [vmem:[%s1 + $0xd70] sm:$0xf]
  %v610 = vld [vmem:[%s1 + $0xd74] sm:$0xff]
  %v611 = vld [vmem:[%s1 + $0xd7c] sm:$0xf]
  %v612 = vld [vmem:[%s1 + $0xd80] sm:$0xff]
  %v613 = vld [vmem:[%s1 + $0xd88] sm:$0xf]
  %v614 = vld [vmem:[%s1 + $0xd8c] sm:$0xff]
  %v615 = vld [vmem:[%s1 + $0xd94] sm:$0xf]
  %v616 = vld [vmem:[%s1 + $0xd98] sm:$0xff]
  %v617 = vld [vmem:[%s1 + $0xda0] sm:$0xf]
  %v618 = vld [vmem:[%s1 + $0xda4] sm:$0xff]
  %v619 = vld [vmem:[%s1 + $0xdac] sm:$0xf]
  %v620 = vld [vmem:[%s1 + $0xdb0] sm:$0xff]
  %v621 = vld [vmem:[%s1 + $0xdb8] sm:$0xf]
  %v622 = vld [vmem:[%s1 + $0xdbc] sm:$0xff]
  %v623 = vld [vmem:[%s1 + $0xdc4] sm:$0xf]
  %v624 = vld [vmem:[%s1 + $0xdc8] sm:$0xff]
  %v625 = vld [vmem:[%s1 + $0xdd0] sm:$0xf]
  %v626 = vld [vmem:[%s1 + $0xdd4] sm:$0xff]
  %v627 = vld [vmem:[%s1 + $0xddc] sm:$0xf]
  %v628 = vld [vmem:[%s1 + $0xde0] sm:$0xff]
  %v629 = vld [vmem:[%s1 + $0xde8] sm:$0xf]
  %v630 = vld [vmem:[%s1 + $0xdec] sm:$0xff]
  %v631 = vld [vmem:[%s1 + $0xdf4] sm:$0xf]
  %v632 = vld [vmem:[%s1 + $0xdf8] sm:$0xff]
  %v633 = vld [vmem:[%s1 + $0xe00] sm:$0xf]
  %v634 = vld [vmem:[%s1 + $0xe04] sm:$0xff]
  %v635 = vld [vmem:[%s1 + $0xe0c] sm:$0xf]
  %v636 = vld [vmem:[%s1 + $0xe10] sm:$0xff]
  %v637 = vld [vmem:[%s1 + $0xe18] sm:$0xf]
  %v638 = vld [vmem:[%s1 + $0xe1c] sm:$0xff]
  %v639 = vld [vmem:[%s1 + $0xe24] sm:$0xf]
  %v640 = vld [vmem:[%s1 + $0xe28] sm:$0xff]
  %v641 = vld [vmem:[%s1 + $0xe30] sm:$0xf]
  %v642 = vld [vmem:[%s1 + $0xe34] sm:$0xff]
  %v643 = vld [vmem:[%s1 + $0xe3c] sm:$0xf]
  %v644 = vld [vmem:[%s1 + $0xe40] sm:$0xff]
  %v645 = vld [vmem:[%s1 + $0xe48] sm:$0xf]
  %v646 = vld [vmem:[%s1 + $0xe4c] sm:$0xff]
  %v647 = vld [vmem:[%s1 + $0xe54] sm:$0xf]
  %v648 = vld [vmem:[%s1 + $0xe58] sm:$0xff]
  %v649 = vld [vmem:[%s1 + $0xe60] sm:$0xf]
  %v650 = vld [vmem:[%s1 + $0xe64] sm:$0xff]
  %v651 = vld [vmem:[%s1 + $0xe6c] sm:$0xf]
  %v652 = vld [vmem:[%s1 + $0xe70] sm:$0xff]
  %v653 = vld [vmem:[%s1 + $0xe78] sm:$0xf]
  %v654 = vld [vmem:[%s1 + $0xe7c] sm:$0xff]
  %v655 = vld [vmem:[%s1 + $0xe84] sm:$0xf]
  %v656 = vld [vmem:[%s1 + $0xe88] sm:$0xff]
  %v657 = vld [vmem:[%s1 + $0xe90] sm:$0xf]
  %v658 = vld [vmem:[%s1 + $0xe94] sm:$0xff]
  %v659 = vld [vmem:[%s1 + $0xe9c] sm:$0xf]
  %v660 = vld [vmem:[%s1 + $0xea0] sm:$0xff]
  %v661 = vld [vmem:[%s1 + $0xea8] sm:$0xf]
  %v662 = vld [vmem:[%s1 + $0xeac] sm:$0xff]
  %v663 = vld [vmem:[%s1 + $0xeb4] sm:$0xf]
  %v664 = vld [vmem:[%s1 + $0xeb8] sm:$0xff]
  %v665 = vld [vmem:[%s1 + $0xec0] sm:$0xf]
  %v666 = vld [vmem:[%s1 + $0xec4] sm:$0xff]
  %v667 = vld [vmem:[%s1 + $0xecc] sm:$0xf]
  %v668 = vld [vmem:[%s1 + $0xed0] sm:$0xff]
  %v669 = vld [vmem:[%s1 + $0xed8] sm:$0xf]
  %v670 = vld [vmem:[%s1 + $0xedc] sm:$0xff]
  %v671 = vld [vmem:[%s1 + $0xee4] sm:$0xf]
  %v672 = vld [vmem:[%s1 + $0xee8] sm:$0xff]
  %v673 = vld [vmem:[%s1 + $0xef0] sm:$0xf]
  %v674 = vld [vmem:[%s1 + $0xef4] sm:$0xff]
  %v675 = vld [vmem:[%s1 + $0xefc] sm:$0xf]
  %v676 = vld [vmem:[%s1 + $0xf00] sm:$0xff]
  %v677 = vld [vmem:[%s1 + $0xf08] sm:$0xf]
  %v678 = vld [vmem:[%s1 + $0xf0c] sm:$0xff]
  %v679 = vld [vmem:[%s1 + $0xf14] sm:$0xf]
  %v680 = vld [vmem:[%s1 + $0xf18] sm:$0xff]
  %v681 = vld [vmem:[%s1 + $0xf20] sm:$0xf]
  %v682 = vld [vmem:[%s1 + $0xf24] sm:$0xff]
  %v683 = vld [vmem:[%s1 + $0xf2c] sm:$0xf]
  %v684 = vld [vmem:[%s1 + $0xf30] sm:$0xff]
  %v685 = vld [vmem:[%s1 + $0xf38] sm:$0xf]
  %v686 = vld [vmem:[%s1 + $0xf3c] sm:$0xff]
  %v687 = vld [vmem:[%s1 + $0xf44] sm:$0xf]
  %v688 = vld [vmem:[%s1 + $0xf48] sm:$0xff]
  %v689 = vld [vmem:[%s1 + $0xf50] sm:$0xf]
  %v690 = vld [vmem:[%s1 + $0xf54] sm:$0xff]
  %v691 = vld [vmem:[%s1 + $0xf5c] sm:$0xf]
  %v692 = vld [vmem:[%s1 + $0xf60] sm:$0xff]
  %v693 = vld [vmem:[%s1 + $0xf68] sm:$0xf]
  %v694 = vld [vmem:[%s1 + $0xf6c] sm:$0xff]
  %v695 = vld [vmem:[%s1 + $0xf74] sm:$0xf]
  %v696 = vld [vmem:[%s1 + $0xf78] sm:$0xff]
  %v697 = vld [vmem:[%s1 + $0xf80] sm:$0xf]
  %v698 = vld [vmem:[%s1 + $0xf84] sm:$0xff]
  %v699 = vld [vmem:[%s1 + $0xf8c] sm:$0xf]
  %v700 = vld [vmem:[%s1 + $0xf90] sm:$0xff]
  %v701 = vld [vmem:[%s1 + $0xf98] sm:$0xf]
  %v702 = vld [vmem:[%s1 + $0xf9c] sm:$0xff]
  %v703 = vld [vmem:[%s1 + $0xfa4] sm:$0xf]
  %v704 = vld [vmem:[%s1 + $0xfa8] sm:$0xff]
  %v705 = vld [vmem:[%s1 + $0xfb0] sm:$0xf]
  %v706 = vld [vmem:[%s1 + $0xfb4] sm:$0xff]
  %v707 = vld [vmem:[%s1 + $0xfbc] sm:$0xf]
  %v708 = vld [vmem:[%s2] sm:$0x7]
  %v710 = vperm.slane %v708, 0
  %v711 = vperm.slane %v708, 1
  %v712 = vperm.slane %v708, 2
  %v738 = vunpack.c.l.b16 %v14
  %v739 = vunpack.c.h.b16 %v14
  %v740 = vunpack.c.l.b16 %v15
  %v741 = vunpack.c.h.b16 %v15
  %v742 = vunpack.c.l.b16 %v16
  %v743 = vunpack.c.h.b16 %v16
  %v744 = vunpack.c.l.b16 %v17
  %v745 = vunpack.c.h.b16 %v17
  %v746 = vunpack.c.l.b16 %v18
  %v747 = vunpack.c.h.b16 %v18
  %v748 = vunpack.c.l.b16 %v19
  %v749 = vunpack.c.h.b16 %v19
  %v750 = vunpack.c.l.b16 %v20
  %v751 = vunpack.c.h.b16 %v20
  %v752 = vunpack.c.l.b16 %v21
  %v753 = vunpack.c.h.b16 %v21
  %v754 = vunpack.c.l.b16 %v22
  %v755 = vunpack.c.h.b16 %v22
  %v756 = vunpack.c.l.b16 %v23
  %v757 = vunpack.c.h.b16 %v23
  %v758 = vunpack.c.l.b16 %v24
  %v759 = vunpack.c.l.b16 %v25
  %v760 = vunpack.c.h.b16 %v25
  %v761 = vunpack.c.l.b16 %v26
  %v762 = vunpack.c.h.b16 %v26
  %v763 = vunpack.c.l.b16 %v27
  %v764 = vunpack.c.h.b16 %v27
  %v765 = vunpack.c.l.b16 %v28
  %v766 = vunpack.c.h.b16 %v28
  %v767 = vunpack.c.l.b16 %v29
  %v768 = vunpack.c.h.b16 %v29
  %v769 = vunpack.c.l.b16 %v30
  %v770 = vunpack.c.h.b16 %v30
  %v771 = vunpack.c.l.b16 %v31
  %v772 = vunpack.c.h.b16 %v31
  %v773 = vunpack.c.l.b16 %v32
  %v774 = vunpack.c.h.b16 %v32
  %v775 = vunpack.c.l.b16 %v33
  %v776 = vunpack.c.h.b16 %v33
  %v777 = vunpack.c.l.b16 %v34
  %v778 = vunpack.c.h.b16 %v34
  %v779 = vunpack.c.l.b16 %v35
  %v780 = vpack.c.b16 %v759, %v738
  %v781 = vpack.c.b16 %v760, %v739
  %v782 = vpack.c.b16 %v761, %v740
  %v783 = vpack.c.b16 %v762, %v741
  %v784 = vpack.c.b16 %v763, %v742
  %v785 = vpack.c.b16 %v764, %v743
  %v786 = vpack.c.b16 %v765, %v744
  %v787 = vpack.c.b16 %v766, %v745
  %v788 = vpack.c.b16 %v767, %v746
  %v789 = vpack.c.b16 %v768, %v747
  %v790 = vpack.c.b16 %v769, %v748
  %v791 = vpack.c.b16 %v770, %v749
  %v792 = vpack.c.b16 %v771, %v750
  %v793 = vpack.c.b16 %v772, %v751
  %v794 = vpack.c.b16 %v773, %v752
  %v795 = vpack.c.b16 %v774, %v753
  %v796 = vpack.c.b16 %v775, %v754
  %v797 = vpack.c.b16 %v776, %v755
  %v798 = vpack.c.b16 %v777, %v756
  %v799 = vpack.c.b16 %v778, %v757
  %v800 = vpack.c.b16 %v779, %v758
  %v1494 = vunpack.c.l.b16 %v36
  %v1495 = vunpack.c.h.b16 %v36
  %v1496 = vunpack.c.l.b16 %v37
  %v1497 = vunpack.c.l.b16 %v38
  %v1498 = vunpack.c.h.b16 %v38
  %v1499 = vunpack.c.l.b16 %v39
  %v1500 = vunpack.c.l.b16 %v40
  %v1501 = vunpack.c.h.b16 %v40
  %v1502 = vunpack.c.l.b16 %v41
  %v1503 = vunpack.c.l.b16 %v42
  %v1504 = vunpack.c.h.b16 %v42
  %v1505 = vunpack.c.l.b16 %v43
  %v1506 = vunpack.c.l.b16 %v44
  %v1507 = vunpack.c.h.b16 %v44
  %v1508 = vunpack.c.l.b16 %v45
  %v1509 = vunpack.c.l.b16 %v46
  %v1510 = vunpack.c.h.b16 %v46
  %v1511 = vunpack.c.l.b16 %v47
  %v1512 = vunpack.c.l.b16 %v48
  %v1513 = vunpack.c.h.b16 %v48
  %v1514 = vunpack.c.l.b16 %v49
  %v1515 = vunpack.c.l.b16 %v50
  %v1516 = vunpack.c.h.b16 %v50
  %v1517 = vunpack.c.l.b16 %v51
  %v1518 = vunpack.c.l.b16 %v52
  %v1519 = vunpack.c.h.b16 %v52
  %v1520 = vunpack.c.l.b16 %v53
  %v1521 = vunpack.c.l.b16 %v54
  %v1522 = vunpack.c.h.b16 %v54
  %v1523 = vunpack.c.l.b16 %v55
  %v1524 = vunpack.c.l.b16 %v56
  %v1525 = vunpack.c.h.b16 %v56
  %v1526 = vunpack.c.l.b16 %v57
  %v1527 = vunpack.c.l.b16 %v58
  %v1528 = vunpack.c.h.b16 %v58
  %v1529 = vunpack.c.l.b16 %v59
  %v1530 = vunpack.c.l.b16 %v60
  %v1531 = vunpack.c.h.b16 %v60
  %v1532 = vunpack.c.l.b16 %v61
  %v1533 = vunpack.c.l.b16 %v62
  %v1534 = vunpack.c.h.b16 %v62
  %v1535 = vunpack.c.l.b16 %v63
  %v1536 = vunpack.c.l.b16 %v64
  %v1537 = vunpack.c.h.b16 %v64
  %v1538 = vunpack.c.l.b16 %v65
  %v1539 = vunpack.c.l.b16 %v66
  %v1540 = vunpack.c.h.b16 %v66
  %v1541 = vunpack.c.l.b16 %v67
  %v1542 = vunpack.c.l.b16 %v68
  %v1543 = vunpack.c.h.b16 %v68
  %v1544 = vunpack.c.l.b16 %v69
  %v1545 = vunpack.c.l.b16 %v70
  %v1546 = vunpack.c.h.b16 %v70
  %v1547 = vunpack.c.l.b16 %v71
  %v1548 = vunpack.c.l.b16 %v72
  %v1549 = vunpack.c.h.b16 %v72
  %v1550 = vunpack.c.l.b16 %v73
  %v1551 = vunpack.c.l.b16 %v74
  %v1552 = vunpack.c.h.b16 %v74
  %v1553 = vunpack.c.l.b16 %v75
  %v1554 = vunpack.c.l.b16 %v76
  %v1555 = vunpack.c.h.b16 %v76
  %v1556 = vunpack.c.l.b16 %v77
  %v1557 = vunpack.c.l.b16 %v78
  %v1558 = vunpack.c.h.b16 %v78
  %v1559 = vunpack.c.l.b16 %v79
  %v1560 = vunpack.c.l.b16 %v80
  %v1561 = vunpack.c.h.b16 %v80
  %v1562 = vunpack.c.l.b16 %v81
  %v1563 = vunpack.c.l.b16 %v82
  %v1564 = vunpack.c.h.b16 %v82
  %v1565 = vunpack.c.l.b16 %v83
  %v1566 = vunpack.c.l.b16 %v84
  %v1567 = vunpack.c.h.b16 %v84
  %v1568 = vunpack.c.l.b16 %v85
  %v1569 = vunpack.c.l.b16 %v86
  %v1570 = vunpack.c.h.b16 %v86
  %v1571 = vunpack.c.l.b16 %v87
  %v1572 = vunpack.c.l.b16 %v88
  %v1573 = vunpack.c.h.b16 %v88
  %v1574 = vunpack.c.l.b16 %v89
  %v1575 = vunpack.c.l.b16 %v90
  %v1576 = vunpack.c.h.b16 %v90
  %v1577 = vunpack.c.l.b16 %v91
  %v1578 = vunpack.c.l.b16 %v92
  %v1579 = vunpack.c.h.b16 %v92
  %v1580 = vunpack.c.l.b16 %v93
  %v1581 = vunpack.c.l.b16 %v94
  %v1582 = vunpack.c.h.b16 %v94
  %v1583 = vunpack.c.l.b16 %v95
  %v1584 = vunpack.c.l.b16 %v96
  %v1585 = vunpack.c.h.b16 %v96
  %v1586 = vunpack.c.l.b16 %v97
  %v1587 = vunpack.c.l.b16 %v98
  %v1588 = vunpack.c.h.b16 %v98
  %v1589 = vunpack.c.l.b16 %v99
  %v1590 = vunpack.c.l.b16 %v100
  %v1591 = vunpack.c.h.b16 %v100
  %v1592 = vunpack.c.l.b16 %v101
  %v1593 = vunpack.c.l.b16 %v102
  %v1594 = vunpack.c.h.b16 %v102
  %v1595 = vunpack.c.l.b16 %v103
  %v1596 = vunpack.c.l.b16 %v104
  %v1597 = vunpack.c.h.b16 %v104
  %v1598 = vunpack.c.l.b16 %v105
  %v1599 = vunpack.c.l.b16 %v106
  %v1600 = vunpack.c.h.b16 %v106
  %v1601 = vunpack.c.l.b16 %v107
  %v1602 = vunpack.c.l.b16 %v108
  %v1603 = vunpack.c.h.b16 %v108
  %v1604 = vunpack.c.l.b16 %v109
  %v1605 = vunpack.c.l.b16 %v110
  %v1606 = vunpack.c.h.b16 %v110
  %v1607 = vunpack.c.l.b16 %v111
  %v1608 = vunpack.c.l.b16 %v112
  %v1609 = vunpack.c.h.b16 %v112
  %v1610 = vunpack.c.l.b16 %v113
  %v1611 = vunpack.c.l.b16 %v114
  %v1612 = vunpack.c.h.b16 %v114
  %v1613 = vunpack.c.l.b16 %v115
  %v1614 = vunpack.c.l.b16 %v116
  %v1615 = vunpack.c.h.b16 %v116
  %v1616 = vunpack.c.l.b16 %v117
  %v1617 = vunpack.c.l.b16 %v118
  %v1618 = vunpack.c.h.b16 %v118
  %v1619 = vunpack.c.l.b16 %v119
  %v1620 = vunpack.c.l.b16 %v120
  %v1621 = vunpack.c.h.b16 %v120
  %v1622 = vunpack.c.l.b16 %v121
  %v1623 = vunpack.c.l.b16 %v122
  %v1624 = vunpack.c.h.b16 %v122
  %v1625 = vunpack.c.l.b16 %v123
  %v1626 = vunpack.c.l.b16 %v124
  %v1627 = vunpack.c.h.b16 %v124
  %v1628 = vunpack.c.l.b16 %v125
  %v1629 = vunpack.c.l.b16 %v126
  %v1630 = vunpack.c.h.b16 %v126
  %v1631 = vunpack.c.l.b16 %v127
  %v1632 = vunpack.c.l.b16 %v128
  %v1633 = vunpack.c.h.b16 %v128
  %v1634 = vunpack.c.l.b16 %v129
  %v1635 = vunpack.c.l.b16 %v130
  %v1636 = vunpack.c.h.b16 %v130
  %v1637 = vunpack.c.l.b16 %v131
  %v1638 = vunpack.c.l.b16 %v132
  %v1639 = vunpack.c.h.b16 %v132
  %v1640 = vunpack.c.l.b16 %v133
  %v1641 = vunpack.c.l.b16 %v134
  %v1642 = vunpack.c.h.b16 %v134
  %v1643 = vunpack.c.l.b16 %v135
  %v1644 = vunpack.c.l.b16 %v136
  %v1645 = vunpack.c.h.b16 %v136
  %v1646 = vunpack.c.l.b16 %v137
  %v1647 = vunpack.c.l.b16 %v138
  %v1648 = vunpack.c.h.b16 %v138
  %v1649 = vunpack.c.l.b16 %v139
  %v1650 = vunpack.c.l.b16 %v140
  %v1651 = vunpack.c.h.b16 %v140
  %v1652 = vunpack.c.l.b16 %v141
  %v1653 = vunpack.c.l.b16 %v142
  %v1654 = vunpack.c.h.b16 %v142
  %v1655 = vunpack.c.l.b16 %v143
  %v1656 = vunpack.c.l.b16 %v144
  %v1657 = vunpack.c.h.b16 %v144
  %v1658 = vunpack.c.l.b16 %v145
  %v1659 = vunpack.c.l.b16 %v146
  %v1660 = vunpack.c.h.b16 %v146
  %v1661 = vunpack.c.l.b16 %v147
  %v1662 = vunpack.c.l.b16 %v148
  %v1663 = vunpack.c.h.b16 %v148
  %v1664 = vunpack.c.l.b16 %v149
  %v1665 = vunpack.c.l.b16 %v150
  %v1666 = vunpack.c.h.b16 %v150
  %v1667 = vunpack.c.l.b16 %v151
  %v1668 = vunpack.c.l.b16 %v152
  %v1669 = vunpack.c.h.b16 %v152
  %v1670 = vunpack.c.l.b16 %v153
  %v1671 = vunpack.c.l.b16 %v154
  %v1672 = vunpack.c.h.b16 %v154
  %v1673 = vunpack.c.l.b16 %v155
  %v1674 = vunpack.c.l.b16 %v156
  %v1675 = vunpack.c.h.b16 %v156
  %v1676 = vunpack.c.l.b16 %v157
  %v1677 = vunpack.c.l.b16 %v158
  %v1678 = vunpack.c.h.b16 %v158
  %v1679 = vunpack.c.l.b16 %v159
  %v1680 = vunpack.c.l.b16 %v160
  %v1681 = vunpack.c.h.b16 %v160
  %v1682 = vunpack.c.l.b16 %v161
  %v1683 = vunpack.c.l.b16 %v162
  %v1684 = vunpack.c.h.b16 %v162
  %v1685 = vunpack.c.l.b16 %v163
  %v1686 = vunpack.c.l.b16 %v164
  %v1687 = vunpack.c.h.b16 %v164
  %v1688 = vunpack.c.l.b16 %v165
  %v1689 = vunpack.c.l.b16 %v166
  %v1690 = vunpack.c.h.b16 %v166
  %v1691 = vunpack.c.l.b16 %v167
  %v1692 = vunpack.c.l.b16 %v168
  %v1693 = vunpack.c.h.b16 %v168
  %v1694 = vunpack.c.l.b16 %v169
  %v1695 = vunpack.c.l.b16 %v170
  %v1696 = vunpack.c.h.b16 %v170
  %v1697 = vunpack.c.l.b16 %v171
  %v1698 = vunpack.c.l.b16 %v172
  %v1699 = vunpack.c.h.b16 %v172
  %v1700 = vunpack.c.l.b16 %v173
  %v1701 = vunpack.c.l.b16 %v174
  %v1702 = vunpack.c.h.b16 %v174
  %v1703 = vunpack.c.l.b16 %v175
  %v1704 = vunpack.c.l.b16 %v176
  %v1705 = vunpack.c.h.b16 %v176
  %v1706 = vunpack.c.l.b16 %v177
  %v1707 = vunpack.c.l.b16 %v178
  %v1708 = vunpack.c.h.b16 %v178
  %v1709 = vunpack.c.l.b16 %v179
  %v1710 = vunpack.c.l.b16 %v180
  %v1711 = vunpack.c.h.b16 %v180
  %v1712 = vunpack.c.l.b16 %v181
  %v1713 = vunpack.c.l.b16 %v182
  %v1714 = vunpack.c.h.b16 %v182
  %v1715 = vunpack.c.l.b16 %v183
  %v1716 = vunpack.c.l.b16 %v184
  %v1717 = vunpack.c.h.b16 %v184
  %v1718 = vunpack.c.l.b16 %v185
  %v1719 = vunpack.c.l.b16 %v186
  %v1720 = vunpack.c.h.b16 %v186
  %v1721 = vunpack.c.l.b16 %v187
  %v1722 = vunpack.c.l.b16 %v188
  %v1723 = vunpack.c.h.b16 %v188
  %v1724 = vunpack.c.l.b16 %v189
  %v1725 = vunpack.c.l.b16 %v190
  %v1726 = vunpack.c.h.b16 %v190
  %v1727 = vunpack.c.l.b16 %v191
  %v1728 = vunpack.c.l.b16 %v192
  %v1729 = vunpack.c.h.b16 %v192
  %v1730 = vunpack.c.l.b16 %v193
  %v1731 = vunpack.c.l.b16 %v194
  %v1732 = vunpack.c.h.b16 %v194
  %v1733 = vunpack.c.l.b16 %v195
  %v1734 = vunpack.c.l.b16 %v196
  %v1735 = vunpack.c.h.b16 %v196
  %v1736 = vunpack.c.l.b16 %v197
  %v1737 = vunpack.c.l.b16 %v198
  %v1738 = vunpack.c.h.b16 %v198
  %v1739 = vunpack.c.l.b16 %v199
  %v1740 = vunpack.c.l.b16 %v200
  %v1741 = vunpack.c.h.b16 %v200
  %v1742 = vunpack.c.l.b16 %v201
  %v1743 = vunpack.c.l.b16 %v202
  %v1744 = vunpack.c.h.b16 %v202
  %v1745 = vunpack.c.l.b16 %v203
  %v1746 = vunpack.c.l.b16 %v204
  %v1747 = vunpack.c.h.b16 %v204
  %v1748 = vunpack.c.l.b16 %v205
  %v1749 = vunpack.c.l.b16 %v206
  %v1750 = vunpack.c.h.b16 %v206
  %v1751 = vunpack.c.l.b16 %v207
  %v1752 = vunpack.c.l.b16 %v208
  %v1753 = vunpack.c.h.b16 %v208
  %v1754 = vunpack.c.l.b16 %v209
  %v1755 = vunpack.c.l.b16 %v210
  %v1756 = vunpack.c.h.b16 %v210
  %v1757 = vunpack.c.l.b16 %v211
  %v1758 = vunpack.c.l.b16 %v212
  %v1759 = vunpack.c.h.b16 %v212
  %v1760 = vunpack.c.l.b16 %v213
  %v1761 = vunpack.c.l.b16 %v214
  %v1762 = vunpack.c.h.b16 %v214
  %v1763 = vunpack.c.l.b16 %v215
  %v1764 = vunpack.c.l.b16 %v216
  %v1765 = vunpack.c.h.b16 %v216
  %v1766 = vunpack.c.l.b16 %v217
  %v1767 = vunpack.c.l.b16 %v218
  %v1768 = vunpack.c.h.b16 %v218
  %v1769 = vunpack.c.l.b16 %v219
  %v1770 = vunpack.c.l.b16 %v220
  %v1771 = vunpack.c.h.b16 %v220
  %v1772 = vunpack.c.l.b16 %v221
  %v1773 = vunpack.c.l.b16 %v222
  %v1774 = vunpack.c.h.b16 %v222
  %v1775 = vunpack.c.l.b16 %v223
  %v1776 = vunpack.c.l.b16 %v224
  %v1777 = vunpack.c.h.b16 %v224
  %v1778 = vunpack.c.l.b16 %v225
  %v1779 = vunpack.c.l.b16 %v226
  %v1780 = vunpack.c.h.b16 %v226
  %v1781 = vunpack.c.l.b16 %v227
  %v1782 = vunpack.c.l.b16 %v228
  %v1783 = vunpack.c.h.b16 %v228
  %v1784 = vunpack.c.l.b16 %v229
  %v1785 = vunpack.c.l.b16 %v230
  %v1786 = vunpack.c.h.b16 %v230
  %v1787 = vunpack.c.l.b16 %v231
  %v1788 = vunpack.c.l.b16 %v232
  %v1789 = vunpack.c.h.b16 %v232
  %v1790 = vunpack.c.l.b16 %v233
  %v1791 = vunpack.c.l.b16 %v234
  %v1792 = vunpack.c.h.b16 %v234
  %v1793 = vunpack.c.l.b16 %v235
  %v1794 = vunpack.c.l.b16 %v236
  %v1795 = vunpack.c.h.b16 %v236
  %v1796 = vunpack.c.l.b16 %v237
  %v1797 = vunpack.c.l.b16 %v238
  %v1798 = vunpack.c.h.b16 %v238
  %v1799 = vunpack.c.l.b16 %v239
  %v1800 = vunpack.c.l.b16 %v240
  %v1801 = vunpack.c.h.b16 %v240
  %v1802 = vunpack.c.l.b16 %v241
  %v1803 = vunpack.c.l.b16 %v242
  %v1804 = vunpack.c.h.b16 %v242
  %v1805 = vunpack.c.l.b16 %v243
  %v1806 = vunpack.c.l.b16 %v244
  %v1807 = vunpack.c.h.b16 %v244
  %v1808 = vunpack.c.l.b16 %v245
  %v1809 = vunpack.c.l.b16 %v246
  %v1810 = vunpack.c.h.b16 %v246
  %v1811 = vunpack.c.l.b16 %v247
  %v1812 = vunpack.c.l.b16 %v248
  %v1813 = vunpack.c.h.b16 %v248
  %v1814 = vunpack.c.l.b16 %v249
  %v1815 = vunpack.c.l.b16 %v250
  %v1816 = vunpack.c.h.b16 %v250
  %v1817 = vunpack.c.l.b16 %v251
  %v1818 = vunpack.c.l.b16 %v252
  %v1819 = vunpack.c.h.b16 %v252
  %v1820 = vunpack.c.l.b16 %v253
  %v1821 = vunpack.c.l.b16 %v254
  %v1822 = vunpack.c.h.b16 %v254
  %v1823 = vunpack.c.l.b16 %v255
  %v1824 = vunpack.c.l.b16 %v256
  %v1825 = vunpack.c.h.b16 %v256
  %v1826 = vunpack.c.l.b16 %v257
  %v1827 = vunpack.c.l.b16 %v258
  %v1828 = vunpack.c.h.b16 %v258
  %v1829 = vunpack.c.l.b16 %v259
  %v1830 = vunpack.c.l.b16 %v260
  %v1831 = vunpack.c.h.b16 %v260
  %v1832 = vunpack.c.l.b16 %v261
  %v1833 = vunpack.c.l.b16 %v262
  %v1834 = vunpack.c.h.b16 %v262
  %v1835 = vunpack.c.l.b16 %v263
  %v1836 = vunpack.c.l.b16 %v264
  %v1837 = vunpack.c.h.b16 %v264
  %v1838 = vunpack.c.l.b16 %v265
  %v1839 = vunpack.c.l.b16 %v266
  %v1840 = vunpack.c.h.b16 %v266
  %v1841 = vunpack.c.l.b16 %v267
  %v1842 = vunpack.c.l.b16 %v268
  %v1843 = vunpack.c.h.b16 %v268
  %v1844 = vunpack.c.l.b16 %v269
  %v1845 = vunpack.c.l.b16 %v270
  %v1846 = vunpack.c.h.b16 %v270
  %v1847 = vunpack.c.l.b16 %v271
  %v1848 = vunpack.c.l.b16 %v272
  %v1849 = vunpack.c.h.b16 %v272
  %v1850 = vunpack.c.l.b16 %v273
  %v1851 = vunpack.c.l.b16 %v274
  %v1852 = vunpack.c.h.b16 %v274
  %v1853 = vunpack.c.l.b16 %v275
  %v1854 = vunpack.c.l.b16 %v276
  %v1855 = vunpack.c.h.b16 %v276
  %v1856 = vunpack.c.l.b16 %v277
  %v1857 = vunpack.c.l.b16 %v278
  %v1858 = vunpack.c.h.b16 %v278
  %v1859 = vunpack.c.l.b16 %v279
  %v1860 = vunpack.c.l.b16 %v280
  %v1861 = vunpack.c.h.b16 %v280
  %v1862 = vunpack.c.l.b16 %v281
  %v1863 = vunpack.c.l.b16 %v282
  %v1864 = vunpack.c.h.b16 %v282
  %v1865 = vunpack.c.l.b16 %v283
  %v1866 = vunpack.c.l.b16 %v284
  %v1867 = vunpack.c.h.b16 %v284
  %v1868 = vunpack.c.l.b16 %v285
  %v1869 = vunpack.c.l.b16 %v286
  %v1870 = vunpack.c.h.b16 %v286
  %v1871 = vunpack.c.l.b16 %v287
  %v1872 = vunpack.c.l.b16 %v288
  %v1873 = vunpack.c.h.b16 %v288
  %v1874 = vunpack.c.l.b16 %v289
  %v1875 = vunpack.c.l.b16 %v290
  %v1876 = vunpack.c.h.b16 %v290
  %v1877 = vunpack.c.l.b16 %v291
  %v1878 = vunpack.c.l.b16 %v292
  %v1879 = vunpack.c.h.b16 %v292
  %v1880 = vunpack.c.l.b16 %v293
  %v1881 = vunpack.c.l.b16 %v294
  %v1882 = vunpack.c.h.b16 %v294
  %v1883 = vunpack.c.l.b16 %v295
  %v1884 = vunpack.c.l.b16 %v296
  %v1885 = vunpack.c.h.b16 %v296
  %v1886 = vunpack.c.l.b16 %v297
  %v1887 = vunpack.c.l.b16 %v298
  %v1888 = vunpack.c.h.b16 %v298
  %v1889 = vunpack.c.l.b16 %v299
  %v1890 = vunpack.c.l.b16 %v300
  %v1891 = vunpack.c.h.b16 %v300
  %v1892 = vunpack.c.l.b16 %v301
  %v1893 = vunpack.c.l.b16 %v302
  %v1894 = vunpack.c.h.b16 %v302
  %v1895 = vunpack.c.l.b16 %v303
  %v1896 = vunpack.c.l.b16 %v304
  %v1897 = vunpack.c.h.b16 %v304
  %v1898 = vunpack.c.l.b16 %v305
  %v1899 = vunpack.c.l.b16 %v306
  %v1900 = vunpack.c.h.b16 %v306
  %v1901 = vunpack.c.l.b16 %v307
  %v1902 = vunpack.c.l.b16 %v308
  %v1903 = vunpack.c.h.b16 %v308
  %v1904 = vunpack.c.l.b16 %v309
  %v1905 = vunpack.c.l.b16 %v310
  %v1906 = vunpack.c.h.b16 %v310
  %v1907 = vunpack.c.l.b16 %v311
  %v1908 = vunpack.c.l.b16 %v312
  %v1909 = vunpack.c.h.b16 %v312
  %v1910 = vunpack.c.l.b16 %v313
  %v1911 = vunpack.c.l.b16 %v314
  %v1912 = vunpack.c.h.b16 %v314
  %v1913 = vunpack.c.l.b16 %v315
  %v1914 = vunpack.c.l.b16 %v316
  %v1915 = vunpack.c.h.b16 %v316
  %v1916 = vunpack.c.l.b16 %v317
  %v1917 = vunpack.c.l.b16 %v318
  %v1918 = vunpack.c.h.b16 %v318
  %v1919 = vunpack.c.l.b16 %v319
  %v1920 = vunpack.c.l.b16 %v320
  %v1921 = vunpack.c.h.b16 %v320
  %v1922 = vunpack.c.l.b16 %v321
  %v1923 = vunpack.c.l.b16 %v322
  %v1924 = vunpack.c.h.b16 %v322
  %v1925 = vunpack.c.l.b16 %v323
  %v1926 = vunpack.c.l.b16 %v324
  %v1927 = vunpack.c.h.b16 %v324
  %v1928 = vunpack.c.l.b16 %v325
  %v1929 = vunpack.c.l.b16 %v326
  %v1930 = vunpack.c.h.b16 %v326
  %v1931 = vunpack.c.l.b16 %v327
  %v1932 = vunpack.c.l.b16 %v328
  %v1933 = vunpack.c.h.b16 %v328
  %v1934 = vunpack.c.l.b16 %v329
  %v1935 = vunpack.c.l.b16 %v330
  %v1936 = vunpack.c.h.b16 %v330
  %v1937 = vunpack.c.l.b16 %v331
  %v1938 = vunpack.c.l.b16 %v332
  %v1939 = vunpack.c.h.b16 %v332
  %v1940 = vunpack.c.l.b16 %v333
  %v1941 = vunpack.c.l.b16 %v334
  %v1942 = vunpack.c.h.b16 %v334
  %v1943 = vunpack.c.l.b16 %v335
  %v1944 = vunpack.c.l.b16 %v336
  %v1945 = vunpack.c.h.b16 %v336
  %v1946 = vunpack.c.l.b16 %v337
  %v1947 = vunpack.c.l.b16 %v338
  %v1948 = vunpack.c.h.b16 %v338
  %v1949 = vunpack.c.l.b16 %v339
  %v1950 = vunpack.c.l.b16 %v340
  %v1951 = vunpack.c.h.b16 %v340
  %v1952 = vunpack.c.l.b16 %v341
  %v1953 = vunpack.c.l.b16 %v342
  %v1954 = vunpack.c.h.b16 %v342
  %v1955 = vunpack.c.l.b16 %v343
  %v1956 = vunpack.c.l.b16 %v344
  %v1957 = vunpack.c.h.b16 %v344
  %v1958 = vunpack.c.l.b16 %v345
  %v1959 = vunpack.c.l.b16 %v346
  %v1960 = vunpack.c.h.b16 %v346
  %v1961 = vunpack.c.l.b16 %v347
  %v1962 = vunpack.c.l.b16 %v348
  %v1963 = vunpack.c.h.b16 %v348
  %v1964 = vunpack.c.l.b16 %v349
  %v1965 = vunpack.c.l.b16 %v350
  %v1966 = vunpack.c.h.b16 %v350
  %v1967 = vunpack.c.l.b16 %v351
  %v1968 = vunpack.c.l.b16 %v352
  %v1969 = vunpack.c.h.b16 %v352
  %v1970 = vunpack.c.l.b16 %v353
  %v1971 = vunpack.c.l.b16 %v354
  %v1972 = vunpack.c.h.b16 %v354
  %v1973 = vunpack.c.l.b16 %v355
  %v1974 = vunpack.c.l.b16 %v356
  %v1975 = vunpack.c.h.b16 %v356
  %v1976 = vunpack.c.l.b16 %v357
  %v1977 = vunpack.c.l.b16 %v358
  %v1978 = vunpack.c.h.b16 %v358
  %v1979 = vunpack.c.l.b16 %v359
  %v1980 = vunpack.c.l.b16 %v360
  %v1981 = vunpack.c.h.b16 %v360
  %v1982 = vunpack.c.l.b16 %v361
  %v1983 = vunpack.c.l.b16 %v362
  %v1984 = vunpack.c.h.b16 %v362
  %v1985 = vunpack.c.l.b16 %v363
  %v1986 = vunpack.c.l.b16 %v364
  %v1987 = vunpack.c.h.b16 %v364
  %v1988 = vunpack.c.l.b16 %v365
  %v1989 = vunpack.c.l.b16 %v366
  %v1990 = vunpack.c.h.b16 %v366
  %v1991 = vunpack.c.l.b16 %v367
  %v1992 = vunpack.c.l.b16 %v368
  %v1993 = vunpack.c.h.b16 %v368
  %v1994 = vunpack.c.l.b16 %v369
  %v1995 = vunpack.c.l.b16 %v370
  %v1996 = vunpack.c.h.b16 %v370
  %v1997 = vunpack.c.l.b16 %v371
  %v1998 = vunpack.c.l.b16 %v372
  %v1999 = vunpack.c.h.b16 %v372
  %v2000 = vunpack.c.l.b16 %v373
  %v2001 = vunpack.c.l.b16 %v374
  %v2002 = vunpack.c.h.b16 %v374
  %v2003 = vunpack.c.l.b16 %v375
  %v2004 = vunpack.c.l.b16 %v376
  %v2005 = vunpack.c.h.b16 %v376
  %v2006 = vunpack.c.l.b16 %v377
  %v2007 = vunpack.c.l.b16 %v378
  %v2008 = vunpack.c.h.b16 %v378
  %v2009 = vunpack.c.l.b16 %v379
  %v2010 = vunpack.c.l.b16 %v380
  %v2011 = vunpack.c.h.b16 %v380
  %v2012 = vunpack.c.l.b16 %v381
  %v2013 = vunpack.c.l.b16 %v382
  %v2014 = vunpack.c.h.b16 %v382
  %v2015 = vunpack.c.l.b16 %v383
  %v2016 = vunpack.c.l.b16 %v384
  %v2017 = vunpack.c.h.b16 %v384
  %v2018 = vunpack.c.l.b16 %v385
  %v2019 = vunpack.c.l.b16 %v386
  %v2020 = vunpack.c.h.b16 %v386
  %v2021 = vunpack.c.l.b16 %v387
  %v2022 = vunpack.c.l.b16 %v388
  %v2023 = vunpack.c.h.b16 %v388
  %v2024 = vunpack.c.l.b16 %v389
  %v2025 = vunpack.c.l.b16 %v390
  %v2026 = vunpack.c.h.b16 %v390
  %v2027 = vunpack.c.l.b16 %v391
  %v2028 = vunpack.c.l.b16 %v392
  %v2029 = vunpack.c.h.b16 %v392
  %v2030 = vunpack.c.l.b16 %v393
  %v2031 = vunpack.c.l.b16 %v394
  %v2032 = vunpack.c.h.b16 %v394
  %v2033 = vunpack.c.l.b16 %v395
  %v2034 = vunpack.c.l.b16 %v396
  %v2035 = vunpack.c.h.b16 %v396
  %v2036 = vunpack.c.l.b16 %v397
  %v2037 = vunpack.c.l.b16 %v398
  %v2038 = vunpack.c.h.b16 %v398
  %v2039 = vunpack.c.l.b16 %v399
  %v2040 = vunpack.c.l.b16 %v400
  %v2041 = vunpack.c.h.b16 %v400
  %v2042 = vunpack.c.l.b16 %v401
  %v2043 = vunpack.c.l.b16 %v402
  %v2044 = vunpack.c.h.b16 %v402
  %v2045 = vunpack.c.l.b16 %v403
  %v2046 = vunpack.c.l.b16 %v404
  %v2047 = vunpack.c.h.b16 %v404
  %v2048 = vunpack.c.l.b16 %v405
  %v2049 = vunpack.c.l.b16 %v406
  %v2050 = vunpack.c.h.b16 %v406
  %v2051 = vunpack.c.l.b16 %v407
  %v2052 = vunpack.c.l.b16 %v408
  %v2053 = vunpack.c.h.b16 %v408
  %v2054 = vunpack.c.l.b16 %v409
  %v2055 = vunpack.c.l.b16 %v410
  %v2056 = vunpack.c.h.b16 %v410
  %v2057 = vunpack.c.l.b16 %v411
  %v2058 = vunpack.c.l.b16 %v412
  %v2059 = vunpack.c.h.b16 %v412
  %v2060 = vunpack.c.l.b16 %v413
  %v2061 = vunpack.c.l.b16 %v414
  %v2062 = vunpack.c.h.b16 %v414
  %v2063 = vunpack.c.l.b16 %v415
  %v2064 = vunpack.c.l.b16 %v416
  %v2065 = vunpack.c.h.b16 %v416
  %v2066 = vunpack.c.l.b16 %v417
  %v2067 = vunpack.c.l.b16 %v418
  %v2068 = vunpack.c.h.b16 %v418
  %v2069 = vunpack.c.l.b16 %v419
  %v2070 = vunpack.c.l.b16 %v420
  %v2071 = vunpack.c.h.b16 %v420
  %v2072 = vunpack.c.l.b16 %v421
  %v2073 = vunpack.c.l.b16 %v422
  %v2074 = vunpack.c.h.b16 %v422
  %v2075 = vunpack.c.l.b16 %v423
  %v2076 = vunpack.c.l.b16 %v424
  %v2077 = vunpack.c.h.b16 %v424
  %v2078 = vunpack.c.l.b16 %v425
  %v2079 = vunpack.c.l.b16 %v426
  %v2080 = vunpack.c.h.b16 %v426
  %v2081 = vunpack.c.l.b16 %v427
  %v2082 = vunpack.c.l.b16 %v428
  %v2083 = vunpack.c.h.b16 %v428
  %v2084 = vunpack.c.l.b16 %v429
  %v2085 = vunpack.c.l.b16 %v430
  %v2086 = vunpack.c.h.b16 %v430
  %v2087 = vunpack.c.l.b16 %v431
  %v2088 = vunpack.c.l.b16 %v432
  %v2089 = vunpack.c.h.b16 %v432
  %v2090 = vunpack.c.l.b16 %v433
  %v2091 = vunpack.c.l.b16 %v434
  %v2092 = vunpack.c.h.b16 %v434
  %v2093 = vunpack.c.l.b16 %v435
  %v2094 = vunpack.c.l.b16 %v436
  %v2095 = vunpack.c.h.b16 %v436
  %v2096 = vunpack.c.l.b16 %v437
  %v2097 = vunpack.c.l.b16 %v438
  %v2098 = vunpack.c.h.b16 %v438
  %v2099 = vunpack.c.l.b16 %v439
  %v2100 = vunpack.c.l.b16 %v440
  %v2101 = vunpack.c.h.b16 %v440
  %v2102 = vunpack.c.l.b16 %v441
  %v2103 = vunpack.c.l.b16 %v442
  %v2104 = vunpack.c.h.b16 %v442
  %v2105 = vunpack.c.l.b16 %v443
  %v2106 = vunpack.c.l.b16 %v444
  %v2107 = vunpack.c.h.b16 %v444
  %v2108 = vunpack.c.l.b16 %v445
  %v2109 = vunpack.c.l.b16 %v446
  %v2110 = vunpack.c.h.b16 %v446
  %v2111 = vunpack.c.l.b16 %v447
  %v2112 = vunpack.c.l.b16 %v448
  %v2113 = vunpack.c.h.b16 %v448
  %v2114 = vunpack.c.l.b16 %v449
  %v2115 = vunpack.c.l.b16 %v450
  %v2116 = vunpack.c.h.b16 %v450
  %v2117 = vunpack.c.l.b16 %v451
  %v2118 = vunpack.c.l.b16 %v452
  %v2119 = vunpack.c.h.b16 %v452
  %v2120 = vunpack.c.l.b16 %v453
  %v2121 = vunpack.c.l.b16 %v454
  %v2122 = vunpack.c.h.b16 %v454
  %v2123 = vunpack.c.l.b16 %v455
  %v2124 = vunpack.c.l.b16 %v456
  %v2125 = vunpack.c.h.b16 %v456
  %v2126 = vunpack.c.l.b16 %v457
  %v2127 = vunpack.c.l.b16 %v458
  %v2128 = vunpack.c.h.b16 %v458
  %v2129 = vunpack.c.l.b16 %v459
  %v2130 = vunpack.c.l.b16 %v460
  %v2131 = vunpack.c.h.b16 %v460
  %v2132 = vunpack.c.l.b16 %v461
  %v2133 = vunpack.c.l.b16 %v462
  %v2134 = vunpack.c.h.b16 %v462
  %v2135 = vunpack.c.l.b16 %v463
  %v2136 = vunpack.c.l.b16 %v464
  %v2137 = vunpack.c.h.b16 %v464
  %v2138 = vunpack.c.l.b16 %v465
  %v2139 = vunpack.c.l.b16 %v466
  %v2140 = vunpack.c.h.b16 %v466
  %v2141 = vunpack.c.l.b16 %v467
  %v2142 = vunpack.c.l.b16 %v468
  %v2143 = vunpack.c.h.b16 %v468
  %v2144 = vunpack.c.l.b16 %v469
  %v2145 = vunpack.c.l.b16 %v470
  %v2146 = vunpack.c.h.b16 %v470
  %v2147 = vunpack.c.l.b16 %v471
  %v2148 = vunpack.c.l.b16 %v472
  %v2149 = vunpack.c.h.b16 %v472
  %v2150 = vunpack.c.l.b16 %v473
  %v2151 = vunpack.c.l.b16 %v474
  %v2152 = vunpack.c.h.b16 %v474
  %v2153 = vunpack.c.l.b16 %v475
  %v2154 = vunpack.c.l.b16 %v476
  %v2155 = vunpack.c.h.b16 %v476
  %v2156 = vunpack.c.l.b16 %v477
  %v2157 = vunpack.c.l.b16 %v478
  %v2158 = vunpack.c.h.b16 %v478
  %v2159 = vunpack.c.l.b16 %v479
  %v2160 = vunpack.c.l.b16 %v480
  %v2161 = vunpack.c.h.b16 %v480
  %v2162 = vunpack.c.l.b16 %v481
  %v2163 = vunpack.c.l.b16 %v482
  %v2164 = vunpack.c.h.b16 %v482
  %v2165 = vunpack.c.l.b16 %v483
  %v2166 = vunpack.c.l.b16 %v484
  %v2167 = vunpack.c.h.b16 %v484
  %v2168 = vunpack.c.l.b16 %v485
  %v2169 = vunpack.c.l.b16 %v486
  %v2170 = vunpack.c.h.b16 %v486
  %v2171 = vunpack.c.l.b16 %v487
  %v2172 = vunpack.c.l.b16 %v488
  %v2173 = vunpack.c.h.b16 %v488
  %v2174 = vunpack.c.l.b16 %v489
  %v2175 = vunpack.c.l.b16 %v490
  %v2176 = vunpack.c.h.b16 %v490
  %v2177 = vunpack.c.l.b16 %v491
  %v2178 = vunpack.c.l.b16 %v492
  %v2179 = vunpack.c.h.b16 %v492
  %v2180 = vunpack.c.l.b16 %v493
  %v2181 = vunpack.c.l.b16 %v494
  %v2182 = vunpack.c.h.b16 %v494
  %v2183 = vunpack.c.l.b16 %v495
  %v2184 = vunpack.c.l.b16 %v496
  %v2185 = vunpack.c.h.b16 %v496
  %v2186 = vunpack.c.l.b16 %v497
  %v2187 = vunpack.c.l.b16 %v498
  %v2188 = vunpack.c.h.b16 %v498
  %v2189 = vunpack.c.l.b16 %v499
  %v2190 = vunpack.c.l.b16 %v500
  %v2191 = vunpack.c.h.b16 %v500
  %v2192 = vunpack.c.l.b16 %v501
  %v2193 = vunpack.c.l.b16 %v502
  %v2194 = vunpack.c.h.b16 %v502
  %v2195 = vunpack.c.l.b16 %v503
  %v2196 = vunpack.c.l.b16 %v504
  %v2197 = vunpack.c.h.b16 %v504
  %v2198 = vunpack.c.l.b16 %v505
  %v2199 = vunpack.c.l.b16 %v506
  %v2200 = vunpack.c.h.b16 %v506
  %v2201 = vunpack.c.l.b16 %v507
  %v2202 = vunpack.c.l.b16 %v508
  %v2203 = vunpack.c.h.b16 %v508
  %v2204 = vunpack.c.l.b16 %v509
  %v2205 = vunpack.c.l.b16 %v510
  %v2206 = vunpack.c.h.b16 %v510
  %v2207 = vunpack.c.l.b16 %v511
  %v2208 = vunpack.c.l.b16 %v512
  %v2209 = vunpack.c.h.b16 %v512
  %v2210 = vunpack.c.l.b16 %v513
  %v2211 = vunpack.c.l.b16 %v514
  %v2212 = vunpack.c.h.b16 %v514
  %v2213 = vunpack.c.l.b16 %v515
  %v2214 = vunpack.c.l.b16 %v516
  %v2215 = vunpack.c.h.b16 %v516
  %v2216 = vunpack.c.l.b16 %v517
  %v2217 = vunpack.c.l.b16 %v518
  %v2218 = vunpack.c.h.b16 %v518
  %v2219 = vunpack.c.l.b16 %v519
  %v2220 = vunpack.c.l.b16 %v520
  %v2221 = vunpack.c.h.b16 %v520
  %v2222 = vunpack.c.l.b16 %v521
  %v2223 = vunpack.c.l.b16 %v522
  %v2224 = vunpack.c.h.b16 %v522
  %v2225 = vunpack.c.l.b16 %v523
  %v2226 = vunpack.c.l.b16 %v524
  %v2227 = vunpack.c.h.b16 %v524
  %v2228 = vunpack.c.l.b16 %v525
  %v2229 = vunpack.c.l.b16 %v526
  %v2230 = vunpack.c.h.b16 %v526
  %v2231 = vunpack.c.l.b16 %v527
  %v2232 = vunpack.c.l.b16 %v528
  %v2233 = vunpack.c.h.b16 %v528
  %v2234 = vunpack.c.l.b16 %v529
  %v2235 = vunpack.c.l.b16 %v530
  %v2236 = vunpack.c.h.b16 %v530
  %v2237 = vunpack.c.l.b16 %v531
  %v2238 = vunpack.c.l.b16 %v532
  %v2239 = vunpack.c.h.b16 %v532
  %v2240 = vunpack.c.l.b16 %v533
  %v2241 = vunpack.c.l.b16 %v534
  %v2242 = vunpack.c.h.b16 %v534
  %v2243 = vunpack.c.l.b16 %v535
  %v2244 = vunpack.c.l.b16 %v536
  %v2245 = vunpack.c.h.b16 %v536
  %v2246 = vunpack.c.l.b16 %v537
  %v2247 = vunpack.c.l.b16 %v538
  %v2248 = vunpack.c.h.b16 %v538
  %v2249 = vunpack.c.l.b16 %v539
  %v2250 = vunpack.c.l.b16 %v540
  %v2251 = vunpack.c.h.b16 %v540
  %v2252 = vunpack.c.l.b16 %v541
  %v2253 = vunpack.c.l.b16 %v542
  %v2254 = vunpack.c.h.b16 %v542
  %v2255 = vunpack.c.l.b16 %v543
  %v2256 = vunpack.c.l.b16 %v544
  %v2257 = vunpack.c.h.b16 %v544
  %v2258 = vunpack.c.l.b16 %v545
  %v2259 = vunpack.c.l.b16 %v546
  %v2260 = vunpack.c.h.b16 %v546
  %v2261 = vunpack.c.l.b16 %v547
  %v2262 = vunpack.c.l.b16 %v548
  %v2263 = vunpack.c.h.b16 %v548
  %v2264 = vunpack.c.l.b16 %v549
  %v2265 = vunpack.c.l.b16 %v550
  %v2266 = vunpack.c.h.b16 %v550
  %v2267 = vunpack.c.l.b16 %v551
  %v2268 = vunpack.c.l.b16 %v552
  %v2269 = vunpack.c.h.b16 %v552
  %v2270 = vunpack.c.l.b16 %v553
  %v2271 = vunpack.c.l.b16 %v554
  %v2272 = vunpack.c.h.b16 %v554
  %v2273 = vunpack.c.l.b16 %v555
  %v2274 = vunpack.c.l.b16 %v556
  %v2275 = vunpack.c.h.b16 %v556
  %v2276 = vunpack.c.l.b16 %v557
  %v2277 = vunpack.c.l.b16 %v558
  %v2278 = vunpack.c.h.b16 %v558
  %v2279 = vunpack.c.l.b16 %v559
  %v2280 = vunpack.c.l.b16 %v560
  %v2281 = vunpack.c.h.b16 %v560
  %v2282 = vunpack.c.l.b16 %v561
  %v2283 = vunpack.c.l.b16 %v562
  %v2284 = vunpack.c.h.b16 %v562
  %v2285 = vunpack.c.l.b16 %v563
  %v2286 = vunpack.c.l.b16 %v564
  %v2287 = vunpack.c.h.b16 %v564
  %v2288 = vunpack.c.l.b16 %v565
  %v2289 = vunpack.c.l.b16 %v566
  %v2290 = vunpack.c.h.b16 %v566
  %v2291 = vunpack.c.l.b16 %v567
  %v2292 = vunpack.c.l.b16 %v568
  %v2293 = vunpack.c.h.b16 %v568
  %v2294 = vunpack.c.l.b16 %v569
  %v2295 = vunpack.c.l.b16 %v570
  %v2296 = vunpack.c.h.b16 %v570
  %v2297 = vunpack.c.l.b16 %v571
  %v2298 = vunpack.c.l.b16 %v572
  %v2299 = vunpack.c.h.b16 %v572
  %v2300 = vunpack.c.l.b16 %v573
  %v2301 = vunpack.c.l.b16 %v574
  %v2302 = vunpack.c.h.b16 %v574
  %v2303 = vunpack.c.l.b16 %v575
  %v2304 = vunpack.c.l.b16 %v576
  %v2305 = vunpack.c.h.b16 %v576
  %v2306 = vunpack.c.l.b16 %v577
  %v2307 = vunpack.c.l.b16 %v578
  %v2308 = vunpack.c.h.b16 %v578
  %v2309 = vunpack.c.l.b16 %v579
  %v2310 = vunpack.c.l.b16 %v580
  %v2311 = vunpack.c.h.b16 %v580
  %v2312 = vunpack.c.l.b16 %v581
  %v2313 = vunpack.c.l.b16 %v582
  %v2314 = vunpack.c.h.b16 %v582
  %v2315 = vunpack.c.l.b16 %v583
  %v2316 = vunpack.c.l.b16 %v584
  %v2317 = vunpack.c.h.b16 %v584
  %v2318 = vunpack.c.l.b16 %v585
  %v2319 = vunpack.c.l.b16 %v586
  %v2320 = vunpack.c.h.b16 %v586
  %v2321 = vunpack.c.l.b16 %v587
  %v2322 = vunpack.c.l.b16 %v588
  %v2323 = vunpack.c.h.b16 %v588
  %v2324 = vunpack.c.l.b16 %v589
  %v2325 = vunpack.c.l.b16 %v590
  %v2326 = vunpack.c.h.b16 %v590
  %v2327 = vunpack.c.l.b16 %v591
  %v2328 = vunpack.c.l.b16 %v592
  %v2329 = vunpack.c.h.b16 %v592
  %v2330 = vunpack.c.l.b16 %v593
  %v2331 = vunpack.c.l.b16 %v594
  %v2332 = vunpack.c.h.b16 %v594
  %v2333 = vunpack.c.l.b16 %v595
  %v2334 = vunpack.c.l.b16 %v596
  %v2335 = vunpack.c.h.b16 %v596
  %v2336 = vunpack.c.l.b16 %v597
  %v2337 = vunpack.c.l.b16 %v598
  %v2338 = vunpack.c.h.b16 %v598
  %v2339 = vunpack.c.l.b16 %v599
  %v2340 = vunpack.c.l.b16 %v600
  %v2341 = vunpack.c.h.b16 %v600
  %v2342 = vunpack.c.l.b16 %v601
  %v2343 = vunpack.c.l.b16 %v602
  %v2344 = vunpack.c.h.b16 %v602
  %v2345 = vunpack.c.l.b16 %v603
  %v2346 = vunpack.c.l.b16 %v604
  %v2347 = vunpack.c.h.b16 %v604
  %v2348 = vunpack.c.l.b16 %v605
  %v2349 = vunpack.c.l.b16 %v606
  %v2350 = vunpack.c.h.b16 %v606
  %v2351 = vunpack.c.l.b16 %v607
  %v2352 = vunpack.c.l.b16 %v608
  %v2353 = vunpack.c.h.b16 %v608
  %v2354 = vunpack.c.l.b16 %v609
  %v2355 = vunpack.c.l.b16 %v610
  %v2356 = vunpack.c.h.b16 %v610
  %v2357 = vunpack.c.l.b16 %v611
  %v2358 = vunpack.c.l.b16 %v612
  %v2359 = vunpack.c.h.b16 %v612
  %v2360 = vunpack.c.l.b16 %v613
  %v2361 = vunpack.c.l.b16 %v614
  %v2362 = vunpack.c.h.b16 %v614
  %v2363 = vunpack.c.l.b16 %v615
  %v2364 = vunpack.c.l.b16 %v616
  %v2365 = vunpack.c.h.b16 %v616
  %v2366 = vunpack.c.l.b16 %v617
  %v2367 = vunpack.c.l.b16 %v618
  %v2368 = vunpack.c.h.b16 %v618
  %v2369 = vunpack.c.l.b16 %v619
  %v2370 = vunpack.c.l.b16 %v620
  %v2371 = vunpack.c.h.b16 %v620
  %v2372 = vunpack.c.l.b16 %v621
  %v2373 = vunpack.c.l.b16 %v622
  %v2374 = vunpack.c.h.b16 %v622
  %v2375 = vunpack.c.l.b16 %v623
  %v2376 = vunpack.c.l.b16 %v624
  %v2377 = vunpack.c.h.b16 %v624
  %v2378 = vunpack.c.l.b16 %v625
  %v2379 = vunpack.c.l.b16 %v626
  %v2380 = vunpack.c.h.b16 %v626
  %v2381 = vunpack.c.l.b16 %v627
  %v2382 = vunpack.c.l.b16 %v628
  %v2383 = vunpack.c.h.b16 %v628
  %v2384 = vunpack.c.l.b16 %v629
  %v2385 = vunpack.c.l.b16 %v630
  %v2386 = vunpack.c.h.b16 %v630
  %v2387 = vunpack.c.l.b16 %v631
  %v2388 = vunpack.c.l.b16 %v632
  %v2389 = vunpack.c.h.b16 %v632
  %v2390 = vunpack.c.l.b16 %v633
  %v2391 = vunpack.c.l.b16 %v634
  %v2392 = vunpack.c.h.b16 %v634
  %v2393 = vunpack.c.l.b16 %v635
  %v2394 = vunpack.c.l.b16 %v636
  %v2395 = vunpack.c.h.b16 %v636
  %v2396 = vunpack.c.l.b16 %v637
  %v2397 = vunpack.c.l.b16 %v638
  %v2398 = vunpack.c.h.b16 %v638
  %v2399 = vunpack.c.l.b16 %v639
  %v2400 = vunpack.c.l.b16 %v640
  %v2401 = vunpack.c.h.b16 %v640
  %v2402 = vunpack.c.l.b16 %v641
  %v2403 = vunpack.c.l.b16 %v642
  %v2404 = vunpack.c.h.b16 %v642
  %v2405 = vunpack.c.l.b16 %v643
  %v2406 = vunpack.c.l.b16 %v644
  %v2407 = vunpack.c.h.b16 %v644
  %v2408 = vunpack.c.l.b16 %v645
  %v2409 = vunpack.c.l.b16 %v646
  %v2410 = vunpack.c.h.b16 %v646
  %v2411 = vunpack.c.l.b16 %v647
  %v2412 = vunpack.c.l.b16 %v648
  %v2413 = vunpack.c.h.b16 %v648
  %v2414 = vunpack.c.l.b16 %v649
  %v2415 = vunpack.c.l.b16 %v650
  %v2416 = vunpack.c.h.b16 %v650
  %v2417 = vunpack.c.l.b16 %v651
  %v2418 = vunpack.c.l.b16 %v652
  %v2419 = vunpack.c.h.b16 %v652
  %v2420 = vunpack.c.l.b16 %v653
  %v2421 = vunpack.c.l.b16 %v654
  %v2422 = vunpack.c.h.b16 %v654
  %v2423 = vunpack.c.l.b16 %v655
  %v2424 = vunpack.c.l.b16 %v656
  %v2425 = vunpack.c.h.b16 %v656
  %v2426 = vunpack.c.l.b16 %v657
  %v2427 = vunpack.c.l.b16 %v658
  %v2428 = vunpack.c.h.b16 %v658
  %v2429 = vunpack.c.l.b16 %v659
  %v2430 = vunpack.c.l.b16 %v660
  %v2431 = vunpack.c.h.b16 %v660
  %v2432 = vunpack.c.l.b16 %v661
  %v2433 = vunpack.c.l.b16 %v662
  %v2434 = vunpack.c.h.b16 %v662
  %v2435 = vunpack.c.l.b16 %v663
  %v2436 = vunpack.c.l.b16 %v664
  %v2437 = vunpack.c.h.b16 %v664
  %v2438 = vunpack.c.l.b16 %v665
  %v2439 = vunpack.c.l.b16 %v666
  %v2440 = vunpack.c.h.b16 %v666
  %v2441 = vunpack.c.l.b16 %v667
  %v2442 = vunpack.c.l.b16 %v668
  %v2443 = vunpack.c.h.b16 %v668
  %v2444 = vunpack.c.l.b16 %v669
  %v2445 = vunpack.c.l.b16 %v670
  %v2446 = vunpack.c.h.b16 %v670
  %v2447 = vunpack.c.l.b16 %v671
  %v2448 = vunpack.c.l.b16 %v672
  %v2449 = vunpack.c.h.b16 %v672
  %v2450 = vunpack.c.l.b16 %v673
  %v2451 = vunpack.c.l.b16 %v674
  %v2452 = vunpack.c.h.b16 %v674
  %v2453 = vunpack.c.l.b16 %v675
  %v2454 = vunpack.c.l.b16 %v676
  %v2455 = vunpack.c.h.b16 %v676
  %v2456 = vunpack.c.l.b16 %v677
  %v2457 = vunpack.c.l.b16 %v678
  %v2458 = vunpack.c.h.b16 %v678
  %v2459 = vunpack.c.l.b16 %v679
  %v2460 = vunpack.c.l.b16 %v680
  %v2461 = vunpack.c.h.b16 %v680
  %v2462 = vunpack.c.l.b16 %v681
  %v2463 = vunpack.c.l.b16 %v682
  %v2464 = vunpack.c.h.b16 %v682
  %v2465 = vunpack.c.l.b16 %v683
  %v2466 = vunpack.c.l.b16 %v684
  %v2467 = vunpack.c.h.b16 %v684
  %v2468 = vunpack.c.l.b16 %v685
  %v2469 = vunpack.c.l.b16 %v686
  %v2470 = vunpack.c.h.b16 %v686
  %v2471 = vunpack.c.l.b16 %v687
  %v2472 = vunpack.c.l.b16 %v688
  %v2473 = vunpack.c.h.b16 %v688
  %v2474 = vunpack.c.l.b16 %v689
  %v2475 = vunpack.c.l.b16 %v690
  %v2476 = vunpack.c.h.b16 %v690
  %v2477 = vunpack.c.l.b16 %v691
  %v2478 = vunpack.c.l.b16 %v692
  %v2479 = vunpack.c.h.b16 %v692
  %v2480 = vunpack.c.l.b16 %v693
  %v2481 = vunpack.c.l.b16 %v694
  %v2482 = vunpack.c.h.b16 %v694
  %v2483 = vunpack.c.l.b16 %v695
  %v2484 = vunpack.c.l.b16 %v696
  %v2485 = vunpack.c.h.b16 %v696
  %v2486 = vunpack.c.l.b16 %v697
  %v2487 = vunpack.c.l.b16 %v698
  %v2488 = vunpack.c.h.b16 %v698
  %v2489 = vunpack.c.l.b16 %v699
  %v2490 = vunpack.c.l.b16 %v700
  %v2491 = vunpack.c.h.b16 %v700
  %v2492 = vunpack.c.l.b16 %v701
  %v2493 = vunpack.c.l.b16 %v702
  %v2494 = vunpack.c.h.b16 %v702
  %v2495 = vunpack.c.l.b16 %v703
  %v2496 = vunpack.c.l.b16 %v704
  %v2497 = vunpack.c.h.b16 %v704
  %v2498 = vunpack.c.l.b16 %v705
  %v2499 = vunpack.c.l.b16 %v706
  %v2500 = vunpack.c.h.b16 %v706
  %v2501 = vunpack.c.l.b16 %v707
  %v2502 = vpack.c.b16 %v1497, %v1494
  %v2503 = vpack.c.b16 %v1498, %v1495
  %v2504 = vpack.c.b16 %v1499, %v1496
  %v2505 = vpack.c.b16 %v1503, %v1500
  %v2506 = vpack.c.b16 %v1504, %v1501
  %v2507 = vpack.c.b16 %v1505, %v1502
  %v2508 = vpack.c.b16 %v1509, %v1506
  %v2509 = vpack.c.b16 %v1510, %v1507
  %v2510 = vpack.c.b16 %v1511, %v1508
  %v2511 = vpack.c.b16 %v1515, %v1512
  %v2512 = vpack.c.b16 %v1516, %v1513
  %v2513 = vpack.c.b16 %v1517, %v1514
  %v2514 = vpack.c.b16 %v1521, %v1518
  %v2515 = vpack.c.b16 %v1522, %v1519
  %v2516 = vpack.c.b16 %v1523, %v1520
  %v2517 = vpack.c.b16 %v1527, %v1524
  %v2518 = vpack.c.b16 %v1528, %v1525
  %v2519 = vpack.c.b16 %v1529, %v1526
  %v2520 = vpack.c.b16 %v1533, %v1530
  %v2521 = vpack.c.b16 %v1534, %v1531
  %v2522 = vpack.c.b16 %v1535, %v1532
  %v2523 = vpack.c.b16 %v1539, %v1536
  %v2524 = vpack.c.b16 %v1540, %v1537
  %v2525 = vpack.c.b16 %v1541, %v1538
  %v2526 = vpack.c.b16 %v1545, %v1542
  %v2527 = vpack.c.b16 %v1546, %v1543
  %v2528 = vpack.c.b16 %v1547, %v1544
  %v2529 = vpack.c.b16 %v1551, %v1548
  %v2530 = vpack.c.b16 %v1552, %v1549
  %v2531 = vpack.c.b16 %v1553, %v1550
  %v2532 = vpack.c.b16 %v1557, %v1554
  %v2533 = vpack.c.b16 %v1558, %v1555
  %v2534 = vpack.c.b16 %v1559, %v1556
  %v2535 = vpack.c.b16 %v1563, %v1560
  %v2536 = vpack.c.b16 %v1564, %v1561
  %v2537 = vpack.c.b16 %v1565, %v1562
  %v2538 = vpack.c.b16 %v1569, %v1566
  %v2539 = vpack.c.b16 %v1570, %v1567
  %v2540 = vpack.c.b16 %v1571, %v1568
  %v2541 = vpack.c.b16 %v1575, %v1572
  %v2542 = vpack.c.b16 %v1576, %v1573
  %v2543 = vpack.c.b16 %v1577, %v1574
  %v2544 = vpack.c.b16 %v1581, %v1578
  %v2545 = vpack.c.b16 %v1582, %v1579
  %v2546 = vpack.c.b16 %v1583, %v1580
  %v2547 = vpack.c.b16 %v1587, %v1584
  %v2548 = vpack.c.b16 %v1588, %v1585
  %v2549 = vpack.c.b16 %v1589, %v1586
  %v2550 = vpack.c.b16 %v1593, %v1590
  %v2551 = vpack.c.b16 %v1594, %v1591
  %v2552 = vpack.c.b16 %v1595, %v1592
  %v2553 = vpack.c.b16 %v1599, %v1596
  %v2554 = vpack.c.b16 %v1600, %v1597
  %v2555 = vpack.c.b16 %v1601, %v1598
  %v2556 = vpack.c.b16 %v1605, %v1602
  %v2557 = vpack.c.b16 %v1606, %v1603
  %v2558 = vpack.c.b16 %v1607, %v1604
  %v2559 = vpack.c.b16 %v1611, %v1608
  %v2560 = vpack.c.b16 %v1612, %v1609
  %v2561 = vpack.c.b16 %v1613, %v1610
  %v2562 = vpack.c.b16 %v1617, %v1614
  %v2563 = vpack.c.b16 %v1618, %v1615
  %v2564 = vpack.c.b16 %v1619, %v1616
  %v2565 = vpack.c.b16 %v1623, %v1620
  %v2566 = vpack.c.b16 %v1624, %v1621
  %v2567 = vpack.c.b16 %v1625, %v1622
  %v2568 = vpack.c.b16 %v1629, %v1626
  %v2569 = vpack.c.b16 %v1630, %v1627
  %v2570 = vpack.c.b16 %v1631, %v1628
  %v2571 = vpack.c.b16 %v1635, %v1632
  %v2572 = vpack.c.b16 %v1636, %v1633
  %v2573 = vpack.c.b16 %v1637, %v1634
  %v2574 = vpack.c.b16 %v1641, %v1638
  %v2575 = vpack.c.b16 %v1642, %v1639
  %v2576 = vpack.c.b16 %v1643, %v1640
  %v2577 = vpack.c.b16 %v1647, %v1644
  %v2578 = vpack.c.b16 %v1648, %v1645
  %v2579 = vpack.c.b16 %v1649, %v1646
  %v2580 = vpack.c.b16 %v1653, %v1650
  %v2581 = vpack.c.b16 %v1654, %v1651
  %v2582 = vpack.c.b16 %v1655, %v1652
  %v2583 = vpack.c.b16 %v1659, %v1656
  %v2584 = vpack.c.b16 %v1660, %v1657
  %v2585 = vpack.c.b16 %v1661, %v1658
  %v2586 = vpack.c.b16 %v1665, %v1662
  %v2587 = vpack.c.b16 %v1666, %v1663
  %v2588 = vpack.c.b16 %v1667, %v1664
  %v2589 = vpack.c.b16 %v1671, %v1668
  %v2590 = vpack.c.b16 %v1672, %v1669
  %v2591 = vpack.c.b16 %v1673, %v1670
  %v2592 = vpack.c.b16 %v1677, %v1674
  %v2593 = vpack.c.b16 %v1678, %v1675
  %v2594 = vpack.c.b16 %v1679, %v1676
  %v2595 = vpack.c.b16 %v1683, %v1680
  %v2596 = vpack.c.b16 %v1684, %v1681
  %v2597 = vpack.c.b16 %v1685, %v1682
  %v2598 = vpack.c.b16 %v1689, %v1686
  %v2599 = vpack.c.b16 %v1690, %v1687
  %v2600 = vpack.c.b16 %v1691, %v1688
  %v2601 = vpack.c.b16 %v1695, %v1692
  %v2602 = vpack.c.b16 %v1696, %v1693
  %v2603 = vpack.c.b16 %v1697, %v1694
  %v2604 = vpack.c.b16 %v1701, %v1698
  %v2605 = vpack.c.b16 %v1702, %v1699
  %v2606 = vpack.c.b16 %v1703, %v1700
  %v2607 = vpack.c.b16 %v1707, %v1704
  %v2608 = vpack.c.b16 %v1708, %v1705
  %v2609 = vpack.c.b16 %v1709, %v1706
  %v2610 = vpack.c.b16 %v1713, %v1710
  %v2611 = vpack.c.b16 %v1714, %v1711
  %v2612 = vpack.c.b16 %v1715, %v1712
  %v2613 = vpack.c.b16 %v1719, %v1716
  %v2614 = vpack.c.b16 %v1720, %v1717
  %v2615 = vpack.c.b16 %v1721, %v1718
  %v2616 = vpack.c.b16 %v1725, %v1722
  %v2617 = vpack.c.b16 %v1726, %v1723
  %v2618 = vpack.c.b16 %v1727, %v1724
  %v2619 = vpack.c.b16 %v1731, %v1728
  %v2620 = vpack.c.b16 %v1732, %v1729
  %v2621 = vpack.c.b16 %v1733, %v1730
  %v2622 = vpack.c.b16 %v1737, %v1734
  %v2623 = vpack.c.b16 %v1738, %v1735
  %v2624 = vpack.c.b16 %v1739, %v1736
  %v2625 = vpack.c.b16 %v1743, %v1740
  %v2626 = vpack.c.b16 %v1744, %v1741
  %v2627 = vpack.c.b16 %v1745, %v1742
  %v2628 = vpack.c.b16 %v1749, %v1746
  %v2629 = vpack.c.b16 %v1750, %v1747
  %v2630 = vpack.c.b16 %v1751, %v1748
  %v2631 = vpack.c.b16 %v1755, %v1752
  %v2632 = vpack.c.b16 %v1756, %v1753
  %v2633 = vpack.c.b16 %v1757, %v1754
  %v2634 = vpack.c.b16 %v1761, %v1758
  %v2635 = vpack.c.b16 %v1762, %v1759
  %v2636 = vpack.c.b16 %v1763, %v1760
  %v2637 = vpack.c.b16 %v1767, %v1764
  %v2638 = vpack.c.b16 %v1768, %v1765
  %v2639 = vpack.c.b16 %v1769, %v1766
  %v2640 = vpack.c.b16 %v1773, %v1770
  %v2641 = vpack.c.b16 %v1774, %v1771
  %v2642 = vpack.c.b16 %v1775, %v1772
  %v2643 = vpack.c.b16 %v1779, %v1776
  %v2644 = vpack.c.b16 %v1780, %v1777
  %v2645 = vpack.c.b16 %v1781, %v1778
  %v2646 = vpack.c.b16 %v1785, %v1782
  %v2647 = vpack.c.b16 %v1786, %v1783
  %v2648 = vpack.c.b16 %v1787, %v1784
  %v2649 = vpack.c.b16 %v1791, %v1788
  %v2650 = vpack.c.b16 %v1792, %v1789
  %v2651 = vpack.c.b16 %v1793, %v1790
  %v2652 = vpack.c.b16 %v1797, %v1794
  %v2653 = vpack.c.b16 %v1798, %v1795
  %v2654 = vpack.c.b16 %v1799, %v1796
  %v2655 = vpack.c.b16 %v1803, %v1800
  %v2656 = vpack.c.b16 %v1804, %v1801
  %v2657 = vpack.c.b16 %v1805, %v1802
  %v2658 = vpack.c.b16 %v1809, %v1806
  %v2659 = vpack.c.b16 %v1810, %v1807
  %v2660 = vpack.c.b16 %v1811, %v1808
  %v2661 = vpack.c.b16 %v1815, %v1812
  %v2662 = vpack.c.b16 %v1816, %v1813
  %v2663 = vpack.c.b16 %v1817, %v1814
  %v2664 = vpack.c.b16 %v1821, %v1818
  %v2665 = vpack.c.b16 %v1822, %v1819
  %v2666 = vpack.c.b16 %v1823, %v1820
  %v2667 = vpack.c.b16 %v1827, %v1824
  %v2668 = vpack.c.b16 %v1828, %v1825
  %v2669 = vpack.c.b16 %v1829, %v1826
  %v2670 = vpack.c.b16 %v1833, %v1830
  %v2671 = vpack.c.b16 %v1834, %v1831
  %v2672 = vpack.c.b16 %v1835, %v1832
  %v2673 = vpack.c.b16 %v1839, %v1836
  %v2674 = vpack.c.b16 %v1840, %v1837
  %v2675 = vpack.c.b16 %v1841, %v1838
  %v2676 = vpack.c.b16 %v1845, %v1842
  %v2677 = vpack.c.b16 %v1846, %v1843
  %v2678 = vpack.c.b16 %v1847, %v1844
  %v2679 = vpack.c.b16 %v1851, %v1848
  %v2680 = vpack.c.b16 %v1852, %v1849
  %v2681 = vpack.c.b16 %v1853, %v1850
  %v2682 = vpack.c.b16 %v1857, %v1854
  %v2683 = vpack.c.b16 %v1858, %v1855
  %v2684 = vpack.c.b16 %v1859, %v1856
  %v2685 = vpack.c.b16 %v1863, %v1860
  %v2686 = vpack.c.b16 %v1864, %v1861
  %v2687 = vpack.c.b16 %v1865, %v1862
  %v2688 = vpack.c.b16 %v1869, %v1866
  %v2689 = vpack.c.b16 %v1870, %v1867
  %v2690 = vpack.c.b16 %v1871, %v1868
  %v2691 = vpack.c.b16 %v1875, %v1872
  %v2692 = vpack.c.b16 %v1876, %v1873
  %v2693 = vpack.c.b16 %v1877, %v1874
  %v2694 = vpack.c.b16 %v1881, %v1878
  %v2695 = vpack.c.b16 %v1882, %v1879
  %v2696 = vpack.c.b16 %v1883, %v1880
  %v2697 = vpack.c.b16 %v1887, %v1884
  %v2698 = vpack.c.b16 %v1888, %v1885
  %v2699 = vpack.c.b16 %v1889, %v1886
  %v2700 = vpack.c.b16 %v1893, %v1890
  %v2701 = vpack.c.b16 %v1894, %v1891
  %v2702 = vpack.c.b16 %v1895, %v1892
  %v2703 = vpack.c.b16 %v1899, %v1896
  %v2704 = vpack.c.b16 %v1900, %v1897
  %v2705 = vpack.c.b16 %v1901, %v1898
  %v2706 = vpack.c.b16 %v1905, %v1902
  %v2707 = vpack.c.b16 %v1906, %v1903
  %v2708 = vpack.c.b16 %v1907, %v1904
  %v2709 = vpack.c.b16 %v1911, %v1908
  %v2710 = vpack.c.b16 %v1912, %v1909
  %v2711 = vpack.c.b16 %v1913, %v1910
  %v2712 = vpack.c.b16 %v1917, %v1914
  %v2713 = vpack.c.b16 %v1918, %v1915
  %v2714 = vpack.c.b16 %v1919, %v1916
  %v2715 = vpack.c.b16 %v1923, %v1920
  %v2716 = vpack.c.b16 %v1924, %v1921
  %v2717 = vpack.c.b16 %v1925, %v1922
  %v2718 = vpack.c.b16 %v1929, %v1926
  %v2719 = vpack.c.b16 %v1930, %v1927
  %v2720 = vpack.c.b16 %v1931, %v1928
  %v2721 = vpack.c.b16 %v1935, %v1932
  %v2722 = vpack.c.b16 %v1936, %v1933
  %v2723 = vpack.c.b16 %v1937, %v1934
  %v2724 = vpack.c.b16 %v1941, %v1938
  %v2725 = vpack.c.b16 %v1942, %v1939
  %v2726 = vpack.c.b16 %v1943, %v1940
  %v2727 = vpack.c.b16 %v1947, %v1944
  %v2728 = vpack.c.b16 %v1948, %v1945
  %v2729 = vpack.c.b16 %v1949, %v1946
  %v2730 = vpack.c.b16 %v1953, %v1950
  %v2731 = vpack.c.b16 %v1954, %v1951
  %v2732 = vpack.c.b16 %v1955, %v1952
  %v2733 = vpack.c.b16 %v1959, %v1956
  %v2734 = vpack.c.b16 %v1960, %v1957
  %v2735 = vpack.c.b16 %v1961, %v1958
  %v2736 = vpack.c.b16 %v1965, %v1962
  %v2737 = vpack.c.b16 %v1966, %v1963
  %v2738 = vpack.c.b16 %v1967, %v1964
  %v2739 = vpack.c.b16 %v1971, %v1968
  %v2740 = vpack.c.b16 %v1972, %v1969
  %v2741 = vpack.c.b16 %v1973, %v1970
  %v2742 = vpack.c.b16 %v1977, %v1974
  %v2743 = vpack.c.b16 %v1978, %v1975
  %v2744 = vpack.c.b16 %v1979, %v1976
  %v2745 = vpack.c.b16 %v1983, %v1980
  %v2746 = vpack.c.b16 %v1984, %v1981
  %v2747 = vpack.c.b16 %v1985, %v1982
  %v2748 = vpack.c.b16 %v1989, %v1986
  %v2749 = vpack.c.b16 %v1990, %v1987
  %v2750 = vpack.c.b16 %v1991, %v1988
  %v2751 = vpack.c.b16 %v1995, %v1992
  %v2752 = vpack.c.b16 %v1996, %v1993
  %v2753 = vpack.c.b16 %v1997, %v1994
  %v2754 = vpack.c.b16 %v2001, %v1998
  %v2755 = vpack.c.b16 %v2002, %v1999
  %v2756 = vpack.c.b16 %v2003, %v2000
  %v2757 = vpack.c.b16 %v2007, %v2004
  %v2758 = vpack.c.b16 %v2008, %v2005
  %v2759 = vpack.c.b16 %v2009, %v2006
  %v2760 = vpack.c.b16 %v2013, %v2010
  %v2761 = vpack.c.b16 %v2014, %v2011
  %v2762 = vpack.c.b16 %v2015, %v2012
  %v2763 = vpack.c.b16 %v2019, %v2016
  %v2764 = vpack.c.b16 %v2020, %v2017
  %v2765 = vpack.c.b16 %v2021, %v2018
  %v2766 = vpack.c.b16 %v2025, %v2022
  %v2767 = vpack.c.b16 %v2026, %v2023
  %v2768 = vpack.c.b16 %v2027, %v2024
  %v2769 = vpack.c.b16 %v2031, %v2028
  %v2770 = vpack.c.b16 %v2032, %v2029
  %v2771 = vpack.c.b16 %v2033, %v2030
  %v2772 = vpack.c.b16 %v2037, %v2034
  %v2773 = vpack.c.b16 %v2038, %v2035
  %v2774 = vpack.c.b16 %v2039, %v2036
  %v2775 = vpack.c.b16 %v2043, %v2040
  %v2776 = vpack.c.b16 %v2044, %v2041
  %v2777 = vpack.c.b16 %v2045, %v2042
  %v2778 = vpack.c.b16 %v2049, %v2046
  %v2779 = vpack.c.b16 %v2050, %v2047
  %v2780 = vpack.c.b16 %v2051, %v2048
  %v2781 = vpack.c.b16 %v2055, %v2052
  %v2782 = vpack.c.b16 %v2056, %v2053
  %v2783 = vpack.c.b16 %v2057, %v2054
  %v2784 = vpack.c.b16 %v2061, %v2058
  %v2785 = vpack.c.b16 %v2062, %v2059
  %v2786 = vpack.c.b16 %v2063, %v2060
  %v2787 = vpack.c.b16 %v2067, %v2064
  %v2788 = vpack.c.b16 %v2068, %v2065
  %v2789 = vpack.c.b16 %v2069, %v2066
  %v2790 = vpack.c.b16 %v2073, %v2070
  %v2791 = vpack.c.b16 %v2074, %v2071
  %v2792 = vpack.c.b16 %v2075, %v2072
  %v2793 = vpack.c.b16 %v2079, %v2076
  %v2794 = vpack.c.b16 %v2080, %v2077
  %v2795 = vpack.c.b16 %v2081, %v2078
  %v2796 = vpack.c.b16 %v2085, %v2082
  %v2797 = vpack.c.b16 %v2086, %v2083
  %v2798 = vpack.c.b16 %v2087, %v2084
  %v2799 = vpack.c.b16 %v2091, %v2088
  %v2800 = vpack.c.b16 %v2092, %v2089
  %v2801 = vpack.c.b16 %v2093, %v2090
  %v2802 = vpack.c.b16 %v2097, %v2094
  %v2803 = vpack.c.b16 %v2098, %v2095
  %v2804 = vpack.c.b16 %v2099, %v2096
  %v2805 = vpack.c.b16 %v2103, %v2100
  %v2806 = vpack.c.b16 %v2104, %v2101
  %v2807 = vpack.c.b16 %v2105, %v2102
  %v2808 = vpack.c.b16 %v2109, %v2106
  %v2809 = vpack.c.b16 %v2110, %v2107
  %v2810 = vpack.c.b16 %v2111, %v2108
  %v2811 = vpack.c.b16 %v2115, %v2112
  %v2812 = vpack.c.b16 %v2116, %v2113
  %v2813 = vpack.c.b16 %v2117, %v2114
  %v2814 = vpack.c.b16 %v2121, %v2118
  %v2815 = vpack.c.b16 %v2122, %v2119
  %v2816 = vpack.c.b16 %v2123, %v2120
  %v2817 = vpack.c.b16 %v2127, %v2124
  %v2818 = vpack.c.b16 %v2128, %v2125
  %v2819 = vpack.c.b16 %v2129, %v2126
  %v2820 = vpack.c.b16 %v2133, %v2130
  %v2821 = vpack.c.b16 %v2134, %v2131
  %v2822 = vpack.c.b16 %v2135, %v2132
  %v2823 = vpack.c.b16 %v2139, %v2136
  %v2824 = vpack.c.b16 %v2140, %v2137
  %v2825 = vpack.c.b16 %v2141, %v2138
  %v2826 = vpack.c.b16 %v2145, %v2142
  %v2827 = vpack.c.b16 %v2146, %v2143
  %v2828 = vpack.c.b16 %v2147, %v2144
  %v2829 = vpack.c.b16 %v2151, %v2148
  %v2830 = vpack.c.b16 %v2152, %v2149
  %v2831 = vpack.c.b16 %v2153, %v2150
  %v2832 = vpack.c.b16 %v2157, %v2154
  %v2833 = vpack.c.b16 %v2158, %v2155
  %v2834 = vpack.c.b16 %v2159, %v2156
  %v2835 = vpack.c.b16 %v2163, %v2160
  %v2836 = vpack.c.b16 %v2164, %v2161
  %v2837 = vpack.c.b16 %v2165, %v2162
  %v2838 = vpack.c.b16 %v2169, %v2166
  %v2839 = vpack.c.b16 %v2170, %v2167
  %v2840 = vpack.c.b16 %v2171, %v2168
  %v2841 = vpack.c.b16 %v2175, %v2172
  %v2842 = vpack.c.b16 %v2176, %v2173
  %v2843 = vpack.c.b16 %v2177, %v2174
  %v2844 = vpack.c.b16 %v2181, %v2178
  %v2845 = vpack.c.b16 %v2182, %v2179
  %v2846 = vpack.c.b16 %v2183, %v2180
  %v2847 = vpack.c.b16 %v2187, %v2184
  %v2848 = vpack.c.b16 %v2188, %v2185
  %v2849 = vpack.c.b16 %v2189, %v2186
  %v2850 = vpack.c.b16 %v2193, %v2190
  %v2851 = vpack.c.b16 %v2194, %v2191
  %v2852 = vpack.c.b16 %v2195, %v2192
  %v2853 = vpack.c.b16 %v2199, %v2196
  %v2854 = vpack.c.b16 %v2200, %v2197
  %v2855 = vpack.c.b16 %v2201, %v2198
  %v2856 = vpack.c.b16 %v2205, %v2202
  %v2857 = vpack.c.b16 %v2206, %v2203
  %v2858 = vpack.c.b16 %v2207, %v2204
  %v2859 = vpack.c.b16 %v2211, %v2208
  %v2860 = vpack.c.b16 %v2212, %v2209
  %v2861 = vpack.c.b16 %v2213, %v2210
  %v2862 = vpack.c.b16 %v2217, %v2214
  %v2863 = vpack.c.b16 %v2218, %v2215
  %v2864 = vpack.c.b16 %v2219, %v2216
  %v2865 = vpack.c.b16 %v2223, %v2220
  %v2866 = vpack.c.b16 %v2224, %v2221
  %v2867 = vpack.c.b16 %v2225, %v2222
  %v2868 = vpack.c.b16 %v2229, %v2226
  %v2869 = vpack.c.b16 %v2230, %v2227
  %v2870 = vpack.c.b16 %v2231, %v2228
  %v2871 = vpack.c.b16 %v2235, %v2232
  %v2872 = vpack.c.b16 %v2236, %v2233
  %v2873 = vpack.c.b16 %v2237, %v2234
  %v2874 = vpack.c.b16 %v2241, %v2238
  %v2875 = vpack.c.b16 %v2242, %v2239
  %v2876 = vpack.c.b16 %v2243, %v2240
  %v2877 = vpack.c.b16 %v2247, %v2244
  %v2878 = vpack.c.b16 %v2248, %v2245
  %v2879 = vpack.c.b16 %v2249, %v2246
  %v2880 = vpack.c.b16 %v2253, %v2250
  %v2881 = vpack.c.b16 %v2254, %v2251
  %v2882 = vpack.c.b16 %v2255, %v2252
  %v2883 = vpack.c.b16 %v2259, %v2256
  %v2884 = vpack.c.b16 %v2260, %v2257
  %v2885 = vpack.c.b16 %v2261, %v2258
  %v2886 = vpack.c.b16 %v2265, %v2262
  %v2887 = vpack.c.b16 %v2266, %v2263
  %v2888 = vpack.c.b16 %v2267, %v2264
  %v2889 = vpack.c.b16 %v2271, %v2268
  %v2890 = vpack.c.b16 %v2272, %v2269
  %v2891 = vpack.c.b16 %v2273, %v2270
  %v2892 = vpack.c.b16 %v2277, %v2274
  %v2893 = vpack.c.b16 %v2278, %v2275
  %v2894 = vpack.c.b16 %v2279, %v2276
  %v2895 = vpack.c.b16 %v2283, %v2280
  %v2896 = vpack.c.b16 %v2284, %v2281
  %v2897 = vpack.c.b16 %v2285, %v2282
  %v2898 = vpack.c.b16 %v2289, %v2286
  %v2899 = vpack.c.b16 %v2290, %v2287
  %v2900 = vpack.c.b16 %v2291, %v2288
  %v2901 = vpack.c.b16 %v2295, %v2292
  %v2902 = vpack.c.b16 %v2296, %v2293
  %v2903 = vpack.c.b16 %v2297, %v2294
  %v2904 = vpack.c.b16 %v2301, %v2298
  %v2905 = vpack.c.b16 %v2302, %v2299
  %v2906 = vpack.c.b16 %v2303, %v2300
  %v2907 = vpack.c.b16 %v2307, %v2304
  %v2908 = vpack.c.b16 %v2308, %v2305
  %v2909 = vpack.c.b16 %v2309, %v2306
  %v2910 = vpack.c.b16 %v2313, %v2310
  %v2911 = vpack.c.b16 %v2314, %v2311
  %v2912 = vpack.c.b16 %v2315, %v2312
  %v2913 = vpack.c.b16 %v2319, %v2316
  %v2914 = vpack.c.b16 %v2320, %v2317
  %v2915 = vpack.c.b16 %v2321, %v2318
  %v2916 = vpack.c.b16 %v2325, %v2322
  %v2917 = vpack.c.b16 %v2326, %v2323
  %v2918 = vpack.c.b16 %v2327, %v2324
  %v2919 = vpack.c.b16 %v2331, %v2328
  %v2920 = vpack.c.b16 %v2332, %v2329
  %v2921 = vpack.c.b16 %v2333, %v2330
  %v2922 = vpack.c.b16 %v2337, %v2334
  %v2923 = vpack.c.b16 %v2338, %v2335
  %v2924 = vpack.c.b16 %v2339, %v2336
  %v2925 = vpack.c.b16 %v2343, %v2340
  %v2926 = vpack.c.b16 %v2344, %v2341
  %v2927 = vpack.c.b16 %v2345, %v2342
  %v2928 = vpack.c.b16 %v2349, %v2346
  %v2929 = vpack.c.b16 %v2350, %v2347
  %v2930 = vpack.c.b16 %v2351, %v2348
  %v2931 = vpack.c.b16 %v2355, %v2352
  %v2932 = vpack.c.b16 %v2356, %v2353
  %v2933 = vpack.c.b16 %v2357, %v2354
  %v2934 = vpack.c.b16 %v2361, %v2358
  %v2935 = vpack.c.b16 %v2362, %v2359
  %v2936 = vpack.c.b16 %v2363, %v2360
  %v2937 = vpack.c.b16 %v2367, %v2364
  %v2938 = vpack.c.b16 %v2368, %v2365
  %v2939 = vpack.c.b16 %v2369, %v2366
  %v2940 = vpack.c.b16 %v2373, %v2370
  %v2941 = vpack.c.b16 %v2374, %v2371
  %v2942 = vpack.c.b16 %v2375, %v2372
  %v2943 = vpack.c.b16 %v2379, %v2376
  %v2944 = vpack.c.b16 %v2380, %v2377
  %v2945 = vpack.c.b16 %v2381, %v2378
  %v2946 = vpack.c.b16 %v2385, %v2382
  %v2947 = vpack.c.b16 %v2386, %v2383
  %v2948 = vpack.c.b16 %v2387, %v2384
  %v2949 = vpack.c.b16 %v2391, %v2388
  %v2950 = vpack.c.b16 %v2392, %v2389
  %v2951 = vpack.c.b16 %v2393, %v2390
  %v2952 = vpack.c.b16 %v2397, %v2394
  %v2953 = vpack.c.b16 %v2398, %v2395
  %v2954 = vpack.c.b16 %v2399, %v2396
  %v2955 = vpack.c.b16 %v2403, %v2400
  %v2956 = vpack.c.b16 %v2404, %v2401
  %v2957 = vpack.c.b16 %v2405, %v2402
  %v2958 = vpack.c.b16 %v2409, %v2406
  %v2959 = vpack.c.b16 %v2410, %v2407
  %v2960 = vpack.c.b16 %v2411, %v2408
  %v2961 = vpack.c.b16 %v2415, %v2412
  %v2962 = vpack.c.b16 %v2416, %v2413
  %v2963 = vpack.c.b16 %v2417, %v2414
  %v2964 = vpack.c.b16 %v2421, %v2418
  %v2965 = vpack.c.b16 %v2422, %v2419
  %v2966 = vpack.c.b16 %v2423, %v2420
  %v2967 = vpack.c.b16 %v2427, %v2424
  %v2968 = vpack.c.b16 %v2428, %v2425
  %v2969 = vpack.c.b16 %v2429, %v2426
  %v2970 = vpack.c.b16 %v2433, %v2430
  %v2971 = vpack.c.b16 %v2434, %v2431
  %v2972 = vpack.c.b16 %v2435, %v2432
  %v2973 = vpack.c.b16 %v2439, %v2436
  %v2974 = vpack.c.b16 %v2440, %v2437
  %v2975 = vpack.c.b16 %v2441, %v2438
  %v2976 = vpack.c.b16 %v2445, %v2442
  %v2977 = vpack.c.b16 %v2446, %v2443
  %v2978 = vpack.c.b16 %v2447, %v2444
  %v2979 = vpack.c.b16 %v2451, %v2448
  %v2980 = vpack.c.b16 %v2452, %v2449
  %v2981 = vpack.c.b16 %v2453, %v2450
  %v2982 = vpack.c.b16 %v2457, %v2454
  %v2983 = vpack.c.b16 %v2458, %v2455
  %v2984 = vpack.c.b16 %v2459, %v2456
  %v2985 = vpack.c.b16 %v2463, %v2460
  %v2986 = vpack.c.b16 %v2464, %v2461
  %v2987 = vpack.c.b16 %v2465, %v2462
  %v2988 = vpack.c.b16 %v2469, %v2466
  %v2989 = vpack.c.b16 %v2470, %v2467
  %v2990 = vpack.c.b16 %v2471, %v2468
  %v2991 = vpack.c.b16 %v2475, %v2472
  %v2992 = vpack.c.b16 %v2476, %v2473
  %v2993 = vpack.c.b16 %v2477, %v2474
  %v2994 = vpack.c.b16 %v2481, %v2478
  %v2995 = vpack.c.b16 %v2482, %v2479
  %v2996 = vpack.c.b16 %v2483, %v2480
  %v2997 = vpack.c.b16 %v2487, %v2484
  %v2998 = vpack.c.b16 %v2488, %v2485
  %v2999 = vpack.c.b16 %v2489, %v2486
  %v3000 = vpack.c.b16 %v2493, %v2490
  %v3001 = vpack.c.b16 %v2494, %v2491
  %v3002 = vpack.c.b16 %v2495, %v2492
  %v3003 = vpack.c.b16 %v2499, %v2496
  %v3004 = vpack.c.b16 %v2500, %v2497
  %v3005 = vpack.c.b16 %v2501, %v2498
  %3510 = vmatpush.bf16.msra.mxu0 %v2523
  %3511 = vmatpush.bf16.msra.mxu0 %v2520
  %3512 = vmatpush.bf16.msra.mxu0 %v2517
  %3513 = vmatpush.bf16.msra.mxu0 %v2514
  %3514 = vmatpush.bf16.msra.mxu0 %v2511
  %3515 = vmatpush.bf16.msra.mxu0 %v2508
  %3516 = vmatpush.bf16.msra.mxu0 %v2505
  %3517 = vmatpush.bf16.msra.mxu0 %v2502
  %3518 = vmatmul.bf16.gmra.mxu0 %v780
  %v3519 = vpop.f32.mrf.mxu0
  %v3520 = vadd.f32 %v710, %v3519
  %v3521 = vpop.f32.mrf.mxu0
  %v3522 = vadd.f32 %v710, %v3521
  %3523 = vdwg.mxu0
  %3524 = vmatpush.bf16.msra.mxu0 %v2547
  %3525 = vmatpush.bf16.msra.mxu0 %v2544
  %3526 = vmatpush.bf16.msra.mxu0 %v2541
  %3527 = vmatpush.bf16.msra.mxu0 %v2538
  %3528 = vmatpush.bf16.msra.mxu0 %v2535
  %3529 = vmatpush.bf16.msra.mxu0 %v2532
  %3530 = vmatpush.bf16.msra.mxu0 %v2529
  %3531 = vmatpush.bf16.msra.mxu0 %v2526
  %3532 = vmatmul.bf16.gmra.mxu0 %v781
  %v3533 = vpop.f32.mrf.mxu0
  %v3534 = vadd.f32 %v3520, %v3533
  %v3535 = vpop.f32.mrf.mxu0
  %v3536 = vadd.f32 %v3522, %v3535
  %3537 = vdwg.mxu0
  %3538 = vmatpush.bf16.msra.mxu0 %v2571
  %3539 = vmatpush.bf16.msra.mxu0 %v2568
  %3540 = vmatpush.bf16.msra.mxu0 %v2565
  %3541 = vmatpush.bf16.msra.mxu0 %v2562
  %3542 = vmatpush.bf16.msra.mxu0 %v2559
  %3543 = vmatpush.bf16.msra.mxu0 %v2556
  %3544 = vmatpush.bf16.msra.mxu0 %v2553
  %3545 = vmatpush.bf16.msra.mxu0 %v2550
  %3546 = vmatmul.bf16.gmra.mxu0 %v782
  %v3547 = vpop.f32.mrf.mxu0
  %v3548 = vadd.f32 %v3534, %v3547
  %v3549 = vpop.f32.mrf.mxu0
  %v3550 = vadd.f32 %v3536, %v3549
  %3551 = vdwg.mxu0
  %3552 = vmatpush.bf16.msra.mxu0 %v2595
  %3553 = vmatpush.bf16.msra.mxu0 %v2592
  %3554 = vmatpush.bf16.msra.mxu0 %v2589
  %3555 = vmatpush.bf16.msra.mxu0 %v2586
  %3556 = vmatpush.bf16.msra.mxu0 %v2583
  %3557 = vmatpush.bf16.msra.mxu0 %v2580
  %3558 = vmatpush.bf16.msra.mxu0 %v2577
  %3559 = vmatpush.bf16.msra.mxu0 %v2574
  %3560 = vmatmul.bf16.gmra.mxu0 %v783
  %v3561 = vpop.f32.mrf.mxu0
  %v3562 = vadd.f32 %v3548, %v3561
  %v3563 = vpop.f32.mrf.mxu0
  %v3564 = vadd.f32 %v3550, %v3563
  %3565 = vdwg.mxu0
  %3566 = vmatpush.bf16.msra.mxu0 %v2619
  %3567 = vmatpush.bf16.msra.mxu0 %v2616
  %3568 = vmatpush.bf16.msra.mxu0 %v2613
  %3569 = vmatpush.bf16.msra.mxu0 %v2610
  %3570 = vmatpush.bf16.msra.mxu0 %v2607
  %3571 = vmatpush.bf16.msra.mxu0 %v2604
  %3572 = vmatpush.bf16.msra.mxu0 %v2601
  %3573 = vmatpush.bf16.msra.mxu0 %v2598
  %3574 = vmatmul.bf16.gmra.mxu0 %v784
  %v3575 = vpop.f32.mrf.mxu0
  %v3576 = vadd.f32 %v3562, %v3575
  %v3577 = vpop.f32.mrf.mxu0
  %v3578 = vadd.f32 %v3564, %v3577
  %3579 = vdwg.mxu0
  %3580 = vmatpush.bf16.msra.mxu0 %v2643
  %3581 = vmatpush.bf16.msra.mxu0 %v2640
  %3582 = vmatpush.bf16.msra.mxu0 %v2637
  %3583 = vmatpush.bf16.msra.mxu0 %v2634
  %3584 = vmatpush.bf16.msra.mxu0 %v2631
  %3585 = vmatpush.bf16.msra.mxu0 %v2628
  %3586 = vmatpush.bf16.msra.mxu0 %v2625
  %3587 = vmatpush.bf16.msra.mxu0 %v2622
  %3588 = vmatmul.bf16.gmra.mxu0 %v785
  %v3589 = vpop.f32.mrf.mxu0
  %v3590 = vadd.f32 %v3576, %v3589
  %v3591 = vpop.f32.mrf.mxu0
  %v3592 = vadd.f32 %v3578, %v3591
  %3593 = vdwg.mxu0
  %3594 = vmatpush.bf16.msra.mxu0 %v2667
  %3595 = vmatpush.bf16.msra.mxu0 %v2664
  %3596 = vmatpush.bf16.msra.mxu0 %v2661
  %3597 = vmatpush.bf16.msra.mxu0 %v2658
  %3598 = vmatpush.bf16.msra.mxu0 %v2655
  %3599 = vmatpush.bf16.msra.mxu0 %v2652
  %3600 = vmatpush.bf16.msra.mxu0 %v2649
  %3601 = vmatpush.bf16.msra.mxu0 %v2646
  %3602 = vmatmul.bf16.gmra.mxu0 %v786
  %v3603 = vpop.f32.mrf.mxu0
  %v3604 = vadd.f32 %v3590, %v3603
  %v3605 = vpop.f32.mrf.mxu0
  %v3606 = vadd.f32 %v3592, %v3605
  %3607 = vdwg.mxu0
  %3608 = vmatpush.bf16.msra.mxu0 %v2691
  %3609 = vmatpush.bf16.msra.mxu0 %v2688
  %3610 = vmatpush.bf16.msra.mxu0 %v2685
  %3611 = vmatpush.bf16.msra.mxu0 %v2682
  %3612 = vmatpush.bf16.msra.mxu0 %v2679
  %3613 = vmatpush.bf16.msra.mxu0 %v2676
  %3614 = vmatpush.bf16.msra.mxu0 %v2673
  %3615 = vmatpush.bf16.msra.mxu0 %v2670
  %3616 = vmatmul.bf16.gmra.mxu0 %v787
  %v3617 = vpop.f32.mrf.mxu0
  %v3618 = vadd.f32 %v3604, %v3617
  %v3619 = vpop.f32.mrf.mxu0
  %v3620 = vadd.f32 %v3606, %v3619
  %3621 = vdwg.mxu0
  %3622 = vmatpush.bf16.msra.mxu0 %v2715
  %3623 = vmatpush.bf16.msra.mxu0 %v2712
  %3624 = vmatpush.bf16.msra.mxu0 %v2709
  %3625 = vmatpush.bf16.msra.mxu0 %v2706
  %3626 = vmatpush.bf16.msra.mxu0 %v2703
  %3627 = vmatpush.bf16.msra.mxu0 %v2700
  %3628 = vmatpush.bf16.msra.mxu0 %v2697
  %3629 = vmatpush.bf16.msra.mxu0 %v2694
  %3630 = vmatmul.bf16.gmra.mxu0 %v788
  %v3631 = vpop.f32.mrf.mxu0
  %v3632 = vadd.f32 %v3618, %v3631
  %v3633 = vpop.f32.mrf.mxu0
  %v3634 = vadd.f32 %v3620, %v3633
  %3635 = vdwg.mxu0
  %3636 = vmatpush.bf16.msra.mxu0 %v2739
  %3637 = vmatpush.bf16.msra.mxu0 %v2736
  %3638 = vmatpush.bf16.msra.mxu0 %v2733
  %3639 = vmatpush.bf16.msra.mxu0 %v2730
  %3640 = vmatpush.bf16.msra.mxu0 %v2727
  %3641 = vmatpush.bf16.msra.mxu0 %v2724
  %3642 = vmatpush.bf16.msra.mxu0 %v2721
  %3643 = vmatpush.bf16.msra.mxu0 %v2718
  %3644 = vmatmul.bf16.gmra.mxu0 %v789
  %v3645 = vpop.f32.mrf.mxu0
  %v3646 = vadd.f32 %v3632, %v3645
  %v3647 = vpop.f32.mrf.mxu0
  %v3648 = vadd.f32 %v3634, %v3647
  %3649 = vdwg.mxu0
  %3650 = vmatpush.bf16.msra.mxu0 %v2763
  %3651 = vmatpush.bf16.msra.mxu0 %v2760
  %3652 = vmatpush.bf16.msra.mxu0 %v2757
  %3653 = vmatpush.bf16.msra.mxu0 %v2754
  %3654 = vmatpush.bf16.msra.mxu0 %v2751
  %3655 = vmatpush.bf16.msra.mxu0 %v2748
  %3656 = vmatpush.bf16.msra.mxu0 %v2745
  %3657 = vmatpush.bf16.msra.mxu0 %v2742
  %3658 = vmatmul.bf16.gmra.mxu0 %v790
  %v3659 = vpop.f32.mrf.mxu0
  %v3660 = vadd.f32 %v3646, %v3659
  %v3661 = vpop.f32.mrf.mxu0
  %v3662 = vadd.f32 %v3648, %v3661
  %3663 = vdwg.mxu0
  %3664 = vmatpush.bf16.msra.mxu0 %v2787
  %3665 = vmatpush.bf16.msra.mxu0 %v2784
  %3666 = vmatpush.bf16.msra.mxu0 %v2781
  %3667 = vmatpush.bf16.msra.mxu0 %v2778
  %3668 = vmatpush.bf16.msra.mxu0 %v2775
  %3669 = vmatpush.bf16.msra.mxu0 %v2772
  %3670 = vmatpush.bf16.msra.mxu0 %v2769
  %3671 = vmatpush.bf16.msra.mxu0 %v2766
  %3672 = vmatmul.bf16.gmra.mxu0 %v791
  %v3673 = vpop.f32.mrf.mxu0
  %v3674 = vadd.f32 %v3660, %v3673
  %v3675 = vpop.f32.mrf.mxu0
  %v3676 = vadd.f32 %v3662, %v3675
  %3677 = vdwg.mxu0
  %3678 = vmatpush.bf16.msra.mxu0 %v2811
  %3679 = vmatpush.bf16.msra.mxu0 %v2808
  %3680 = vmatpush.bf16.msra.mxu0 %v2805
  %3681 = vmatpush.bf16.msra.mxu0 %v2802
  %3682 = vmatpush.bf16.msra.mxu0 %v2799
  %3683 = vmatpush.bf16.msra.mxu0 %v2796
  %3684 = vmatpush.bf16.msra.mxu0 %v2793
  %3685 = vmatpush.bf16.msra.mxu0 %v2790
  %3686 = vmatmul.bf16.gmra.mxu0 %v792
  %v3687 = vpop.f32.mrf.mxu0
  %v3688 = vadd.f32 %v3674, %v3687
  %v3689 = vpop.f32.mrf.mxu0
  %v3690 = vadd.f32 %v3676, %v3689
  %3691 = vdwg.mxu0
  %3692 = vmatpush.bf16.msra.mxu0 %v2835
  %3693 = vmatpush.bf16.msra.mxu0 %v2832
  %3694 = vmatpush.bf16.msra.mxu0 %v2829
  %3695 = vmatpush.bf16.msra.mxu0 %v2826
  %3696 = vmatpush.bf16.msra.mxu0 %v2823
  %3697 = vmatpush.bf16.msra.mxu0 %v2820
  %3698 = vmatpush.bf16.msra.mxu0 %v2817
  %3699 = vmatpush.bf16.msra.mxu0 %v2814
  %3700 = vmatmul.bf16.gmra.mxu0 %v793
  %v3701 = vpop.f32.mrf.mxu0
  %v3702 = vadd.f32 %v3688, %v3701
  %v3703 = vpop.f32.mrf.mxu0
  %v3704 = vadd.f32 %v3690, %v3703
  %3705 = vdwg.mxu0
  %3706 = vmatpush.bf16.msra.mxu0 %v2859
  %3707 = vmatpush.bf16.msra.mxu0 %v2856
  %3708 = vmatpush.bf16.msra.mxu0 %v2853
  %3709 = vmatpush.bf16.msra.mxu0 %v2850
  %3710 = vmatpush.bf16.msra.mxu0 %v2847
  %3711 = vmatpush.bf16.msra.mxu0 %v2844
  %3712 = vmatpush.bf16.msra.mxu0 %v2841
  %3713 = vmatpush.bf16.msra.mxu0 %v2838
  %3714 = vmatmul.bf16.gmra.mxu0 %v794
  %v3715 = vpop.f32.mrf.mxu0
  %v3716 = vadd.f32 %v3702, %v3715
  %v3717 = vpop.f32.mrf.mxu0
  %v3718 = vadd.f32 %v3704, %v3717
  %3719 = vdwg.mxu0
  %3720 = vmatpush.bf16.msra.mxu0 %v2883
  %3721 = vmatpush.bf16.msra.mxu0 %v2880
  %3722 = vmatpush.bf16.msra.mxu0 %v2877
  %3723 = vmatpush.bf16.msra.mxu0 %v2874
  %3724 = vmatpush.bf16.msra.mxu0 %v2871
  %3725 = vmatpush.bf16.msra.mxu0 %v2868
  %3726 = vmatpush.bf16.msra.mxu0 %v2865
  %3727 = vmatpush.bf16.msra.mxu0 %v2862
  %3728 = vmatmul.bf16.gmra.mxu0 %v795
  %v3729 = vpop.f32.mrf.mxu0
  %v3730 = vadd.f32 %v3716, %v3729
  %v3731 = vpop.f32.mrf.mxu0
  %v3732 = vadd.f32 %v3718, %v3731
  %3733 = vdwg.mxu0
  %3734 = vmatpush.bf16.msra.mxu0 %v2907
  %3735 = vmatpush.bf16.msra.mxu0 %v2904
  %3736 = vmatpush.bf16.msra.mxu0 %v2901
  %3737 = vmatpush.bf16.msra.mxu0 %v2898
  %3738 = vmatpush.bf16.msra.mxu0 %v2895
  %3739 = vmatpush.bf16.msra.mxu0 %v2892
  %3740 = vmatpush.bf16.msra.mxu0 %v2889
  %3741 = vmatpush.bf16.msra.mxu0 %v2886
  %3742 = vmatmul.bf16.gmra.mxu0 %v796
  %v3743 = vpop.f32.mrf.mxu0
  %v3744 = vadd.f32 %v3730, %v3743
  %v3745 = vpop.f32.mrf.mxu0
  %v3746 = vadd.f32 %v3732, %v3745
  %3747 = vdwg.mxu0
  %3748 = vmatpush.bf16.msra.mxu0 %v2931
  %3749 = vmatpush.bf16.msra.mxu0 %v2928
  %3750 = vmatpush.bf16.msra.mxu0 %v2925
  %3751 = vmatpush.bf16.msra.mxu0 %v2922
  %3752 = vmatpush.bf16.msra.mxu0 %v2919
  %3753 = vmatpush.bf16.msra.mxu0 %v2916
  %3754 = vmatpush.bf16.msra.mxu0 %v2913
  %3755 = vmatpush.bf16.msra.mxu0 %v2910
  %3756 = vmatmul.bf16.gmra.mxu0 %v797
  %v3757 = vpop.f32.mrf.mxu0
  %v3758 = vadd.f32 %v3744, %v3757
  %v3759 = vpop.f32.mrf.mxu0
  %v3760 = vadd.f32 %v3746, %v3759
  %3761 = vdwg.mxu0
  %3762 = vmatpush.bf16.msra.mxu0 %v2955
  %3763 = vmatpush.bf16.msra.mxu0 %v2952
  %3764 = vmatpush.bf16.msra.mxu0 %v2949
  %3765 = vmatpush.bf16.msra.mxu0 %v2946
  %3766 = vmatpush.bf16.msra.mxu0 %v2943
  %3767 = vmatpush.bf16.msra.mxu0 %v2940
  %3768 = vmatpush.bf16.msra.mxu0 %v2937
  %3769 = vmatpush.bf16.msra.mxu0 %v2934
  %3770 = vmatmul.bf16.gmra.mxu0 %v798
  %v3771 = vpop.f32.mrf.mxu0
  %v3772 = vadd.f32 %v3758, %v3771
  %v3773 = vpop.f32.mrf.mxu0
  %v3774 = vadd.f32 %v3760, %v3773
  %3775 = vdwg.mxu0
  %3776 = vmatpush.bf16.msra.mxu0 %v2979
  %3777 = vmatpush.bf16.msra.mxu0 %v2976
  %3778 = vmatpush.bf16.msra.mxu0 %v2973
  %3779 = vmatpush.bf16.msra.mxu0 %v2970
  %3780 = vmatpush.bf16.msra.mxu0 %v2967
  %3781 = vmatpush.bf16.msra.mxu0 %v2964
  %3782 = vmatpush.bf16.msra.mxu0 %v2961
  %3783 = vmatpush.bf16.msra.mxu0 %v2958
  %3784 = vmatmul.bf16.gmra.mxu0 %v799
  %v3785 = vpop.f32.mrf.mxu0
  %v3786 = vadd.f32 %v3772, %v3785
  %v3787 = vpop.f32.mrf.mxu0
  %v3788 = vadd.f32 %v3774, %v3787
  %3789 = vdwg.mxu0
  %3790 = vmatpush.bf16.msra.mxu0 %v3003
  %3791 = vmatpush.bf16.msra.mxu0 %v3000
  %3792 = vmatpush.bf16.msra.mxu0 %v2997
  %3793 = vmatpush.bf16.msra.mxu0 %v2994
  %3794 = vmatpush.bf16.msra.mxu0 %v2991
  %3795 = vmatpush.bf16.msra.mxu0 %v2988
  %3796 = vmatpush.bf16.msra.mxu0 %v2985
  %3797 = vmatpush.bf16.msra.mxu0 %v2982
  %3798 = vmatmul.bf16.gmra.mxu0 %v800
  %v3799 = vpop.f32.mrf.mxu0
  %v3800 = vadd.f32 %v3786, %v3799
  %v3801 = vpop.f32.mrf.mxu0
  %v3802 = vadd.f32 %v3788, %v3801
  %3803 = vdwg.mxu0
  %3804 = vmatpush.bf16.msra.mxu0 %v2524
  %3805 = vmatpush.bf16.msra.mxu0 %v2521
  %3806 = vmatpush.bf16.msra.mxu0 %v2518
  %3807 = vmatpush.bf16.msra.mxu0 %v2515
  %3808 = vmatpush.bf16.msra.mxu0 %v2512
  %3809 = vmatpush.bf16.msra.mxu0 %v2509
  %3810 = vmatpush.bf16.msra.mxu0 %v2506
  %3811 = vmatpush.bf16.msra.mxu0 %v2503
  %3812 = vmatmul.bf16.gmra.mxu0 %v780
  %v3813 = vpop.f32.mrf.mxu0
  %v3814 = vadd.f32 %v711, %v3813
  %v3815 = vpop.f32.mrf.mxu0
  %v3816 = vadd.f32 %v711, %v3815
  %3817 = vdwg.mxu0
  %3818 = vmatpush.bf16.msra.mxu0 %v2548
  %3819 = vmatpush.bf16.msra.mxu0 %v2545
  %3820 = vmatpush.bf16.msra.mxu0 %v2542
  %3821 = vmatpush.bf16.msra.mxu0 %v2539
  %3822 = vmatpush.bf16.msra.mxu0 %v2536
  %3823 = vmatpush.bf16.msra.mxu0 %v2533
  %3824 = vmatpush.bf16.msra.mxu0 %v2530
  %3825 = vmatpush.bf16.msra.mxu0 %v2527
  %3826 = vmatmul.bf16.gmra.mxu0 %v781
  %v3827 = vpop.f32.mrf.mxu0
  %v3828 = vadd.f32 %v3814, %v3827
  %v3829 = vpop.f32.mrf.mxu0
  %v3830 = vadd.f32 %v3816, %v3829
  %3831 = vdwg.mxu0
  %3832 = vmatpush.bf16.msra.mxu0 %v2572
  %3833 = vmatpush.bf16.msra.mxu0 %v2569
  %3834 = vmatpush.bf16.msra.mxu0 %v2566
  %3835 = vmatpush.bf16.msra.mxu0 %v2563
  %3836 = vmatpush.bf16.msra.mxu0 %v2560
  %3837 = vmatpush.bf16.msra.mxu0 %v2557
  %3838 = vmatpush.bf16.msra.mxu0 %v2554
  %3839 = vmatpush.bf16.msra.mxu0 %v2551
  %3840 = vmatmul.bf16.gmra.mxu0 %v782
  %v3841 = vpop.f32.mrf.mxu0
  %v3842 = vadd.f32 %v3828, %v3841
  %v3843 = vpop.f32.mrf.mxu0
  %v3844 = vadd.f32 %v3830, %v3843
  %3845 = vdwg.mxu0
  %3846 = vmatpush.bf16.msra.mxu0 %v2596
  %3847 = vmatpush.bf16.msra.mxu0 %v2593
  %3848 = vmatpush.bf16.msra.mxu0 %v2590
  %3849 = vmatpush.bf16.msra.mxu0 %v2587
  %3850 = vmatpush.bf16.msra.mxu0 %v2584
  %3851 = vmatpush.bf16.msra.mxu0 %v2581
  %3852 = vmatpush.bf16.msra.mxu0 %v2578
  %3853 = vmatpush.bf16.msra.mxu0 %v2575
  %3854 = vmatmul.bf16.gmra.mxu0 %v783
  %v3855 = vpop.f32.mrf.mxu0
  %v3856 = vadd.f32 %v3842, %v3855
  %v3857 = vpop.f32.mrf.mxu0
  %v3858 = vadd.f32 %v3844, %v3857
  %3859 = vdwg.mxu0
  %3860 = vmatpush.bf16.msra.mxu0 %v2620
  %3861 = vmatpush.bf16.msra.mxu0 %v2617
  %3862 = vmatpush.bf16.msra.mxu0 %v2614
  %3863 = vmatpush.bf16.msra.mxu0 %v2611
  %3864 = vmatpush.bf16.msra.mxu0 %v2608
  %3865 = vmatpush.bf16.msra.mxu0 %v2605
  %3866 = vmatpush.bf16.msra.mxu0 %v2602
  %3867 = vmatpush.bf16.msra.mxu0 %v2599
  %3868 = vmatmul.bf16.gmra.mxu0 %v784
  %v3869 = vpop.f32.mrf.mxu0
  %v3870 = vadd.f32 %v3856, %v3869
  %v3871 = vpop.f32.mrf.mxu0
  %v3872 = vadd.f32 %v3858, %v3871
  %3873 = vdwg.mxu0
  %3874 = vmatpush.bf16.msra.mxu0 %v2644
  %3875 = vmatpush.bf16.msra.mxu0 %v2641
  %3876 = vmatpush.bf16.msra.mxu0 %v2638
  %3877 = vmatpush.bf16.msra.mxu0 %v2635
  %3878 = vmatpush.bf16.msra.mxu0 %v2632
  %3879 = vmatpush.bf16.msra.mxu0 %v2629
  %3880 = vmatpush.bf16.msra.mxu0 %v2626
  %3881 = vmatpush.bf16.msra.mxu0 %v2623
  %3882 = vmatmul.bf16.gmra.mxu0 %v785
  %v3883 = vpop.f32.mrf.mxu0
  %v3884 = vadd.f32 %v3870, %v3883
  %v3885 = vpop.f32.mrf.mxu0
  %v3886 = vadd.f32 %v3872, %v3885
  %3887 = vdwg.mxu0
  %3888 = vmatpush.bf16.msra.mxu0 %v2668
  %3889 = vmatpush.bf16.msra.mxu0 %v2665
  %3890 = vmatpush.bf16.msra.mxu0 %v2662
  %3891 = vmatpush.bf16.msra.mxu0 %v2659
  %3892 = vmatpush.bf16.msra.mxu0 %v2656
  %3893 = vmatpush.bf16.msra.mxu0 %v2653
  %3894 = vmatpush.bf16.msra.mxu0 %v2650
  %3895 = vmatpush.bf16.msra.mxu0 %v2647
  %3896 = vmatmul.bf16.gmra.mxu0 %v786
  %v3897 = vpop.f32.mrf.mxu0
  %v3898 = vadd.f32 %v3884, %v3897
  %v3899 = vpop.f32.mrf.mxu0
  %v3900 = vadd.f32 %v3886, %v3899
  %3901 = vdwg.mxu0
  %3902 = vmatpush.bf16.msra.mxu0 %v2692
  %3903 = vmatpush.bf16.msra.mxu0 %v2689
  %3904 = vmatpush.bf16.msra.mxu0 %v2686
  %3905 = vmatpush.bf16.msra.mxu0 %v2683
  %3906 = vmatpush.bf16.msra.mxu0 %v2680
  %3907 = vmatpush.bf16.msra.mxu0 %v2677
  %3908 = vmatpush.bf16.msra.mxu0 %v2674
  %3909 = vmatpush.bf16.msra.mxu0 %v2671
  %3910 = vmatmul.bf16.gmra.mxu0 %v787
  %v3911 = vpop.f32.mrf.mxu0
  %v3912 = vadd.f32 %v3898, %v3911
  %v3913 = vpop.f32.mrf.mxu0
  %v3914 = vadd.f32 %v3900, %v3913
  %3915 = vdwg.mxu0
  %3916 = vmatpush.bf16.msra.mxu0 %v2716
  %3917 = vmatpush.bf16.msra.mxu0 %v2713
  %3918 = vmatpush.bf16.msra.mxu0 %v2710
  %3919 = vmatpush.bf16.msra.mxu0 %v2707
  %3920 = vmatpush.bf16.msra.mxu0 %v2704
  %3921 = vmatpush.bf16.msra.mxu0 %v2701
  %3922 = vmatpush.bf16.msra.mxu0 %v2698
  %3923 = vmatpush.bf16.msra.mxu0 %v2695
  %3924 = vmatmul.bf16.gmra.mxu0 %v788
  %v3925 = vpop.f32.mrf.mxu0
  %v3926 = vadd.f32 %v3912, %v3925
  %v3927 = vpop.f32.mrf.mxu0
  %v3928 = vadd.f32 %v3914, %v3927
  %3929 = vdwg.mxu0
  %3930 = vmatpush.bf16.msra.mxu0 %v2740
  %3931 = vmatpush.bf16.msra.mxu0 %v2737
  %3932 = vmatpush.bf16.msra.mxu0 %v2734
  %3933 = vmatpush.bf16.msra.mxu0 %v2731
  %3934 = vmatpush.bf16.msra.mxu0 %v2728
  %3935 = vmatpush.bf16.msra.mxu0 %v2725
  %3936 = vmatpush.bf16.msra.mxu0 %v2722
  %3937 = vmatpush.bf16.msra.mxu0 %v2719
  %3938 = vmatmul.bf16.gmra.mxu0 %v789
  %v3939 = vpop.f32.mrf.mxu0
  %v3940 = vadd.f32 %v3926, %v3939
  %v3941 = vpop.f32.mrf.mxu0
  %v3942 = vadd.f32 %v3928, %v3941
  %3943 = vdwg.mxu0
  %3944 = vmatpush.bf16.msra.mxu0 %v2764
  %3945 = vmatpush.bf16.msra.mxu0 %v2761
  %3946 = vmatpush.bf16.msra.mxu0 %v2758
  %3947 = vmatpush.bf16.msra.mxu0 %v2755
  %3948 = vmatpush.bf16.msra.mxu0 %v2752
  %3949 = vmatpush.bf16.msra.mxu0 %v2749
  %3950 = vmatpush.bf16.msra.mxu0 %v2746
  %3951 = vmatpush.bf16.msra.mxu0 %v2743
  %3952 = vmatmul.bf16.gmra.mxu0 %v790
  %v3953 = vpop.f32.mrf.mxu0
  %v3954 = vadd.f32 %v3940, %v3953
  %v3955 = vpop.f32.mrf.mxu0
  %v3956 = vadd.f32 %v3942, %v3955
  %3957 = vdwg.mxu0
  %3958 = vmatpush.bf16.msra.mxu0 %v2788
  %3959 = vmatpush.bf16.msra.mxu0 %v2785
  %3960 = vmatpush.bf16.msra.mxu0 %v2782
  %3961 = vmatpush.bf16.msra.mxu0 %v2779
  %3962 = vmatpush.bf16.msra.mxu0 %v2776
  %3963 = vmatpush.bf16.msra.mxu0 %v2773
  %3964 = vmatpush.bf16.msra.mxu0 %v2770
  %3965 = vmatpush.bf16.msra.mxu0 %v2767
  %3966 = vmatmul.bf16.gmra.mxu0 %v791
  %v3967 = vpop.f32.mrf.mxu0
  %v3968 = vadd.f32 %v3954, %v3967
  %v3969 = vpop.f32.mrf.mxu0
  %v3970 = vadd.f32 %v3956, %v3969
  %3971 = vdwg.mxu0
  %3972 = vmatpush.bf16.msra.mxu0 %v2812
  %3973 = vmatpush.bf16.msra.mxu0 %v2809
  %3974 = vmatpush.bf16.msra.mxu0 %v2806
  %3975 = vmatpush.bf16.msra.mxu0 %v2803
  %3976 = vmatpush.bf16.msra.mxu0 %v2800
  %3977 = vmatpush.bf16.msra.mxu0 %v2797
  %3978 = vmatpush.bf16.msra.mxu0 %v2794
  %3979 = vmatpush.bf16.msra.mxu0 %v2791
  %3980 = vmatmul.bf16.gmra.mxu0 %v792
  %v3981 = vpop.f32.mrf.mxu0
  %v3982 = vadd.f32 %v3968, %v3981
  %v3983 = vpop.f32.mrf.mxu0
  %v3984 = vadd.f32 %v3970, %v3983
  %3985 = vdwg.mxu0
  %3986 = vmatpush.bf16.msra.mxu0 %v2836
  %3987 = vmatpush.bf16.msra.mxu0 %v2833
  %3988 = vmatpush.bf16.msra.mxu0 %v2830
  %3989 = vmatpush.bf16.msra.mxu0 %v2827
  %3990 = vmatpush.bf16.msra.mxu0 %v2824
  %3991 = vmatpush.bf16.msra.mxu0 %v2821
  %3992 = vmatpush.bf16.msra.mxu0 %v2818
  %3993 = vmatpush.bf16.msra.mxu0 %v2815
  %3994 = vmatmul.bf16.gmra.mxu0 %v793
  %v3995 = vpop.f32.mrf.mxu0
  %v3996 = vadd.f32 %v3982, %v3995
  %v3997 = vpop.f32.mrf.mxu0
  %v3998 = vadd.f32 %v3984, %v3997
  %3999 = vdwg.mxu0
  %4000 = vmatpush.bf16.msra.mxu0 %v2860
  %4001 = vmatpush.bf16.msra.mxu0 %v2857
  %4002 = vmatpush.bf16.msra.mxu0 %v2854
  %4003 = vmatpush.bf16.msra.mxu0 %v2851
  %4004 = vmatpush.bf16.msra.mxu0 %v2848
  %4005 = vmatpush.bf16.msra.mxu0 %v2845
  %4006 = vmatpush.bf16.msra.mxu0 %v2842
  %4007 = vmatpush.bf16.msra.mxu0 %v2839
  %4008 = vmatmul.bf16.gmra.mxu0 %v794
  %v4009 = vpop.f32.mrf.mxu0
  %v4010 = vadd.f32 %v3996, %v4009
  %v4011 = vpop.f32.mrf.mxu0
  %v4012 = vadd.f32 %v3998, %v4011
  %4013 = vdwg.mxu0
  %4014 = vmatpush.bf16.msra.mxu0 %v2884
  %4015 = vmatpush.bf16.msra.mxu0 %v2881
  %4016 = vmatpush.bf16.msra.mxu0 %v2878
  %4017 = vmatpush.bf16.msra.mxu0 %v2875
  %4018 = vmatpush.bf16.msra.mxu0 %v2872
  %4019 = vmatpush.bf16.msra.mxu0 %v2869
  %4020 = vmatpush.bf16.msra.mxu0 %v2866
  %4021 = vmatpush.bf16.msra.mxu0 %v2863
  %4022 = vmatmul.bf16.gmra.mxu0 %v795
  %v4023 = vpop.f32.mrf.mxu0
  %v4024 = vadd.f32 %v4010, %v4023
  %v4025 = vpop.f32.mrf.mxu0
  %v4026 = vadd.f32 %v4012, %v4025
  %4027 = vdwg.mxu0
  %4028 = vmatpush.bf16.msra.mxu0 %v2908
  %4029 = vmatpush.bf16.msra.mxu0 %v2905
  %4030 = vmatpush.bf16.msra.mxu0 %v2902
  %4031 = vmatpush.bf16.msra.mxu0 %v2899
  %4032 = vmatpush.bf16.msra.mxu0 %v2896
  %4033 = vmatpush.bf16.msra.mxu0 %v2893
  %4034 = vmatpush.bf16.msra.mxu0 %v2890
  %4035 = vmatpush.bf16.msra.mxu0 %v2887
  %4036 = vmatmul.bf16.gmra.mxu0 %v796
  %v4037 = vpop.f32.mrf.mxu0
  %v4038 = vadd.f32 %v4024, %v4037
  %v4039 = vpop.f32.mrf.mxu0
  %v4040 = vadd.f32 %v4026, %v4039
  %4041 = vdwg.mxu0
  %4042 = vmatpush.bf16.msra.mxu0 %v2932
  %4043 = vmatpush.bf16.msra.mxu0 %v2929
  %4044 = vmatpush.bf16.msra.mxu0 %v2926
  %4045 = vmatpush.bf16.msra.mxu0 %v2923
  %4046 = vmatpush.bf16.msra.mxu0 %v2920
  %4047 = vmatpush.bf16.msra.mxu0 %v2917
  %4048 = vmatpush.bf16.msra.mxu0 %v2914
  %4049 = vmatpush.bf16.msra.mxu0 %v2911
  %4050 = vmatmul.bf16.gmra.mxu0 %v797
  %v4051 = vpop.f32.mrf.mxu0
  %v4052 = vadd.f32 %v4038, %v4051
  %v4053 = vpop.f32.mrf.mxu0
  %v4054 = vadd.f32 %v4040, %v4053
  %4055 = vdwg.mxu0
  %4056 = vmatpush.bf16.msra.mxu0 %v2956
  %4057 = vmatpush.bf16.msra.mxu0 %v2953
  %4058 = vmatpush.bf16.msra.mxu0 %v2950
  %4059 = vmatpush.bf16.msra.mxu0 %v2947
  %4060 = vmatpush.bf16.msra.mxu0 %v2944
  %4061 = vmatpush.bf16.msra.mxu0 %v2941
  %4062 = vmatpush.bf16.msra.mxu0 %v2938
  %4063 = vmatpush.bf16.msra.mxu0 %v2935
  %4064 = vmatmul.bf16.gmra.mxu0 %v798
  %v4065 = vpop.f32.mrf.mxu0
  %v4066 = vadd.f32 %v4052, %v4065
  %v4067 = vpop.f32.mrf.mxu0
  %v4068 = vadd.f32 %v4054, %v4067
  %4069 = vdwg.mxu0
  %4070 = vmatpush.bf16.msra.mxu0 %v2980
  %4071 = vmatpush.bf16.msra.mxu0 %v2977
  %4072 = vmatpush.bf16.msra.mxu0 %v2974
  %4073 = vmatpush.bf16.msra.mxu0 %v2971
  %4074 = vmatpush.bf16.msra.mxu0 %v2968
  %4075 = vmatpush.bf16.msra.mxu0 %v2965
  %4076 = vmatpush.bf16.msra.mxu0 %v2962
  %4077 = vmatpush.bf16.msra.mxu0 %v2959
  %4078 = vmatmul.bf16.gmra.mxu0 %v799
  %v4079 = vpop.f32.mrf.mxu0
  %v4080 = vadd.f32 %v4066, %v4079
  %v4081 = vpop.f32.mrf.mxu0
  %v4082 = vadd.f32 %v4068, %v4081
  %4083 = vdwg.mxu0
  %4084 = vmatpush.bf16.msra.mxu0 %v3004
  %4085 = vmatpush.bf16.msra.mxu0 %v3001
  %4086 = vmatpush.bf16.msra.mxu0 %v2998
  %4087 = vmatpush.bf16.msra.mxu0 %v2995
  %4088 = vmatpush.bf16.msra.mxu0 %v2992
  %4089 = vmatpush.bf16.msra.mxu0 %v2989
  %4090 = vmatpush.bf16.msra.mxu0 %v2986
  %4091 = vmatpush.bf16.msra.mxu0 %v2983
  %4092 = vmatmul.bf16.gmra.mxu0 %v800
  %v4093 = vpop.f32.mrf.mxu0
  %v4094 = vadd.f32 %v4080, %v4093
  %v4095 = vpop.f32.mrf.mxu0
  %v4096 = vadd.f32 %v4082, %v4095
  %4097 = vdwg.mxu0
  %4098 = vmatpush.bf16.msra.mxu0 %v2525
  %4099 = vmatpush.bf16.msra.mxu0 %v2522
  %4100 = vmatpush.bf16.msra.mxu0 %v2519
  %4101 = vmatpush.bf16.msra.mxu0 %v2516
  %4102 = vmatpush.bf16.msra.mxu0 %v2513
  %4103 = vmatpush.bf16.msra.mxu0 %v2510
  %4104 = vmatpush.bf16.msra.mxu0 %v2507
  %4105 = vmatpush.bf16.msra.mxu0 %v2504
  %4106 = vmatmul.bf16.gmra.mxu0 %v780
  %v4107 = vpop.f32.mrf.mxu0
  %v4108 = vadd.f32 %v712, %v4107
  %v4109 = vpop.f32.mrf.mxu0
  %v4110 = vadd.f32 %v712, %v4109
  %4111 = vdwg.mxu0
  %4112 = vmatpush.bf16.msra.mxu0 %v2549
  %4113 = vmatpush.bf16.msra.mxu0 %v2546
  %4114 = vmatpush.bf16.msra.mxu0 %v2543
  %4115 = vmatpush.bf16.msra.mxu0 %v2540
  %4116 = vmatpush.bf16.msra.mxu0 %v2537
  %4117 = vmatpush.bf16.msra.mxu0 %v2534
  %4118 = vmatpush.bf16.msra.mxu0 %v2531
  %4119 = vmatpush.bf16.msra.mxu0 %v2528
  %4120 = vmatmul.bf16.gmra.mxu0 %v781
  %v4121 = vpop.f32.mrf.mxu0
  %v4122 = vadd.f32 %v4108, %v4121
  %v4123 = vpop.f32.mrf.mxu0
  %v4124 = vadd.f32 %v4110, %v4123
  %4125 = vdwg.mxu0
  %4126 = vmatpush.bf16.msra.mxu0 %v2573
  %4127 = vmatpush.bf16.msra.mxu0 %v2570
  %4128 = vmatpush.bf16.msra.mxu0 %v2567
  %4129 = vmatpush.bf16.msra.mxu0 %v2564
  %4130 = vmatpush.bf16.msra.mxu0 %v2561
  %4131 = vmatpush.bf16.msra.mxu0 %v2558
  %4132 = vmatpush.bf16.msra.mxu0 %v2555
  %4133 = vmatpush.bf16.msra.mxu0 %v2552
  %4134 = vmatmul.bf16.gmra.mxu0 %v782
  %v4135 = vpop.f32.mrf.mxu0
  %v4136 = vadd.f32 %v4122, %v4135
  %v4137 = vpop.f32.mrf.mxu0
  %v4138 = vadd.f32 %v4124, %v4137
  %4139 = vdwg.mxu0
  %4140 = vmatpush.bf16.msra.mxu0 %v2597
  %4141 = vmatpush.bf16.msra.mxu0 %v2594
  %4142 = vmatpush.bf16.msra.mxu0 %v2591
  %4143 = vmatpush.bf16.msra.mxu0 %v2588
  %4144 = vmatpush.bf16.msra.mxu0 %v2585
  %4145 = vmatpush.bf16.msra.mxu0 %v2582
  %4146 = vmatpush.bf16.msra.mxu0 %v2579
  %4147 = vmatpush.bf16.msra.mxu0 %v2576
  %4148 = vmatmul.bf16.gmra.mxu0 %v783
  %v4149 = vpop.f32.mrf.mxu0
  %v4150 = vadd.f32 %v4136, %v4149
  %v4151 = vpop.f32.mrf.mxu0
  %v4152 = vadd.f32 %v4138, %v4151
  %4153 = vdwg.mxu0
  %4154 = vmatpush.bf16.msra.mxu0 %v2621
  %4155 = vmatpush.bf16.msra.mxu0 %v2618
  %4156 = vmatpush.bf16.msra.mxu0 %v2615
  %4157 = vmatpush.bf16.msra.mxu0 %v2612
  %4158 = vmatpush.bf16.msra.mxu0 %v2609
  %4159 = vmatpush.bf16.msra.mxu0 %v2606
  %4160 = vmatpush.bf16.msra.mxu0 %v2603
  %4161 = vmatpush.bf16.msra.mxu0 %v2600
  %4162 = vmatmul.bf16.gmra.mxu0 %v784
  %v4163 = vpop.f32.mrf.mxu0
  %v4164 = vadd.f32 %v4150, %v4163
  %v4165 = vpop.f32.mrf.mxu0
  %v4166 = vadd.f32 %v4152, %v4165
  %4167 = vdwg.mxu0
  %4168 = vmatpush.bf16.msra.mxu0 %v2645
  %4169 = vmatpush.bf16.msra.mxu0 %v2642
  %4170 = vmatpush.bf16.msra.mxu0 %v2639
  %4171 = vmatpush.bf16.msra.mxu0 %v2636
  %4172 = vmatpush.bf16.msra.mxu0 %v2633
  %4173 = vmatpush.bf16.msra.mxu0 %v2630
  %4174 = vmatpush.bf16.msra.mxu0 %v2627
  %4175 = vmatpush.bf16.msra.mxu0 %v2624
  %4176 = vmatmul.bf16.gmra.mxu0 %v785
  %v4177 = vpop.f32.mrf.mxu0
  %v4178 = vadd.f32 %v4164, %v4177
  %v4179 = vpop.f32.mrf.mxu0
  %v4180 = vadd.f32 %v4166, %v4179
  %4181 = vdwg.mxu0
  %4182 = vmatpush.bf16.msra.mxu0 %v2669
  %4183 = vmatpush.bf16.msra.mxu0 %v2666
  %4184 = vmatpush.bf16.msra.mxu0 %v2663
  %4185 = vmatpush.bf16.msra.mxu0 %v2660
  %4186 = vmatpush.bf16.msra.mxu0 %v2657
  %4187 = vmatpush.bf16.msra.mxu0 %v2654
  %4188 = vmatpush.bf16.msra.mxu0 %v2651
  %4189 = vmatpush.bf16.msra.mxu0 %v2648
  %4190 = vmatmul.bf16.gmra.mxu0 %v786
  %v4191 = vpop.f32.mrf.mxu0
  %v4192 = vadd.f32 %v4178, %v4191
  %v4193 = vpop.f32.mrf.mxu0
  %v4194 = vadd.f32 %v4180, %v4193
  %4195 = vdwg.mxu0
  %4196 = vmatpush.bf16.msra.mxu0 %v2693
  %4197 = vmatpush.bf16.msra.mxu0 %v2690
  %4198 = vmatpush.bf16.msra.mxu0 %v2687
  %4199 = vmatpush.bf16.msra.mxu0 %v2684
  %4200 = vmatpush.bf16.msra.mxu0 %v2681
  %4201 = vmatpush.bf16.msra.mxu0 %v2678
  %4202 = vmatpush.bf16.msra.mxu0 %v2675
  %4203 = vmatpush.bf16.msra.mxu0 %v2672
  %4204 = vmatmul.bf16.gmra.mxu0 %v787
  %v4205 = vpop.f32.mrf.mxu0
  %v4206 = vadd.f32 %v4192, %v4205
  %v4207 = vpop.f32.mrf.mxu0
  %v4208 = vadd.f32 %v4194, %v4207
  %4209 = vdwg.mxu0
  %4210 = vmatpush.bf16.msra.mxu0 %v2717
  %4211 = vmatpush.bf16.msra.mxu0 %v2714
  %4212 = vmatpush.bf16.msra.mxu0 %v2711
  %4213 = vmatpush.bf16.msra.mxu0 %v2708
  %4214 = vmatpush.bf16.msra.mxu0 %v2705
  %4215 = vmatpush.bf16.msra.mxu0 %v2702
  %4216 = vmatpush.bf16.msra.mxu0 %v2699
  %4217 = vmatpush.bf16.msra.mxu0 %v2696
  %4218 = vmatmul.bf16.gmra.mxu0 %v788
  %v4219 = vpop.f32.mrf.mxu0
  %v4220 = vadd.f32 %v4206, %v4219
  %v4221 = vpop.f32.mrf.mxu0
  %v4222 = vadd.f32 %v4208, %v4221
  %4223 = vdwg.mxu0
  %4224 = vmatpush.bf16.msra.mxu0 %v2741
  %4225 = vmatpush.bf16.msra.mxu0 %v2738
  %4226 = vmatpush.bf16.msra.mxu0 %v2735
  %4227 = vmatpush.bf16.msra.mxu0 %v2732
  %4228 = vmatpush.bf16.msra.mxu0 %v2729
  %4229 = vmatpush.bf16.msra.mxu0 %v2726
  %4230 = vmatpush.bf16.msra.mxu0 %v2723
  %4231 = vmatpush.bf16.msra.mxu0 %v2720
  %4232 = vmatmul.bf16.gmra.mxu0 %v789
  %v4233 = vpop.f32.mrf.mxu0
  %v4234 = vadd.f32 %v4220, %v4233
  %v4235 = vpop.f32.mrf.mxu0
  %v4236 = vadd.f32 %v4222, %v4235
  %4237 = vdwg.mxu0
  %4238 = vmatpush.bf16.msra.mxu0 %v2765
  %4239 = vmatpush.bf16.msra.mxu0 %v2762
  %4240 = vmatpush.bf16.msra.mxu0 %v2759
  %4241 = vmatpush.bf16.msra.mxu0 %v2756
  %4242 = vmatpush.bf16.msra.mxu0 %v2753
  %4243 = vmatpush.bf16.msra.mxu0 %v2750
  %4244 = vmatpush.bf16.msra.mxu0 %v2747
  %4245 = vmatpush.bf16.msra.mxu0 %v2744
  %4246 = vmatmul.bf16.gmra.mxu0 %v790
  %v4247 = vpop.f32.mrf.mxu0
  %v4248 = vadd.f32 %v4234, %v4247
  %v4249 = vpop.f32.mrf.mxu0
  %v4250 = vadd.f32 %v4236, %v4249
  %4251 = vdwg.mxu0
  %4252 = vmatpush.bf16.msra.mxu0 %v2789
  %4253 = vmatpush.bf16.msra.mxu0 %v2786
  %4254 = vmatpush.bf16.msra.mxu0 %v2783
  %4255 = vmatpush.bf16.msra.mxu0 %v2780
  %4256 = vmatpush.bf16.msra.mxu0 %v2777
  %4257 = vmatpush.bf16.msra.mxu0 %v2774
  %4258 = vmatpush.bf16.msra.mxu0 %v2771
  %4259 = vmatpush.bf16.msra.mxu0 %v2768
  %4260 = vmatmul.bf16.gmra.mxu0 %v791
  %v4261 = vpop.f32.mrf.mxu0
  %v4262 = vadd.f32 %v4248, %v4261
  %v4263 = vpop.f32.mrf.mxu0
  %v4264 = vadd.f32 %v4250, %v4263
  %4265 = vdwg.mxu0
  %4266 = vmatpush.bf16.msra.mxu0 %v2813
  %4267 = vmatpush.bf16.msra.mxu0 %v2810
  %4268 = vmatpush.bf16.msra.mxu0 %v2807
  %4269 = vmatpush.bf16.msra.mxu0 %v2804
  %4270 = vmatpush.bf16.msra.mxu0 %v2801
  %4271 = vmatpush.bf16.msra.mxu0 %v2798
  %4272 = vmatpush.bf16.msra.mxu0 %v2795
  %4273 = vmatpush.bf16.msra.mxu0 %v2792
  %4274 = vmatmul.bf16.gmra.mxu0 %v792
  %v4275 = vpop.f32.mrf.mxu0
  %v4276 = vadd.f32 %v4262, %v4275
  %v4277 = vpop.f32.mrf.mxu0
  %v4278 = vadd.f32 %v4264, %v4277
  %4279 = vdwg.mxu0
  %4280 = vmatpush.bf16.msra.mxu0 %v2837
  %4281 = vmatpush.bf16.msra.mxu0 %v2834
  %4282 = vmatpush.bf16.msra.mxu0 %v2831
  %4283 = vmatpush.bf16.msra.mxu0 %v2828
  %4284 = vmatpush.bf16.msra.mxu0 %v2825
  %4285 = vmatpush.bf16.msra.mxu0 %v2822
  %4286 = vmatpush.bf16.msra.mxu0 %v2819
  %4287 = vmatpush.bf16.msra.mxu0 %v2816
  %4288 = vmatmul.bf16.gmra.mxu0 %v793
  %v4289 = vpop.f32.mrf.mxu0
  %v4290 = vadd.f32 %v4276, %v4289
  %v4291 = vpop.f32.mrf.mxu0
  %v4292 = vadd.f32 %v4278, %v4291
  %4293 = vdwg.mxu0
  %4294 = vmatpush.bf16.msra.mxu0 %v2861
  %4295 = vmatpush.bf16.msra.mxu0 %v2858
  %4296 = vmatpush.bf16.msra.mxu0 %v2855
  %4297 = vmatpush.bf16.msra.mxu0 %v2852
  %4298 = vmatpush.bf16.msra.mxu0 %v2849
  %4299 = vmatpush.bf16.msra.mxu0 %v2846
  %4300 = vmatpush.bf16.msra.mxu0 %v2843
  %4301 = vmatpush.bf16.msra.mxu0 %v2840
  %4302 = vmatmul.bf16.gmra.mxu0 %v794
  %v4303 = vpop.f32.mrf.mxu0
  %v4304 = vadd.f32 %v4290, %v4303
  %v4305 = vpop.f32.mrf.mxu0
  %v4306 = vadd.f32 %v4292, %v4305
  %4307 = vdwg.mxu0
  %4308 = vmatpush.bf16.msra.mxu0 %v2885
  %4309 = vmatpush.bf16.msra.mxu0 %v2882
  %4310 = vmatpush.bf16.msra.mxu0 %v2879
  %4311 = vmatpush.bf16.msra.mxu0 %v2876
  %4312 = vmatpush.bf16.msra.mxu0 %v2873
  %4313 = vmatpush.bf16.msra.mxu0 %v2870
  %4314 = vmatpush.bf16.msra.mxu0 %v2867
  %4315 = vmatpush.bf16.msra.mxu0 %v2864
  %4316 = vmatmul.bf16.gmra.mxu0 %v795
  %v4317 = vpop.f32.mrf.mxu0
  %v4318 = vadd.f32 %v4304, %v4317
  %v4319 = vpop.f32.mrf.mxu0
  %v4320 = vadd.f32 %v4306, %v4319
  %4321 = vdwg.mxu0
  %4322 = vmatpush.bf16.msra.mxu0 %v2909
  %4323 = vmatpush.bf16.msra.mxu0 %v2906
  %4324 = vmatpush.bf16.msra.mxu0 %v2903
  %4325 = vmatpush.bf16.msra.mxu0 %v2900
  %4326 = vmatpush.bf16.msra.mxu0 %v2897
  %4327 = vmatpush.bf16.msra.mxu0 %v2894
  %4328 = vmatpush.bf16.msra.mxu0 %v2891
  %4329 = vmatpush.bf16.msra.mxu0 %v2888
  %4330 = vmatmul.bf16.gmra.mxu0 %v796
  %v4331 = vpop.f32.mrf.mxu0
  %v4332 = vadd.f32 %v4318, %v4331
  %v4333 = vpop.f32.mrf.mxu0
  %v4334 = vadd.f32 %v4320, %v4333
  %4335 = vdwg.mxu0
  %4336 = vmatpush.bf16.msra.mxu0 %v2933
  %4337 = vmatpush.bf16.msra.mxu0 %v2930
  %4338 = vmatpush.bf16.msra.mxu0 %v2927
  %4339 = vmatpush.bf16.msra.mxu0 %v2924
  %4340 = vmatpush.bf16.msra.mxu0 %v2921
  %4341 = vmatpush.bf16.msra.mxu0 %v2918
  %4342 = vmatpush.bf16.msra.mxu0 %v2915
  %4343 = vmatpush.bf16.msra.mxu0 %v2912
  %4344 = vmatmul.bf16.gmra.mxu0 %v797
  %v4345 = vpop.f32.mrf.mxu0
  %v4346 = vadd.f32 %v4332, %v4345
  %v4347 = vpop.f32.mrf.mxu0
  %v4348 = vadd.f32 %v4334, %v4347
  %4349 = vdwg.mxu0
  %4350 = vmatpush.bf16.msra.mxu0 %v2957
  %4351 = vmatpush.bf16.msra.mxu0 %v2954
  %4352 = vmatpush.bf16.msra.mxu0 %v2951
  %4353 = vmatpush.bf16.msra.mxu0 %v2948
  %4354 = vmatpush.bf16.msra.mxu0 %v2945
  %4355 = vmatpush.bf16.msra.mxu0 %v2942
  %4356 = vmatpush.bf16.msra.mxu0 %v2939
  %4357 = vmatpush.bf16.msra.mxu0 %v2936
  %4358 = vmatmul.bf16.gmra.mxu0 %v798
  %v4359 = vpop.f32.mrf.mxu0
  %v4360 = vadd.f32 %v4346, %v4359
  %v4361 = vpop.f32.mrf.mxu0
  %v4362 = vadd.f32 %v4348, %v4361
  %4363 = vdwg.mxu0
  %4364 = vmatpush.bf16.msra.mxu0 %v2981
  %4365 = vmatpush.bf16.msra.mxu0 %v2978
  %4366 = vmatpush.bf16.msra.mxu0 %v2975
  %4367 = vmatpush.bf16.msra.mxu0 %v2972
  %4368 = vmatpush.bf16.msra.mxu0 %v2969
  %4369 = vmatpush.bf16.msra.mxu0 %v2966
  %4370 = vmatpush.bf16.msra.mxu0 %v2963
  %4371 = vmatpush.bf16.msra.mxu0 %v2960
  %4372 = vmatmul.bf16.gmra.mxu0 %v799
  %v4373 = vpop.f32.mrf.mxu0
  %v4374 = vadd.f32 %v4360, %v4373
  %v4375 = vpop.f32.mrf.mxu0
  %v4376 = vadd.f32 %v4362, %v4375
  %4377 = vdwg.mxu0
  %4378 = vmatpush.bf16.msra.mxu0 %v3005
  %4379 = vmatpush.bf16.msra.mxu0 %v3002
  %4380 = vmatpush.bf16.msra.mxu0 %v2999
  %4381 = vmatpush.bf16.msra.mxu0 %v2996
  %4382 = vmatpush.bf16.msra.mxu0 %v2993
  %4383 = vmatpush.bf16.msra.mxu0 %v2990
  %4384 = vmatpush.bf16.msra.mxu0 %v2987
  %4385 = vmatpush.bf16.msra.mxu0 %v2984
  %4386 = vmatmul.bf16.gmra.mxu0 %v800
  %v4387 = vpop.f32.mrf.mxu0
  %v4388 = vadd.f32 %v4374, %v4387
  %v4389 = vpop.f32.mrf.mxu0
  %v4390 = vadd.f32 %v4376, %v4389
  %4391 = vdwg.mxu0
  %vm4392 = vcmp.gt.f32.partialorder %v3800, 0.0
  %vm4393 = vcmp.gt.f32.partialorder %v4094, 0.0
  %vm4394 = vcmp.gt.f32.partialorder %v4388, 0.0
  %vm4395 = vcmp.gt.f32.partialorder %v3802, 0.0
  %vm4396 = vcmp.gt.f32.partialorder %v4096, 0.0
  %vm4397 = vcmp.gt.f32.partialorder %v4390, 0.0
  %v4398 = vmul.f32 %v3800, 0.1
  %v4399 = vmul.f32 %v4094, 0.1
  %v4400 = vmul.f32 %v4388, 0.1
  %v4401 = vmul.f32 %v3802, 0.1
  %v4402 = vmul.f32 %v4096, 0.1
  %v4403 = vmul.f32 %v4390, 0.1
  %v4404 = vsel %vm4392, %v3800, %v4398
  %v4405 = vsel %vm4393, %v4094, %v4399
  %v4406 = vsel %vm4394, %v4388, %v4400
  %v4407 = vsel %vm4395, %v3802, %v4401
  %v4408 = vsel %vm4396, %v4096, %v4402
  %v4409 = vsel %vm4397, %v4390, %v4403
  %v4410 = vpack.c.bf16 %v4405, %v4404
  %v4411 = vpack.c.bf16 %v4406, %v4406
  %v4412 = vpack.c.bf16 %v4408, %v4407
  %v4413 = vpack.c.bf16 %v4409, %v4409
  %4414 = vst [vmem:[%s3] sm:$0xff] %v4410
  %4415 = vst [vmem:[%s3 + $0x8] sm:$0xf] %v4411
  %4416 = vst [vmem:[%s3 + $0xc] sm:$0xff] %v4412
  %4417 = vst [vmem:[%s3 + $0x14] sm:$0xf] %v4413
  // Predicated region
  $region14: #{forward.15} parent=0 // pred_check
    _
  $region15: #{forward.15} parent=0 // pred_check_branch
    %4419 = sbr.rel (0) target = $region17
  $region16: #{forward.15} parent=0 // pred_region
    _
  $region17: #{forward.15} parent=0 // pred_fallthru
    _
  // Predicated region
  $region18: #{forward.15} parent=0 // pred_check
    _
  $region19: #{forward.15} parent=0 // pred_check_branch
    %4421 = sbr.rel (0) target = $region21
  $region20: #{forward.15} parent=0 // pred_region
    _
  $region21: #{forward.15} parent=0 // pred_fallthru
    _

// kernel: forward.16
$region0: #{forward.16}
  #allocation0 [shape = 'u32[]', space=smem, size = 0x4, offset = 0x4, fixed_abs, tag = 'smem constant byte address 0x4 - core index']
  #allocation1 [shape = 'u32[72,128]{1,0:T(1,128)}', space=vmem, size = 0x9000, scoped, tag = 'internal scratch']
  %s0 = inlined_call_operand.vmem [shape: bf16[8,384], index: 0, kind: input, shape index: {}]
  %s1 = inlined_call_operand.vmem [shape: bf16[384,256], index: 1, kind: input, shape index: {}]
  %s2 = inlined_call_operand.vmem [shape: f32[1,256], index: 2, kind: input, shape index: {}]
  %s3 = inlined_call_operand.vmem [shape: f32[8,128], index: 3, kind: input, shape index: {}]
  %s4 = inlined_call_operand.vmem [shape: f32[8,256], index: 4, kind: output, shape index: {0}]
  %s5 = inlined_call_operand.vmem [shape: f32[8,128], index: 5, kind: output, shape index: {1}]
  %6 = xla_tuple %s4, %s5
  %s7 = sld [smem:[#allocation0]]
  $region34: #{forward.16} parent=0
    _
  %s9 = ssub.s32 1, %s7
  %s10 = scalar_select 0, %s9, %s7
  // Predicated region
  $region2: #{forward.16} parent=0 // pred_check
    _
  $region3: #{forward.16} parent=0 // pred_check_branch
    %12 = sbr.rel (0) target = $region5
  $region4: #{forward.16} parent=0 // pred_region
    _
  $region5: #{forward.16} parent=0 // pred_fallthru
    _
  // Predicated region
  $region6: #{forward.16} parent=0 // pred_check
    _
  $region7: #{forward.16} parent=0 // pred_check_branch
    %14 = sbr.rel (0) target = $region9
  $region8: #{forward.16} parent=0 // pred_region
    _
  $region9: #{forward.16} parent=0 // pred_fallthru
    _
  // Predicated region
  $region10: #{forward.16} parent=0 // pred_check
    _
  $region11: #{forward.16} parent=0 // pred_check_branch
    %16 = sbr.rel (0) target = $region13
  $region12: #{forward.16} parent=0 // pred_region
    _
  $region13: #{forward.16} parent=0 // pred_fallthru
    _
  // Predicated region
  $region14: #{forward.16} parent=0 // pred_check
    _
  $region15: #{forward.16} parent=0 // pred_check_branch
    %18 = sbr.rel (0) target = $region17
  $region16: #{forward.16} parent=0 // pred_region
    _
  $region17: #{forward.16} parent=0 // pred_fallthru
    _
  %v19 = vld [vmem:[%s0] sm:$0xff]
  %v20 = vld [vmem:[%s0 + $0x8] sm:$0xf]
  %v21 = vld [vmem:[%s1] sm:$0xff]
  %v22 = vld [vmem:[%s1 + $0x8] sm:$0xff]
  %v23 = vld [vmem:[%s1 + $0x10] sm:$0xff]
  %v24 = vld [vmem:[%s1 + $0x18] sm:$0xff]
  %v25 = vld [vmem:[%s1 + $0x20] sm:$0xff]
  %v26 = vld [vmem:[%s1 + $0x28] sm:$0xff]
  %v27 = vld [vmem:[%s1 + $0x30] sm:$0xff]
  %v28 = vld [vmem:[%s1 + $0x38] sm:$0xff]
  %v29 = vld [vmem:[%s1 + $0x40] sm:$0xff]
  %v30 = vld [vmem:[%s1 + $0x48] sm:$0xff]
  %v31 = vld [vmem:[%s1 + $0x50] sm:$0xff]
  %v32 = vld [vmem:[%s1 + $0x58] sm:$0xff]
  %v33 = vld [vmem:[%s1 + $0x60] sm:$0xff]
  %v34 = vld [vmem:[%s1 + $0x68] sm:$0xff]
  %v35 = vld [vmem:[%s1 + $0x70] sm:$0xff]
  %v36 = vld [vmem:[%s1 + $0x78] sm:$0xff]
  %v37 = vld [vmem:[%s1 + $0x80] sm:$0xff]
  %v38 = vld [vmem:[%s1 + $0x88] sm:$0xff]
  %v39 = vld [vmem:[%s1 + $0x90] sm:$0xff]
  %v40 = vld [vmem:[%s1 + $0x98] sm:$0xff]
  %v41 = vld [vmem:[%s1 + $0xa0] sm:$0xff]
  %v42 = vld [vmem:[%s1 + $0xa8] sm:$0xff]
  %v43 = vld [vmem:[%s1 + $0xb0] sm:$0xff]
  %v44 = vld [vmem:[%s1 + $0xb8] sm:$0xff]
  %v45 = vld [vmem:[%s1 + $0xc0] sm:$0xff]
  %v46 = vld [vmem:[%s1 + $0xc8] sm:$0xff]
  %v47 = vld [vmem:[%s1 + $0xd0] sm:$0xff]
  %v48 = vld [vmem:[%s1 + $0xd8] sm:$0xff]
  %v49 = vld [vmem:[%s1 + $0xe0] sm:$0xff]
  %v50 = vld [vmem:[%s1 + $0xe8] sm:$0xff]
  %v51 = vld [vmem:[%s1 + $0xf0] sm:$0xff]
  %v52 = vld [vmem:[%s1 + $0xf8] sm:$0xff]
  %v53 = vld [vmem:[%s1 + $0x100] sm:$0xff]
  %v54 = vld [vmem:[%s1 + $0x108] sm:$0xff]
  %v55 = vld [vmem:[%s1 + $0x110] sm:$0xff]
  %v56 = vld [vmem:[%s1 + $0x118] sm:$0xff]
  %v57 = vld [vmem:[%s1 + $0x120] sm:$0xff]
  %v58 = vld [vmem:[%s1 + $0x128] sm:$0xff]
  %v59 = vld [vmem:[%s1 + $0x130] sm:$0xff]
  %v60 = vld [vmem:[%s1 + $0x138] sm:$0xff]
  %v61 = vld [vmem:[%s1 + $0x140] sm:$0xff]
  %v62 = vld [vmem:[%s1 + $0x148] sm:$0xff]
  %v63 = vld [vmem:[%s1 + $0x150] sm:$0xff]
  %v64 = vld [vmem:[%s1 + $0x158] sm:$0xff]
  %v65 = vld [vmem:[%s1 + $0x160] sm:$0xff]
  %v66 = vld [vmem:[%s1 + $0x168] sm:$0xff]
  %v67 = vld [vmem:[%s1 + $0x170] sm:$0xff]
  %v68 = vld [vmem:[%s1 + $0x178] sm:$0xff]
  %v69 = vld [vmem:[%s2] sm:$0x3]
  %v71 = vperm.slane %v69, 0
  %v72 = vperm.slane %v69, 1
  %v77 = vunpack.c.l.b16 %v19
  %v78 = vunpack.c.h.b16 %v19
  %v79 = vunpack.c.l.b16 %v20
  %v80 = vpack.c.b16 %v77, %v77
  %v81 = vpack.c.b16 %v78, %v78
  %v82 = vpack.c.b16 %v79, %v79
  %v134 = vunpack.c.l.b16 %v21
  %v135 = vunpack.c.h.b16 %v21
  %v136 = vunpack.c.l.b16 %v22
  %v137 = vunpack.c.h.b16 %v22
  %v138 = vunpack.c.l.b16 %v23
  %v139 = vunpack.c.h.b16 %v23
  %v140 = vunpack.c.l.b16 %v24
  %v141 = vunpack.c.h.b16 %v24
  %v142 = vunpack.c.l.b16 %v25
  %v143 = vunpack.c.h.b16 %v25
  %v144 = vunpack.c.l.b16 %v26
  %v145 = vunpack.c.h.b16 %v26
  %v146 = vunpack.c.l.b16 %v27
  %v147 = vunpack.c.h.b16 %v27
  %v148 = vunpack.c.l.b16 %v28
  %v149 = vunpack.c.h.b16 %v28
  %v150 = vunpack.c.l.b16 %v29
  %v151 = vunpack.c.h.b16 %v29
  %v152 = vunpack.c.l.b16 %v30
  %v153 = vunpack.c.h.b16 %v30
  %v154 = vunpack.c.l.b16 %v31
  %v155 = vunpack.c.h.b16 %v31
  %v156 = vunpack.c.l.b16 %v32
  %v157 = vunpack.c.h.b16 %v32
  %v158 = vunpack.c.l.b16 %v33
  %v159 = vunpack.c.h.b16 %v33
  %v160 = vunpack.c.l.b16 %v34
  %v161 = vunpack.c.h.b16 %v34
  %v162 = vunpack.c.l.b16 %v35
  %v163 = vunpack.c.h.b16 %v35
  %v164 = vunpack.c.l.b16 %v36
  %v165 = vunpack.c.h.b16 %v36
  %v166 = vunpack.c.l.b16 %v37
  %v167 = vunpack.c.h.b16 %v37
  %v168 = vunpack.c.l.b16 %v38
  %v169 = vunpack.c.h.b16 %v38
  %v170 = vunpack.c.l.b16 %v39
  %v171 = vunpack.c.h.b16 %v39
  %v172 = vunpack.c.l.b16 %v40
  %v173 = vunpack.c.h.b16 %v40
  %v174 = vunpack.c.l.b16 %v41
  %v175 = vunpack.c.h.b16 %v41
  %v176 = vunpack.c.l.b16 %v42
  %v177 = vunpack.c.h.b16 %v42
  %v178 = vunpack.c.l.b16 %v43
  %v179 = vunpack.c.h.b16 %v43
  %v180 = vunpack.c.l.b16 %v44
  %v181 = vunpack.c.h.b16 %v44
  %v182 = vunpack.c.l.b16 %v45
  %v183 = vunpack.c.h.b16 %v45
  %v184 = vunpack.c.l.b16 %v46
  %v185 = vunpack.c.h.b16 %v46
  %v186 = vunpack.c.l.b16 %v47
  %v187 = vunpack.c.h.b16 %v47
  %v188 = vunpack.c.l.b16 %v48
  %v189 = vunpack.c.h.b16 %v48
  %v190 = vunpack.c.l.b16 %v49
  %v191 = vunpack.c.h.b16 %v49
  %v192 = vunpack.c.l.b16 %v50
  %v193 = vunpack.c.h.b16 %v50
  %v194 = vunpack.c.l.b16 %v51
  %v195 = vunpack.c.h.b16 %v51
  %v196 = vunpack.c.l.b16 %v52
  %v197 = vunpack.c.h.b16 %v52
  %v198 = vunpack.c.l.b16 %v53
  %v199 = vunpack.c.h.b16 %v53
  %v200 = vunpack.c.l.b16 %v54
  %v201 = vunpack.c.h.b16 %v54
  %v202 = vunpack.c.l.b16 %v55
  %v203 = vunpack.c.h.b16 %v55
  %v204 = vunpack.c.l.b16 %v56
  %v205 = vunpack.c.h.b16 %v56
  %v206 = vunpack.c.l.b16 %v57
  %v207 = vunpack.c.h.b16 %v57
  %v208 = vunpack.c.l.b16 %v58
  %v209 = vunpack.c.h.b16 %v58
  %v210 = vunpack.c.l.b16 %v59
  %v211 = vunpack.c.h.b16 %v59
  %v212 = vunpack.c.l.b16 %v60
  %v213 = vunpack.c.h.b16 %v60
  %v214 = vunpack.c.l.b16 %v61
  %v215 = vunpack.c.h.b16 %v61
  %v216 = vunpack.c.l.b16 %v62
  %v217 = vunpack.c.h.b16 %v62
  %v218 = vunpack.c.l.b16 %v63
  %v219 = vunpack.c.h.b16 %v63
  %v220 = vunpack.c.l.b16 %v64
  %v221 = vunpack.c.h.b16 %v64
  %v222 = vunpack.c.l.b16 %v65
  %v223 = vunpack.c.h.b16 %v65
  %v224 = vunpack.c.l.b16 %v66
  %v225 = vunpack.c.h.b16 %v66
  %v226 = vunpack.c.l.b16 %v67
  %v227 = vunpack.c.h.b16 %v67
  %v228 = vunpack.c.l.b16 %v68
  %v229 = vunpack.c.h.b16 %v68
  %v230 = vpack.c.b16 %v136, %v134
  %v231 = vpack.c.b16 %v137, %v135
  %v232 = vpack.c.b16 %v140, %v138
  %v233 = vpack.c.b16 %v141, %v139
  %v234 = vpack.c.b16 %v144, %v142
  %v235 = vpack.c.b16 %v145, %v143
  %v236 = vpack.c.b16 %v148, %v146
  %v237 = vpack.c.b16 %v149, %v147
  %v238 = vpack.c.b16 %v152, %v150
  %v239 = vpack.c.b16 %v153, %v151
  %v240 = vpack.c.b16 %v156, %v154
  %v241 = vpack.c.b16 %v157, %v155
  %v242 = vpack.c.b16 %v160, %v158
  %v243 = vpack.c.b16 %v161, %v159
  %v244 = vpack.c.b16 %v164, %v162
  %v245 = vpack.c.b16 %v165, %v163
  %v246 = vpack.c.b16 %v168, %v166
  %v247 = vpack.c.b16 %v169, %v167
  %v248 = vpack.c.b16 %v172, %v170
  %v249 = vpack.c.b16 %v173, %v171
  %v250 = vpack.c.b16 %v176, %v174
  %v251 = vpack.c.b16 %v177, %v175
  %v252 = vpack.c.b16 %v180, %v178
  %v253 = vpack.c.b16 %v181, %v179
  %v254 = vpack.c.b16 %v184, %v182
  %v255 = vpack.c.b16 %v185, %v183
  %v256 = vpack.c.b16 %v188, %v186
  %v257 = vpack.c.b16 %v189, %v187
  %v258 = vpack.c.b16 %v192, %v190
  %v259 = vpack.c.b16 %v193, %v191
  %v260 = vpack.c.b16 %v196, %v194
  %v261 = vpack.c.b16 %v197, %v195
  %v262 = vpack.c.b16 %v200, %v198
  %v263 = vpack.c.b16 %v201, %v199
  %v264 = vpack.c.b16 %v204, %v202
  %v265 = vpack.c.b16 %v205, %v203
  %v266 = vpack.c.b16 %v208, %v206
  %v267 = vpack.c.b16 %v209, %v207
  %v268 = vpack.c.b16 %v212, %v210
  %v269 = vpack.c.b16 %v213, %v211
  %v270 = vpack.c.b16 %v216, %v214
  %v271 = vpack.c.b16 %v217, %v215
  %v272 = vpack.c.b16 %v220, %v218
  %v273 = vpack.c.b16 %v221, %v219
  %v274 = vpack.c.b16 %v224, %v222
  %v275 = vpack.c.b16 %v225, %v223
  %v276 = vpack.c.b16 %v228, %v226
  %v277 = vpack.c.b16 %v229, %v227
  %326 = vmatpush.bf16.msra.mxu0 %v244
  %327 = vmatpush.bf16.msra.mxu0 %v242
  %328 = vmatpush.bf16.msra.mxu0 %v240
  %329 = vmatpush.bf16.msra.mxu0 %v238
  %330 = vmatpush.bf16.msra.mxu0 %v236
  %331 = vmatpush.bf16.msra.mxu0 %v234
  %332 = vmatpush.bf16.msra.mxu0 %v232
  %333 = vmatpush.bf16.msra.mxu0 %v230
  %334 = vmatmul.bf16.gmra.mxu0 %v80
  %v335 = vpop.f32.mrf.mxu0
  %v336 = vadd.f32 %v71, %v335
  %v337 = vpop.f32.mrf.mxu0
  %338 = vdwg.mxu0
  %339 = vmatpush.bf16.msra.mxu0 %v260
  %340 = vmatpush.bf16.msra.mxu0 %v258
  %341 = vmatpush.bf16.msra.mxu0 %v256
  %342 = vmatpush.bf16.msra.mxu0 %v254
  %343 = vmatpush.bf16.msra.mxu0 %v252
  %344 = vmatpush.bf16.msra.mxu0 %v250
  %345 = vmatpush.bf16.msra.mxu0 %v248
  %346 = vmatpush.bf16.msra.mxu0 %v246
  %347 = vmatmul.bf16.gmra.mxu0 %v81
  %v348 = vpop.f32.mrf.mxu0
  %v349 = vadd.f32 %v336, %v348
  %v350 = vpop.f32.mrf.mxu0
  %351 = vdwg.mxu0
  %352 = vmatpush.bf16.msra.mxu0 %v276
  %353 = vmatpush.bf16.msra.mxu0 %v274
  %354 = vmatpush.bf16.msra.mxu0 %v272
  %355 = vmatpush.bf16.msra.mxu0 %v270
  %356 = vmatpush.bf16.msra.mxu0 %v268
  %357 = vmatpush.bf16.msra.mxu0 %v266
  %358 = vmatpush.bf16.msra.mxu0 %v264
  %359 = vmatpush.bf16.msra.mxu0 %v262
  %360 = vmatmul.bf16.gmra.mxu0 %v82
  %v361 = vpop.f32.mrf.mxu0
  %v362 = vadd.f32 %v349, %v361
  %v363 = vpop.f32.mrf.mxu0
  %364 = vdwg.mxu0
  %365 = vmatpush.bf16.msra.mxu0 %v245
  %366 = vmatpush.bf16.msra.mxu0 %v243
  %367 = vmatpush.bf16.msra.mxu0 %v241
  %368 = vmatpush.bf16.msra.mxu0 %v239
  %369 = vmatpush.bf16.msra.mxu0 %v237
  %370 = vmatpush.bf16.msra.mxu0 %v235
  %371 = vmatpush.bf16.msra.mxu0 %v233
  %372 = vmatpush.bf16.msra.mxu0 %v231
  %373 = vmatmul.bf16.gmra.mxu0 %v80
  %v374 = vpop.f32.mrf.mxu0
  %v375 = vadd.f32 %v72, %v374
  %v376 = vpop.f32.mrf.mxu0
  %377 = vdwg.mxu0
  %378 = vmatpush.bf16.msra.mxu0 %v261
  %379 = vmatpush.bf16.msra.mxu0 %v259
  %380 = vmatpush.bf16.msra.mxu0 %v257
  %381 = vmatpush.bf16.msra.mxu0 %v255
  %382 = vmatpush.bf16.msra.mxu0 %v253
  %383 = vmatpush.bf16.msra.mxu0 %v251
  %384 = vmatpush.bf16.msra.mxu0 %v249
  %385 = vmatpush.bf16.msra.mxu0 %v247
  %386 = vmatmul.bf16.gmra.mxu0 %v81
  %v387 = vpop.f32.mrf.mxu0
  %v388 = vadd.f32 %v375, %v387
  %v389 = vpop.f32.mrf.mxu0
  %390 = vdwg.mxu0
  %391 = vmatpush.bf16.msra.mxu0 %v277
  %392 = vmatpush.bf16.msra.mxu0 %v275
  %393 = vmatpush.bf16.msra.mxu0 %v273
  %394 = vmatpush.bf16.msra.mxu0 %v271
  %395 = vmatpush.bf16.msra.mxu0 %v269
  %396 = vmatpush.bf16.msra.mxu0 %v267
  %397 = vmatpush.bf16.msra.mxu0 %v265
  %398 = vmatpush.bf16.msra.mxu0 %v263
  %399 = vmatmul.bf16.gmra.mxu0 %v82
  %v400 = vpop.f32.mrf.mxu0
  %v401 = vadd.f32 %v388, %v400
  %v402 = vpop.f32.mrf.mxu0
  %403 = vdwg.mxu0
  %v404 = vld [vmem:[%s3] sm:$0xff]
  %v405 = vmul.f32 %v401, 0.5
  %v406 = vmul.f32 %v405, 1.442695
  %v407 = vpow.pop %v406
  %v408 = vmul.f32 %v404, %v407
  %v409 = vadd.f32 %v362, %v408
  %410 = vst [vmem:[%s5] sm:$0xff] %v409
  %411 = vst [vmem:[%s4] sm:$0xff] %v362
  %412 = vst [vmem:[%s4 + $0x8] sm:$0xff] %v401
  // Predicated region
  $region18: #{forward.16} parent=0 // pred_check
    _
  $region19: #{forward.16} parent=0 // pred_check_branch
    %414 = sbr.rel (0) target = $region21
  $region20: #{forward.16} parent=0 // pred_region
    _
  $region21: #{forward.16} parent=0 // pred_fallthru
    _
  // Predicated region
  $region22: #{forward.16} parent=0 // pred_check
    _
  $region23: #{forward.16} parent=0 // pred_check_branch
    %416 = sbr.rel (0) target = $region25
  $region24: #{forward.16} parent=0 // pred_region
    _
  $region25: #{forward.16} parent=0 // pred_fallthru
    _
  // Predicated region
  $region26: #{forward.16} parent=0 // pred_check
    _
  $region27: #{forward.16} parent=0 // pred_check_branch
    %418 = sbr.rel (0) target = $region29
  $region28: #{forward.16} parent=0 // pred_region
    _
  $region29: #{forward.16} parent=0 // pred_fallthru
    _
  // Predicated region
  $region30: #{forward.16} parent=0 // pred_check
    _
  $region31: #{forward.16} parent=0 // pred_check_branch
    %420 = sbr.rel (0) target = $region33
  $region32: #{forward.16} parent=0 // pred_region
    _
  $region33: #{forward.16} parent=0 // pred_fallthru
    _

// kernel: forward.17
$region0: #{forward.17}
  #allocation0 [shape = 'u32[]', space=smem, size = 0x4, offset = 0x4, fixed_abs, tag = 'smem constant byte address 0x4 - core index']
  #allocation1 [shape = 'u32[72,128]{1,0:T(1,128)}', space=vmem, size = 0x9000, scoped, tag = 'internal scratch']
  %s0 = inlined_call_operand.vmem [shape: bf16[16,128], index: 0, kind: input, shape index: {}]
  %s1 = inlined_call_operand.vmem [shape: bf16[128,2688], index: 1, kind: input, shape index: {}]
  %s2 = inlined_call_operand.vmem [shape: f32[1,2688], index: 2, kind: input, shape index: {}]
  %s3 = inlined_call_operand.vmem [shape: bf16[16,2688], index: 3, kind: output, shape index: {}]
  %s4 = sld [smem:[#allocation0]]
  $region22: #{forward.17} parent=0
    _
  %s6 = ssub.s32 1, %s4
  %s7 = scalar_select 0, %s6, %s4
  // Predicated region
  $region2: #{forward.17} parent=0 // pred_check
    _
  $region3: #{forward.17} parent=0 // pred_check_branch
    %9 = sbr.rel (0) target = $region5
  $region4: #{forward.17} parent=0 // pred_region
    _
  $region5: #{forward.17} parent=0 // pred_fallthru
    _
  // Predicated region
  $region6: #{forward.17} parent=0 // pred_check
    _
  $region7: #{forward.17} parent=0 // pred_check_branch
    %11 = sbr.rel (0) target = $region9
  $region8: #{forward.17} parent=0 // pred_region
    _
  $region9: #{forward.17} parent=0 // pred_fallthru
    _
  // Predicated region
  $region10: #{forward.17} parent=0 // pred_check
    _
  $region11: #{forward.17} parent=0 // pred_check_branch
    %13 = sbr.rel (0) target = $region13
  $region12: #{forward.17} parent=0 // pred_region
    _
  $region13: #{forward.17} parent=0 // pred_fallthru
    _
  %v14 = vld [vmem:[%s0] sm:$0xf]
  %v15 = vld [vmem:[%s0 + $0x4] sm:$0xf]
  %v16 = vld [vmem:[%s1] sm:$0xff]
  %v17 = vld [vmem:[%s1 + $0x8] sm:$0xff]
  %v18 = vld [vmem:[%s1 + $0x10] sm:$0xff]
  %v19 = vld [vmem:[%s1 + $0x18] sm:$0xff]
  %v20 = vld [vmem:[%s1 + $0x20] sm:$0xff]
  %v21 = vld [vmem:[%s1 + $0x28] sm:$0xff]
  %v22 = vld [vmem:[%s1 + $0x30] sm:$0xff]
  %v23 = vld [vmem:[%s1 + $0x38] sm:$0xff]
  %v24 = vld [vmem:[%s1 + $0x40] sm:$0xff]
  %v25 = vld [vmem:[%s1 + $0x48] sm:$0xff]
  %v26 = vld [vmem:[%s1 + $0x50] sm:$0xf]
  %v27 = vld [vmem:[%s1 + $0x54] sm:$0xff]
  %v28 = vld [vmem:[%s1 + $0x5c] sm:$0xff]
  %v29 = vld [vmem:[%s1 + $0x64] sm:$0xff]
  %v30 = vld [vmem:[%s1 + $0x6c] sm:$0xff]
  %v31 = vld [vmem:[%s1 + $0x74] sm:$0xff]
  %v32 = vld [vmem:[%s1 + $0x7c] sm:$0xff]
  %v33 = vld [vmem:[%s1 + $0x84] sm:$0xff]
  %v34 = vld [vmem:[%s1 + $0x8c] sm:$0xff]
  %v35 = vld [vmem:[%s1 + $0x94] sm:$0xff]
  %v36 = vld [vmem:[%s1 + $0x9c] sm:$0xff]
  %v37 = vld [vmem:[%s1 + $0xa4] sm:$0xf]
  %v38 = vld [vmem:[%s1 + $0xa8] sm:$0xff]
  %v39 = vld [vmem:[%s1 + $0xb0] sm:$0xff]
  %v40 = vld [vmem:[%s1 + $0xb8] sm:$0xff]
  %v41 = vld [vmem:[%s1 + $0xc0] sm:$0xff]
  %v42 = vld [vmem:[%s1 + $0xc8] sm:$0xff]
  %v43 = vld [vmem:[%s1 + $0xd0] sm:$0xff]
  %v44 = vld [vmem:[%s1 + $0xd8] sm:$0xff]
  %v45 = vld [vmem:[%s1 + $0xe0] sm:$0xff]
  %v46 = vld [vmem:[%s1 + $0xe8] sm:$0xff]
  %v47 = vld [vmem:[%s1 + $0xf0] sm:$0xff]
  %v48 = vld [vmem:[%s1 + $0xf8] sm:$0xf]
  %v49 = vld [vmem:[%s1 + $0xfc] sm:$0xff]
  %v50 = vld [vmem:[%s1 + $0x104] sm:$0xff]
  %v51 = vld [vmem:[%s1 + $0x10c] sm:$0xff]
  %v52 = vld [vmem:[%s1 + $0x114] sm:$0xff]
  %v53 = vld [vmem:[%s1 + $0x11c] sm:$0xff]
  %v54 = vld [vmem:[%s1 + $0x124] sm:$0xff]
  %v55 = vld [vmem:[%s1 + $0x12c] sm:$0xff]
  %v56 = vld [vmem:[%s1 + $0x134] sm:$0xff]
  %v57 = vld [vmem:[%s1 + $0x13c] sm:$0xff]
  %v58 = vld [vmem:[%s1 + $0x144] sm:$0xff]
  %v59 = vld [vmem:[%s1 + $0x14c] sm:$0xf]
  %v60 = vld [vmem:[%s1 + $0x150] sm:$0xff]
  %v61 = vld [vmem:[%s1 + $0x158] sm:$0xff]
  %v62 = vld [vmem:[%s1 + $0x160] sm:$0xff]
  %v63 = vld [vmem:[%s1 + $0x168] sm:$0xff]
  %v64 = vld [vmem:[%s1 + $0x170] sm:$0xff]
  %v65 = vld [vmem:[%s1 + $0x178] sm:$0xff]
  %v66 = vld [vmem:[%s1 + $0x180] sm:$0xff]
  %v67 = vld [vmem:[%s1 + $0x188] sm:$0xff]
  %v68 = vld [vmem:[%s1 + $0x190] sm:$0xff]
  %v69 = vld [vmem:[%s1 + $0x198] sm:$0xff]
  %v70 = vld [vmem:[%s1 + $0x1a0] sm:$0xf]
  %v71 = vld [vmem:[%s1 + $0x1a4] sm:$0xff]
  %v72 = vld [vmem:[%s1 + $0x1ac] sm:$0xff]
  %v73 = vld [vmem:[%s1 + $0x1b4] sm:$0xff]
  %v74 = vld [vmem:[%s1 + $0x1bc] sm:$0xff]
  %v75 = vld [vmem:[%s1 + $0x1c4] sm:$0xff]
  %v76 = vld [vmem:[%s1 + $0x1cc] sm:$0xff]
  %v77 = vld [vmem:[%s1 + $0x1d4] sm:$0xff]
  %v78 = vld [vmem:[%s1 + $0x1dc] sm:$0xff]
  %v79 = vld [vmem:[%s1 + $0x1e4] sm:$0xff]
  %v80 = vld [vmem:[%s1 + $0x1ec] sm:$0xff]
  %v81 = vld [vmem:[%s1 + $0x1f4] sm:$0xf]
  %v82 = vld [vmem:[%s1 + $0x1f8] sm:$0xff]
  %v83 = vld [vmem:[%s1 + $0x200] sm:$0xff]
  %v84 = vld [vmem:[%s1 + $0x208] sm:$0xff]
  %v85 = vld [vmem:[%s1 + $0x210] sm:$0xff]
  %v86 = vld [vmem:[%s1 + $0x218] sm:$0xff]
  %v87 = vld [vmem:[%s1 + $0x220] sm:$0xff]
  %v88 = vld [vmem:[%s1 + $0x228] sm:$0xff]
  %v89 = vld [vmem:[%s1 + $0x230] sm:$0xff]
  %v90 = vld [vmem:[%s1 + $0x238] sm:$0xff]
  %v91 = vld [vmem:[%s1 + $0x240] sm:$0xff]
  %v92 = vld [vmem:[%s1 + $0x248] sm:$0xf]
  %v93 = vld [vmem:[%s1 + $0x24c] sm:$0xff]
  %v94 = vld [vmem:[%s1 + $0x254] sm:$0xff]
  %v95 = vld [vmem:[%s1 + $0x25c] sm:$0xff]
  %v96 = vld [vmem:[%s1 + $0x264] sm:$0xff]
  %v97 = vld [vmem:[%s1 + $0x26c] sm:$0xff]
  %v98 = vld [vmem:[%s1 + $0x274] sm:$0xff]
  %v99 = vld [vmem:[%s1 + $0x27c] sm:$0xff]
  %v100 = vld [vmem:[%s1 + $0x284] sm:$0xff]
  %v101 = vld [vmem:[%s1 + $0x28c] sm:$0xff]
  %v102 = vld [vmem:[%s1 + $0x294] sm:$0xff]
  %v103 = vld [vmem:[%s1 + $0x29c] sm:$0xf]
  %v104 = vld [vmem:[%s1 + $0x2a0] sm:$0xff]
  %v105 = vld [vmem:[%s1 + $0x2a8] sm:$0xff]
  %v106 = vld [vmem:[%s1 + $0x2b0] sm:$0xff]
  %v107 = vld [vmem:[%s1 + $0x2b8] sm:$0xff]
  %v108 = vld [vmem:[%s1 + $0x2c0] sm:$0xff]
  %v109 = vld [vmem:[%s1 + $0x2c8] sm:$0xff]
  %v110 = vld [vmem:[%s1 + $0x2d0] sm:$0xff]
  %v111 = vld [vmem:[%s1 + $0x2d8] sm:$0xff]
  %v112 = vld [vmem:[%s1 + $0x2e0] sm:$0xff]
  %v113 = vld [vmem:[%s1 + $0x2e8] sm:$0xff]
  %v114 = vld [vmem:[%s1 + $0x2f0] sm:$0xf]
  %v115 = vld [vmem:[%s1 + $0x2f4] sm:$0xff]
  %v116 = vld [vmem:[%s1 + $0x2fc] sm:$0xff]
  %v117 = vld [vmem:[%s1 + $0x304] sm:$0xff]
  %v118 = vld [vmem:[%s1 + $0x30c] sm:$0xff]
  %v119 = vld [vmem:[%s1 + $0x314] sm:$0xff]
  %v120 = vld [vmem:[%s1 + $0x31c] sm:$0xff]
  %v121 = vld [vmem:[%s1 + $0x324] sm:$0xff]
  %v122 = vld [vmem:[%s1 + $0x32c] sm:$0xff]
  %v123 = vld [vmem:[%s1 + $0x334] sm:$0xff]
  %v124 = vld [vmem:[%s1 + $0x33c] sm:$0xff]
  %v125 = vld [vmem:[%s1 + $0x344] sm:$0xf]
  %v126 = vld [vmem:[%s1 + $0x348] sm:$0xff]
  %v127 = vld [vmem:[%s1 + $0x350] sm:$0xff]
  %v128 = vld [vmem:[%s1 + $0x358] sm:$0xff]
  %v129 = vld [vmem:[%s1 + $0x360] sm:$0xff]
  %v130 = vld [vmem:[%s1 + $0x368] sm:$0xff]
  %v131 = vld [vmem:[%s1 + $0x370] sm:$0xff]
  %v132 = vld [vmem:[%s1 + $0x378] sm:$0xff]
  %v133 = vld [vmem:[%s1 + $0x380] sm:$0xff]
  %v134 = vld [vmem:[%s1 + $0x388] sm:$0xff]
  %v135 = vld [vmem:[%s1 + $0x390] sm:$0xff]
  %v136 = vld [vmem:[%s1 + $0x398] sm:$0xf]
  %v137 = vld [vmem:[%s1 + $0x39c] sm:$0xff]
  %v138 = vld [vmem:[%s1 + $0x3a4] sm:$0xff]
  %v139 = vld [vmem:[%s1 + $0x3ac] sm:$0xff]
  %v140 = vld [vmem:[%s1 + $0x3b4] sm:$0xff]
  %v141 = vld [vmem:[%s1 + $0x3bc] sm:$0xff]
  %v142 = vld [vmem:[%s1 + $0x3c4] sm:$0xff]
  %v143 = vld [vmem:[%s1 + $0x3cc] sm:$0xff]
  %v144 = vld [vmem:[%s1 + $0x3d4] sm:$0xff]
  %v145 = vld [vmem:[%s1 + $0x3dc] sm:$0xff]
  %v146 = vld [vmem:[%s1 + $0x3e4] sm:$0xff]
  %v147 = vld [vmem:[%s1 + $0x3ec] sm:$0xf]
  %v148 = vld [vmem:[%s1 + $0x3f0] sm:$0xff]
  %v149 = vld [vmem:[%s1 + $0x3f8] sm:$0xff]
  %v150 = vld [vmem:[%s1 + $0x400] sm:$0xff]
  %v151 = vld [vmem:[%s1 + $0x408] sm:$0xff]
  %v152 = vld [vmem:[%s1 + $0x410] sm:$0xff]
  %v153 = vld [vmem:[%s1 + $0x418] sm:$0xff]
  %v154 = vld [vmem:[%s1 + $0x420] sm:$0xff]
  %v155 = vld [vmem:[%s1 + $0x428] sm:$0xff]
  %v156 = vld [vmem:[%s1 + $0x430] sm:$0xff]
  %v157 = vld [vmem:[%s1 + $0x438] sm:$0xff]
  %v158 = vld [vmem:[%s1 + $0x440] sm:$0xf]
  %v159 = vld [vmem:[%s1 + $0x444] sm:$0xff]
  %v160 = vld [vmem:[%s1 + $0x44c] sm:$0xff]
  %v161 = vld [vmem:[%s1 + $0x454] sm:$0xff]
  %v162 = vld [vmem:[%s1 + $0x45c] sm:$0xff]
  %v163 = vld [vmem:[%s1 + $0x464] sm:$0xff]
  %v164 = vld [vmem:[%s1 + $0x46c] sm:$0xff]
  %v165 = vld [vmem:[%s1 + $0x474] sm:$0xff]
  %v166 = vld [vmem:[%s1 + $0x47c] sm:$0xff]
  %v167 = vld [vmem:[%s1 + $0x484] sm:$0xff]
  %v168 = vld [vmem:[%s1 + $0x48c] sm:$0xff]
  %v169 = vld [vmem:[%s1 + $0x494] sm:$0xf]
  %v170 = vld [vmem:[%s1 + $0x498] sm:$0xff]
  %v171 = vld [vmem:[%s1 + $0x4a0] sm:$0xff]
  %v172 = vld [vmem:[%s1 + $0x4a8] sm:$0xff]
  %v173 = vld [vmem:[%s1 + $0x4b0] sm:$0xff]
  %v174 = vld [vmem:[%s1 + $0x4b8] sm:$0xff]
  %v175 = vld [vmem:[%s1 + $0x4c0] sm:$0xff]
  %v176 = vld [vmem:[%s1 + $0x4c8] sm:$0xff]
  %v177 = vld [vmem:[%s1 + $0x4d0] sm:$0xff]
  %v178 = vld [vmem:[%s1 + $0x4d8] sm:$0xff]
  %v179 = vld [vmem:[%s1 + $0x4e0] sm:$0xff]
  %v180 = vld [vmem:[%s1 + $0x4e8] sm:$0xf]
  %v181 = vld [vmem:[%s1 + $0x4ec] sm:$0xff]
  %v182 = vld [vmem:[%s1 + $0x4f4] sm:$0xff]
  %v183 = vld [vmem:[%s1 + $0x4fc] sm:$0xff]
  %v184 = vld [vmem:[%s1 + $0x504] sm:$0xff]
  %v185 = vld [vmem:[%s1 + $0x50c] sm:$0xff]
  %v186 = vld [vmem:[%s1 + $0x514] sm:$0xff]
  %v187 = vld [vmem:[%s1 + $0x51c] sm:$0xff]
  %v188 = vld [vmem:[%s1 + $0x524] sm:$0xff]
  %v189 = vld [vmem:[%s1 + $0x52c] sm:$0xff]
  %v190 = vld [vmem:[%s1 + $0x534] sm:$0xff]
  %v191 = vld [vmem:[%s1 + $0x53c] sm:$0xf]
  %v192 = vld [vmem:[%s2] sm:$0xff]
  %v193 = vld [vmem:[%s2 + $0x8] sm:$0xff]
  %v194 = vld [vmem:[%s2 + $0x10] sm:$0x1f]
  %v198 = vperm.slane %v192, 0
  %v199 = vperm.slane %v192, 1
  %v200 = vperm.slane %v192, 2
  %v201 = vperm.slane %v192, 3
  %v202 = vperm.slane %v192, 4
  %v203 = vperm.slane %v192, 5
  %v204 = vperm.slane %v192, 6
  %v205 = vperm.slane %v192, 7
  %v206 = vperm.slane %v193, 0
  %v207 = vperm.slane %v193, 1
  %v208 = vperm.slane %v193, 2
  %v209 = vperm.slane %v193, 3
  %v210 = vperm.slane %v193, 4
  %v211 = vperm.slane %v193, 5
  %v212 = vperm.slane %v193, 6
  %v213 = vperm.slane %v193, 7
  %v214 = vperm.slane %v194, 0
  %v215 = vperm.slane %v194, 1
  %v216 = vperm.slane %v194, 2
  %v217 = vperm.slane %v194, 3
  %v218 = vperm.slane %v194, 4
  %v242 = vunpack.c.l.b16 %v14
  %v243 = vunpack.c.l.b16 %v15
  %v244 = vpack.c.b16 %v243, %v242
  %v422 = vunpack.c.l.b16 %v16
  %v423 = vunpack.c.h.b16 %v16
  %v424 = vunpack.c.l.b16 %v17
  %v425 = vunpack.c.h.b16 %v17
  %v426 = vunpack.c.l.b16 %v18
  %v427 = vunpack.c.h.b16 %v18
  %v428 = vunpack.c.l.b16 %v19
  %v429 = vunpack.c.h.b16 %v19
  %v430 = vunpack.c.l.b16 %v20
  %v431 = vunpack.c.h.b16 %v20
  %v432 = vunpack.c.l.b16 %v21
  %v433 = vunpack.c.h.b16 %v21
  %v434 = vunpack.c.l.b16 %v22
  %v435 = vunpack.c.h.b16 %v22
  %v436 = vunpack.c.l.b16 %v23
  %v437 = vunpack.c.h.b16 %v23
  %v438 = vunpack.c.l.b16 %v24
  %v439 = vunpack.c.h.b16 %v24
  %v440 = vunpack.c.l.b16 %v25
  %v441 = vunpack.c.h.b16 %v25
  %v442 = vunpack.c.l.b16 %v26
  %v443 = vunpack.c.l.b16 %v27
  %v444 = vunpack.c.h.b16 %v27
  %v445 = vunpack.c.l.b16 %v28
  %v446 = vunpack.c.h.b16 %v28
  %v447 = vunpack.c.l.b16 %v29
  %v448 = vunpack.c.h.b16 %v29
  %v449 = vunpack.c.l.b16 %v30
  %v450 = vunpack.c.h.b16 %v30
  %v451 = vunpack.c.l.b16 %v31
  %v452 = vunpack.c.h.b16 %v31
  %v453 = vunpack.c.l.b16 %v32
  %v454 = vunpack.c.h.b16 %v32
  %v455 = vunpack.c.l.b16 %v33
  %v456 = vunpack.c.h.b16 %v33
  %v457 = vunpack.c.l.b16 %v34
  %v458 = vunpack.c.h.b16 %v34
  %v459 = vunpack.c.l.b16 %v35
  %v460 = vunpack.c.h.b16 %v35
  %v461 = vunpack.c.l.b16 %v36
  %v462 = vunpack.c.h.b16 %v36
  %v463 = vunpack.c.l.b16 %v37
  %v464 = vunpack.c.l.b16 %v38
  %v465 = vunpack.c.h.b16 %v38
  %v466 = vunpack.c.l.b16 %v39
  %v467 = vunpack.c.h.b16 %v39
  %v468 = vunpack.c.l.b16 %v40
  %v469 = vunpack.c.h.b16 %v40
  %v470 = vunpack.c.l.b16 %v41
  %v471 = vunpack.c.h.b16 %v41
  %v472 = vunpack.c.l.b16 %v42
  %v473 = vunpack.c.h.b16 %v42
  %v474 = vunpack.c.l.b16 %v43
  %v475 = vunpack.c.h.b16 %v43
  %v476 = vunpack.c.l.b16 %v44
  %v477 = vunpack.c.h.b16 %v44
  %v478 = vunpack.c.l.b16 %v45
  %v479 = vunpack.c.h.b16 %v45
  %v480 = vunpack.c.l.b16 %v46
  %v481 = vunpack.c.h.b16 %v46
  %v482 = vunpack.c.l.b16 %v47
  %v483 = vunpack.c.h.b16 %v47
  %v484 = vunpack.c.l.b16 %v48
  %v485 = vunpack.c.l.b16 %v49
  %v486 = vunpack.c.h.b16 %v49
  %v487 = vunpack.c.l.b16 %v50
  %v488 = vunpack.c.h.b16 %v50
  %v489 = vunpack.c.l.b16 %v51
  %v490 = vunpack.c.h.b16 %v51
  %v491 = vunpack.c.l.b16 %v52
  %v492 = vunpack.c.h.b16 %v52
  %v493 = vunpack.c.l.b16 %v53
  %v494 = vunpack.c.h.b16 %v53
  %v495 = vunpack.c.l.b16 %v54
  %v496 = vunpack.c.h.b16 %v54
  %v497 = vunpack.c.l.b16 %v55
  %v498 = vunpack.c.h.b16 %v55
  %v499 = vunpack.c.l.b16 %v56
  %v500 = vunpack.c.h.b16 %v56
  %v501 = vunpack.c.l.b16 %v57
  %v502 = vunpack.c.h.b16 %v57
  %v503 = vunpack.c.l.b16 %v58
  %v504 = vunpack.c.h.b16 %v58
  %v505 = vunpack.c.l.b16 %v59
  %v506 = vunpack.c.l.b16 %v60
  %v507 = vunpack.c.h.b16 %v60
  %v508 = vunpack.c.l.b16 %v61
  %v509 = vunpack.c.h.b16 %v61
  %v510 = vunpack.c.l.b16 %v62
  %v511 = vunpack.c.h.b16 %v62
  %v512 = vunpack.c.l.b16 %v63
  %v513 = vunpack.c.h.b16 %v63
  %v514 = vunpack.c.l.b16 %v64
  %v515 = vunpack.c.h.b16 %v64
  %v516 = vunpack.c.l.b16 %v65
  %v517 = vunpack.c.h.b16 %v65
  %v518 = vunpack.c.l.b16 %v66
  %v519 = vunpack.c.h.b16 %v66
  %v520 = vunpack.c.l.b16 %v67
  %v521 = vunpack.c.h.b16 %v67
  %v522 = vunpack.c.l.b16 %v68
  %v523 = vunpack.c.h.b16 %v68
  %v524 = vunpack.c.l.b16 %v69
  %v525 = vunpack.c.h.b16 %v69
  %v526 = vunpack.c.l.b16 %v70
  %v527 = vunpack.c.l.b16 %v71
  %v528 = vunpack.c.h.b16 %v71
  %v529 = vunpack.c.l.b16 %v72
  %v530 = vunpack.c.h.b16 %v72
  %v531 = vunpack.c.l.b16 %v73
  %v532 = vunpack.c.h.b16 %v73
  %v533 = vunpack.c.l.b16 %v74
  %v534 = vunpack.c.h.b16 %v74
  %v535 = vunpack.c.l.b16 %v75
  %v536 = vunpack.c.h.b16 %v75
  %v537 = vunpack.c.l.b16 %v76
  %v538 = vunpack.c.h.b16 %v76
  %v539 = vunpack.c.l.b16 %v77
  %v540 = vunpack.c.h.b16 %v77
  %v541 = vunpack.c.l.b16 %v78
  %v542 = vunpack.c.h.b16 %v78
  %v543 = vunpack.c.l.b16 %v79
  %v544 = vunpack.c.h.b16 %v79
  %v545 = vunpack.c.l.b16 %v80
  %v546 = vunpack.c.h.b16 %v80
  %v547 = vunpack.c.l.b16 %v81
  %v548 = vunpack.c.l.b16 %v82
  %v549 = vunpack.c.h.b16 %v82
  %v550 = vunpack.c.l.b16 %v83
  %v551 = vunpack.c.h.b16 %v83
  %v552 = vunpack.c.l.b16 %v84
  %v553 = vunpack.c.h.b16 %v84
  %v554 = vunpack.c.l.b16 %v85
  %v555 = vunpack.c.h.b16 %v85
  %v556 = vunpack.c.l.b16 %v86
  %v557 = vunpack.c.h.b16 %v86
  %v558 = vunpack.c.l.b16 %v87
  %v559 = vunpack.c.h.b16 %v87
  %v560 = vunpack.c.l.b16 %v88
  %v561 = vunpack.c.h.b16 %v88
  %v562 = vunpack.c.l.b16 %v89
  %v563 = vunpack.c.h.b16 %v89
  %v564 = vunpack.c.l.b16 %v90
  %v565 = vunpack.c.h.b16 %v90
  %v566 = vunpack.c.l.b16 %v91
  %v567 = vunpack.c.h.b16 %v91
  %v568 = vunpack.c.l.b16 %v92
  %v569 = vunpack.c.l.b16 %v93
  %v570 = vunpack.c.h.b16 %v93
  %v571 = vunpack.c.l.b16 %v94
  %v572 = vunpack.c.h.b16 %v94
  %v573 = vunpack.c.l.b16 %v95
  %v574 = vunpack.c.h.b16 %v95
  %v575 = vunpack.c.l.b16 %v96
  %v576 = vunpack.c.h.b16 %v96
  %v577 = vunpack.c.l.b16 %v97
  %v578 = vunpack.c.h.b16 %v97
  %v579 = vunpack.c.l.b16 %v98
  %v580 = vunpack.c.h.b16 %v98
  %v581 = vunpack.c.l.b16 %v99
  %v582 = vunpack.c.h.b16 %v99
  %v583 = vunpack.c.l.b16 %v100
  %v584 = vunpack.c.h.b16 %v100
  %v585 = vunpack.c.l.b16 %v101
  %v586 = vunpack.c.h.b16 %v101
  %v587 = vunpack.c.l.b16 %v102
  %v588 = vunpack.c.h.b16 %v102
  %v589 = vunpack.c.l.b16 %v103
  %v590 = vunpack.c.l.b16 %v104
  %v591 = vunpack.c.h.b16 %v104
  %v592 = vunpack.c.l.b16 %v105
  %v593 = vunpack.c.h.b16 %v105
  %v594 = vunpack.c.l.b16 %v106
  %v595 = vunpack.c.h.b16 %v106
  %v596 = vunpack.c.l.b16 %v107
  %v597 = vunpack.c.h.b16 %v107
  %v598 = vunpack.c.l.b16 %v108
  %v599 = vunpack.c.h.b16 %v108
  %v600 = vunpack.c.l.b16 %v109
  %v601 = vunpack.c.h.b16 %v109
  %v602 = vunpack.c.l.b16 %v110
  %v603 = vunpack.c.h.b16 %v110
  %v604 = vunpack.c.l.b16 %v111
  %v605 = vunpack.c.h.b16 %v111
  %v606 = vunpack.c.l.b16 %v112
  %v607 = vunpack.c.h.b16 %v112
  %v608 = vunpack.c.l.b16 %v113
  %v609 = vunpack.c.h.b16 %v113
  %v610 = vunpack.c.l.b16 %v114
  %v611 = vunpack.c.l.b16 %v115
  %v612 = vunpack.c.h.b16 %v115
  %v613 = vunpack.c.l.b16 %v116
  %v614 = vunpack.c.h.b16 %v116
  %v615 = vunpack.c.l.b16 %v117
  %v616 = vunpack.c.h.b16 %v117
  %v617 = vunpack.c.l.b16 %v118
  %v618 = vunpack.c.h.b16 %v118
  %v619 = vunpack.c.l.b16 %v119
  %v620 = vunpack.c.h.b16 %v119
  %v621 = vunpack.c.l.b16 %v120
  %v622 = vunpack.c.h.b16 %v120
  %v623 = vunpack.c.l.b16 %v121
  %v624 = vunpack.c.h.b16 %v121
  %v625 = vunpack.c.l.b16 %v122
  %v626 = vunpack.c.h.b16 %v122
  %v627 = vunpack.c.l.b16 %v123
  %v628 = vunpack.c.h.b16 %v123
  %v629 = vunpack.c.l.b16 %v124
  %v630 = vunpack.c.h.b16 %v124
  %v631 = vunpack.c.l.b16 %v125
  %v632 = vunpack.c.l.b16 %v126
  %v633 = vunpack.c.h.b16 %v126
  %v634 = vunpack.c.l.b16 %v127
  %v635 = vunpack.c.h.b16 %v127
  %v636 = vunpack.c.l.b16 %v128
  %v637 = vunpack.c.h.b16 %v128
  %v638 = vunpack.c.l.b16 %v129
  %v639 = vunpack.c.h.b16 %v129
  %v640 = vunpack.c.l.b16 %v130
  %v641 = vunpack.c.h.b16 %v130
  %v642 = vunpack.c.l.b16 %v131
  %v643 = vunpack.c.h.b16 %v131
  %v644 = vunpack.c.l.b16 %v132
  %v645 = vunpack.c.h.b16 %v132
  %v646 = vunpack.c.l.b16 %v133
  %v647 = vunpack.c.h.b16 %v133
  %v648 = vunpack.c.l.b16 %v134
  %v649 = vunpack.c.h.b16 %v134
  %v650 = vunpack.c.l.b16 %v135
  %v651 = vunpack.c.h.b16 %v135
  %v652 = vunpack.c.l.b16 %v136
  %v653 = vunpack.c.l.b16 %v137
  %v654 = vunpack.c.h.b16 %v137
  %v655 = vunpack.c.l.b16 %v138
  %v656 = vunpack.c.h.b16 %v138
  %v657 = vunpack.c.l.b16 %v139
  %v658 = vunpack.c.h.b16 %v139
  %v659 = vunpack.c.l.b16 %v140
  %v660 = vunpack.c.h.b16 %v140
  %v661 = vunpack.c.l.b16 %v141
  %v662 = vunpack.c.h.b16 %v141
  %v663 = vunpack.c.l.b16 %v142
  %v664 = vunpack.c.h.b16 %v142
  %v665 = vunpack.c.l.b16 %v143
  %v666 = vunpack.c.h.b16 %v143
  %v667 = vunpack.c.l.b16 %v144
  %v668 = vunpack.c.h.b16 %v144
  %v669 = vunpack.c.l.b16 %v145
  %v670 = vunpack.c.h.b16 %v145
  %v671 = vunpack.c.l.b16 %v146
  %v672 = vunpack.c.h.b16 %v146
  %v673 = vunpack.c.l.b16 %v147
  %v674 = vunpack.c.l.b16 %v148
  %v675 = vunpack.c.h.b16 %v148
  %v676 = vunpack.c.l.b16 %v149
  %v677 = vunpack.c.h.b16 %v149
  %v678 = vunpack.c.l.b16 %v150
  %v679 = vunpack.c.h.b16 %v150
  %v680 = vunpack.c.l.b16 %v151
  %v681 = vunpack.c.h.b16 %v151
  %v682 = vunpack.c.l.b16 %v152
  %v683 = vunpack.c.h.b16 %v152
  %v684 = vunpack.c.l.b16 %v153
  %v685 = vunpack.c.h.b16 %v153
  %v686 = vunpack.c.l.b16 %v154
  %v687 = vunpack.c.h.b16 %v154
  %v688 = vunpack.c.l.b16 %v155
  %v689 = vunpack.c.h.b16 %v155
  %v690 = vunpack.c.l.b16 %v156
  %v691 = vunpack.c.h.b16 %v156
  %v692 = vunpack.c.l.b16 %v157
  %v693 = vunpack.c.h.b16 %v157
  %v694 = vunpack.c.l.b16 %v158
  %v695 = vunpack.c.l.b16 %v159
  %v696 = vunpack.c.h.b16 %v159
  %v697 = vunpack.c.l.b16 %v160
  %v698 = vunpack.c.h.b16 %v160
  %v699 = vunpack.c.l.b16 %v161
  %v700 = vunpack.c.h.b16 %v161
  %v701 = vunpack.c.l.b16 %v162
  %v702 = vunpack.c.h.b16 %v162
  %v703 = vunpack.c.l.b16 %v163
  %v704 = vunpack.c.h.b16 %v163
  %v705 = vunpack.c.l.b16 %v164
  %v706 = vunpack.c.h.b16 %v164
  %v707 = vunpack.c.l.b16 %v165
  %v708 = vunpack.c.h.b16 %v165
  %v709 = vunpack.c.l.b16 %v166
  %v710 = vunpack.c.h.b16 %v166
  %v711 = vunpack.c.l.b16 %v167
  %v712 = vunpack.c.h.b16 %v167
  %v713 = vunpack.c.l.b16 %v168
  %v714 = vunpack.c.h.b16 %v168
  %v715 = vunpack.c.l.b16 %v169
  %v716 = vunpack.c.l.b16 %v170
  %v717 = vunpack.c.h.b16 %v170
  %v718 = vunpack.c.l.b16 %v171
  %v719 = vunpack.c.h.b16 %v171
  %v720 = vunpack.c.l.b16 %v172
  %v721 = vunpack.c.h.b16 %v172
  %v722 = vunpack.c.l.b16 %v173
  %v723 = vunpack.c.h.b16 %v173
  %v724 = vunpack.c.l.b16 %v174
  %v725 = vunpack.c.h.b16 %v174
  %v726 = vunpack.c.l.b16 %v175
  %v727 = vunpack.c.h.b16 %v175
  %v728 = vunpack.c.l.b16 %v176
  %v729 = vunpack.c.h.b16 %v176
  %v730 = vunpack.c.l.b16 %v177
  %v731 = vunpack.c.h.b16 %v177
  %v732 = vunpack.c.l.b16 %v178
  %v733 = vunpack.c.h.b16 %v178
  %v734 = vunpack.c.l.b16 %v179
  %v735 = vunpack.c.h.b16 %v179
  %v736 = vunpack.c.l.b16 %v180
  %v737 = vunpack.c.l.b16 %v181
  %v738 = vunpack.c.h.b16 %v181
  %v739 = vunpack.c.l.b16 %v182
  %v740 = vunpack.c.h.b16 %v182
  %v741 = vunpack.c.l.b16 %v183
  %v742 = vunpack.c.h.b16 %v183
  %v743 = vunpack.c.l.b16 %v184
  %v744 = vunpack.c.h.b16 %v184
  %v745 = vunpack.c.l.b16 %v185
  %v746 = vunpack.c.h.b16 %v185
  %v747 = vunpack.c.l.b16 %v186
  %v748 = vunpack.c.h.b16 %v186
  %v749 = vunpack.c.l.b16 %v187
  %v750 = vunpack.c.h.b16 %v187
  %v751 = vunpack.c.l.b16 %v188
  %v752 = vunpack.c.h.b16 %v188
  %v753 = vunpack.c.l.b16 %v189
  %v754 = vunpack.c.h.b16 %v189
  %v755 = vunpack.c.l.b16 %v190
  %v756 = vunpack.c.h.b16 %v190
  %v757 = vunpack.c.l.b16 %v191
  %v758 = vpack.c.b16 %v443, %v422
  %v759 = vpack.c.b16 %v444, %v423
  %v760 = vpack.c.b16 %v445, %v424
  %v761 = vpack.c.b16 %v446, %v425
  %v762 = vpack.c.b16 %v447, %v426
  %v763 = vpack.c.b16 %v448, %v427
  %v764 = vpack.c.b16 %v449, %v428
  %v765 = vpack.c.b16 %v450, %v429
  %v766 = vpack.c.b16 %v451, %v430
  %v767 = vpack.c.b16 %v452, %v431
  %v768 = vpack.c.b16 %v453, %v432
  %v769 = vpack.c.b16 %v454, %v433
  %v770 = vpack.c.b16 %v455, %v434
  %v771 = vpack.c.b16 %v456, %v435
  %v772 = vpack.c.b16 %v457, %v436
  %v773 = vpack.c.b16 %v458, %v437
  %v774 = vpack.c.b16 %v459, %v438
  %v775 = vpack.c.b16 %v460, %v439
  %v776 = vpack.c.b16 %v461, %v440
  %v777 = vpack.c.b16 %v462, %v441
  %v778 = vpack.c.b16 %v463, %v442
  %v779 = vpack.c.b16 %v485, %v464
  %v780 = vpack.c.b16 %v486, %v465
  %v781 = vpack.c.b16 %v487, %v466
  %v782 = vpack.c.b16 %v488, %v467
  %v783 = vpack.c.b16 %v489, %v468
  %v784 = vpack.c.b16 %v490, %v469
  %v785 = vpack.c.b16 %v491, %v470
  %v786 = vpack.c.b16 %v492, %v471
  %v787 = vpack.c.b16 %v493, %v472
  %v788 = vpack.c.b16 %v494, %v473
  %v789 = vpack.c.b16 %v495, %v474
  %v790 = vpack.c.b16 %v496, %v475
  %v791 = vpack.c.b16 %v497, %v476
  %v792 = vpack.c.b16 %v498, %v477
  %v793 = vpack.c.b16 %v499, %v478
  %v794 = vpack.c.b16 %v500, %v479
  %v795 = vpack.c.b16 %v501, %v480
  %v796 = vpack.c.b16 %v502, %v481
  %v797 = vpack.c.b16 %v503, %v482
  %v798 = vpack.c.b16 %v504, %v483
  %v799 = vpack.c.b16 %v505, %v484
  %v800 = vpack.c.b16 %v527, %v506
  %v801 = vpack.c.b16 %v528, %v507
  %v802 = vpack.c.b16 %v529, %v508
  %v803 = vpack.c.b16 %v530, %v509
  %v804 = vpack.c.b16 %v531, %v510
  %v805 = vpack.c.b16 %v532, %v511
  %v806 = vpack.c.b16 %v533, %v512
  %v807 = vpack.c.b16 %v534, %v513
  %v808 = vpack.c.b16 %v535, %v514
  %v809 = vpack.c.b16 %v536, %v515
  %v810 = vpack.c.b16 %v537, %v516
  %v811 = vpack.c.b16 %v538, %v517
  %v812 = vpack.c.b16 %v539, %v518
  %v813 = vpack.c.b16 %v540, %v519
  %v814 = vpack.c.b16 %v541, %v520
  %v815 = vpack.c.b16 %v542, %v521
  %v816 = vpack.c.b16 %v543, %v522
  %v817 = vpack.c.b16 %v544, %v523
  %v818 = vpack.c.b16 %v545, %v524
  %v819 = vpack.c.b16 %v546, %v525
  %v820 = vpack.c.b16 %v547, %v526
  %v821 = vpack.c.b16 %v569, %v548
  %v822 = vpack.c.b16 %v570, %v549
  %v823 = vpack.c.b16 %v571, %v550
  %v824 = vpack.c.b16 %v572, %v551
  %v825 = vpack.c.b16 %v573, %v552
  %v826 = vpack.c.b16 %v574, %v553
  %v827 = vpack.c.b16 %v575, %v554
  %v828 = vpack.c.b16 %v576, %v555
  %v829 = vpack.c.b16 %v577, %v556
  %v830 = vpack.c.b16 %v578, %v557
  %v831 = vpack.c.b16 %v579, %v558
  %v832 = vpack.c.b16 %v580, %v559
  %v833 = vpack.c.b16 %v581, %v560
  %v834 = vpack.c.b16 %v582, %v561
  %v835 = vpack.c.b16 %v583, %v562
  %v836 = vpack.c.b16 %v584, %v563
  %v837 = vpack.c.b16 %v585, %v564
  %v838 = vpack.c.b16 %v586, %v565
  %v839 = vpack.c.b16 %v587, %v566
  %v840 = vpack.c.b16 %v588, %v567
  %v841 = vpack.c.b16 %v589, %v568
  %v842 = vpack.c.b16 %v611, %v590
  %v843 = vpack.c.b16 %v612, %v591
  %v844 = vpack.c.b16 %v613, %v592
  %v845 = vpack.c.b16 %v614, %v593
  %v846 = vpack.c.b16 %v615, %v594
  %v847 = vpack.c.b16 %v616, %v595
  %v848 = vpack.c.b16 %v617, %v596
  %v849 = vpack.c.b16 %v618, %v597
  %v850 = vpack.c.b16 %v619, %v598
  %v851 = vpack.c.b16 %v620, %v599
  %v852 = vpack.c.b16 %v621, %v600
  %v853 = vpack.c.b16 %v622, %v601
  %v854 = vpack.c.b16 %v623, %v602
  %v855 = vpack.c.b16 %v624, %v603
  %v856 = vpack.c.b16 %v625, %v604
  %v857 = vpack.c.b16 %v626, %v605
  %v858 = vpack.c.b16 %v627, %v606
  %v859 = vpack.c.b16 %v628, %v607
  %v860 = vpack.c.b16 %v629, %v608
  %v861 = vpack.c.b16 %v630, %v609
  %v862 = vpack.c.b16 %v631, %v610
  %v863 = vpack.c.b16 %v653, %v632
  %v864 = vpack.c.b16 %v654, %v633
  %v865 = vpack.c.b16 %v655, %v634
  %v866 = vpack.c.b16 %v656, %v635
  %v867 = vpack.c.b16 %v657, %v636
  %v868 = vpack.c.b16 %v658, %v637
  %v869 = vpack.c.b16 %v659, %v638
  %v870 = vpack.c.b16 %v660, %v639
  %v871 = vpack.c.b16 %v661, %v640
  %v872 = vpack.c.b16 %v662, %v641
  %v873 = vpack.c.b16 %v663, %v642
  %v874 = vpack.c.b16 %v664, %v643
  %v875 = vpack.c.b16 %v665, %v644
  %v876 = vpack.c.b16 %v666, %v645
  %v877 = vpack.c.b16 %v667, %v646
  %v878 = vpack.c.b16 %v668, %v647
  %v879 = vpack.c.b16 %v669, %v648
  %v880 = vpack.c.b16 %v670, %v649
  %v881 = vpack.c.b16 %v671, %v650
  %v882 = vpack.c.b16 %v672, %v651
  %v883 = vpack.c.b16 %v673, %v652
  %v884 = vpack.c.b16 %v695, %v674
  %v885 = vpack.c.b16 %v696, %v675
  %v886 = vpack.c.b16 %v697, %v676
  %v887 = vpack.c.b16 %v698, %v677
  %v888 = vpack.c.b16 %v699, %v678
  %v889 = vpack.c.b16 %v700, %v679
  %v890 = vpack.c.b16 %v701, %v680
  %v891 = vpack.c.b16 %v702, %v681
  %v892 = vpack.c.b16 %v703, %v682
  %v893 = vpack.c.b16 %v704, %v683
  %v894 = vpack.c.b16 %v705, %v684
  %v895 = vpack.c.b16 %v706, %v685
  %v896 = vpack.c.b16 %v707, %v686
  %v897 = vpack.c.b16 %v708, %v687
  %v898 = vpack.c.b16 %v709, %v688
  %v899 = vpack.c.b16 %v710, %v689
  %v900 = vpack.c.b16 %v711, %v690
  %v901 = vpack.c.b16 %v712, %v691
  %v902 = vpack.c.b16 %v713, %v692
  %v903 = vpack.c.b16 %v714, %v693
  %v904 = vpack.c.b16 %v715, %v694
  %v905 = vpack.c.b16 %v737, %v716
  %v906 = vpack.c.b16 %v738, %v717
  %v907 = vpack.c.b16 %v739, %v718
  %v908 = vpack.c.b16 %v740, %v719
  %v909 = vpack.c.b16 %v741, %v720
  %v910 = vpack.c.b16 %v742, %v721
  %v911 = vpack.c.b16 %v743, %v722
  %v912 = vpack.c.b16 %v744, %v723
  %v913 = vpack.c.b16 %v745, %v724
  %v914 = vpack.c.b16 %v746, %v725
  %v915 = vpack.c.b16 %v747, %v726
  %v916 = vpack.c.b16 %v748, %v727
  %v917 = vpack.c.b16 %v749, %v728
  %v918 = vpack.c.b16 %v750, %v729
  %v919 = vpack.c.b16 %v751, %v730
  %v920 = vpack.c.b16 %v752, %v731
  %v921 = vpack.c.b16 %v753, %v732
  %v922 = vpack.c.b16 %v754, %v733
  %v923 = vpack.c.b16 %v755, %v734
  %v924 = vpack.c.b16 %v756, %v735
  %v925 = vpack.c.b16 %v757, %v736
  %1094 = vmatpush.bf16.msra.mxu0 %v905
  %1095 = vmatpush.bf16.msra.mxu0 %v884
  %1096 = vmatpush.bf16.msra.mxu0 %v863
  %1097 = vmatpush.bf16.msra.mxu0 %v842
  %1098 = vmatpush.bf16.msra.mxu0 %v821
  %1099 = vmatpush.bf16.msra.mxu0 %v800
  %1100 = vmatpush.bf16.msra.mxu0 %v779
  %1101 = vmatpush.bf16.msra.mxu0 %v758
  %1102 = vmatmul.bf16.gmra.mxu0 %v244
  %v1103 = vpop.f32.mrf.mxu0
  %v1104 = vadd.f32 %v198, %v1103
  %v1105 = vpop.f32.mrf.mxu0
  %v1106 = vadd.f32 %v198, %v1105
  %1107 = vdwg.mxu0
  %1108 = vmatpush.bf16.msra.mxu0 %v906
  %1109 = vmatpush.bf16.msra.mxu0 %v885
  %1110 = vmatpush.bf16.msra.mxu0 %v864
  %1111 = vmatpush.bf16.msra.mxu0 %v843
  %1112 = vmatpush.bf16.msra.mxu0 %v822
  %1113 = vmatpush.bf16.msra.mxu0 %v801
  %1114 = vmatpush.bf16.msra.mxu0 %v780
  %1115 = vmatpush.bf16.msra.mxu0 %v759
  %1116 = vmatmul.bf16.gmra.mxu0 %v244
  %v1117 = vpop.f32.mrf.mxu0
  %v1118 = vadd.f32 %v199, %v1117
  %v1119 = vpop.f32.mrf.mxu0
  %v1120 = vadd.f32 %v199, %v1119
  %1121 = vdwg.mxu0
  %1122 = vmatpush.bf16.msra.mxu0 %v907
  %1123 = vmatpush.bf16.msra.mxu0 %v886
  %1124 = vmatpush.bf16.msra.mxu0 %v865
  %1125 = vmatpush.bf16.msra.mxu0 %v844
  %1126 = vmatpush.bf16.msra.mxu0 %v823
  %1127 = vmatpush.bf16.msra.mxu0 %v802
  %1128 = vmatpush.bf16.msra.mxu0 %v781
  %1129 = vmatpush.bf16.msra.mxu0 %v760
  %1130 = vmatmul.bf16.gmra.mxu0 %v244
  %v1131 = vpop.f32.mrf.mxu0
  %v1132 = vadd.f32 %v200, %v1131
  %v1133 = vpop.f32.mrf.mxu0
  %v1134 = vadd.f32 %v200, %v1133
  %1135 = vdwg.mxu0
  %1136 = vmatpush.bf16.msra.mxu0 %v908
  %1137 = vmatpush.bf16.msra.mxu0 %v887
  %1138 = vmatpush.bf16.msra.mxu0 %v866
  %1139 = vmatpush.bf16.msra.mxu0 %v845
  %1140 = vmatpush.bf16.msra.mxu0 %v824
  %1141 = vmatpush.bf16.msra.mxu0 %v803
  %1142 = vmatpush.bf16.msra.mxu0 %v782
  %1143 = vmatpush.bf16.msra.mxu0 %v761
  %1144 = vmatmul.bf16.gmra.mxu0 %v244
  %v1145 = vpop.f32.mrf.mxu0
  %v1146 = vadd.f32 %v201, %v1145
  %v1147 = vpop.f32.mrf.mxu0
  %v1148 = vadd.f32 %v201, %v1147
  %1149 = vdwg.mxu0
  %1150 = vmatpush.bf16.msra.mxu0 %v909
  %1151 = vmatpush.bf16.msra.mxu0 %v888
  %1152 = vmatpush.bf16.msra.mxu0 %v867
  %1153 = vmatpush.bf16.msra.mxu0 %v846
  %1154 = vmatpush.bf16.msra.mxu0 %v825
  %1155 = vmatpush.bf16.msra.mxu0 %v804
  %1156 = vmatpush.bf16.msra.mxu0 %v783
  %1157 = vmatpush.bf16.msra.mxu0 %v762
  %1158 = vmatmul.bf16.gmra.mxu0 %v244
  %v1159 = vpop.f32.mrf.mxu0
  %v1160 = vadd.f32 %v202, %v1159
  %v1161 = vpop.f32.mrf.mxu0
  %v1162 = vadd.f32 %v202, %v1161
  %1163 = vdwg.mxu0
  %1164 = vmatpush.bf16.msra.mxu0 %v910
  %1165 = vmatpush.bf16.msra.mxu0 %v889
  %1166 = vmatpush.bf16.msra.mxu0 %v868
  %1167 = vmatpush.bf16.msra.mxu0 %v847
  %1168 = vmatpush.bf16.msra.mxu0 %v826
  %1169 = vmatpush.bf16.msra.mxu0 %v805
  %1170 = vmatpush.bf16.msra.mxu0 %v784
  %1171 = vmatpush.bf16.msra.mxu0 %v763
  %1172 = vmatmul.bf16.gmra.mxu0 %v244
  %v1173 = vpop.f32.mrf.mxu0
  %v1174 = vadd.f32 %v203, %v1173
  %v1175 = vpop.f32.mrf.mxu0
  %v1176 = vadd.f32 %v203, %v1175
  %1177 = vdwg.mxu0
  %1178 = vmatpush.bf16.msra.mxu0 %v911
  %1179 = vmatpush.bf16.msra.mxu0 %v890
  %1180 = vmatpush.bf16.msra.mxu0 %v869
  %1181 = vmatpush.bf16.msra.mxu0 %v848
  %1182 = vmatpush.bf16.msra.mxu0 %v827
  %1183 = vmatpush.bf16.msra.mxu0 %v806
  %1184 = vmatpush.bf16.msra.mxu0 %v785
  %1185 = vmatpush.bf16.msra.mxu0 %v764
  %1186 = vmatmul.bf16.gmra.mxu0 %v244
  %v1187 = vpop.f32.mrf.mxu0
  %v1188 = vadd.f32 %v204, %v1187
  %v1189 = vpop.f32.mrf.mxu0
  %v1190 = vadd.f32 %v204, %v1189
  %1191 = vdwg.mxu0
  %1192 = vmatpush.bf16.msra.mxu0 %v912
  %1193 = vmatpush.bf16.msra.mxu0 %v891
  %1194 = vmatpush.bf16.msra.mxu0 %v870
  %1195 = vmatpush.bf16.msra.mxu0 %v849
  %1196 = vmatpush.bf16.msra.mxu0 %v828
  %1197 = vmatpush.bf16.msra.mxu0 %v807
  %1198 = vmatpush.bf16.msra.mxu0 %v786
  %1199 = vmatpush.bf16.msra.mxu0 %v765
  %1200 = vmatmul.bf16.gmra.mxu0 %v244
  %v1201 = vpop.f32.mrf.mxu0
  %v1202 = vadd.f32 %v205, %v1201
  %v1203 = vpop.f32.mrf.mxu0
  %v1204 = vadd.f32 %v205, %v1203
  %1205 = vdwg.mxu0
  %1206 = vmatpush.bf16.msra.mxu0 %v913
  %1207 = vmatpush.bf16.msra.mxu0 %v892
  %1208 = vmatpush.bf16.msra.mxu0 %v871
  %1209 = vmatpush.bf16.msra.mxu0 %v850
  %1210 = vmatpush.bf16.msra.mxu0 %v829
  %1211 = vmatpush.bf16.msra.mxu0 %v808
  %1212 = vmatpush.bf16.msra.mxu0 %v787
  %1213 = vmatpush.bf16.msra.mxu0 %v766
  %1214 = vmatmul.bf16.gmra.mxu0 %v244
  %v1215 = vpop.f32.mrf.mxu0
  %v1216 = vadd.f32 %v206, %v1215
  %v1217 = vpop.f32.mrf.mxu0
  %v1218 = vadd.f32 %v206, %v1217
  %1219 = vdwg.mxu0
  %1220 = vmatpush.bf16.msra.mxu0 %v914
  %1221 = vmatpush.bf16.msra.mxu0 %v893
  %1222 = vmatpush.bf16.msra.mxu0 %v872
  %1223 = vmatpush.bf16.msra.mxu0 %v851
  %1224 = vmatpush.bf16.msra.mxu0 %v830
  %1225 = vmatpush.bf16.msra.mxu0 %v809
  %1226 = vmatpush.bf16.msra.mxu0 %v788
  %1227 = vmatpush.bf16.msra.mxu0 %v767
  %1228 = vmatmul.bf16.gmra.mxu0 %v244
  %v1229 = vpop.f32.mrf.mxu0
  %v1230 = vadd.f32 %v207, %v1229
  %v1231 = vpop.f32.mrf.mxu0
  %v1232 = vadd.f32 %v207, %v1231
  %1233 = vdwg.mxu0
  %1234 = vmatpush.bf16.msra.mxu0 %v915
  %1235 = vmatpush.bf16.msra.mxu0 %v894
  %1236 = vmatpush.bf16.msra.mxu0 %v873
  %1237 = vmatpush.bf16.msra.mxu0 %v852
  %1238 = vmatpush.bf16.msra.mxu0 %v831
  %1239 = vmatpush.bf16.msra.mxu0 %v810
  %1240 = vmatpush.bf16.msra.mxu0 %v789
  %1241 = vmatpush.bf16.msra.mxu0 %v768
  %1242 = vmatmul.bf16.gmra.mxu0 %v244
  %v1243 = vpop.f32.mrf.mxu0
  %v1244 = vadd.f32 %v208, %v1243
  %v1245 = vpop.f32.mrf.mxu0
  %v1246 = vadd.f32 %v208, %v1245
  %1247 = vdwg.mxu0
  %1248 = vmatpush.bf16.msra.mxu0 %v916
  %1249 = vmatpush.bf16.msra.mxu0 %v895
  %1250 = vmatpush.bf16.msra.mxu0 %v874
  %1251 = vmatpush.bf16.msra.mxu0 %v853
  %1252 = vmatpush.bf16.msra.mxu0 %v832
  %1253 = vmatpush.bf16.msra.mxu0 %v811
  %1254 = vmatpush.bf16.msra.mxu0 %v790
  %1255 = vmatpush.bf16.msra.mxu0 %v769
  %1256 = vmatmul.bf16.gmra.mxu0 %v244
  %v1257 = vpop.f32.mrf.mxu0
  %v1258 = vadd.f32 %v209, %v1257
  %v1259 = vpop.f32.mrf.mxu0
  %v1260 = vadd.f32 %v209, %v1259
  %1261 = vdwg.mxu0
  %1262 = vmatpush.bf16.msra.mxu0 %v917
  %1263 = vmatpush.bf16.msra.mxu0 %v896
  %1264 = vmatpush.bf16.msra.mxu0 %v875
  %1265 = vmatpush.bf16.msra.mxu0 %v854
  %1266 = vmatpush.bf16.msra.mxu0 %v833
  %1267 = vmatpush.bf16.msra.mxu0 %v812
  %1268 = vmatpush.bf16.msra.mxu0 %v791
  %1269 = vmatpush.bf16.msra.mxu0 %v770
  %1270 = vmatmul.bf16.gmra.mxu0 %v244
  %v1271 = vpop.f32.mrf.mxu0
  %v1272 = vadd.f32 %v210, %v1271
  %v1273 = vpop.f32.mrf.mxu0
  %v1274 = vadd.f32 %v210, %v1273
  %1275 = vdwg.mxu0
  %1276 = vmatpush.bf16.msra.mxu0 %v918
  %1277 = vmatpush.bf16.msra.mxu0 %v897
  %1278 = vmatpush.bf16.msra.mxu0 %v876
  %1279 = vmatpush.bf16.msra.mxu0 %v855
  %1280 = vmatpush.bf16.msra.mxu0 %v834
  %1281 = vmatpush.bf16.msra.mxu0 %v813
  %1282 = vmatpush.bf16.msra.mxu0 %v792
  %1283 = vmatpush.bf16.msra.mxu0 %v771
  %1284 = vmatmul.bf16.gmra.mxu0 %v244
  %v1285 = vpop.f32.mrf.mxu0
  %v1286 = vadd.f32 %v211, %v1285
  %v1287 = vpop.f32.mrf.mxu0
  %v1288 = vadd.f32 %v211, %v1287
  %1289 = vdwg.mxu0
  %1290 = vmatpush.bf16.msra.mxu0 %v919
  %1291 = vmatpush.bf16.msra.mxu0 %v898
  %1292 = vmatpush.bf16.msra.mxu0 %v877
  %1293 = vmatpush.bf16.msra.mxu0 %v856
  %1294 = vmatpush.bf16.msra.mxu0 %v835
  %1295 = vmatpush.bf16.msra.mxu0 %v814
  %1296 = vmatpush.bf16.msra.mxu0 %v793
  %1297 = vmatpush.bf16.msra.mxu0 %v772
  %1298 = vmatmul.bf16.gmra.mxu0 %v244
  %v1299 = vpop.f32.mrf.mxu0
  %v1300 = vadd.f32 %v212, %v1299
  %v1301 = vpop.f32.mrf.mxu0
  %v1302 = vadd.f32 %v212, %v1301
  %1303 = vdwg.mxu0
  %1304 = vmatpush.bf16.msra.mxu0 %v920
  %1305 = vmatpush.bf16.msra.mxu0 %v899
  %1306 = vmatpush.bf16.msra.mxu0 %v878
  %1307 = vmatpush.bf16.msra.mxu0 %v857
  %1308 = vmatpush.bf16.msra.mxu0 %v836
  %1309 = vmatpush.bf16.msra.mxu0 %v815
  %1310 = vmatpush.bf16.msra.mxu0 %v794
  %1311 = vmatpush.bf16.msra.mxu0 %v773
  %1312 = vmatmul.bf16.gmra.mxu0 %v244
  %v1313 = vpop.f32.mrf.mxu0
  %v1314 = vadd.f32 %v213, %v1313
  %v1315 = vpop.f32.mrf.mxu0
  %v1316 = vadd.f32 %v213, %v1315
  %1317 = vdwg.mxu0
  %1318 = vmatpush.bf16.msra.mxu0 %v921
  %1319 = vmatpush.bf16.msra.mxu0 %v900
  %1320 = vmatpush.bf16.msra.mxu0 %v879
  %1321 = vmatpush.bf16.msra.mxu0 %v858
  %1322 = vmatpush.bf16.msra.mxu0 %v837
  %1323 = vmatpush.bf16.msra.mxu0 %v816
  %1324 = vmatpush.bf16.msra.mxu0 %v795
  %1325 = vmatpush.bf16.msra.mxu0 %v774
  %1326 = vmatmul.bf16.gmra.mxu0 %v244
  %v1327 = vpop.f32.mrf.mxu0
  %v1328 = vadd.f32 %v214, %v1327
  %v1329 = vpop.f32.mrf.mxu0
  %v1330 = vadd.f32 %v214, %v1329
  %1331 = vdwg.mxu0
  %1332 = vmatpush.bf16.msra.mxu0 %v922
  %1333 = vmatpush.bf16.msra.mxu0 %v901
  %1334 = vmatpush.bf16.msra.mxu0 %v880
  %1335 = vmatpush.bf16.msra.mxu0 %v859
  %1336 = vmatpush.bf16.msra.mxu0 %v838
  %1337 = vmatpush.bf16.msra.mxu0 %v817
  %1338 = vmatpush.bf16.msra.mxu0 %v796
  %1339 = vmatpush.bf16.msra.mxu0 %v775
  %1340 = vmatmul.bf16.gmra.mxu0 %v244
  %v1341 = vpop.f32.mrf.mxu0
  %v1342 = vadd.f32 %v215, %v1341
  %v1343 = vpop.f32.mrf.mxu0
  %v1344 = vadd.f32 %v215, %v1343
  %1345 = vdwg.mxu0
  %1346 = vmatpush.bf16.msra.mxu0 %v923
  %1347 = vmatpush.bf16.msra.mxu0 %v902
  %1348 = vmatpush.bf16.msra.mxu0 %v881
  %1349 = vmatpush.bf16.msra.mxu0 %v860
  %1350 = vmatpush.bf16.msra.mxu0 %v839
  %1351 = vmatpush.bf16.msra.mxu0 %v818
  %1352 = vmatpush.bf16.msra.mxu0 %v797
  %1353 = vmatpush.bf16.msra.mxu0 %v776
  %1354 = vmatmul.bf16.gmra.mxu0 %v244
  %v1355 = vpop.f32.mrf.mxu0
  %v1356 = vadd.f32 %v216, %v1355
  %v1357 = vpop.f32.mrf.mxu0
  %v1358 = vadd.f32 %v216, %v1357
  %1359 = vdwg.mxu0
  %1360 = vmatpush.bf16.msra.mxu0 %v924
  %1361 = vmatpush.bf16.msra.mxu0 %v903
  %1362 = vmatpush.bf16.msra.mxu0 %v882
  %1363 = vmatpush.bf16.msra.mxu0 %v861
  %1364 = vmatpush.bf16.msra.mxu0 %v840
  %1365 = vmatpush.bf16.msra.mxu0 %v819
  %1366 = vmatpush.bf16.msra.mxu0 %v798
  %1367 = vmatpush.bf16.msra.mxu0 %v777
  %1368 = vmatmul.bf16.gmra.mxu0 %v244
  %v1369 = vpop.f32.mrf.mxu0
  %v1370 = vadd.f32 %v217, %v1369
  %v1371 = vpop.f32.mrf.mxu0
  %v1372 = vadd.f32 %v217, %v1371
  %1373 = vdwg.mxu0
  %1374 = vmatpush.bf16.msra.mxu0 %v925
  %1375 = vmatpush.bf16.msra.mxu0 %v904
  %1376 = vmatpush.bf16.msra.mxu0 %v883
  %1377 = vmatpush.bf16.msra.mxu0 %v862
  %1378 = vmatpush.bf16.msra.mxu0 %v841
  %1379 = vmatpush.bf16.msra.mxu0 %v820
  %1380 = vmatpush.bf16.msra.mxu0 %v799
  %1381 = vmatpush.bf16.msra.mxu0 %v778
  %1382 = vmatmul.bf16.gmra.mxu0 %v244
  %v1383 = vpop.f32.mrf.mxu0
  %v1384 = vadd.f32 %v218, %v1383
  %v1385 = vpop.f32.mrf.mxu0
  %v1386 = vadd.f32 %v218, %v1385
  %1387 = vdwg.mxu0
  %vm1388 = vcmp.gt.f32.partialorder %v1104, 0.0
  %vm1389 = vcmp.gt.f32.partialorder %v1118, 0.0
  %vm1390 = vcmp.gt.f32.partialorder %v1132, 0.0
  %vm1391 = vcmp.gt.f32.partialorder %v1146, 0.0
  %vm1392 = vcmp.gt.f32.partialorder %v1160, 0.0
  %vm1393 = vcmp.gt.f32.partialorder %v1174, 0.0
  %vm1394 = vcmp.gt.f32.partialorder %v1188, 0.0
  %vm1395 = vcmp.gt.f32.partialorder %v1202, 0.0
  %vm1396 = vcmp.gt.f32.partialorder %v1216, 0.0
  %vm1397 = vcmp.gt.f32.partialorder %v1230, 0.0
  %vm1398 = vcmp.gt.f32.partialorder %v1244, 0.0
  %vm1399 = vcmp.gt.f32.partialorder %v1258, 0.0
  %vm1400 = vcmp.gt.f32.partialorder %v1272, 0.0
  %vm1401 = vcmp.gt.f32.partialorder %v1286, 0.0
  %vm1402 = vcmp.gt.f32.partialorder %v1300, 0.0
  %vm1403 = vcmp.gt.f32.partialorder %v1314, 0.0
  %vm1404 = vcmp.gt.f32.partialorder %v1328, 0.0
  %vm1405 = vcmp.gt.f32.partialorder %v1342, 0.0
  %vm1406 = vcmp.gt.f32.partialorder %v1356, 0.0
  %vm1407 = vcmp.gt.f32.partialorder %v1370, 0.0
  %vm1408 = vcmp.gt.f32.partialorder %v1384, 0.0
  %vm1409 = vcmp.gt.f32.partialorder %v1106, 0.0
  %vm1410 = vcmp.gt.f32.partialorder %v1120, 0.0
  %vm1411 = vcmp.gt.f32.partialorder %v1134, 0.0
  %vm1412 = vcmp.gt.f32.partialorder %v1148, 0.0
  %vm1413 = vcmp.gt.f32.partialorder %v1162, 0.0
  %vm1414 = vcmp.gt.f32.partialorder %v1176, 0.0
  %vm1415 = vcmp.gt.f32.partialorder %v1190, 0.0
  %vm1416 = vcmp.gt.f32.partialorder %v1204, 0.0
  %vm1417 = vcmp.gt.f32.partialorder %v1218, 0.0
  %vm1418 = vcmp.gt.f32.partialorder %v1232, 0.0
  %vm1419 = vcmp.gt.f32.partialorder %v1246, 0.0
  %vm1420 = vcmp.gt.f32.partialorder %v1260, 0.0
  %vm1421 = vcmp.gt.f32.partialorder %v1274, 0.0
  %vm1422 = vcmp.gt.f32.partialorder %v1288, 0.0
  %vm1423 = vcmp.gt.f32.partialorder %v1302, 0.0
  %vm1424 = vcmp.gt.f32.partialorder %v1316, 0.0
  %vm1425 = vcmp.gt.f32.partialorder %v1330, 0.0
  %vm1426 = vcmp.gt.f32.partialorder %v1344, 0.0
  %vm1427 = vcmp.gt.f32.partialorder %v1358, 0.0
  %vm1428 = vcmp.gt.f32.partialorder %v1372, 0.0
  %vm1429 = vcmp.gt.f32.partialorder %v1386, 0.0
  %v1430 = vmul.f32 %v1104, 0.1
  %v1431 = vmul.f32 %v1118, 0.1
  %v1432 = vmul.f32 %v1132, 0.1
  %v1433 = vmul.f32 %v1146, 0.1
  %v1434 = vmul.f32 %v1160, 0.1
  %v1435 = vmul.f32 %v1174, 0.1
  %v1436 = vmul.f32 %v1188, 0.1
  %v1437 = vmul.f32 %v1202, 0.1
  %v1438 = vmul.f32 %v1216, 0.1
  %v1439 = vmul.f32 %v1230, 0.1
  %v1440 = vmul.f32 %v1244, 0.1
  %v1441 = vmul.f32 %v1258, 0.1
  %v1442 = vmul.f32 %v1272, 0.1
  %v1443 = vmul.f32 %v1286, 0.1
  %v1444 = vmul.f32 %v1300, 0.1
  %v1445 = vmul.f32 %v1314, 0.1
  %v1446 = vmul.f32 %v1328, 0.1
  %v1447 = vmul.f32 %v1342, 0.1
  %v1448 = vmul.f32 %v1356, 0.1
  %v1449 = vmul.f32 %v1370, 0.1
  %v1450 = vmul.f32 %v1384, 0.1
  %v1451 = vmul.f32 %v1106, 0.1
  %v1452 = vmul.f32 %v1120, 0.1
  %v1453 = vmul.f32 %v1134, 0.1
  %v1454 = vmul.f32 %v1148, 0.1
  %v1455 = vmul.f32 %v1162, 0.1
  %v1456 = vmul.f32 %v1176, 0.1
  %v1457 = vmul.f32 %v1190, 0.1
  %v1458 = vmul.f32 %v1204, 0.1
  %v1459 = vmul.f32 %v1218, 0.1
  %v1460 = vmul.f32 %v1232, 0.1
  %v1461 = vmul.f32 %v1246, 0.1
  %v1462 = vmul.f32 %v1260, 0.1
  %v1463 = vmul.f32 %v1274, 0.1
  %v1464 = vmul.f32 %v1288, 0.1
  %v1465 = vmul.f32 %v1302, 0.1
  %v1466 = vmul.f32 %v1316, 0.1
  %v1467 = vmul.f32 %v1330, 0.1
  %v1468 = vmul.f32 %v1344, 0.1
  %v1469 = vmul.f32 %v1358, 0.1
  %v1470 = vmul.f32 %v1372, 0.1
  %v1471 = vmul.f32 %v1386, 0.1
  %v1472 = vsel %vm1388, %v1104, %v1430
  %v1473 = vsel %vm1389, %v1118, %v1431
  %v1474 = vsel %vm1390, %v1132, %v1432
  %v1475 = vsel %vm1391, %v1146, %v1433
  %v1476 = vsel %vm1392, %v1160, %v1434
  %v1477 = vsel %vm1393, %v1174, %v1435
  %v1478 = vsel %vm1394, %v1188, %v1436
  %v1479 = vsel %vm1395, %v1202, %v1437
  %v1480 = vsel %vm1396, %v1216, %v1438
  %v1481 = vsel %vm1397, %v1230, %v1439
  %v1482 = vsel %vm1398, %v1244, %v1440
  %v1483 = vsel %vm1399, %v1258, %v1441
  %v1484 = vsel %vm1400, %v1272, %v1442
  %v1485 = vsel %vm1401, %v1286, %v1443
  %v1486 = vsel %vm1402, %v1300, %v1444
  %v1487 = vsel %vm1403, %v1314, %v1445
  %v1488 = vsel %vm1404, %v1328, %v1446
  %v1489 = vsel %vm1405, %v1342, %v1447
  %v1490 = vsel %vm1406, %v1356, %v1448
  %v1491 = vsel %vm1407, %v1370, %v1449
  %v1492 = vsel %vm1408, %v1384, %v1450
  %v1493 = vsel %vm1409, %v1106, %v1451
  %v1494 = vsel %vm1410, %v1120, %v1452
  %v1495 = vsel %vm1411, %v1134, %v1453
  %v1496 = vsel %vm1412, %v1148, %v1454
  %v1497 = vsel %vm1413, %v1162, %v1455
  %v1498 = vsel %vm1414, %v1176, %v1456
  %v1499 = vsel %vm1415, %v1190, %v1457
  %v1500 = vsel %vm1416, %v1204, %v1458
  %v1501 = vsel %vm1417, %v1218, %v1459
  %v1502 = vsel %vm1418, %v1232, %v1460
  %v1503 = vsel %vm1419, %v1246, %v1461
  %v1504 = vsel %vm1420, %v1260, %v1462
  %v1505 = vsel %vm1421, %v1274, %v1463
  %v1506 = vsel %vm1422, %v1288, %v1464
  %v1507 = vsel %vm1423, %v1302, %v1465
  %v1508 = vsel %vm1424, %v1316, %v1466
  %v1509 = vsel %vm1425, %v1330, %v1467
  %v1510 = vsel %vm1426, %v1344, %v1468
  %v1511 = vsel %vm1427, %v1358, %v1469
  %v1512 = vsel %vm1428, %v1372, %v1470
  %v1513 = vsel %vm1429, %v1386, %v1471
  %v1514 = vpack.c.bf16 %v1473, %v1472
  %v1515 = vpack.c.bf16 %v1475, %v1474
  %v1516 = vpack.c.bf16 %v1477, %v1476
  %v1517 = vpack.c.bf16 %v1479, %v1478
  %v1518 = vpack.c.bf16 %v1481, %v1480
  %v1519 = vpack.c.bf16 %v1483, %v1482
  %v1520 = vpack.c.bf16 %v1485, %v1484
  %v1521 = vpack.c.bf16 %v1487, %v1486
  %v1522 = vpack.c.bf16 %v1489, %v1488
  %v1523 = vpack.c.bf16 %v1491, %v1490
  %v1524 = vpack.c.bf16 %v1492, %v1492
  %v1525 = vpack.c.bf16 %v1494, %v1493
  %v1526 = vpack.c.bf16 %v1496, %v1495
  %v1527 = vpack.c.bf16 %v1498, %v1497
  %v1528 = vpack.c.bf16 %v1500, %v1499
  %v1529 = vpack.c.bf16 %v1502, %v1501
  %v1530 = vpack.c.bf16 %v1504, %v1503
  %v1531 = vpack.c.bf16 %v1506, %v1505
  %v1532 = vpack.c.bf16 %v1508, %v1507
  %v1533 = vpack.c.bf16 %v1510, %v1509
  %v1534 = vpack.c.bf16 %v1512, %v1511
  %v1535 = vpack.c.bf16 %v1513, %v1513
  %1536 = vst [vmem:[%s3] sm:$0xff] %v1514
  %1537 = vst [vmem:[%s3 + $0x8] sm:$0xff] %v1515
  %1538 = vst [vmem:[%s3 + $0x10] sm:$0xff] %v1516
  %1539 = vst [vmem:[%s3 + $0x18] sm:$0xff] %v1517
  %1540 = vst [vmem:[%s3 + $0x20] sm:$0xff] %v1518
  %1541 = vst [vmem:[%s3 + $0x28] sm:$0xff] %v1519
  %1542 = vst [vmem:[%s3 + $0x30] sm:$0xff] %v1520
  %1543 = vst [vmem:[%s3 + $0x38] sm:$0xff] %v1521
  %1544 = vst [vmem:[%s3 + $0x40] sm:$0xff] %v1522
  %1545 = vst [vmem:[%s3 + $0x48] sm:$0xff] %v1523
  %1546 = vst [vmem:[%s3 + $0x50] sm:$0xf] %v1524
  %1547 = vst [vmem:[%s3 + $0x54] sm:$0xff] %v1525
  %1548 = vst [vmem:[%s3 + $0x5c] sm:$0xff] %v1526
  %1549 = vst [vmem:[%s3 + $0x64] sm:$0xff] %v1527
  %1550 = vst [vmem:[%s3 + $0x6c] sm:$0xff] %v1528
  %1551 = vst [vmem:[%s3 + $0x74] sm:$0xff] %v1529
  %1552 = vst [vmem:[%s3 + $0x7c] sm:$0xff] %v1530
  %1553 = vst [vmem:[%s3 + $0x84] sm:$0xff] %v1531
  %1554 = vst [vmem:[%s3 + $0x8c] sm:$0xff] %v1532
  %1555 = vst [vmem:[%s3 + $0x94] sm:$0xff] %v1533
  %1556 = vst [vmem:[%s3 + $0x9c] sm:$0xff] %v1534
  %1557 = vst [vmem:[%s3 + $0xa4] sm:$0xf] %v1535
  // Predicated region
  $region14: #{forward.17} parent=0 // pred_check
    _
  $region15: #{forward.17} parent=0 // pred_check_branch
    %1559 = sbr.rel (0) target = $region17
  $region16: #{forward.17} parent=0 // pred_region
    _
  $region17: #{forward.17} parent=0 // pred_fallthru
    _
  // Predicated region
  $region18: #{forward.17} parent=0 // pred_check
    _
  $region19: #{forward.17} parent=0 // pred_check_branch
    %1561 = sbr.rel (0) target = $region21
  $region20: #{forward.17} parent=0 // pred_region
    _
  $region21: #{forward.17} parent=0 // pred_fallthru
    _

// kernel: forward.18
$region0: #{forward.18}
  #allocation0 [shape = 'u32[]', space=smem, size = 0x4, offset = 0x4, fixed_abs, tag = 'smem constant byte address 0x4 - core index']
  #allocation1 [shape = 'u32[72,128]{1,0:T(1,128)}', space=vmem, size = 0x9000, scoped, tag = 'internal scratch']
  %s0 = inlined_call_operand.vmem [shape: bf16[208,128], index: 0, kind: input, shape index: {}]
  %s1 = inlined_call_operand.vmem [shape: bf16[128,128], index: 1, kind: input, shape index: {}]
  %s2 = inlined_call_operand.vmem [shape: f32[1,128], index: 2, kind: input, shape index: {}]
  %s3 = inlined_call_operand.vmem [shape: bf16[208,128], index: 3, kind: output, shape index: {}]
  %s4 = sld [smem:[#allocation0]]
  $region22: #{forward.18} parent=0
    _
  %s6 = ssub.s32 1, %s4
  %s7 = scalar_select 0, %s6, %s4
  // Predicated region
  $region2: #{forward.18} parent=0 // pred_check
    _
  $region3: #{forward.18} parent=0 // pred_check_branch
    %9 = sbr.rel (0) target = $region5
  $region4: #{forward.18} parent=0 // pred_region
    _
  $region5: #{forward.18} parent=0 // pred_fallthru
    _
  // Predicated region
  $region6: #{forward.18} parent=0 // pred_check
    _
  $region7: #{forward.18} parent=0 // pred_check_branch
    %11 = sbr.rel (0) target = $region9
  $region8: #{forward.18} parent=0 // pred_region
    _
  $region9: #{forward.18} parent=0 // pred_fallthru
    _
  // Predicated region
  $region10: #{forward.18} parent=0 // pred_check
    _
  $region11: #{forward.18} parent=0 // pred_check_branch
    %13 = sbr.rel (0) target = $region13
  $region12: #{forward.18} parent=0 // pred_region
    _
  $region13: #{forward.18} parent=0 // pred_fallthru
    _
  %v14 = vld [vmem:[%s0] sm:$0xf]
  %v15 = vld [vmem:[%s0 + $0x4] sm:$0xf]
  %v16 = vld [vmem:[%s0 + $0x8] sm:$0xf]
  %v17 = vld [vmem:[%s0 + $0xc] sm:$0xf]
  %v18 = vld [vmem:[%s0 + $0x10] sm:$0xf]
  %v19 = vld [vmem:[%s0 + $0x14] sm:$0xf]
  %v20 = vld [vmem:[%s0 + $0x18] sm:$0xf]
  %v21 = vld [vmem:[%s0 + $0x1c] sm:$0xf]
  %v22 = vld [vmem:[%s0 + $0x20] sm:$0xf]
  %v23 = vld [vmem:[%s0 + $0x24] sm:$0xf]
  %v24 = vld [vmem:[%s0 + $0x28] sm:$0xf]
  %v25 = vld [vmem:[%s0 + $0x2c] sm:$0xf]
  %v26 = vld [vmem:[%s0 + $0x30] sm:$0xf]
  %v27 = vld [vmem:[%s0 + $0x34] sm:$0xf]
  %v28 = vld [vmem:[%s0 + $0x38] sm:$0xf]
  %v29 = vld [vmem:[%s0 + $0x3c] sm:$0xf]
  %v30 = vld [vmem:[%s0 + $0x40] sm:$0xf]
  %v31 = vld [vmem:[%s0 + $0x44] sm:$0xf]
  %v32 = vld [vmem:[%s0 + $0x48] sm:$0xf]
  %v33 = vld [vmem:[%s0 + $0x4c] sm:$0xf]
  %v34 = vld [vmem:[%s0 + $0x50] sm:$0xf]
  %v35 = vld [vmem:[%s0 + $0x54] sm:$0xf]
  %v36 = vld [vmem:[%s0 + $0x58] sm:$0xf]
  %v37 = vld [vmem:[%s0 + $0x5c] sm:$0xf]
  %v38 = vld [vmem:[%s0 + $0x60] sm:$0xf]
  %v39 = vld [vmem:[%s0 + $0x64] sm:$0xf]
  %v40 = vld [vmem:[%s1] sm:$0xf]
  %v41 = vld [vmem:[%s1 + $0x4] sm:$0xf]
  %v42 = vld [vmem:[%s1 + $0x8] sm:$0xf]
  %v43 = vld [vmem:[%s1 + $0xc] sm:$0xf]
  %v44 = vld [vmem:[%s1 + $0x10] sm:$0xf]
  %v45 = vld [vmem:[%s1 + $0x14] sm:$0xf]
  %v46 = vld [vmem:[%s1 + $0x18] sm:$0xf]
  %v47 = vld [vmem:[%s1 + $0x1c] sm:$0xf]
  %v48 = vld [vmem:[%s1 + $0x20] sm:$0xf]
  %v49 = vld [vmem:[%s1 + $0x24] sm:$0xf]
  %v50 = vld [vmem:[%s1 + $0x28] sm:$0xf]
  %v51 = vld [vmem:[%s1 + $0x2c] sm:$0xf]
  %v52 = vld [vmem:[%s1 + $0x30] sm:$0xf]
  %v53 = vld [vmem:[%s1 + $0x34] sm:$0xf]
  %v54 = vld [vmem:[%s1 + $0x38] sm:$0xf]
  %v55 = vld [vmem:[%s1 + $0x3c] sm:$0xf]
  %v56 = vld [vmem:[%s2] sm:$0x1]
  %v58 = vperm.slane %v56, 0
  %v86 = vunpack.c.l.b16 %v14
  %v87 = vunpack.c.l.b16 %v15
  %v88 = vunpack.c.l.b16 %v16
  %v89 = vunpack.c.l.b16 %v17
  %v90 = vunpack.c.l.b16 %v18
  %v91 = vunpack.c.l.b16 %v19
  %v92 = vunpack.c.l.b16 %v20
  %v93 = vunpack.c.l.b16 %v21
  %v94 = vunpack.c.l.b16 %v22
  %v95 = vunpack.c.l.b16 %v23
  %v96 = vunpack.c.l.b16 %v24
  %v97 = vunpack.c.l.b16 %v25
  %v98 = vunpack.c.l.b16 %v26
  %v99 = vunpack.c.l.b16 %v27
  %v100 = vunpack.c.l.b16 %v28
  %v101 = vunpack.c.l.b16 %v29
  %v102 = vunpack.c.l.b16 %v30
  %v103 = vunpack.c.l.b16 %v31
  %v104 = vunpack.c.l.b16 %v32
  %v105 = vunpack.c.l.b16 %v33
  %v106 = vunpack.c.l.b16 %v34
  %v107 = vunpack.c.l.b16 %v35
  %v108 = vunpack.c.l.b16 %v36
  %v109 = vunpack.c.l.b16 %v37
  %v110 = vunpack.c.l.b16 %v38
  %v111 = vunpack.c.l.b16 %v39
  %v112 = vpack.c.b16 %v87, %v86
  %v113 = vpack.c.b16 %v89, %v88
  %v114 = vpack.c.b16 %v91, %v90
  %v115 = vpack.c.b16 %v93, %v92
  %v116 = vpack.c.b16 %v95, %v94
  %v117 = vpack.c.b16 %v97, %v96
  %v118 = vpack.c.b16 %v99, %v98
  %v119 = vpack.c.b16 %v101, %v100
  %v120 = vpack.c.b16 %v103, %v102
  %v121 = vpack.c.b16 %v105, %v104
  %v122 = vpack.c.b16 %v107, %v106
  %v123 = vpack.c.b16 %v109, %v108
  %v124 = vpack.c.b16 %v111, %v110
  %v154 = vunpack.c.l.b16 %v40
  %v155 = vunpack.c.l.b16 %v41
  %v156 = vunpack.c.l.b16 %v42
  %v157 = vunpack.c.l.b16 %v43
  %v158 = vunpack.c.l.b16 %v44
  %v159 = vunpack.c.l.b16 %v45
  %v160 = vunpack.c.l.b16 %v46
  %v161 = vunpack.c.l.b16 %v47
  %v162 = vunpack.c.l.b16 %v48
  %v163 = vunpack.c.l.b16 %v49
  %v164 = vunpack.c.l.b16 %v50
  %v165 = vunpack.c.l.b16 %v51
  %v166 = vunpack.c.l.b16 %v52
  %v167 = vunpack.c.l.b16 %v53
  %v168 = vunpack.c.l.b16 %v54
  %v169 = vunpack.c.l.b16 %v55
  %v170 = vpack.c.b16 %v155, %v154
  %v171 = vpack.c.b16 %v157, %v156
  %v172 = vpack.c.b16 %v159, %v158
  %v173 = vpack.c.b16 %v161, %v160
  %v174 = vpack.c.b16 %v163, %v162
  %v175 = vpack.c.b16 %v165, %v164
  %v176 = vpack.c.b16 %v167, %v166
  %v177 = vpack.c.b16 %v169, %v168
  %186 = vmatpush.bf16.msra.mxu0 %v177
  %187 = vmatpush.bf16.msra.mxu0 %v176
  %188 = vmatpush.bf16.msra.mxu0 %v175
  %189 = vmatpush.bf16.msra.mxu0 %v174
  %190 = vmatpush.bf16.msra.mxu0 %v173
  %191 = vmatpush.bf16.msra.mxu0 %v172
  %192 = vmatpush.bf16.msra.mxu0 %v171
  %193 = vmatpush.bf16.msra.mxu0 %v170
  %194 = vmatmul.bf16.gmra.mxu0 %v112
  %v195 = vpop.f32.mrf.mxu0
  %v196 = vadd.f32 %v58, %v195
  %v197 = vpop.f32.mrf.mxu0
  %v198 = vadd.f32 %v58, %v197
  %199 = vmatmul.bf16.gmra.mxu0 %v113
  %v200 = vpop.f32.mrf.mxu0
  %v201 = vadd.f32 %v58, %v200
  %v202 = vpop.f32.mrf.mxu0
  %v203 = vadd.f32 %v58, %v202
  %204 = vmatmul.bf16.gmra.mxu0 %v114
  %v205 = vpop.f32.mrf.mxu0
  %v206 = vadd.f32 %v58, %v205
  %v207 = vpop.f32.mrf.mxu0
  %v208 = vadd.f32 %v58, %v207
  %209 = vmatmul.bf16.gmra.mxu0 %v115
  %v210 = vpop.f32.mrf.mxu0
  %v211 = vadd.f32 %v58, %v210
  %v212 = vpop.f32.mrf.mxu0
  %v213 = vadd.f32 %v58, %v212
  %214 = vmatmul.bf16.gmra.mxu0 %v116
  %v215 = vpop.f32.mrf.mxu0
  %v216 = vadd.f32 %v58, %v215
  %v217 = vpop.f32.mrf.mxu0
  %v218 = vadd.f32 %v58, %v217
  %219 = vmatmul.bf16.gmra.mxu0 %v117
  %v220 = vpop.f32.mrf.mxu0
  %v221 = vadd.f32 %v58, %v220
  %v222 = vpop.f32.mrf.mxu0
  %v223 = vadd.f32 %v58, %v222
  %224 = vmatmul.bf16.gmra.mxu0 %v118
  %v225 = vpop.f32.mrf.mxu0
  %v226 = vadd.f32 %v58, %v225
  %v227 = vpop.f32.mrf.mxu0
  %v228 = vadd.f32 %v58, %v227
  %229 = vmatmul.bf16.gmra.mxu0 %v119
  %v230 = vpop.f32.mrf.mxu0
  %v231 = vadd.f32 %v58, %v230
  %v232 = vpop.f32.mrf.mxu0
  %v233 = vadd.f32 %v58, %v232
  %234 = vmatmul.bf16.gmra.mxu0 %v120
  %v235 = vpop.f32.mrf.mxu0
  %v236 = vadd.f32 %v58, %v235
  %v237 = vpop.f32.mrf.mxu0
  %v238 = vadd.f32 %v58, %v237
  %239 = vmatmul.bf16.gmra.mxu0 %v121
  %v240 = vpop.f32.mrf.mxu0
  %v241 = vadd.f32 %v58, %v240
  %v242 = vpop.f32.mrf.mxu0
  %v243 = vadd.f32 %v58, %v242
  %244 = vmatmul.bf16.gmra.mxu0 %v122
  %v245 = vpop.f32.mrf.mxu0
  %v246 = vadd.f32 %v58, %v245
  %v247 = vpop.f32.mrf.mxu0
  %v248 = vadd.f32 %v58, %v247
  %249 = vmatmul.bf16.gmra.mxu0 %v123
  %v250 = vpop.f32.mrf.mxu0
  %v251 = vadd.f32 %v58, %v250
  %v252 = vpop.f32.mrf.mxu0
  %v253 = vadd.f32 %v58, %v252
  %254 = vmatmul.bf16.gmra.mxu0 %v124
  %v255 = vpop.f32.mrf.mxu0
  %v256 = vadd.f32 %v58, %v255
  %v257 = vpop.f32.mrf.mxu0
  %v258 = vadd.f32 %v58, %v257
  %259 = vdwg.mxu0
  %vm260 = vcmp.gt.f32.partialorder %v196, 0.0
  %vm261 = vcmp.gt.f32.partialorder %v198, 0.0
  %vm262 = vcmp.gt.f32.partialorder %v201, 0.0
  %vm263 = vcmp.gt.f32.partialorder %v203, 0.0
  %vm264 = vcmp.gt.f32.partialorder %v206, 0.0
  %vm265 = vcmp.gt.f32.partialorder %v208, 0.0
  %vm266 = vcmp.gt.f32.partialorder %v211, 0.0
  %vm267 = vcmp.gt.f32.partialorder %v213, 0.0
  %vm268 = vcmp.gt.f32.partialorder %v216, 0.0
  %vm269 = vcmp.gt.f32.partialorder %v218, 0.0
  %vm270 = vcmp.gt.f32.partialorder %v221, 0.0
  %vm271 = vcmp.gt.f32.partialorder %v223, 0.0
  %vm272 = vcmp.gt.f32.partialorder %v226, 0.0
  %vm273 = vcmp.gt.f32.partialorder %v228, 0.0
  %vm274 = vcmp.gt.f32.partialorder %v231, 0.0
  %vm275 = vcmp.gt.f32.partialorder %v233, 0.0
  %vm276 = vcmp.gt.f32.partialorder %v236, 0.0
  %vm277 = vcmp.gt.f32.partialorder %v238, 0.0
  %vm278 = vcmp.gt.f32.partialorder %v241, 0.0
  %vm279 = vcmp.gt.f32.partialorder %v243, 0.0
  %vm280 = vcmp.gt.f32.partialorder %v246, 0.0
  %vm281 = vcmp.gt.f32.partialorder %v248, 0.0
  %vm282 = vcmp.gt.f32.partialorder %v251, 0.0
  %vm283 = vcmp.gt.f32.partialorder %v253, 0.0
  %vm284 = vcmp.gt.f32.partialorder %v256, 0.0
  %vm285 = vcmp.gt.f32.partialorder %v258, 0.0
  %v286 = vmul.f32 %v196, 0.1
  %v287 = vmul.f32 %v198, 0.1
  %v288 = vmul.f32 %v201, 0.1
  %v289 = vmul.f32 %v203, 0.1
  %v290 = vmul.f32 %v206, 0.1
  %v291 = vmul.f32 %v208, 0.1
  %v292 = vmul.f32 %v211, 0.1
  %v293 = vmul.f32 %v213, 0.1
  %v294 = vmul.f32 %v216, 0.1
  %v295 = vmul.f32 %v218, 0.1
  %v296 = vmul.f32 %v221, 0.1
  %v297 = vmul.f32 %v223, 0.1
  %v298 = vmul.f32 %v226, 0.1
  %v299 = vmul.f32 %v228, 0.1
  %v300 = vmul.f32 %v231, 0.1
  %v301 = vmul.f32 %v233, 0.1
  %v302 = vmul.f32 %v236, 0.1
  %v303 = vmul.f32 %v238, 0.1
  %v304 = vmul.f32 %v241, 0.1
  %v305 = vmul.f32 %v243, 0.1
  %v306 = vmul.f32 %v246, 0.1
  %v307 = vmul.f32 %v248, 0.1
  %v308 = vmul.f32 %v251, 0.1
  %v309 = vmul.f32 %v253, 0.1
  %v310 = vmul.f32 %v256, 0.1
  %v311 = vmul.f32 %v258, 0.1
  %v312 = vsel %vm260, %v196, %v286
  %v313 = vsel %vm261, %v198, %v287
  %v314 = vsel %vm262, %v201, %v288
  %v315 = vsel %vm263, %v203, %v289
  %v316 = vsel %vm264, %v206, %v290
  %v317 = vsel %vm265, %v208, %v291
  %v318 = vsel %vm266, %v211, %v292
  %v319 = vsel %vm267, %v213, %v293
  %v320 = vsel %vm268, %v216, %v294
  %v321 = vsel %vm269, %v218, %v295
  %v322 = vsel %vm270, %v221, %v296
  %v323 = vsel %vm271, %v223, %v297
  %v324 = vsel %vm272, %v226, %v298
  %v325 = vsel %vm273, %v228, %v299
  %v326 = vsel %vm274, %v231, %v300
  %v327 = vsel %vm275, %v233, %v301
  %v328 = vsel %vm276, %v236, %v302
  %v329 = vsel %vm277, %v238, %v303
  %v330 = vsel %vm278, %v241, %v304
  %v331 = vsel %vm279, %v243, %v305
  %v332 = vsel %vm280, %v246, %v306
  %v333 = vsel %vm281, %v248, %v307
  %v334 = vsel %vm282, %v251, %v308
  %v335 = vsel %vm283, %v253, %v309
  %v336 = vsel %vm284, %v256, %v310
  %v337 = vsel %vm285, %v258, %v311
  %v338 = vpack.c.bf16 %v312, %v312
  %v339 = vpack.c.bf16 %v313, %v313
  %v340 = vpack.c.bf16 %v314, %v314
  %v341 = vpack.c.bf16 %v315, %v315
  %v342 = vpack.c.bf16 %v316, %v316
  %v343 = vpack.c.bf16 %v317, %v317
  %v344 = vpack.c.bf16 %v318, %v318
  %v345 = vpack.c.bf16 %v319, %v319
  %v346 = vpack.c.bf16 %v320, %v320
  %v347 = vpack.c.bf16 %v321, %v321
  %v348 = vpack.c.bf16 %v322, %v322
  %v349 = vpack.c.bf16 %v323, %v323
  %v350 = vpack.c.bf16 %v324, %v324
  %v351 = vpack.c.bf16 %v325, %v325
  %v352 = vpack.c.bf16 %v326, %v326
  %v353 = vpack.c.bf16 %v327, %v327
  %v354 = vpack.c.bf16 %v328, %v328
  %v355 = vpack.c.bf16 %v329, %v329
  %v356 = vpack.c.bf16 %v330, %v330
  %v357 = vpack.c.bf16 %v331, %v331
  %v358 = vpack.c.bf16 %v332, %v332
  %v359 = vpack.c.bf16 %v333, %v333
  %v360 = vpack.c.bf16 %v334, %v334
  %v361 = vpack.c.bf16 %v335, %v335
  %v362 = vpack.c.bf16 %v336, %v336
  %v363 = vpack.c.bf16 %v337, %v337
  %364 = vst [vmem:[%s3] sm:$0xf] %v338
  %365 = vst [vmem:[%s3 + $0x4] sm:$0xf] %v339
  %366 = vst [vmem:[%s3 + $0x8] sm:$0xf] %v340
  %367 = vst [vmem:[%s3 + $0xc] sm:$0xf] %v341
  %368 = vst [vmem:[%s3 + $0x10] sm:$0xf] %v342
  %369 = vst [vmem:[%s3 + $0x14] sm:$0xf] %v343
  %370 = vst [vmem:[%s3 + $0x18] sm:$0xf] %v344
  %371 = vst [vmem:[%s3 + $0x1c] sm:$0xf] %v345
  %372 = vst [vmem:[%s3 + $0x20] sm:$0xf] %v346
  %373 = vst [vmem:[%s3 + $0x24] sm:$0xf] %v347
  %374 = vst [vmem:[%s3 + $0x28] sm:$0xf] %v348
  %375 = vst [vmem:[%s3 + $0x2c] sm:$0xf] %v349
  %376 = vst [vmem:[%s3 + $0x30] sm:$0xf] %v350
  %377 = vst [vmem:[%s3 + $0x34] sm:$0xf] %v351
  %378 = vst [vmem:[%s3 + $0x38] sm:$0xf] %v352
  %379 = vst [vmem:[%s3 + $0x3c] sm:$0xf] %v353
  %380 = vst [vmem:[%s3 + $0x40] sm:$0xf] %v354
  %381 = vst [vmem:[%s3 + $0x44] sm:$0xf] %v355
  %382 = vst [vmem:[%s3 + $0x48] sm:$0xf] %v356
  %383 = vst [vmem:[%s3 + $0x4c] sm:$0xf] %v357
  %384 = vst [vmem:[%s3 + $0x50] sm:$0xf] %v358
  %385 = vst [vmem:[%s3 + $0x54] sm:$0xf] %v359
  %386 = vst [vmem:[%s3 + $0x58] sm:$0xf] %v360
  %387 = vst [vmem:[%s3 + $0x5c] sm:$0xf] %v361
  %388 = vst [vmem:[%s3 + $0x60] sm:$0xf] %v362
  %389 = vst [vmem:[%s3 + $0x64] sm:$0xf] %v363
  // Predicated region
  $region14: #{forward.18} parent=0 // pred_check
    _
  $region15: #{forward.18} parent=0 // pred_check_branch
    %391 = sbr.rel (0) target = $region17
  $region16: #{forward.18} parent=0 // pred_region
    _
  $region17: #{forward.18} parent=0 // pred_fallthru
    _
  // Predicated region
  $region18: #{forward.18} parent=0 // pred_check
    _
  $region19: #{forward.18} parent=0 // pred_check_branch
    %393 = sbr.rel (0) target = $region21
  $region20: #{forward.18} parent=0 // pred_region
    _
  $region21: #{forward.18} parent=0 // pred_fallthru
    _

// kernel: forward.21
$region0: #{forward.21}
  #allocation0 [shape = 'u32[]', space=smem, size = 0x4, offset = 0x4, fixed_abs, tag = 'smem constant byte address 0x4 - core index']
  #allocation1 [shape = 'u32[72,128]{1,0:T(1,128)}', space=vmem, size = 0x9000, scoped, tag = 'internal scratch']
  %s0 = inlined_call_operand.vmem [shape: bf16[13824,128], index: 0, kind: input, shape index: {}]
  %s1 = inlined_call_operand.vmem [shape: bf16[128,128], index: 1, kind: input, shape index: {}]
  %s2 = inlined_call_operand.vmem [shape: f32[1,128], index: 2, kind: input, shape index: {}]
  %s3 = inlined_call_operand.vmem [shape: f32[13824,128], index: 3, kind: output, shape index: {}]
  %s4 = sld [smem:[#allocation0]]
  $region45: #{forward.21} parent=0
    _
  %s6 = ssub.s32 1, %s4
  %s7 = scalar_select 0, %s6, %s4
  loop: start=0, step=1, limit=29
  $region2: #{forward.21} parent=0 // loop_pre_header
    _
  $region3: #{forward.21} parent=0 // loop_header
    %s9 = sphi 0, %s13
    %p10 = scmp.ge.s32.totalorder %s9, 29
    %s19 = sphi 0, %s21
    %s22 = sphi 0, %s19
    %s23 = sphi 0, %s22
    %s39 = sphi 0, %s23
    %s43 = sphi 0, %s43
    %s45 = sphi 0, %s43
    %s46 = sphi 0, %s45
    %s60 = sphi 0, %s46
    %s64 = sphi 0, %s64
    %s66 = sphi 0, %s64
    %s67 = sphi 0, %s66
    %s81 = sphi 0, %s67
    %s87 = sphi 0, %s89
    %s90 = sphi 0, %s87
    %s91 = sphi 0, %s90
    %s107 = sphi 0, %s91
  $region4: #{forward.21} parent=0 // loop_header_branch
    %12 = sbr.rel (%p10) target = $region8
  $region5: #{forward.21} parent=0 // loop_body
    %s14 = ssub.s32 %s9, 1
    %s15 = ssub.s32 %s9, 2
    %s16 = sadd.s32 %s9, 1
    %s17 = ssub.s32 %s9, %s16
    %p18 = scmp.eq.s32.totalorder %s17, 0
    %s20 = sadd.s32 %s19, 1
    %s21 = scalar_select %p18, %s19, %s20
    %p24 = pneg %p18
    %p25 = scmp.eq.s32.totalorder %s9, 26
    %p26 = por %p24, %p25
    %p27 = scmp.ne.s32.totalorder %s19, %s22
    %p28 = scmp.eq.s32.totalorder %s9, 0
    %p29 = por %p27, %p28
    %p30 = scmp.ne.s32.totalorder %s19, %s22
    %p31 = scmp.eq.s32.totalorder %s14, 26
    %p32 = por %p30, %p31
    %p33 = scmp.ne.s32.totalorder %s22, %s23
    %p34 = scmp.eq.s32.totalorder %s14, 0
    %p35 = por %p33, %p34
    %p36 = scmp.ne.s32.totalorder %s22, %s23
    %p37 = scmp.eq.s32.totalorder %s15, 26
    %p38 = por %p36, %p37
    %p40 = scmp.ne.s32.totalorder %s23, %s39
    %p41 = scmp.eq.s32.totalorder %s15, 0
    %p42 = por %p40, %p41
    %s44 = sadd.s32 %s43, 1
    %p47 = scmp.eq.s32.totalorder %s9, 26
    %p48 = scmp.ne.s32.totalorder %s43, %s45
    %p49 = scmp.eq.s32.totalorder %s9, 0
    %p50 = por %p48, %p49
    %p51 = scmp.ne.s32.totalorder %s43, %s45
    %p52 = scmp.eq.s32.totalorder %s14, 26
    %p53 = por %p51, %p52
    %p54 = scmp.ne.s32.totalorder %s45, %s46
    %p55 = scmp.eq.s32.totalorder %s14, 0
    %p56 = por %p54, %p55
    %p57 = scmp.ne.s32.totalorder %s45, %s46
    %p58 = scmp.eq.s32.totalorder %s15, 26
    %p59 = por %p57, %p58
    %p61 = scmp.ne.s32.totalorder %s46, %s60
    %p62 = scmp.eq.s32.totalorder %s15, 0
    %p63 = por %p61, %p62
    %s65 = sadd.s32 %s64, 1
    %p68 = scmp.eq.s32.totalorder %s9, 26
    %p69 = scmp.ne.s32.totalorder %s64, %s66
    %p70 = scmp.eq.s32.totalorder %s9, 0
    %p71 = por %p69, %p70
    %p72 = scmp.ne.s32.totalorder %s64, %s66
    %p73 = scmp.eq.s32.totalorder %s14, 26
    %p74 = por %p72, %p73
    %p75 = scmp.ne.s32.totalorder %s66, %s67
    %p76 = scmp.eq.s32.totalorder %s14, 0
    %p77 = por %p75, %p76
    %p78 = scmp.ne.s32.totalorder %s66, %s67
    %p79 = scmp.eq.s32.totalorder %s15, 26
    %p80 = por %p78, %p79
    %p82 = scmp.ne.s32.totalorder %s67, %s81
    %p83 = scmp.eq.s32.totalorder %s15, 0
    %p84 = por %p82, %p83
    %s85 = ssub.s32 %s9, %s16
    %p86 = scmp.eq.s32.totalorder %s85, 0
    %s88 = sadd.s32 %s87, 1
    %s89 = scalar_select %p86, %s87, %s88
    %p92 = pneg %p86
    %p93 = scmp.eq.s32.totalorder %s9, 26
    %p94 = por %p92, %p93
    %p95 = scmp.ne.s32.totalorder %s87, %s90
    %p96 = scmp.eq.s32.totalorder %s9, 0
    %p97 = por %p95, %p96
    %p98 = scmp.ne.s32.totalorder %s87, %s90
    %p99 = scmp.eq.s32.totalorder %s14, 26
    %p100 = por %p98, %p99
    %p101 = scmp.ne.s32.totalorder %s90, %s91
    %p102 = scmp.eq.s32.totalorder %s14, 0
    %p103 = por %p101, %p102
    %p104 = scmp.ne.s32.totalorder %s90, %s91
    %p105 = scmp.eq.s32.totalorder %s15, 26
    %p106 = por %p104, %p105
    %p108 = scmp.ne.s32.totalorder %s91, %s107
    %p109 = scmp.eq.s32.totalorder %s15, 0
    %p110 = por %p108, %p109
    %p111 = scmp.le.s32.totalorder 1, %s9
    %p112 = scmp.lt.s32.totalorder %s9, 28
    %p113 = pnand %p111, %p112
    %p114 = pneg %p113
    // Predicated region
    $region9: #{forward.21} parent=5 // pred_check
      _
    $region10: #{forward.21} parent=5 // pred_check_branch
      %116 = sbr.rel (%p113) target = $region12
    $region11: #{forward.21} parent=5 // pred_region
      %s117 = ssub.s32 %s9, 1
      // Predicated region
      $region13: #{forward.21} parent=11 // pred_check
        %p118 = pneg %p56
      $region14: #{forward.21} parent=11 // pred_check_branch
        %120 = sbr.rel (%p118) target = $region16
      $region15: #{forward.21} parent=11 // pred_region
        _
      $region16: #{forward.21} parent=11 // pred_fallthru
        _
      // Predicated region
      $region17: #{forward.21} parent=11 // pred_check
        %p121 = pneg %p77
      $region18: #{forward.21} parent=11 // pred_check_branch
        %123 = sbr.rel (%p121) target = $region20
      $region19: #{forward.21} parent=11 // pred_region
        _
      $region20: #{forward.21} parent=11 // pred_fallthru
        _
    $region12: #{forward.21} parent=5 // pred_fallthru
      _
    %p124 = scmp.lt.s32.totalorder %s9, 27
    // Predicated region
    $region21: #{forward.21} parent=5 // pred_check
      %p125 = pneg %p124
    $region22: #{forward.21} parent=5 // pred_check_branch
      %127 = sbr.rel (%p125) target = $region24
    $region23: #{forward.21} parent=5 // pred_region
      // Predicated region
      $region25: #{forward.21} parent=23 // pred_check
        %p128 = pneg %p29
      $region26: #{forward.21} parent=23 // pred_check_branch
        %130 = sbr.rel (%p128) target = $region28
      $region27: #{forward.21} parent=23 // pred_region
        %s131 = smul.u32 64, %s9
        %p132 = scmp.lt.s32.totalorder %s131, 1727
        %s133 = scalar_select %p132, %s131, 1727
        %s134 = smul.addr %s133, 4
        %s135 = scalar_lea.vmem %s0, %s134
        %s136 = smul.u32 64, %s9
      $region28: #{forward.21} parent=23 // pred_fallthru
        _
    $region24: #{forward.21} parent=5 // pred_fallthru
      _
    %p137 = scmp.le.s32.totalorder 1, %s9
    %p138 = scmp.lt.s32.totalorder %s9, 28
    %p139 = pnand %p137, %p138
    %p140 = pneg %p139
    // Predicated region
    $region29: #{forward.21} parent=5 // pred_check
      _
    $region30: #{forward.21} parent=5 // pred_check_branch
      %142 = sbr.rel (%p139) target = $region32
    $region31: #{forward.21} parent=5 // pred_region
      %s143 = ssub.s32 %s9, 1
      %s144 = smul.u32 64, %s14
      %p145 = scmp.lt.s32.totalorder %s144, 1727
      %s146 = scalar_select %p145, %s144, 1727
      %s147 = smul.addr %s146, 4
      %s148 = scalar_lea.vmem %s0, %s147
      %p149 = pneg %p35
      %p150 = pneg %p32
      %p151 = pneg %p56
      %p152 = pneg %p53
      %p153 = pneg %p77
      %p154 = pneg %p74
      %p155 = pneg %p103
      %p156 = pneg %p100
      %s157 = smul.u32 64, %s14
      %p158 = scmp.lt.s32.totalorder %s157, 1727
      %s159 = scalar_select %p158, %s157, 1727
      %s160 = smul.addr %s159, 8
      %s161 = scalar_lea.vmem %s3, %s160
      %s162 = smul.u32 64, %s14
      %p163 = scmp.lt.s32.totalorder %s162, 1727
      %s164 = scalar_select %p163, %s162, 1727
      %s165 = smul.addr %s164, 4
      %s166 = scalar_lea.vmem %s0, %s165
      %s167 = smul.u32 64, %s14
      %s168 = smul.u32 64, %s14
      %p169 = scmp.lt.s32.totalorder %s168, 1727
      %s170 = scalar_select %p169, %s168, 1727
      %s171 = smul.addr %s170, 8
      %s172 = scalar_lea.vmem %s3, %s171
      %s173 = smul.u32 64, %s14
      %v174 = vld [vmem:[%s166] sm:$0xf]
      %v175 = vld [vmem:[%s166 + $0x4] sm:$0xf]
      %v176 = vld [vmem:[%s166 + $0x8] sm:$0xf]
      %v177 = vld [vmem:[%s166 + $0xc] sm:$0xf]
      %v178 = vld [vmem:[%s166 + $0x10] sm:$0xf]
      %v179 = vld [vmem:[%s166 + $0x14] sm:$0xf]
      %v180 = vld [vmem:[%s166 + $0x18] sm:$0xf]
      %v181 = vld [vmem:[%s166 + $0x1c] sm:$0xf]
      %v182 = vld [vmem:[%s166 + $0x20] sm:$0xf]
      %v183 = vld [vmem:[%s166 + $0x24] sm:$0xf]
      %v184 = vld [vmem:[%s166 + $0x28] sm:$0xf]
      %v185 = vld [vmem:[%s166 + $0x2c] sm:$0xf]
      %v186 = vld [vmem:[%s166 + $0x30] sm:$0xf]
      %v187 = vld [vmem:[%s166 + $0x34] sm:$0xf]
      %v188 = vld [vmem:[%s166 + $0x38] sm:$0xf]
      %v189 = vld [vmem:[%s166 + $0x3c] sm:$0xf]
      %v190 = vld [vmem:[%s166 + $0x40] sm:$0xf]
      %v191 = vld [vmem:[%s166 + $0x44] sm:$0xf]
      %v192 = vld [vmem:[%s166 + $0x48] sm:$0xf]
      %v193 = vld [vmem:[%s166 + $0x4c] sm:$0xf]
      %v194 = vld [vmem:[%s166 + $0x50] sm:$0xf]
      %v195 = vld [vmem:[%s166 + $0x54] sm:$0xf]
      %v196 = vld [vmem:[%s166 + $0x58] sm:$0xf]
      %v197 = vld [vmem:[%s166 + $0x5c] sm:$0xf]
      %v198 = vld [vmem:[%s166 + $0x60] sm:$0xf]
      %v199 = vld [vmem:[%s166 + $0x64] sm:$0xf]
      %v200 = vld [vmem:[%s166 + $0x68] sm:$0xf]
      %v201 = vld [vmem:[%s166 + $0x6c] sm:$0xf]
      %v202 = vld [vmem:[%s166 + $0x70] sm:$0xf]
      %v203 = vld [vmem:[%s166 + $0x74] sm:$0xf]
      %v204 = vld [vmem:[%s166 + $0x78] sm:$0xf]
      %v205 = vld [vmem:[%s166 + $0x7c] sm:$0xf]
      %v206 = vld [vmem:[%s166 + $0x80] sm:$0xf]
      %v207 = vld [vmem:[%s166 + $0x84] sm:$0xf]
      %v208 = vld [vmem:[%s166 + $0x88] sm:$0xf]
      %v209 = vld [vmem:[%s166 + $0x8c] sm:$0xf]
      %v210 = vld [vmem:[%s166 + $0x90] sm:$0xf]
      %v211 = vld [vmem:[%s166 + $0x94] sm:$0xf]
      %v212 = vld [vmem:[%s166 + $0x98] sm:$0xf]
      %v213 = vld [vmem:[%s166 + $0x9c] sm:$0xf]
      %v214 = vld [vmem:[%s166 + $0xa0] sm:$0xf]
      %v215 = vld [vmem:[%s166 + $0xa4] sm:$0xf]
      %v216 = vld [vmem:[%s166 + $0xa8] sm:$0xf]
      %v217 = vld [vmem:[%s166 + $0xac] sm:$0xf]
      %v218 = vld [vmem:[%s166 + $0xb0] sm:$0xf]
      %v219 = vld [vmem:[%s166 + $0xb4] sm:$0xf]
      %v220 = vld [vmem:[%s166 + $0xb8] sm:$0xf]
      %v221 = vld [vmem:[%s166 + $0xbc] sm:$0xf]
      %v222 = vld [vmem:[%s166 + $0xc0] sm:$0xf]
      %v223 = vld [vmem:[%s166 + $0xc4] sm:$0xf]
      %v224 = vld [vmem:[%s166 + $0xc8] sm:$0xf]
      %v225 = vld [vmem:[%s166 + $0xcc] sm:$0xf]
      %v226 = vld [vmem:[%s166 + $0xd0] sm:$0xf]
      %v227 = vld [vmem:[%s166 + $0xd4] sm:$0xf]
      %v228 = vld [vmem:[%s166 + $0xd8] sm:$0xf]
      %v229 = vld [vmem:[%s166 + $0xdc] sm:$0xf]
      %v230 = vld [vmem:[%s166 + $0xe0] sm:$0xf]
      %v231 = vld [vmem:[%s166 + $0xe4] sm:$0xf]
      %v232 = vld [vmem:[%s166 + $0xe8] sm:$0xf]
      %v233 = vld [vmem:[%s166 + $0xec] sm:$0xf]
      %v234 = vld [vmem:[%s166 + $0xf0] sm:$0xf]
      %v235 = vld [vmem:[%s166 + $0xf4] sm:$0xf]
      %v236 = vld [vmem:[%s166 + $0xf8] sm:$0xf]
      %v237 = vld [vmem:[%s166 + $0xfc] sm:$0xf]
      %v238 = vld [vmem:[%s1] sm:$0xf]
      %v239 = vld [vmem:[%s1 + $0x4] sm:$0xf]
      %v240 = vld [vmem:[%s1 + $0x8] sm:$0xf]
      %v241 = vld [vmem:[%s1 + $0xc] sm:$0xf]
      %v242 = vld [vmem:[%s1 + $0x10] sm:$0xf]
      %v243 = vld [vmem:[%s1 + $0x14] sm:$0xf]
      %v244 = vld [vmem:[%s1 + $0x18] sm:$0xf]
      %v245 = vld [vmem:[%s1 + $0x1c] sm:$0xf]
      %v246 = vld [vmem:[%s1 + $0x20] sm:$0xf]
      %v247 = vld [vmem:[%s1 + $0x24] sm:$0xf]
      %v248 = vld [vmem:[%s1 + $0x28] sm:$0xf]
      %v249 = vld [vmem:[%s1 + $0x2c] sm:$0xf]
      %v250 = vld [vmem:[%s1 + $0x30] sm:$0xf]
      %v251 = vld [vmem:[%s1 + $0x34] sm:$0xf]
      %v252 = vld [vmem:[%s1 + $0x38] sm:$0xf]
      %v253 = vld [vmem:[%s1 + $0x3c] sm:$0xf]
      %v254 = vld [vmem:[%s2] sm:$0x1]
      %v256 = vperm.slane %v254, 0
      %v322 = vunpack.c.l.b16 %v174
      %v323 = vunpack.c.l.b16 %v175
      %v324 = vunpack.c.l.b16 %v176
      %v325 = vunpack.c.l.b16 %v177
      %v326 = vunpack.c.l.b16 %v178
      %v327 = vunpack.c.l.b16 %v179
      %v328 = vunpack.c.l.b16 %v180
      %v329 = vunpack.c.l.b16 %v181
      %v330 = vunpack.c.l.b16 %v182
      %v331 = vunpack.c.l.b16 %v183
      %v332 = vunpack.c.l.b16 %v184
      %v333 = vunpack.c.l.b16 %v185
      %v334 = vunpack.c.l.b16 %v186
      %v335 = vunpack.c.l.b16 %v187
      %v336 = vunpack.c.l.b16 %v188
      %v337 = vunpack.c.l.b16 %v189
      %v338 = vunpack.c.l.b16 %v190
      %v339 = vunpack.c.l.b16 %v191
      %v340 = vunpack.c.l.b16 %v192
      %v341 = vunpack.c.l.b16 %v193
      %v342 = vunpack.c.l.b16 %v194
      %v343 = vunpack.c.l.b16 %v195
      %v344 = vunpack.c.l.b16 %v196
      %v345 = vunpack.c.l.b16 %v197
      %v346 = vunpack.c.l.b16 %v198
      %v347 = vunpack.c.l.b16 %v199
      %v348 = vunpack.c.l.b16 %v200
      %v349 = vunpack.c.l.b16 %v201
      %v350 = vunpack.c.l.b16 %v202
      %v351 = vunpack.c.l.b16 %v203
      %v352 = vunpack.c.l.b16 %v204
      %v353 = vunpack.c.l.b16 %v205
      %v354 = vunpack.c.l.b16 %v206
      %v355 = vunpack.c.l.b16 %v207
      %v356 = vunpack.c.l.b16 %v208
      %v357 = vunpack.c.l.b16 %v209
      %v358 = vunpack.c.l.b16 %v210
      %v359 = vunpack.c.l.b16 %v211
      %v360 = vunpack.c.l.b16 %v212
      %v361 = vunpack.c.l.b16 %v213
      %v362 = vunpack.c.l.b16 %v214
      %v363 = vunpack.c.l.b16 %v215
      %v364 = vunpack.c.l.b16 %v216
      %v365 = vunpack.c.l.b16 %v217
      %v366 = vunpack.c.l.b16 %v218
      %v367 = vunpack.c.l.b16 %v219
      %v368 = vunpack.c.l.b16 %v220
      %v369 = vunpack.c.l.b16 %v221
      %v370 = vunpack.c.l.b16 %v222
      %v371 = vunpack.c.l.b16 %v223
      %v372 = vunpack.c.l.b16 %v224
      %v373 = vunpack.c.l.b16 %v225
      %v374 = vunpack.c.l.b16 %v226
      %v375 = vunpack.c.l.b16 %v227
      %v376 = vunpack.c.l.b16 %v228
      %v377 = vunpack.c.l.b16 %v229
      %v378 = vunpack.c.l.b16 %v230
      %v379 = vunpack.c.l.b16 %v231
      %v380 = vunpack.c.l.b16 %v232
      %v381 = vunpack.c.l.b16 %v233
      %v382 = vunpack.c.l.b16 %v234
      %v383 = vunpack.c.l.b16 %v235
      %v384 = vunpack.c.l.b16 %v236
      %v385 = vunpack.c.l.b16 %v237
      %v386 = vpack.c.b16 %v323, %v322
      %v387 = vpack.c.b16 %v325, %v324
      %v388 = vpack.c.b16 %v327, %v326
      %v389 = vpack.c.b16 %v329, %v328
      %v390 = vpack.c.b16 %v331, %v330
      %v391 = vpack.c.b16 %v333, %v332
      %v392 = vpack.c.b16 %v335, %v334
      %v393 = vpack.c.b16 %v337, %v336
      %v394 = vpack.c.b16 %v339, %v338
      %v395 = vpack.c.b16 %v341, %v340
      %v396 = vpack.c.b16 %v343, %v342
      %v397 = vpack.c.b16 %v345, %v344
      %v398 = vpack.c.b16 %v347, %v346
      %v399 = vpack.c.b16 %v349, %v348
      %v400 = vpack.c.b16 %v351, %v350
      %v401 = vpack.c.b16 %v353, %v352
      %v402 = vpack.c.b16 %v355, %v354
      %v403 = vpack.c.b16 %v357, %v356
      %v404 = vpack.c.b16 %v359, %v358
      %v405 = vpack.c.b16 %v361, %v360
      %v406 = vpack.c.b16 %v363, %v362
      %v407 = vpack.c.b16 %v365, %v364
      %v408 = vpack.c.b16 %v367, %v366
      %v409 = vpack.c.b16 %v369, %v368
      %v410 = vpack.c.b16 %v371, %v370
      %v411 = vpack.c.b16 %v373, %v372
      %v412 = vpack.c.b16 %v375, %v374
      %v413 = vpack.c.b16 %v377, %v376
      %v414 = vpack.c.b16 %v379, %v378
      %v415 = vpack.c.b16 %v381, %v380
      %v416 = vpack.c.b16 %v383, %v382
      %v417 = vpack.c.b16 %v385, %v384
      %v466 = vunpack.c.l.b16 %v238
      %v467 = vunpack.c.l.b16 %v239
      %v468 = vunpack.c.l.b16 %v240
      %v469 = vunpack.c.l.b16 %v241
      %v470 = vunpack.c.l.b16 %v242
      %v471 = vunpack.c.l.b16 %v243
      %v472 = vunpack.c.l.b16 %v244
      %v473 = vunpack.c.l.b16 %v245
      %v474 = vunpack.c.l.b16 %v246
      %v475 = vunpack.c.l.b16 %v247
      %v476 = vunpack.c.l.b16 %v248
      %v477 = vunpack.c.l.b16 %v249
      %v478 = vunpack.c.l.b16 %v250
      %v479 = vunpack.c.l.b16 %v251
      %v480 = vunpack.c.l.b16 %v252
      %v481 = vunpack.c.l.b16 %v253
      %v482 = vpack.c.b16 %v467, %v466
      %v483 = vpack.c.b16 %v469, %v468
      %v484 = vpack.c.b16 %v471, %v470
      %v485 = vpack.c.b16 %v473, %v472
      %v486 = vpack.c.b16 %v475, %v474
      %v487 = vpack.c.b16 %v477, %v476
      %v488 = vpack.c.b16 %v479, %v478
      %v489 = vpack.c.b16 %v481, %v480
      %498 = vmatpush.bf16.msra.mxu0 %v489
      %499 = vmatpush.bf16.msra.mxu0 %v488
      %500 = vmatpush.bf16.msra.mxu0 %v487
      %501 = vmatpush.bf16.msra.mxu0 %v486
      %502 = vmatpush.bf16.msra.mxu0 %v485
      %503 = vmatpush.bf16.msra.mxu0 %v484
      %504 = vmatpush.bf16.msra.mxu0 %v483
      %505 = vmatpush.bf16.msra.mxu0 %v482
      %506 = vmatmul.bf16.gmra.mxu0 %v386
      %v507 = vpop.f32.mrf.mxu0
      %v508 = vadd.f32 %v256, %v507
      %v509 = vpop.f32.mrf.mxu0
      %v510 = vadd.f32 %v256, %v509
      %511 = vmatmul.bf16.gmra.mxu0 %v387
      %v512 = vpop.f32.mrf.mxu0
      %v513 = vadd.f32 %v256, %v512
      %v514 = vpop.f32.mrf.mxu0
      %v515 = vadd.f32 %v256, %v514
      %516 = vmatmul.bf16.gmra.mxu0 %v388
      %v517 = vpop.f32.mrf.mxu0
      %v518 = vadd.f32 %v256, %v517
      %v519 = vpop.f32.mrf.mxu0
      %v520 = vadd.f32 %v256, %v519
      %521 = vmatmul.bf16.gmra.mxu0 %v389
      %v522 = vpop.f32.mrf.mxu0
      %v523 = vadd.f32 %v256, %v522
      %v524 = vpop.f32.mrf.mxu0
      %v525 = vadd.f32 %v256, %v524
      %526 = vmatmul.bf16.gmra.mxu0 %v390
      %v527 = vpop.f32.mrf.mxu0
      %v528 = vadd.f32 %v256, %v527
      %v529 = vpop.f32.mrf.mxu0
      %v530 = vadd.f32 %v256, %v529
      %531 = vmatmul.bf16.gmra.mxu0 %v391
      %v532 = vpop.f32.mrf.mxu0
      %v533 = vadd.f32 %v256, %v532
      %v534 = vpop.f32.mrf.mxu0
      %v535 = vadd.f32 %v256, %v534
      %536 = vmatmul.bf16.gmra.mxu0 %v392
      %v537 = vpop.f32.mrf.mxu0
      %v538 = vadd.f32 %v256, %v537
      %v539 = vpop.f32.mrf.mxu0
      %v540 = vadd.f32 %v256, %v539
      %541 = vmatmul.bf16.gmra.mxu0 %v393
      %v542 = vpop.f32.mrf.mxu0
      %v543 = vadd.f32 %v256, %v542
      %v544 = vpop.f32.mrf.mxu0
      %v545 = vadd.f32 %v256, %v544
      %546 = vmatmul.bf16.gmra.mxu0 %v394
      %v547 = vpop.f32.mrf.mxu0
      %v548 = vadd.f32 %v256, %v547
      %v549 = vpop.f32.mrf.mxu0
      %v550 = vadd.f32 %v256, %v549
      %551 = vmatmul.bf16.gmra.mxu0 %v395
      %v552 = vpop.f32.mrf.mxu0
      %v553 = vadd.f32 %v256, %v552
      %v554 = vpop.f32.mrf.mxu0
      %v555 = vadd.f32 %v256, %v554
      %556 = vmatmul.bf16.gmra.mxu0 %v396
      %v557 = vpop.f32.mrf.mxu0
      %v558 = vadd.f32 %v256, %v557
      %v559 = vpop.f32.mrf.mxu0
      %v560 = vadd.f32 %v256, %v559
      %561 = vmatmul.bf16.gmra.mxu0 %v397
      %v562 = vpop.f32.mrf.mxu0
      %v563 = vadd.f32 %v256, %v562
      %v564 = vpop.f32.mrf.mxu0
      %v565 = vadd.f32 %v256, %v564
      %566 = vmatmul.bf16.gmra.mxu0 %v398
      %v567 = vpop.f32.mrf.mxu0
      %v568 = vadd.f32 %v256, %v567
      %v569 = vpop.f32.mrf.mxu0
      %v570 = vadd.f32 %v256, %v569
      %571 = vmatmul.bf16.gmra.mxu0 %v399
      %v572 = vpop.f32.mrf.mxu0
      %v573 = vadd.f32 %v256, %v572
      %v574 = vpop.f32.mrf.mxu0
      %v575 = vadd.f32 %v256, %v574
      %576 = vmatmul.bf16.gmra.mxu0 %v400
      %v577 = vpop.f32.mrf.mxu0
      %v578 = vadd.f32 %v256, %v577
      %v579 = vpop.f32.mrf.mxu0
      %v580 = vadd.f32 %v256, %v579
      %581 = vmatmul.bf16.gmra.mxu0 %v401
      %v582 = vpop.f32.mrf.mxu0
      %v583 = vadd.f32 %v256, %v582
      %v584 = vpop.f32.mrf.mxu0
      %v585 = vadd.f32 %v256, %v584
      %586 = vmatmul.bf16.gmra.mxu0 %v402
      %v587 = vpop.f32.mrf.mxu0
      %v588 = vadd.f32 %v256, %v587
      %v589 = vpop.f32.mrf.mxu0
      %v590 = vadd.f32 %v256, %v589
      %591 = vmatmul.bf16.gmra.mxu0 %v403
      %v592 = vpop.f32.mrf.mxu0
      %v593 = vadd.f32 %v256, %v592
      %v594 = vpop.f32.mrf.mxu0
      %v595 = vadd.f32 %v256, %v594
      %596 = vmatmul.bf16.gmra.mxu0 %v404
      %v597 = vpop.f32.mrf.mxu0
      %v598 = vadd.f32 %v256, %v597
      %v599 = vpop.f32.mrf.mxu0
      %v600 = vadd.f32 %v256, %v599
      %601 = vmatmul.bf16.gmra.mxu0 %v405
      %v602 = vpop.f32.mrf.mxu0
      %v603 = vadd.f32 %v256, %v602
      %v604 = vpop.f32.mrf.mxu0
      %v605 = vadd.f32 %v256, %v604
      %606 = vmatmul.bf16.gmra.mxu0 %v406
      %v607 = vpop.f32.mrf.mxu0
      %v608 = vadd.f32 %v256, %v607
      %v609 = vpop.f32.mrf.mxu0
      %v610 = vadd.f32 %v256, %v609
      %611 = vmatmul.bf16.gmra.mxu0 %v407
      %v612 = vpop.f32.mrf.mxu0
      %v613 = vadd.f32 %v256, %v612
      %v614 = vpop.f32.mrf.mxu0
      %v615 = vadd.f32 %v256, %v614
      %616 = vmatmul.bf16.gmra.mxu0 %v408
      %v617 = vpop.f32.mrf.mxu0
      %v618 = vadd.f32 %v256, %v617
      %v619 = vpop.f32.mrf.mxu0
      %v620 = vadd.f32 %v256, %v619
      %621 = vmatmul.bf16.gmra.mxu0 %v409
      %v622 = vpop.f32.mrf.mxu0
      %v623 = vadd.f32 %v256, %v622
      %v624 = vpop.f32.mrf.mxu0
      %v625 = vadd.f32 %v256, %v624
      %626 = vmatmul.bf16.gmra.mxu0 %v410
      %v627 = vpop.f32.mrf.mxu0
      %v628 = vadd.f32 %v256, %v627
      %v629 = vpop.f32.mrf.mxu0
      %v630 = vadd.f32 %v256, %v629
      %631 = vmatmul.bf16.gmra.mxu0 %v411
      %v632 = vpop.f32.mrf.mxu0
      %v633 = vadd.f32 %v256, %v632
      %v634 = vpop.f32.mrf.mxu0
      %v635 = vadd.f32 %v256, %v634
      %636 = vmatmul.bf16.gmra.mxu0 %v412
      %v637 = vpop.f32.mrf.mxu0
      %v638 = vadd.f32 %v256, %v637
      %v639 = vpop.f32.mrf.mxu0
      %v640 = vadd.f32 %v256, %v639
      %641 = vmatmul.bf16.gmra.mxu0 %v413
      %v642 = vpop.f32.mrf.mxu0
      %v643 = vadd.f32 %v256, %v642
      %v644 = vpop.f32.mrf.mxu0
      %v645 = vadd.f32 %v256, %v644
      %646 = vmatmul.bf16.gmra.mxu0 %v414
      %v647 = vpop.f32.mrf.mxu0
      %v648 = vadd.f32 %v256, %v647
      %v649 = vpop.f32.mrf.mxu0
      %v650 = vadd.f32 %v256, %v649
      %651 = vmatmul.bf16.gmra.mxu0 %v415
      %v652 = vpop.f32.mrf.mxu0
      %v653 = vadd.f32 %v256, %v652
      %v654 = vpop.f32.mrf.mxu0
      %v655 = vadd.f32 %v256, %v654
      %656 = vmatmul.bf16.gmra.mxu0 %v416
      %v657 = vpop.f32.mrf.mxu0
      %v658 = vadd.f32 %v256, %v657
      %v659 = vpop.f32.mrf.mxu0
      %v660 = vadd.f32 %v256, %v659
      %661 = vmatmul.bf16.gmra.mxu0 %v417
      %v662 = vpop.f32.mrf.mxu0
      %v663 = vadd.f32 %v256, %v662
      %v664 = vpop.f32.mrf.mxu0
      %v665 = vadd.f32 %v256, %v664
      %666 = vdwg.mxu0
      %667 = vst [vmem:[%s172] sm:$0xff] %v508
      %668 = vst [vmem:[%s172 + $0x8] sm:$0xff] %v510
      %669 = vst [vmem:[%s172 + $0x10] sm:$0xff] %v513
      %670 = vst [vmem:[%s172 + $0x18] sm:$0xff] %v515
      %671 = vst [vmem:[%s172 + $0x20] sm:$0xff] %v518
      %672 = vst [vmem:[%s172 + $0x28] sm:$0xff] %v520
      %673 = vst [vmem:[%s172 + $0x30] sm:$0xff] %v523
      %674 = vst [vmem:[%s172 + $0x38] sm:$0xff] %v525
      %675 = vst [vmem:[%s172 + $0x40] sm:$0xff] %v528
      %676 = vst [vmem:[%s172 + $0x48] sm:$0xff] %v530
      %677 = vst [vmem:[%s172 + $0x50] sm:$0xff] %v533
      %678 = vst [vmem:[%s172 + $0x58] sm:$0xff] %v535
      %679 = vst [vmem:[%s172 + $0x60] sm:$0xff] %v538
      %680 = vst [vmem:[%s172 + $0x68] sm:$0xff] %v540
      %681 = vst [vmem:[%s172 + $0x70] sm:$0xff] %v543
      %682 = vst [vmem:[%s172 + $0x78] sm:$0xff] %v545
      %683 = vst [vmem:[%s172 + $0x80] sm:$0xff] %v548
      %684 = vst [vmem:[%s172 + $0x88] sm:$0xff] %v550
      %685 = vst [vmem:[%s172 + $0x90] sm:$0xff] %v553
      %686 = vst [vmem:[%s172 + $0x98] sm:$0xff] %v555
      %687 = vst [vmem:[%s172 + $0xa0] sm:$0xff] %v558
      %688 = vst [vmem:[%s172 + $0xa8] sm:$0xff] %v560
      %689 = vst [vmem:[%s172 + $0xb0] sm:$0xff] %v563
      %690 = vst [vmem:[%s172 + $0xb8] sm:$0xff] %v565
      %691 = vst [vmem:[%s172 + $0xc0] sm:$0xff] %v568
      %692 = vst [vmem:[%s172 + $0xc8] sm:$0xff] %v570
      %693 = vst [vmem:[%s172 + $0xd0] sm:$0xff] %v573
      %694 = vst [vmem:[%s172 + $0xd8] sm:$0xff] %v575
      %695 = vst [vmem:[%s172 + $0xe0] sm:$0xff] %v578
      %696 = vst [vmem:[%s172 + $0xe8] sm:$0xff] %v580
      %697 = vst [vmem:[%s172 + $0xf0] sm:$0xff] %v583
      %698 = vst [vmem:[%s172 + $0xf8] sm:$0xff] %v585
      %699 = vst [vmem:[%s172 + $0x100] sm:$0xff] %v588
      %700 = vst [vmem:[%s172 + $0x108] sm:$0xff] %v590
      %701 = vst [vmem:[%s172 + $0x110] sm:$0xff] %v593
      %702 = vst [vmem:[%s172 + $0x118] sm:$0xff] %v595
      %703 = vst [vmem:[%s172 + $0x120] sm:$0xff] %v598
      %704 = vst [vmem:[%s172 + $0x128] sm:$0xff] %v600
      %705 = vst [vmem:[%s172 + $0x130] sm:$0xff] %v603
      %706 = vst [vmem:[%s172 + $0x138] sm:$0xff] %v605
      %707 = vst [vmem:[%s172 + $0x140] sm:$0xff] %v608
      %708 = vst [vmem:[%s172 + $0x148] sm:$0xff] %v610
      %709 = vst [vmem:[%s172 + $0x150] sm:$0xff] %v613
      %710 = vst [vmem:[%s172 + $0x158] sm:$0xff] %v615
      %711 = vst [vmem:[%s172 + $0x160] sm:$0xff] %v618
      %712 = vst [vmem:[%s172 + $0x168] sm:$0xff] %v620
      %713 = vst [vmem:[%s172 + $0x170] sm:$0xff] %v623
      %714 = vst [vmem:[%s172 + $0x178] sm:$0xff] %v625
      %715 = vst [vmem:[%s172 + $0x180] sm:$0xff] %v628
      %716 = vst [vmem:[%s172 + $0x188] sm:$0xff] %v630
      %717 = vst [vmem:[%s172 + $0x190] sm:$0xff] %v633
      %718 = vst [vmem:[%s172 + $0x198] sm:$0xff] %v635
      %719 = vst [vmem:[%s172 + $0x1a0] sm:$0xff] %v638
      %720 = vst [vmem:[%s172 + $0x1a8] sm:$0xff] %v640
      %721 = vst [vmem:[%s172 + $0x1b0] sm:$0xff] %v643
      %722 = vst [vmem:[%s172 + $0x1b8] sm:$0xff] %v645
      %723 = vst [vmem:[%s172 + $0x1c0] sm:$0xff] %v648
      %724 = vst [vmem:[%s172 + $0x1c8] sm:$0xff] %v650
      %725 = vst [vmem:[%s172 + $0x1d0] sm:$0xff] %v653
      %726 = vst [vmem:[%s172 + $0x1d8] sm:$0xff] %v655
      %727 = vst [vmem:[%s172 + $0x1e0] sm:$0xff] %v658
      %728 = vst [vmem:[%s172 + $0x1e8] sm:$0xff] %v660
      %729 = vst [vmem:[%s172 + $0x1f0] sm:$0xff] %v663
      %730 = vst [vmem:[%s172 + $0x1f8] sm:$0xff] %v665
      %s731 = smul.u32 64, %s14
      %p732 = scmp.lt.s32.totalorder %s731, 1727
      %s733 = scalar_select %p732, %s731, 1727
      %s734 = smul.addr %s733, 8
      %s735 = scalar_lea.vmem %s3, %s734
      // Predicated region
      $region33: #{forward.21} parent=31 // pred_check
        %p736 = pneg %p100
      $region34: #{forward.21} parent=31 // pred_check_branch
        %738 = sbr.rel (%p736) target = $region36
      $region35: #{forward.21} parent=31 // pred_region
        %s739 = smul.u32 64, %s14
      $region36: #{forward.21} parent=31 // pred_fallthru
        _
    $region32: #{forward.21} parent=5 // pred_fallthru
      _
    %p740 = scmp.le.s32.totalorder 2, %s9
    // Predicated region
    $region37: #{forward.21} parent=5 // pred_check
      %p741 = pneg %p740
    $region38: #{forward.21} parent=5 // pred_check_branch
      %743 = sbr.rel (%p741) target = $region40
    $region39: #{forward.21} parent=5 // pred_region
      %s744 = ssub.s32 %s9, 2
      // Predicated region
      $region41: #{forward.21} parent=39 // pred_check
        %p745 = pneg %p106
      $region42: #{forward.21} parent=39 // pred_check_branch
        %747 = sbr.rel (%p745) target = $region44
      $region43: #{forward.21} parent=39 // pred_region
        %s748 = smul.u32 64, %s15
        %p749 = scmp.lt.s32.totalorder %s748, 1727
        %s750 = scalar_select %p749, %s748, 1727
        %s751 = smul.addr %s750, 8
        %s752 = scalar_lea.vmem %s3, %s751
      $region44: #{forward.21} parent=39 // pred_fallthru
        _
    $region40: #{forward.21} parent=5 // pred_fallthru
      _
  $region6: #{forward.21} parent=0 // loop_footer
    %s13 = sadd.s32 1, %s9
  $region7: #{forward.21} parent=0 // loop_footer_branch
    %8 = sbr.rel target = $region3
  $region8: #{forward.21} parent=0 // loop_exit
    _

</llo_original>
